<compile_context>
chip_gen: v7x
topology: tpu7x:2x2x1
jax: 0.10.0
libtpu: 0.0.40
codegen_flags: <defaults>
</compile_context>

<pallas_src>
import jax
import jax.numpy as jnp
from jax import lax
from jax.experimental import pallas as pl
from jax.experimental.pallas import tpu as pltpu

# ------------------- small synthetic config -------------------
VOCAB = 256      # vocab_size
N_LAYER = 2      # num_hidden_layers
C = 128          # hidden_size (n_embd / dim_att)
HEAD = 64        # head_size_a
H = C // HEAD    # number of RWKV heads
FFN = 256        # intermediate_size (dim_ffn)
LORA = 32        # low-rank dim for decay / a / v / g projections
B, T = 2, 8
BT = B * T       # batch folded into the matmul M dimension
BC = B * C       # batch-stacked lane width of the WKV state
NV = 16          # rows in the packed per-layer vector table

# rows of the packed per-layer [C]-vector table
(ROW_LN_IN, ROW_XR, ROW_XW, ROW_XK, ROW_XV, ROW_XA, ROW_XG, ROW_W0, ROW_A0,
 ROW_V0, ROW_KK, ROW_KA, ROW_RK, ROW_GNW, ROW_GNB, ROW_LN_POST) = range(NV)


# ------------------- fused whole-model kernel (grid over layers) ----------
def _model_kernel(x_in_ref, mask_ref, dh2_ref, dm2_ref, vecs_ref, wbig_ref,
                  wup_ref, wo_ref, wgu_ref, wdn_ref, lnf_ref, whead_ref,
                  logits_ref, x_scr, vf_scr, st_scr, v2_scr):
    f32 = jnp.float32
    bf16 = jnp.bfloat16
    is_first = pl.program_id(0) == 0

    def mxdot(a, b):                     # bf16 MXU matmul, f32 accumulate
        return jnp.dot(a.astype(bf16), b, preferred_element_type=f32)

    def sigmoid(z):                      # exp + approx reciprocal (EUP slots)
        return pl.reciprocal(1.0 + jnp.exp(-z), approx=True)

    def softplus(z):
        return jnp.maximum(z, 0.0) + jnp.log(1.0 + jnp.exp(-jnp.abs(z)))

    # exact-f32 per-head (64-lane) reduction, broadcast back over the head:
    # masked XLU lane reductions (kept off the MXU), used outside the loop.
    lane_c = lax.broadcasted_iota(jnp.int32, (BT, C), 1)
    head_masks = [((lane_c >= h * HEAD) & (lane_c < (h + 1) * HEAD)).astype(f32)
                  for h in range(H)]

    def head_reduce(z):                  # [BT, C] -> [BT, C]
        acc = jnp.zeros_like(z)
        for m in head_masks:
            acc = acc + m * jnp.sum(z * m, axis=-1, keepdims=True)
        return acc

    # per-(batch, head) reduction on the batch-stacked state: one-pass bf16
    # selector matmul against the precomputed block-diagonal 0/1 matrix.
    def hsum2(z):                        # [M, B*C] -> [M, B*C]
        return jnp.dot(z.astype(bf16), dh2_ref[...], preferred_element_type=f32)

    # ---- per-layer packed vectors ----
    vecs = vecs_ref[...]                               # [NV, C] f32
    ln_in = vecs[ROW_LN_IN:ROW_LN_IN + 1]
    mu_r = vecs[ROW_XR:ROW_XR + 1]
    mu_w = vecs[ROW_XW:ROW_XW + 1]
    mu_k = vecs[ROW_XK:ROW_XK + 1]
    mu_v = vecs[ROW_XV:ROW_XV + 1]
    mu_a = vecs[ROW_XA:ROW_XA + 1]
    mu_g = vecs[ROW_XG:ROW_XG + 1]
    w0 = vecs[ROW_W0:ROW_W0 + 1]
    a0 = vecs[ROW_A0:ROW_A0 + 1]
    v0 = vecs[ROW_V0:ROW_V0 + 1]
    k_k = vecs[ROW_KK:ROW_KK + 1]
    k_a = vecs[ROW_KA:ROW_KA + 1]
    r_k = vecs[ROW_RK:ROW_RK + 1]
    gnw = vecs[ROW_GNW:ROW_GNW + 1]
    gnb = vecs[ROW_GNB:ROW_GNB + 1]
    ln_post = vecs[ROW_LN_POST:ROW_LN_POST + 1]

    @pl.when(is_first)
    def _():                             # residual stream lives in VMEM
        x_scr[...] = x_in_ref[...]

    x_res = x_scr[...]                                 # [BT, C] f32
    mask = mask_ref[...]                               # [BT, 1] f32

    # ---- input RMSNorm (Llama input_layernorm) ----
    var = jnp.mean(x_res * x_res, axis=-1, keepdims=True)
    x_ln = x_res * lax.rsqrt(var + 1e-6) * ln_in

    # ---- TimeMixer: token shift via XLU roll + per-sequence zeroing ----
    xm = x_ln * mask
    rows = lax.broadcasted_iota(jnp.int32, (BT, 1), 0)
    x_prev = jnp.where(rows % T == 0, 0.0, pltpu.roll(xm, 1, 0))
    xx = x_prev - xm

    # ---- fused projections: [xr|xk|xv|xw|xa|xg] @ block(W_r,W_k,W_v,LoRA_dn)
    xcat = jnp.concatenate(
        [xm + xx * mu_r, xm + xx * mu_k, xm + xx * mu_v,
         xm + xx * mu_w, xm + xx * mu_a, xm + xx * mu_g], axis=1)   # [BT, 6C]
    p = mxdot(xcat, wbig_ref[...])                     # [BT, 3C + 4*LORA]
    r = p[:, 0:C]
    k = p[:, C:2 * C]
    v = p[:, 2 * C:3 * C]
    hcat = p[:, 3 * C:3 * C + 4 * LORA]                # [BT, 128] = hv|hw|ha|hg
    lane_l = lax.broadcasted_iota(jnp.int32, (BT, 4 * LORA), 1)
    hact = jnp.where((lane_l >= LORA) & (lane_l < 2 * LORA), jnp.tanh(hcat),
                     jnp.where(lane_l >= 3 * LORA, sigmoid(hcat), hcat))
    q = mxdot(hact, wup_ref[...])                      # [BT, 4C] = v|w|a|g outs
    v_lr = q[:, 0:C]
    w_lr = q[:, C:2 * C]
    a_lr = q[:, 2 * C:3 * C]
    g = q[:, 3 * C:4 * C]

    decay = jnp.exp(-jnp.exp(-softplus(-(w0 + w_lr)) - 0.5))        # in (0, 1)
    a_gate = sigmoid(a0 + a_lr)

    @pl.when(is_first)
    def _():                             # publish v_first at layer 0
        vf_scr[...] = v
    vf = vf_scr[...]
    v = v + (vf - v) * sigmoid(v0 + v_lr)              # exact no-op at layer 0

    kk = k * k_k
    kk = kk * lax.rsqrt(jnp.maximum(head_reduce(kk * kk), 1e-24))
    k_eff = k * (1.0 + (a_gate - 1.0) * k_a)
    a_vec = -kk
    b_vec = kk * a_gate

    # ---- WKV-7 recurrence with batch-stacked state [HEAD, B*C] ----
    def fold(z):                         # [B*T, C] -> [T, B*C]: 1 row per step
        return jnp.concatenate([z[b * T:(b + 1) * T, :] for b in range(B)],
                               axis=1)

    w_s = fold(decay)
    k_s = fold(k_eff)
    a_s = fold(a_vec)
    b_s = fold(b_vec)
    r_s = fold(r)
    v_s = fold(v)
    dm2 = dm2_ref[...]                                 # [HEAD, B*C] diag mask

    # v2 (per-head transpose of v) for ALL steps: one batched selector matmul,
    # entirely off the serial chain; stored in VMEM scratch.
    vv = jnp.concatenate([dm2 * v_s[t:t + 1, :] for t in range(T)], axis=0)
    v2_scr[...] = hsum2(vv)                            # [T*HEAD, B*C]

    # serial chain: only the `sa` matmul + elementwise update per step.
    state = jnp.zeros((HEAD, BC), f32)
    for t in range(T):                   # T is small & static: fully unrolled
        sa = hsum2(state * a_s[t:t + 1, :])
        state = (state * w_s[t:t + 1, :]
                 + v2_scr[t * HEAD:(t + 1) * HEAD, :] * k_s[t:t + 1, :]
                 + sa * b_s[t:t + 1, :])
        st_scr[t * HEAD:(t + 1) * HEAD, :] = state

    # output extraction for all steps AFTER the loop (independent matmuls).
    y_rows = []
    for t in range(T):
        ob = hsum2(st_scr[t * HEAD:(t + 1) * HEAD, :] * r_s[t:t + 1, :])
        y_rows.append(jnp.sum(ob * dm2, axis=0, keepdims=True))     # [1, B*C]
    y_s = jnp.concatenate(y_rows, axis=0)              # [T, B*C]
    y = jnp.concatenate([y_s[:, b * C:(b + 1) * C] for b in range(B)], axis=0)

    # ---- per-head GroupNorm (ln_x), eps = 1e-5 * head_size_divisor**2 ----
    mean = head_reduce(y) * (1.0 / HEAD)
    yc = y - mean
    var_h = head_reduce(yc * yc) * (1.0 / HEAD)
    y = yc * lax.rsqrt(var_h + 64e-5) * gnw + gnb

    # ---- r_k bonus + output gate + output projection ----
    y = y + head_reduce(r * k_eff * r_k) * v
    attn_out = mxdot(y * g, wo_ref[...])

    # ---- residual + post-attn RMSNorm + SwiGLU MLP + residual ----
    x1 = x_res + attn_out
    var2 = jnp.mean(x1 * x1, axis=-1, keepdims=True)
    h_ln = x1 * lax.rsqrt(var2 + 1e-6) * ln_post
    gu = mxdot(h_ln, wgu_ref[...])                     # [BT, 2*FFN] gate | up
    gate = gu[:, :FFN]
    up = gu[:, FFN:]
    x2 = x1 + mxdot(gate * sigmoid(gate) * up, wdn_ref[...])
    x_scr[...] = x2                                    # carry to next layer

    # ---- final RMSNorm + lm_head (only the last layer's write survives) ----
    var3 = jnp.mean(x2 * x2, axis=-1, keepdims=True)
    xn = x2 * lax.rsqrt(var3 + 1e-6) * lnf_ref[...]
    logits_ref[...] = mxdot(xn, whead_ref[...])


# ------------------- model forward -------------------
def hybrid_forward(params, input_ids, attention_mask):
    x = params['embed'][input_ids].reshape(BT, C)      # embedding gather (JAX)
    mask2d = attention_mask.astype(jnp.float32).reshape(BT, 1)

    def const2(shape):
        return pl.BlockSpec(shape, lambda l: (0, 0))

    def per_layer(shape):
        return pl.BlockSpec((None,) + shape, lambda l: (l, 0, 0))

    logits = pl.pallas_call(
        _model_kernel,
        out_shape=jax.ShapeDtypeStruct((BT, VOCAB), jnp.float32),
        grid=(N_LAYER,),
        in_specs=[
            const2((BT, C)),                     # embedded tokens
            const2((BT, 1)),                     # attention mask
            const2((BC, BC)),                    # block-diag head selector
            const2((HEAD, BC)),                  # within-head diag mask
            per_layer((NV, C)),                  # packed per-layer vectors
            per_layer((6 * C, 3 * C + 4 * LORA)),  # fused R/K/V + LoRA-downs
            per_layer((4 * LORA, 4 * C)),        # fused LoRA-ups
            per_layer((C, C)),                   # W_o
            per_layer((C, 2 * FFN)),             # W_gate | W_up
            per_layer((FFN, C)),                 # W_down
            const2((1, C)),                      # final RMSNorm weight
            const2((C, VOCAB)),                  # lm_head
        ],
        out_specs=pl.BlockSpec((BT, VOCAB), lambda l: (0, 0)),
        scratch_shapes=[
            pltpu.VMEM((BT, C), jnp.float32),          # residual stream x
            pltpu.VMEM((BT, C), jnp.float32),          # v_first
            pltpu.VMEM((T * HEAD, BC), jnp.float32),   # per-step WKV states
            pltpu.VMEM((T * HEAD, BC), jnp.float32),   # per-step v2
        ],
        compiler_params=pltpu.CompilerParams(
            dimension_semantics=("arbitrary",)),       # layers are sequential
    )(x, mask2d, params['dh2'], params['dm2'], params['vecs'], params['wbig'],
      params['wup'], params['wo'], params['wgu'], params['wdn'],
      params['final_ln'], params['lm_head'])
    return logits.reshape(B, T, VOCAB)


# ------------------- deterministic parameter init -------------------
def init_params(key):
    keys = iter(jax.random.split(key, 1024))

    def nrm(shape, scale=0.02):
        return scale * jax.random.normal(next(keys), shape, dtype=jnp.float32)

    params = {
        'embed': nrm((VOCAB, C)),
        'final_ln': jnp.ones((1, C), jnp.float32),
        'lm_head': nrm((C, VOCAB)).astype(jnp.bfloat16),
    }
    # 0/1 selector constants for per-(batch, head) reductions of the WKV state
    qi = jnp.arange(BC)
    params['dh2'] = (qi[:, None] // HEAD == qi[None, :] // HEAD).astype(jnp.bfloat16)
    params['dm2'] = (qi[None, :] % HEAD == jnp.arange(HEAD)[:, None]).astype(jnp.float32)

    vecs_l, wbig_l, wup_l, wo_l, wgu_l, wdn_l = [], [], [], [], [], []
    for li in range(N_LAYER):
        vecs = jnp.zeros((NV, C), jnp.float32)
        vecs = vecs.at[ROW_LN_IN].set(1.0)
        for row in (ROW_XR, ROW_XW, ROW_XK, ROW_XV, ROW_XA, ROW_XG):
            vecs = vecs.at[row].set(nrm((C,), 0.1))
        vecs = vecs.at[ROW_W0].set(nrm((C,), 0.1) - 0.5)
        vecs = vecs.at[ROW_A0].set(nrm((C,), 0.1))
        if li > 0:
            vecs = vecs.at[ROW_V0].set(1.0)
        vecs = vecs.at[ROW_KK].set(0.85)
        vecs = vecs.at[ROW_KA].set(1.0)
        vecs = vecs.at[ROW_RK].set(nrm((C,), 0.1))     # r_k flattened [H*HEAD]
        vecs = vecs.at[ROW_GNW].set(1.0)
        # ROW_GNB stays 0
        vecs = vecs.at[ROW_LN_POST].set(1.0)
        vecs_l.append(vecs)

        w_r, w_k, w_v, w_o = (nrm((C, C)) for _ in range(4))
        dn = [nrm((C, LORA)) for _ in range(4)]        # order: v, w, a, g
        up = [nrm((LORA, C)) for _ in range(4)]
        if li == 0:                                    # v-LoRA unused at layer 0
            dn[0] = jnp.zeros((C, LORA), jnp.float32)
            up[0] = jnp.zeros((LORA, C), jnp.float32)

        # fused block-structured weight: rows = [xr|xk|xv|xw|xa|xg],
        # cols = [ r | k | v | hv hw ha hg ]
        wbig = jnp.zeros((6 * C, 3 * C + 4 * LORA), jnp.float32)
        wbig = wbig.at[0 * C:1 * C, 0 * C:1 * C].set(w_r)
        wbig = wbig.at[1 * C:2 * C, 1 * C:2 * C].set(w_k)
        wbig = wbig.at[2 * C:3 * C, 2 * C:3 * C].set(w_v)
        base = 3 * C
        wbig = wbig.at[2 * C:3 * C, base + 0 * LORA:base + 1 * LORA].set(dn[0])
        wbig = wbig.at[3 * C:4 * C, base + 1 * LORA:base + 2 * LORA].set(dn[1])
        wbig = wbig.at[4 * C:5 * C, base + 2 * LORA:base + 3 * LORA].set(dn[2])
        wbig = wbig.at[5 * C:6 * C, base + 3 * LORA:base + 4 * LORA].set(dn[3])
        wbig_l.append(wbig.astype(jnp.bfloat16))

        # fused LoRA-up weight: rows = [hv|hw|ha|hg], cols = [v|w|a|g] outputs
        wup = jnp.zeros((4 * LORA, 4 * C), jnp.float32)
        for i in range(4):
            wup = wup.at[i * LORA:(i + 1) * LORA, i * C:(i + 1) * C].set(up[i])
        wup_l.append(wup.astype(jnp.bfloat16))

        wo_l.append(w_o.astype(jnp.bfloat16))
        wgu_l.append(nrm((C, 2 * FFN)).astype(jnp.bfloat16))   # gate | up
        wdn_l.append(nrm((FFN, C)).astype(jnp.bfloat16))

    params['vecs'] = jnp.stack(vecs_l)
    params['wbig'] = jnp.stack(wbig_l)
    params['wup'] = jnp.stack(wup_l)
    params['wo'] = jnp.stack(wo_l)
    params['wgu'] = jnp.stack(wgu_l)
    params['wdn'] = jnp.stack(wdn_l)
    return params


# TODO(synk): teacher_attn distillation loss (stage==1 path), deepspeed
# activation checkpointing and torch checkpoint loading (load_check_point) are
# training/IO machinery with no forward-compute Pallas equivalent; only the
# student (RWKV-7) forward path is implemented here.

if __name__ == "__main__":
    key = jax.random.PRNGKey(0)
    pkey, ikey = jax.random.split(key)
    params = init_params(pkey)
    input_ids = jax.random.randint(ikey, (B, T), 0, VOCAB, dtype=jnp.int32)
    attention_mask = jnp.ones((B, T), dtype=jnp.float32)

    fwd = jax.jit(hybrid_forward)
    logits = fwd(params, input_ids, attention_mask)
    jax.block_until_ready(logits)

    assert logits.shape == (B, T, VOCAB), logits.shape
    assert bool(jnp.all(jnp.isfinite(logits)))
    print("KERNEL_OK")
</pallas_src>

<mosaic_0001>
module attributes {stable_mosaic.version = 11 : i64} {
  func.func @_model_kernel(%arg0: i32, %arg1: memref<16x128xf32, #tpu.memory_space<vmem>>, %arg2: memref<16x1xf32, #tpu.memory_space<vmem>>, %arg3: memref<256x256xbf16, #tpu.memory_space<vmem>>, %arg4: memref<64x256xf32, #tpu.memory_space<vmem>>, %arg5: memref<1x16x128xf32, #tpu.memory_space<vmem>>, %arg6: memref<1x768x512xbf16, #tpu.memory_space<vmem>>, %arg7: memref<1x128x512xbf16, #tpu.memory_space<vmem>>, %arg8: memref<1x128x128xbf16, #tpu.memory_space<vmem>>, %arg9: memref<1x128x512xbf16, #tpu.memory_space<vmem>>, %arg10: memref<1x256x128xbf16, #tpu.memory_space<vmem>>, %arg11: memref<1x128xf32, #tpu.memory_space<vmem>>, %arg12: memref<128x256xbf16, #tpu.memory_space<vmem>>, %arg13: memref<16x256xf32, #tpu.memory_space<vmem>>, %arg14: memref<16x128xf32, #tpu.memory_space<vmem>>, %arg15: memref<16x128xf32, #tpu.memory_space<vmem>>, %arg16: memref<512x256xf32, #tpu.memory_space<vmem>>, %arg17: memref<512x256xf32, #tpu.memory_space<vmem>>) attributes {dimension_semantics = [#tpu.dimension_semantics<arbitrary>], iteration_bounds = array<i64: 2>, scalar_prefetch = 0 : i64, scratch_operands = 4 : i64, tpu.core_type = #tpu.core_type<tc>, window_params = [{pipeline_mode = #tpu.pipeline_mode<synchronous>, transform_indices = @transform_0, window_bounds = array<i64: 16, 128>}, {pipeline_mode = #tpu.pipeline_mode<synchronous>, transform_indices = @transform_1, window_bounds = array<i64: 16, 1>}, {pipeline_mode = #tpu.pipeline_mode<synchronous>, transform_indices = @transform_2, window_bounds = array<i64: 256, 256>}, {pipeline_mode = #tpu.pipeline_mode<synchronous>, transform_indices = @transform_3, window_bounds = array<i64: 64, 256>}, {transform_indices = @transform_4, window_bounds = array<i64: 1, 16, 128>}, {transform_indices = @transform_5, window_bounds = array<i64: 1, 768, 512>}, {transform_indices = @transform_6, window_bounds = array<i64: 1, 128, 512>}, {transform_indices = @transform_7, window_bounds = array<i64: 1, 128, 128>}, {transform_indices = @transform_8, window_bounds = array<i64: 1, 128, 512>}, {transform_indices = @transform_9, window_bounds = array<i64: 1, 256, 128>}, {pipeline_mode = #tpu.pipeline_mode<synchronous>, transform_indices = @transform_10, window_bounds = array<i64: 1, 128>}, {pipeline_mode = #tpu.pipeline_mode<synchronous>, transform_indices = @transform_11, window_bounds = array<i64: 128, 256>}, {pipeline_mode = #tpu.pipeline_mode<synchronous>, transform_indices = @transform_12, window_bounds = array<i64: 16, 256>}]} {
    %c0_i32 = arith.constant 0 : i32
    %0 = arith.cmpi eq, %arg0, %c0_i32 : i32
    %1 = tpu.iota {dimensions = array<i32: 1>} : vector<16x128xi32>
    %c0_i32_0 = arith.constant 0 : i32
    %2 = vector.broadcast %c0_i32_0 : i32 to vector<16x128xi32>
    %3 = arith.cmpi sge, %1, %2 : vector<16x128xi32>
    %c64_i32 = arith.constant 64 : i32
    %4 = vector.broadcast %c64_i32 : i32 to vector<16x128xi32>
    %5 = arith.cmpi slt, %1, %4 : vector<16x128xi32>
    %6 = arith.andi %3, %5 : vector<16x128xi1>
    %7 = arith.extui %6 : vector<16x128xi1> to vector<16x128xi32>
    %8 = arith.sitofp %7 : vector<16x128xi32> to vector<16x128xf32>
    %c64_i32_1 = arith.constant 64 : i32
    %9 = vector.broadcast %c64_i32_1 : i32 to vector<16x128xi32>
    %10 = arith.cmpi sge, %1, %9 : vector<16x128xi32>
    %c128_i32 = arith.constant 128 : i32
    %11 = vector.broadcast %c128_i32 : i32 to vector<16x128xi32>
    %12 = arith.cmpi slt, %1, %11 : vector<16x128xi32>
    %13 = arith.andi %10, %12 : vector<16x128xi1>
    %14 = arith.extui %13 : vector<16x128xi1> to vector<16x128xi32>
    %15 = arith.sitofp %14 : vector<16x128xi32> to vector<16x128xf32>
    %c0 = arith.constant 0 : index
    %c0_2 = arith.constant 0 : index
    %c0_3 = arith.constant 0 : index
    %16 = vector.load %arg5[%c0, %c0_2, %c0_3] : memref<1x16x128xf32, #tpu.memory_space<vmem>>, vector<1x16x128xf32>
    %17 = vector.shape_cast %16 : vector<1x16x128xf32> to vector<16x128xf32>
    %18 = vector.extract_strided_slice %17 {offsets = [0, 0], sizes = [1, 128], strides = [1, 1]} : vector<16x128xf32> to vector<1x128xf32>
    %19 = vector.extract_strided_slice %17 {offsets = [1, 0], sizes = [1, 128], strides = [1, 1]} : vector<16x128xf32> to vector<1x128xf32>
    %20 = vector.extract_strided_slice %17 {offsets = [2, 0], sizes = [1, 128], strides = [1, 1]} : vector<16x128xf32> to vector<1x128xf32>
    %21 = vector.extract_strided_slice %17 {offsets = [3, 0], sizes = [1, 128], strides = [1, 1]} : vector<16x128xf32> to vector<1x128xf32>
    %22 = vector.extract_strided_slice %17 {offsets = [4, 0], sizes = [1, 128], strides = [1, 1]} : vector<16x128xf32> to vector<1x128xf32>
    %23 = vector.extract_strided_slice %17 {offsets = [5, 0], sizes = [1, 128], strides = [1, 1]} : vector<16x128xf32> to vector<1x128xf32>
    %24 = vector.extract_strided_slice %17 {offsets = [6, 0], sizes = [1, 128], strides = [1, 1]} : vector<16x128xf32> to vector<1x128xf32>
    %25 = vector.extract_strided_slice %17 {offsets = [7, 0], sizes = [1, 128], strides = [1, 1]} : vector<16x128xf32> to vector<1x128xf32>
    %26 = vector.extract_strided_slice %17 {offsets = [8, 0], sizes = [1, 128], strides = [1, 1]} : vector<16x128xf32> to vector<1x128xf32>
    %27 = vector.extract_strided_slice %17 {offsets = [9, 0], sizes = [1, 128], strides = [1, 1]} : vector<16x128xf32> to vector<1x128xf32>
    %28 = vector.extract_strided_slice %17 {offsets = [10, 0], sizes = [1, 128], strides = [1, 1]} : vector<16x128xf32> to vector<1x128xf32>
    %29 = vector.extract_strided_slice %17 {offsets = [11, 0], sizes = [1, 128], strides = [1, 1]} : vector<16x128xf32> to vector<1x128xf32>
    %30 = vector.extract_strided_slice %17 {offsets = [12, 0], sizes = [1, 128], strides = [1, 1]} : vector<16x128xf32> to vector<1x128xf32>
    %31 = vector.extract_strided_slice %17 {offsets = [13, 0], sizes = [1, 128], strides = [1, 1]} : vector<16x128xf32> to vector<1x128xf32>
    %32 = vector.extract_strided_slice %17 {offsets = [14, 0], sizes = [1, 128], strides = [1, 1]} : vector<16x128xf32> to vector<1x128xf32>
    %33 = vector.extract_strided_slice %17 {offsets = [15, 0], sizes = [1, 128], strides = [1, 1]} : vector<16x128xf32> to vector<1x128xf32>
    %34 = arith.extui %0 : i1 to i32
    %c0_i32_4 = arith.constant 0 : i32
    %35 = arith.cmpi ne, %34, %c0_i32_4 : i32
    scf.if %35 {
      %c0_196 = arith.constant 0 : index
      %c0_197 = arith.constant 0 : index
      %601 = vector.load %arg1[%c0_196, %c0_197] : memref<16x128xf32, #tpu.memory_space<vmem>>, vector<16x128xf32>
      %c0_198 = arith.constant 0 : index
      %c0_199 = arith.constant 0 : index
      %602 = vector.load %arg14[%c0_198, %c0_199] : memref<16x128xf32, #tpu.memory_space<vmem>>, vector<16x128xf32>
      tpu.vector_store %arg14[%c0_198, %c0_199], %601 {strides = array<i32>} : memref<16x128xf32, #tpu.memory_space<vmem>>, vector<16x128xf32>,
    } else {
    }
    %c0_5 = arith.constant 0 : index
    %c0_6 = arith.constant 0 : index
    %36 = vector.load %arg14[%c0_5, %c0_6] : memref<16x128xf32, #tpu.memory_space<vmem>>, vector<16x128xf32>
    %c0_7 = arith.constant 0 : index
    %c0_8 = arith.constant 0 : index
    %37 = vector.load %arg2[%c0_7, %c0_8] : memref<16x1xf32, #tpu.memory_space<vmem>>, vector<16x1xf32>
    %38 = arith.mulf %36, %36 : vector<16x128xf32>
    %cst = arith.constant dense<0.000000e+00> : vector<16xf32>
    %39 = vector.multi_reduction <add>, %38, %cst [1] : vector<16x128xf32> to vector<16xf32>
    %40 = vector.shape_cast %39 : vector<16xf32> to vector<16x1xf32>
    %cst_9 = arith.constant 1.280000e+02 : f32
    %41 = vector.broadcast %cst_9 : f32 to vector<16x1xf32>
    %42 = arith.divf %40, %41 : vector<16x1xf32>
    %cst_10 = arith.constant 9.99999997E-7 : f32
    %43 = vector.broadcast %cst_10 : f32 to vector<16x1xf32>
    %44 = arith.addf %42, %43 : vector<16x1xf32>
    %45 = math.rsqrt %44 : vector<16x1xf32>
    %46 = vector.broadcast %45 : vector<16x1xf32> to vector<16x128xf32>
    %47 = arith.mulf %36, %46 : vector<16x128xf32>
    %48 = vector.broadcast %18 : vector<1x128xf32> to vector<16x128xf32>
    %49 = arith.mulf %47, %48 : vector<16x128xf32>
    %50 = vector.broadcast %37 : vector<16x1xf32> to vector<16x128xf32>
    %51 = arith.mulf %49, %50 : vector<16x128xf32>
    %52 = tpu.iota {dimensions = array<i32: 0>} : vector<16x1xi32>
    %c8_i32 = arith.constant 8 : i32
    %c0_i32_11 = arith.constant 0 : i32
    %53 = arith.cmpi eq, %c8_i32, %c0_i32_11 : i32
    %c1_i32 = arith.constant 1 : i32
    %54 = arith.select %53, %c1_i32, %c8_i32 : i32
    %55 = vector.broadcast %54 : i32 to vector<16x1xi32>
    %56 = arith.remsi %52, %55 : vector<16x1xi32>
    %c0_i32_12 = arith.constant 0 : i32
    %57 = vector.broadcast %c0_i32_12 : i32 to vector<16x1xi32>
    %58 = arith.cmpi ne, %56, %57 : vector<16x1xi32>
    %c0_i32_13 = arith.constant 0 : i32
    %59 = vector.broadcast %c0_i32_13 : i32 to vector<16x1xi32>
    %60 = arith.cmpi slt, %56, %59 : vector<16x1xi32>
    %c0_i32_14 = arith.constant 0 : i32
    %61 = arith.cmpi slt, %54, %c0_i32_14 : i32
    %62 = vector.broadcast %61 : i1 to vector<16x1xi1>
    %63 = vector.broadcast %62 : vector<16x1xi1> to vector<16x1xi1>
    %64 = arith.xori %60, %63 : vector<16x1xi1>
    %65 = arith.andi %64, %58 : vector<16x1xi1>
    %66 = vector.broadcast %54 : i32 to vector<16x1xi32>
    %67 = arith.addi %56, %66 : vector<16x1xi32>
    %68 = arith.select %65, %67, %56 : vector<16x1xi1>, vector<16x1xi32>
    %c0_i32_15 = arith.constant 0 : i32
    %69 = vector.broadcast %c0_i32_15 : i32 to vector<16x1xi32>
    %70 = arith.cmpi eq, %68, %69 : vector<16x1xi32>
    %c1_i32_16 = arith.constant 1 : i32
    %71 = tpu.dynamic_rotate %51 by %c1_i32_16 dim 0 : vector<16x128xf32>, i32 -> vector<16x128xf32>
    %cst_17 = arith.constant 0.000000e+00 : f32
    %72 = vector.shape_cast %70 : vector<16x1xi1> to vector<16x1xi1>
    %73 = vector.broadcast %72 : vector<16x1xi1> to vector<16x128xi1>
    %74 = vector.broadcast %cst_17 : f32 to vector<16x128xf32>
    %75 = arith.select %73, %74, %71 : vector<16x128xi1>, vector<16x128xf32>
    %76 = arith.subf %75, %51 : vector<16x128xf32>
    %77 = vector.broadcast %19 : vector<1x128xf32> to vector<16x128xf32>
    %78 = arith.mulf %76, %77 : vector<16x128xf32>
    %79 = arith.addf %51, %78 : vector<16x128xf32>
    %80 = vector.broadcast %21 : vector<1x128xf32> to vector<16x128xf32>
    %81 = arith.mulf %76, %80 : vector<16x128xf32>
    %82 = arith.addf %51, %81 : vector<16x128xf32>
    %83 = vector.broadcast %22 : vector<1x128xf32> to vector<16x128xf32>
    %84 = arith.mulf %76, %83 : vector<16x128xf32>
    %85 = arith.addf %51, %84 : vector<16x128xf32>
    %86 = vector.broadcast %20 : vector<1x128xf32> to vector<16x128xf32>
    %87 = arith.mulf %76, %86 : vector<16x128xf32>
    %88 = arith.addf %51, %87 : vector<16x128xf32>
    %89 = vector.broadcast %23 : vector<1x128xf32> to vector<16x128xf32>
    %90 = arith.mulf %76, %89 : vector<16x128xf32>
    %91 = arith.addf %51, %90 : vector<16x128xf32>
    %92 = vector.broadcast %24 : vector<1x128xf32> to vector<16x128xf32>
    %93 = arith.mulf %76, %92 : vector<16x128xf32>
    %94 = arith.addf %51, %93 : vector<16x128xf32>
    %95 = tpu.concatenate %79, %82, %85, %88, %91, %94 in 1 : vector<16x128xf32>, vector<16x128xf32>, vector<16x128xf32>, vector<16x128xf32>, vector<16x128xf32>, vector<16x128xf32> -> vector<16x768xf32>
    %c0_18 = arith.constant 0 : index
    %c0_19 = arith.constant 0 : index
    %c0_20 = arith.constant 0 : index
    %96 = vector.load %arg6[%c0_18, %c0_19, %c0_20] : memref<1x768x512xbf16, #tpu.memory_space<vmem>>, vector<1x768x512xbf16>
    %97 = vector.shape_cast %96 : vector<1x768x512xbf16> to vector<768x512xbf16>
    %98 = arith.truncf %95 : vector<16x768xf32> to vector<16x768xbf16>
    %cst_21 = arith.constant dense<0.000000e+00> : vector<16x512xf32>
    %99 = tpu.matmul %98, %97, %cst_21 {dimension_numbers = #tpu.dot_dimension_numbers<[1], [0], [0], [1], [0, 0, 1, 1], [], []>} : vector<16x768xbf16>, vector<768x512xbf16>, vector<16x512xf32> -> vector<16x512xf32>
    %100 = vector.extract_strided_slice %99 {offsets = [0, 0], sizes = [16, 128], strides = [1, 1]} : vector<16x512xf32> to vector<16x128xf32>
    %101 = vector.extract_strided_slice %99 {offsets = [0, 128], sizes = [16, 128], strides = [1, 1]} : vector<16x512xf32> to vector<16x128xf32>
    %102 = vector.extract_strided_slice %99 {offsets = [0, 256], sizes = [16, 128], strides = [1, 1]} : vector<16x512xf32> to vector<16x128xf32>
    %103 = vector.extract_strided_slice %99 {offsets = [0, 384], sizes = [16, 128], strides = [1, 1]} : vector<16x512xf32> to vector<16x128xf32>
    %104 = tpu.iota {dimensions = array<i32: 1>} : vector<16x128xi32>
    %c32_i32 = arith.constant 32 : i32
    %105 = vector.broadcast %c32_i32 : i32 to vector<16x128xi32>
    %106 = arith.cmpi sge, %104, %105 : vector<16x128xi32>
    %c64_i32_22 = arith.constant 64 : i32
    %107 = vector.broadcast %c64_i32_22 : i32 to vector<16x128xi32>
    %108 = arith.cmpi slt, %104, %107 : vector<16x128xi32>
    %109 = arith.andi %106, %108 : vector<16x128xi1>
    %110 = math.tanh %103 : vector<16x128xf32>
    %c96_i32 = arith.constant 96 : i32
    %111 = vector.broadcast %c96_i32 : i32 to vector<16x128xi32>
    %112 = arith.cmpi sge, %104, %111 : vector<16x128xi32>
    %cst_23 = arith.constant 0.000000e+00 : f32
    %113 = vector.broadcast %cst_23 : f32 to vector<16x128xf32>
    %114 = arith.subf %113, %103 : vector<16x128xf32>
    %115 = math.exp %114 : vector<16x128xf32>
    %cst_24 = arith.constant 1.000000e+00 : f32
    %116 = vector.broadcast %cst_24 : f32 to vector<16x128xf32>
    %117 = arith.addf %116, %115 : vector<16x128xf32>
    %118 = tpu.reciprocal %117 {approx = true} : vector<16x128xf32> -> vector<16x128xf32>
    %119 = arith.select %112, %118, %103 : vector<16x128xi1>, vector<16x128xf32>
    %120 = arith.select %109, %110, %119 : vector<16x128xi1>, vector<16x128xf32>
    %c0_25 = arith.constant 0 : index
    %c0_26 = arith.constant 0 : index
    %c0_27 = arith.constant 0 : index
    %121 = vector.load %arg7[%c0_25, %c0_26, %c0_27] : memref<1x128x512xbf16, #tpu.memory_space<vmem>>, vector<1x128x512xbf16>
    %122 = vector.shape_cast %121 : vector<1x128x512xbf16> to vector<128x512xbf16>
    %123 = arith.truncf %120 : vector<16x128xf32> to vector<16x128xbf16>
    %cst_28 = arith.constant dense<0.000000e+00> : vector<16x512xf32>
    %124 = tpu.matmul %123, %122, %cst_28 {dimension_numbers = #tpu.dot_dimension_numbers<[1], [0], [0], [1], [0, 0, 1, 1], [], []>} : vector<16x128xbf16>, vector<128x512xbf16>, vector<16x512xf32> -> vector<16x512xf32>
    %125 = vector.extract_strided_slice %124 {offsets = [0, 0], sizes = [16, 128], strides = [1, 1]} : vector<16x512xf32> to vector<16x128xf32>
    %126 = vector.extract_strided_slice %124 {offsets = [0, 128], sizes = [16, 128], strides = [1, 1]} : vector<16x512xf32> to vector<16x128xf32>
    %127 = vector.extract_strided_slice %124 {offsets = [0, 256], sizes = [16, 128], strides = [1, 1]} : vector<16x512xf32> to vector<16x128xf32>
    %128 = vector.extract_strided_slice %124 {offsets = [0, 384], sizes = [16, 128], strides = [1, 1]} : vector<16x512xf32> to vector<16x128xf32>
    %129 = vector.broadcast %25 : vector<1x128xf32> to vector<16x128xf32>
    %130 = arith.addf %129, %126 : vector<16x128xf32>
    %cst_29 = arith.constant 0.000000e+00 : f32
    %131 = vector.broadcast %cst_29 : f32 to vector<16x128xf32>
    %132 = arith.subf %131, %130 : vector<16x128xf32>
    %cst_30 = arith.constant 0.000000e+00 : f32
    %133 = vector.broadcast %cst_30 : f32 to vector<16x128xf32>
    %134 = arith.maximumf %132, %133 : vector<16x128xf32>
    %135 = math.absf %132 : vector<16x128xf32>
    %cst_31 = arith.constant 0.000000e+00 : f32
    %136 = vector.broadcast %cst_31 : f32 to vector<16x128xf32>
    %137 = arith.subf %136, %135 : vector<16x128xf32>
    %138 = math.exp %137 : vector<16x128xf32>
    %cst_32 = arith.constant 1.000000e+00 : f32
    %139 = vector.broadcast %cst_32 : f32 to vector<16x128xf32>
    %140 = arith.addf %139, %138 : vector<16x128xf32>
    %141 = math.log %140 : vector<16x128xf32>
    %142 = arith.addf %134, %141 : vector<16x128xf32>
    %cst_33 = arith.constant 0.000000e+00 : f32
    %143 = vector.broadcast %cst_33 : f32 to vector<16x128xf32>
    %144 = arith.subf %143, %142 : vector<16x128xf32>
    %cst_34 = arith.constant 5.000000e-01 : f32
    %145 = vector.broadcast %cst_34 : f32 to vector<16x128xf32>
    %146 = arith.subf %144, %145 : vector<16x128xf32>
    %147 = math.exp %146 : vector<16x128xf32>
    %cst_35 = arith.constant 0.000000e+00 : f32
    %148 = vector.broadcast %cst_35 : f32 to vector<16x128xf32>
    %149 = arith.subf %148, %147 : vector<16x128xf32>
    %150 = math.exp %149 : vector<16x128xf32>
    %151 = vector.broadcast %26 : vector<1x128xf32> to vector<16x128xf32>
    %152 = arith.addf %151, %127 : vector<16x128xf32>
    %cst_36 = arith.constant 0.000000e+00 : f32
    %153 = vector.broadcast %cst_36 : f32 to vector<16x128xf32>
    %154 = arith.subf %153, %152 : vector<16x128xf32>
    %155 = math.exp %154 : vector<16x128xf32>
    %cst_37 = arith.constant 1.000000e+00 : f32
    %156 = vector.broadcast %cst_37 : f32 to vector<16x128xf32>
    %157 = arith.addf %156, %155 : vector<16x128xf32>
    %158 = tpu.reciprocal %157 {approx = true} : vector<16x128xf32> -> vector<16x128xf32>
    %159 = arith.extui %0 : i1 to i32
    %c0_i32_38 = arith.constant 0 : i32
    %160 = arith.cmpi ne, %159, %c0_i32_38 : i32
    scf.if %160 {
      %c0_196 = arith.constant 0 : index
      %c0_197 = arith.constant 0 : index
      %601 = vector.load %arg15[%c0_196, %c0_197] : memref<16x128xf32, #tpu.memory_space<vmem>>, vector<16x128xf32>
      tpu.vector_store %arg15[%c0_196, %c0_197], %102 {strides = array<i32>} : memref<16x128xf32, #tpu.memory_space<vmem>>, vector<16x128xf32>,
    } else {
    }
    %c0_39 = arith.constant 0 : index
    %c0_40 = arith.constant 0 : index
    %161 = vector.load %arg15[%c0_39, %c0_40] : memref<16x128xf32, #tpu.memory_space<vmem>>, vector<16x128xf32>
    %162 = arith.subf %161, %102 : vector<16x128xf32>
    %163 = vector.broadcast %27 : vector<1x128xf32> to vector<16x128xf32>
    %164 = arith.addf %163, %125 : vector<16x128xf32>
    %cst_41 = arith.constant 0.000000e+00 : f32
    %165 = vector.broadcast %cst_41 : f32 to vector<16x128xf32>
    %166 = arith.subf %165, %164 : vector<16x128xf32>
    %167 = math.exp %166 : vector<16x128xf32>
    %cst_42 = arith.constant 1.000000e+00 : f32
    %168 = vector.broadcast %cst_42 : f32 to vector<16x128xf32>
    %169 = arith.addf %168, %167 : vector<16x128xf32>
    %170 = tpu.reciprocal %169 {approx = true} : vector<16x128xf32> -> vector<16x128xf32>
    %171 = arith.mulf %162, %170 : vector<16x128xf32>
    %172 = arith.addf %102, %171 : vector<16x128xf32>
    %173 = vector.broadcast %28 : vector<1x128xf32> to vector<16x128xf32>
    %174 = arith.mulf %101, %173 : vector<16x128xf32>
    %175 = arith.mulf %174, %174 : vector<16x128xf32>
    %cst_43 = arith.constant 0.000000e+00 : f32
    %176 = vector.broadcast %cst_43 : f32 to vector<16x128xf32>
    %177 = arith.mulf %175, %8 : vector<16x128xf32>
    %cst_44 = arith.constant dense<0.000000e+00> : vector<16xf32>
    %178 = vector.multi_reduction <add>, %177, %cst_44 [1] : vector<16x128xf32> to vector<16xf32>
    %179 = vector.shape_cast %178 : vector<16xf32> to vector<16x1xf32>
    %180 = vector.broadcast %179 : vector<16x1xf32> to vector<16x128xf32>
    %181 = arith.mulf %8, %180 : vector<16x128xf32>
    %182 = arith.addf %176, %181 : vector<16x128xf32>
    %183 = arith.mulf %175, %15 : vector<16x128xf32>
    %cst_45 = arith.constant dense<0.000000e+00> : vector<16xf32>
    %184 = vector.multi_reduction <add>, %183, %cst_45 [1] : vector<16x128xf32> to vector<16xf32>
    %185 = vector.shape_cast %184 : vector<16xf32> to vector<16x1xf32>
    %186 = vector.broadcast %185 : vector<16x1xf32> to vector<16x128xf32>
    %187 = arith.mulf %15, %186 : vector<16x128xf32>
    %188 = arith.addf %182, %187 : vector<16x128xf32>
    %cst_46 = arith.constant 1.000000e-24 : f32
    %189 = vector.broadcast %cst_46 : f32 to vector<16x128xf32>
    %190 = arith.maximumf %188, %189 : vector<16x128xf32>
    %191 = math.rsqrt %190 : vector<16x128xf32>
    %192 = arith.mulf %174, %191 : vector<16x128xf32>
    %cst_47 = arith.constant 1.000000e+00 : f32
    %193 = vector.broadcast %cst_47 : f32 to vector<16x128xf32>
    %194 = arith.subf %158, %193 : vector<16x128xf32>
    %195 = vector.broadcast %29 : vector<1x128xf32> to vector<16x128xf32>
    %196 = arith.mulf %194, %195 : vector<16x128xf32>
    %cst_48 = arith.constant 1.000000e+00 : f32
    %197 = vector.broadcast %cst_48 : f32 to vector<16x128xf32>
    %198 = arith.addf %197, %196 : vector<16x128xf32>
    %199 = arith.mulf %101, %198 : vector<16x128xf32>
    %cst_49 = arith.constant 0.000000e+00 : f32
    %200 = vector.broadcast %cst_49 : f32 to vector<16x128xf32>
    %201 = arith.subf %200, %192 : vector<16x128xf32>
    %202 = arith.mulf %192, %158 : vector<16x128xf32>
    %203 = vector.extract_strided_slice %150 {offsets = [0, 0], sizes = [8, 128], strides = [1, 1]} : vector<16x128xf32> to vector<8x128xf32>
    %204 = vector.extract_strided_slice %150 {offsets = [8, 0], sizes = [8, 128], strides = [1, 1]} : vector<16x128xf32> to vector<8x128xf32>
    %205 = tpu.concatenate %203, %204 in 1 : vector<8x128xf32>, vector<8x128xf32> -> vector<8x256xf32>
    %206 = vector.extract_strided_slice %199 {offsets = [0, 0], sizes = [8, 128], strides = [1, 1]} : vector<16x128xf32> to vector<8x128xf32>
    %207 = vector.extract_strided_slice %199 {offsets = [8, 0], sizes = [8, 128], strides = [1, 1]} : vector<16x128xf32> to vector<8x128xf32>
    %208 = tpu.concatenate %206, %207 in 1 : vector<8x128xf32>, vector<8x128xf32> -> vector<8x256xf32>
    %209 = vector.extract_strided_slice %201 {offsets = [0, 0], sizes = [8, 128], strides = [1, 1]} : vector<16x128xf32> to vector<8x128xf32>
    %210 = vector.extract_strided_slice %201 {offsets = [8, 0], sizes = [8, 128], strides = [1, 1]} : vector<16x128xf32> to vector<8x128xf32>
    %211 = tpu.concatenate %209, %210 in 1 : vector<8x128xf32>, vector<8x128xf32> -> vector<8x256xf32>
    %212 = vector.extract_strided_slice %202 {offsets = [0, 0], sizes = [8, 128], strides = [1, 1]} : vector<16x128xf32> to vector<8x128xf32>
    %213 = vector.extract_strided_slice %202 {offsets = [8, 0], sizes = [8, 128], strides = [1, 1]} : vector<16x128xf32> to vector<8x128xf32>
    %214 = tpu.concatenate %212, %213 in 1 : vector<8x128xf32>, vector<8x128xf32> -> vector<8x256xf32>
    %215 = vector.extract_strided_slice %100 {offsets = [0, 0], sizes = [8, 128], strides = [1, 1]} : vector<16x128xf32> to vector<8x128xf32>
    %216 = vector.extract_strided_slice %100 {offsets = [8, 0], sizes = [8, 128], strides = [1, 1]} : vector<16x128xf32> to vector<8x128xf32>
    %217 = tpu.concatenate %215, %216 in 1 : vector<8x128xf32>, vector<8x128xf32> -> vector<8x256xf32>
    %218 = vector.extract_strided_slice %172 {offsets = [0, 0], sizes = [8, 128], strides = [1, 1]} : vector<16x128xf32> to vector<8x128xf32>
    %219 = vector.extract_strided_slice %172 {offsets = [8, 0], sizes = [8, 128], strides = [1, 1]} : vector<16x128xf32> to vector<8x128xf32>
    %220 = tpu.concatenate %218, %219 in 1 : vector<8x128xf32>, vector<8x128xf32> -> vector<8x256xf32>
    %c0_50 = arith.constant 0 : index
    %c0_51 = arith.constant 0 : index
    %221 = vector.load %arg4[%c0_50, %c0_51] : memref<64x256xf32, #tpu.memory_space<vmem>>, vector<64x256xf32>
    %222 = vector.extract_strided_slice %220 {offsets = [0, 0], sizes = [1, 256], strides = [1, 1]} : vector<8x256xf32> to vector<1x256xf32>
    %223 = vector.broadcast %222 : vector<1x256xf32> to vector<64x256xf32>
    %224 = arith.mulf %221, %223 : vector<64x256xf32>
    %225 = vector.extract_strided_slice %220 {offsets = [1, 0], sizes = [1, 256], strides = [1, 1]} : vector<8x256xf32> to vector<1x256xf32>
    %226 = vector.broadcast %225 : vector<1x256xf32> to vector<64x256xf32>
    %227 = arith.mulf %221, %226 : vector<64x256xf32>
    %228 = vector.extract_strided_slice %220 {offsets = [2, 0], sizes = [1, 256], strides = [1, 1]} : vector<8x256xf32> to vector<1x256xf32>
    %229 = vector.broadcast %228 : vector<1x256xf32> to vector<64x256xf32>
    %230 = arith.mulf %221, %229 : vector<64x256xf32>
    %231 = vector.extract_strided_slice %220 {offsets = [3, 0], sizes = [1, 256], strides = [1, 1]} : vector<8x256xf32> to vector<1x256xf32>
    %232 = vector.broadcast %231 : vector<1x256xf32> to vector<64x256xf32>
    %233 = arith.mulf %221, %232 : vector<64x256xf32>
    %234 = vector.extract_strided_slice %220 {offsets = [4, 0], sizes = [1, 256], strides = [1, 1]} : vector<8x256xf32> to vector<1x256xf32>
    %235 = vector.broadcast %234 : vector<1x256xf32> to vector<64x256xf32>
    %236 = arith.mulf %221, %235 : vector<64x256xf32>
    %237 = vector.extract_strided_slice %220 {offsets = [5, 0], sizes = [1, 256], strides = [1, 1]} : vector<8x256xf32> to vector<1x256xf32>
    %238 = vector.broadcast %237 : vector<1x256xf32> to vector<64x256xf32>
    %239 = arith.mulf %221, %238 : vector<64x256xf32>
    %240 = vector.extract_strided_slice %220 {offsets = [6, 0], sizes = [1, 256], strides = [1, 1]} : vector<8x256xf32> to vector<1x256xf32>
    %241 = vector.broadcast %240 : vector<1x256xf32> to vector<64x256xf32>
    %242 = arith.mulf %221, %241 : vector<64x256xf32>
    %243 = vector.extract_strided_slice %220 {offsets = [7, 0], sizes = [1, 256], strides = [1, 1]} : vector<8x256xf32> to vector<1x256xf32>
    %244 = vector.broadcast %243 : vector<1x256xf32> to vector<64x256xf32>
    %245 = arith.mulf %221, %244 : vector<64x256xf32>
    %246 = tpu.concatenate %224, %227, %230, %233, %236, %239, %242, %245 in 0 : vector<64x256xf32>, vector<64x256xf32>, vector<64x256xf32>, vector<64x256xf32>, vector<64x256xf32>, vector<64x256xf32>, vector<64x256xf32>, vector<64x256xf32> -> vector<512x256xf32>
    %247 = arith.truncf %246 : vector<512x256xf32> to vector<512x256xbf16>
    %c0_52 = arith.constant 0 : index
    %c0_53 = arith.constant 0 : index
    %248 = vector.load %arg3[%c0_52, %c0_53] : memref<256x256xbf16, #tpu.memory_space<vmem>>, vector<256x256xbf16>
    %cst_54 = arith.constant dense<0.000000e+00> : vector<512x256xf32>
    %249 = tpu.matmul %247, %248, %cst_54 {dimension_numbers = #tpu.dot_dimension_numbers<[1], [0], [0], [1], [0, 0, 1, 1], [], []>} : vector<512x256xbf16>, vector<256x256xbf16>, vector<512x256xf32> -> vector<512x256xf32>
    %c0_55 = arith.constant 0 : index
    %c0_56 = arith.constant 0 : index
    %250 = vector.load %arg17[%c0_55, %c0_56] : memref<512x256xf32, #tpu.memory_space<vmem>>, vector<512x256xf32>
    tpu.vector_store %arg17[%c0_55, %c0_56], %249 {strides = array<i32>} : memref<512x256xf32, #tpu.memory_space<vmem>>, vector<512x256xf32>,
    %cst_57 = arith.constant 0.000000e+00 : f32
    %251 = vector.broadcast %cst_57 : f32 to vector<64x256xf32>
    %252 = vector.extract_strided_slice %211 {offsets = [0, 0], sizes = [1, 256], strides = [1, 1]} : vector<8x256xf32> to vector<1x256xf32>
    %253 = vector.broadcast %252 : vector<1x256xf32> to vector<64x256xf32>
    %254 = arith.mulf %251, %253 : vector<64x256xf32>
    %255 = arith.truncf %254 : vector<64x256xf32> to vector<64x256xbf16>
    %c0_58 = arith.constant 0 : index
    %c0_59 = arith.constant 0 : index
    %256 = vector.load %arg3[%c0_58, %c0_59] : memref<256x256xbf16, #tpu.memory_space<vmem>>, vector<256x256xbf16>
    %cst_60 = arith.constant dense<0.000000e+00> : vector<64x256xf32>
    %257 = tpu.matmul %255, %256, %cst_60 {dimension_numbers = #tpu.dot_dimension_numbers<[1], [0], [0], [1], [0, 0, 1, 1], [], []>} : vector<64x256xbf16>, vector<256x256xbf16>, vector<64x256xf32> -> vector<64x256xf32>
    %258 = vector.extract_strided_slice %205 {offsets = [0, 0], sizes = [1, 256], strides = [1, 1]} : vector<8x256xf32> to vector<1x256xf32>
    %259 = vector.broadcast %258 : vector<1x256xf32> to vector<64x256xf32>
    %260 = arith.mulf %251, %259 : vector<64x256xf32>
    %c0_61 = arith.constant 0 : index
    %c0_62 = arith.constant 0 : index
    %261 = vector.load %arg17[%c0_61, %c0_62] : memref<512x256xf32, #tpu.memory_space<vmem>>, vector<64x256xf32>
    %262 = vector.extract_strided_slice %208 {offsets = [0, 0], sizes = [1, 256], strides = [1, 1]} : vector<8x256xf32> to vector<1x256xf32>
    %263 = vector.broadcast %262 : vector<1x256xf32> to vector<64x256xf32>
    %264 = arith.mulf %261, %263 : vector<64x256xf32>
    %265 = arith.addf %260, %264 : vector<64x256xf32>
    %266 = vector.extract_strided_slice %214 {offsets = [0, 0], sizes = [1, 256], strides = [1, 1]} : vector<8x256xf32> to vector<1x256xf32>
    %267 = vector.broadcast %266 : vector<1x256xf32> to vector<64x256xf32>
    %268 = arith.mulf %257, %267 : vector<64x256xf32>
    %269 = arith.addf %265, %268 : vector<64x256xf32>
    %c0_63 = arith.constant 0 : index
    %c0_64 = arith.constant 0 : index
    %270 = vector.load %arg16[%c0_63, %c0_64] : memref<512x256xf32, #tpu.memory_space<vmem>>, vector<64x256xf32>
    tpu.vector_store %arg16[%c0_63, %c0_64], %269 {strides = array<i32>} : memref<512x256xf32, #tpu.memory_space<vmem>>, vector<64x256xf32>,
    %271 = vector.extract_strided_slice %211 {offsets = [1, 0], sizes = [1, 256], strides = [1, 1]} : vector<8x256xf32> to vector<1x256xf32>
    %272 = vector.broadcast %271 : vector<1x256xf32> to vector<64x256xf32>
    %273 = arith.mulf %269, %272 : vector<64x256xf32>
    %274 = arith.truncf %273 : vector<64x256xf32> to vector<64x256xbf16>
    %c0_65 = arith.constant 0 : index
    %c0_66 = arith.constant 0 : index
    %275 = vector.load %arg3[%c0_65, %c0_66] : memref<256x256xbf16, #tpu.memory_space<vmem>>, vector<256x256xbf16>
    %cst_67 = arith.constant dense<0.000000e+00> : vector<64x256xf32>
    %276 = tpu.matmul %274, %275, %cst_67 {dimension_numbers = #tpu.dot_dimension_numbers<[1], [0], [0], [1], [0, 0, 1, 1], [], []>} : vector<64x256xbf16>, vector<256x256xbf16>, vector<64x256xf32> -> vector<64x256xf32>
    %277 = vector.extract_strided_slice %205 {offsets = [1, 0], sizes = [1, 256], strides = [1, 1]} : vector<8x256xf32> to vector<1x256xf32>
    %278 = vector.broadcast %277 : vector<1x256xf32> to vector<64x256xf32>
    %279 = arith.mulf %269, %278 : vector<64x256xf32>
    %c64 = arith.constant 64 : index
    %c0_68 = arith.constant 0 : index
    %280 = vector.load %arg17[%c64, %c0_68] : memref<512x256xf32, #tpu.memory_space<vmem>>, vector<64x256xf32>
    %281 = vector.extract_strided_slice %208 {offsets = [1, 0], sizes = [1, 256], strides = [1, 1]} : vector<8x256xf32> to vector<1x256xf32>
    %282 = vector.broadcast %281 : vector<1x256xf32> to vector<64x256xf32>
    %283 = arith.mulf %280, %282 : vector<64x256xf32>
    %284 = arith.addf %279, %283 : vector<64x256xf32>
    %285 = vector.extract_strided_slice %214 {offsets = [1, 0], sizes = [1, 256], strides = [1, 1]} : vector<8x256xf32> to vector<1x256xf32>
    %286 = vector.broadcast %285 : vector<1x256xf32> to vector<64x256xf32>
    %287 = arith.mulf %276, %286 : vector<64x256xf32>
    %288 = arith.addf %284, %287 : vector<64x256xf32>
    %c64_69 = arith.constant 64 : index
    %c0_70 = arith.constant 0 : index
    %289 = vector.load %arg16[%c64_69, %c0_70] : memref<512x256xf32, #tpu.memory_space<vmem>>, vector<64x256xf32>
    tpu.vector_store %arg16[%c64_69, %c0_70], %288 {strides = array<i32>} : memref<512x256xf32, #tpu.memory_space<vmem>>, vector<64x256xf32>,
    %290 = vector.extract_strided_slice %211 {offsets = [2, 0], sizes = [1, 256], strides = [1, 1]} : vector<8x256xf32> to vector<1x256xf32>
    %291 = vector.broadcast %290 : vector<1x256xf32> to vector<64x256xf32>
    %292 = arith.mulf %288, %291 : vector<64x256xf32>
    %293 = arith.truncf %292 : vector<64x256xf32> to vector<64x256xbf16>
    %c0_71 = arith.constant 0 : index
    %c0_72 = arith.constant 0 : index
    %294 = vector.load %arg3[%c0_71, %c0_72] : memref<256x256xbf16, #tpu.memory_space<vmem>>, vector<256x256xbf16>
    %cst_73 = arith.constant dense<0.000000e+00> : vector<64x256xf32>
    %295 = tpu.matmul %293, %294, %cst_73 {dimension_numbers = #tpu.dot_dimension_numbers<[1], [0], [0], [1], [0, 0, 1, 1], [], []>} : vector<64x256xbf16>, vector<256x256xbf16>, vector<64x256xf32> -> vector<64x256xf32>
    %296 = vector.extract_strided_slice %205 {offsets = [2, 0], sizes = [1, 256], strides = [1, 1]} : vector<8x256xf32> to vector<1x256xf32>
    %297 = vector.broadcast %296 : vector<1x256xf32> to vector<64x256xf32>
    %298 = arith.mulf %288, %297 : vector<64x256xf32>
    %c128 = arith.constant 128 : index
    %c0_74 = arith.constant 0 : index
    %299 = vector.load %arg17[%c128, %c0_74] : memref<512x256xf32, #tpu.memory_space<vmem>>, vector<64x256xf32>
    %300 = vector.extract_strided_slice %208 {offsets = [2, 0], sizes = [1, 256], strides = [1, 1]} : vector<8x256xf32> to vector<1x256xf32>
    %301 = vector.broadcast %300 : vector<1x256xf32> to vector<64x256xf32>
    %302 = arith.mulf %299, %301 : vector<64x256xf32>
    %303 = arith.addf %298, %302 : vector<64x256xf32>
    %304 = vector.extract_strided_slice %214 {offsets = [2, 0], sizes = [1, 256], strides = [1, 1]} : vector<8x256xf32> to vector<1x256xf32>
    %305 = vector.broadcast %304 : vector<1x256xf32> to vector<64x256xf32>
    %306 = arith.mulf %295, %305 : vector<64x256xf32>
    %307 = arith.addf %303, %306 : vector<64x256xf32>
    %c128_75 = arith.constant 128 : index
    %c0_76 = arith.constant 0 : index
    %308 = vector.load %arg16[%c128_75, %c0_76] : memref<512x256xf32, #tpu.memory_space<vmem>>, vector<64x256xf32>
    tpu.vector_store %arg16[%c128_75, %c0_76], %307 {strides = array<i32>} : memref<512x256xf32, #tpu.memory_space<vmem>>, vector<64x256xf32>,
    %309 = vector.extract_strided_slice %211 {offsets = [3, 0], sizes = [1, 256], strides = [1, 1]} : vector<8x256xf32> to vector<1x256xf32>
    %310 = vector.broadcast %309 : vector<1x256xf32> to vector<64x256xf32>
    %311 = arith.mulf %307, %310 : vector<64x256xf32>
    %312 = arith.truncf %311 : vector<64x256xf32> to vector<64x256xbf16>
    %c0_77 = arith.constant 0 : index
    %c0_78 = arith.constant 0 : index
    %313 = vector.load %arg3[%c0_77, %c0_78] : memref<256x256xbf16, #tpu.memory_space<vmem>>, vector<256x256xbf16>
    %cst_79 = arith.constant dense<0.000000e+00> : vector<64x256xf32>
    %314 = tpu.matmul %312, %313, %cst_79 {dimension_numbers = #tpu.dot_dimension_numbers<[1], [0], [0], [1], [0, 0, 1, 1], [], []>} : vector<64x256xbf16>, vector<256x256xbf16>, vector<64x256xf32> -> vector<64x256xf32>
    %315 = vector.extract_strided_slice %205 {offsets = [3, 0], sizes = [1, 256], strides = [1, 1]} : vector<8x256xf32> to vector<1x256xf32>
    %316 = vector.broadcast %315 : vector<1x256xf32> to vector<64x256xf32>
    %317 = arith.mulf %307, %316 : vector<64x256xf32>
    %c192 = arith.constant 192 : index
    %c0_80 = arith.constant 0 : index
    %318 = vector.load %arg17[%c192, %c0_80] : memref<512x256xf32, #tpu.memory_space<vmem>>, vector<64x256xf32>
    %319 = vector.extract_strided_slice %208 {offsets = [3, 0], sizes = [1, 256], strides = [1, 1]} : vector<8x256xf32> to vector<1x256xf32>
    %320 = vector.broadcast %319 : vector<1x256xf32> to vector<64x256xf32>
    %321 = arith.mulf %318, %320 : vector<64x256xf32>
    %322 = arith.addf %317, %321 : vector<64x256xf32>
    %323 = vector.extract_strided_slice %214 {offsets = [3, 0], sizes = [1, 256], strides = [1, 1]} : vector<8x256xf32> to vector<1x256xf32>
    %324 = vector.broadcast %323 : vector<1x256xf32> to vector<64x256xf32>
    %325 = arith.mulf %314, %324 : vector<64x256xf32>
    %326 = arith.addf %322, %325 : vector<64x256xf32>
    %c192_81 = arith.constant 192 : index
    %c0_82 = arith.constant 0 : index
    %327 = vector.load %arg16[%c192_81, %c0_82] : memref<512x256xf32, #tpu.memory_space<vmem>>, vector<64x256xf32>
    tpu.vector_store %arg16[%c192_81, %c0_82], %326 {strides = array<i32>} : memref<512x256xf32, #tpu.memory_space<vmem>>, vector<64x256xf32>,
    %328 = vector.extract_strided_slice %211 {offsets = [4, 0], sizes = [1, 256], strides = [1, 1]} : vector<8x256xf32> to vector<1x256xf32>
    %329 = vector.broadcast %328 : vector<1x256xf32> to vector<64x256xf32>
    %330 = arith.mulf %326, %329 : vector<64x256xf32>
    %331 = arith.truncf %330 : vector<64x256xf32> to vector<64x256xbf16>
    %c0_83 = arith.constant 0 : index
    %c0_84 = arith.constant 0 : index
    %332 = vector.load %arg3[%c0_83, %c0_84] : memref<256x256xbf16, #tpu.memory_space<vmem>>, vector<256x256xbf16>
    %cst_85 = arith.constant dense<0.000000e+00> : vector<64x256xf32>
    %333 = tpu.matmul %331, %332, %cst_85 {dimension_numbers = #tpu.dot_dimension_numbers<[1], [0], [0], [1], [0, 0, 1, 1], [], []>} : vector<64x256xbf16>, vector<256x256xbf16>, vector<64x256xf32> -> vector<64x256xf32>
    %334 = vector.extract_strided_slice %205 {offsets = [4, 0], sizes = [1, 256], strides = [1, 1]} : vector<8x256xf32> to vector<1x256xf32>
    %335 = vector.broadcast %334 : vector<1x256xf32> to vector<64x256xf32>
    %336 = arith.mulf %326, %335 : vector<64x256xf32>
    %c256 = arith.constant 256 : index
    %c0_86 = arith.constant 0 : index
    %337 = vector.load %arg17[%c256, %c0_86] : memref<512x256xf32, #tpu.memory_space<vmem>>, vector<64x256xf32>
    %338 = vector.extract_strided_slice %208 {offsets = [4, 0], sizes = [1, 256], strides = [1, 1]} : vector<8x256xf32> to vector<1x256xf32>
    %339 = vector.broadcast %338 : vector<1x256xf32> to vector<64x256xf32>
    %340 = arith.mulf %337, %339 : vector<64x256xf32>
    %341 = arith.addf %336, %340 : vector<64x256xf32>
    %342 = vector.extract_strided_slice %214 {offsets = [4, 0], sizes = [1, 256], strides = [1, 1]} : vector<8x256xf32> to vector<1x256xf32>
    %343 = vector.broadcast %342 : vector<1x256xf32> to vector<64x256xf32>
    %344 = arith.mulf %333, %343 : vector<64x256xf32>
    %345 = arith.addf %341, %344 : vector<64x256xf32>
    %c256_87 = arith.constant 256 : index
    %c0_88 = arith.constant 0 : index
    %346 = vector.load %arg16[%c256_87, %c0_88] : memref<512x256xf32, #tpu.memory_space<vmem>>, vector<64x256xf32>
    tpu.vector_store %arg16[%c256_87, %c0_88], %345 {strides = array<i32>} : memref<512x256xf32, #tpu.memory_space<vmem>>, vector<64x256xf32>,
    %347 = vector.extract_strided_slice %211 {offsets = [5, 0], sizes = [1, 256], strides = [1, 1]} : vector<8x256xf32> to vector<1x256xf32>
    %348 = vector.broadcast %347 : vector<1x256xf32> to vector<64x256xf32>
    %349 = arith.mulf %345, %348 : vector<64x256xf32>
    %350 = arith.truncf %349 : vector<64x256xf32> to vector<64x256xbf16>
    %c0_89 = arith.constant 0 : index
    %c0_90 = arith.constant 0 : index
    %351 = vector.load %arg3[%c0_89, %c0_90] : memref<256x256xbf16, #tpu.memory_space<vmem>>, vector<256x256xbf16>
    %cst_91 = arith.constant dense<0.000000e+00> : vector<64x256xf32>
    %352 = tpu.matmul %350, %351, %cst_91 {dimension_numbers = #tpu.dot_dimension_numbers<[1], [0], [0], [1], [0, 0, 1, 1], [], []>} : vector<64x256xbf16>, vector<256x256xbf16>, vector<64x256xf32> -> vector<64x256xf32>
    %353 = vector.extract_strided_slice %205 {offsets = [5, 0], sizes = [1, 256], strides = [1, 1]} : vector<8x256xf32> to vector<1x256xf32>
    %354 = vector.broadcast %353 : vector<1x256xf32> to vector<64x256xf32>
    %355 = arith.mulf %345, %354 : vector<64x256xf32>
    %c320 = arith.constant 320 : index
    %c0_92 = arith.constant 0 : index
    %356 = vector.load %arg17[%c320, %c0_92] : memref<512x256xf32, #tpu.memory_space<vmem>>, vector<64x256xf32>
    %357 = vector.extract_strided_slice %208 {offsets = [5, 0], sizes = [1, 256], strides = [1, 1]} : vector<8x256xf32> to vector<1x256xf32>
    %358 = vector.broadcast %357 : vector<1x256xf32> to vector<64x256xf32>
    %359 = arith.mulf %356, %358 : vector<64x256xf32>
    %360 = arith.addf %355, %359 : vector<64x256xf32>
    %361 = vector.extract_strided_slice %214 {offsets = [5, 0], sizes = [1, 256], strides = [1, 1]} : vector<8x256xf32> to vector<1x256xf32>
    %362 = vector.broadcast %361 : vector<1x256xf32> to vector<64x256xf32>
    %363 = arith.mulf %352, %362 : vector<64x256xf32>
    %364 = arith.addf %360, %363 : vector<64x256xf32>
    %c320_93 = arith.constant 320 : index
    %c0_94 = arith.constant 0 : index
    %365 = vector.load %arg16[%c320_93, %c0_94] : memref<512x256xf32, #tpu.memory_space<vmem>>, vector<64x256xf32>
    tpu.vector_store %arg16[%c320_93, %c0_94], %364 {strides = array<i32>} : memref<512x256xf32, #tpu.memory_space<vmem>>, vector<64x256xf32>,
    %366 = vector.extract_strided_slice %211 {offsets = [6, 0], sizes = [1, 256], strides = [1, 1]} : vector<8x256xf32> to vector<1x256xf32>
    %367 = vector.broadcast %366 : vector<1x256xf32> to vector<64x256xf32>
    %368 = arith.mulf %364, %367 : vector<64x256xf32>
    %369 = arith.truncf %368 : vector<64x256xf32> to vector<64x256xbf16>
    %c0_95 = arith.constant 0 : index
    %c0_96 = arith.constant 0 : index
    %370 = vector.load %arg3[%c0_95, %c0_96] : memref<256x256xbf16, #tpu.memory_space<vmem>>, vector<256x256xbf16>
    %cst_97 = arith.constant dense<0.000000e+00> : vector<64x256xf32>
    %371 = tpu.matmul %369, %370, %cst_97 {dimension_numbers = #tpu.dot_dimension_numbers<[1], [0], [0], [1], [0, 0, 1, 1], [], []>} : vector<64x256xbf16>, vector<256x256xbf16>, vector<64x256xf32> -> vector<64x256xf32>
    %372 = vector.extract_strided_slice %205 {offsets = [6, 0], sizes = [1, 256], strides = [1, 1]} : vector<8x256xf32> to vector<1x256xf32>
    %373 = vector.broadcast %372 : vector<1x256xf32> to vector<64x256xf32>
    %374 = arith.mulf %364, %373 : vector<64x256xf32>
    %c384 = arith.constant 384 : index
    %c0_98 = arith.constant 0 : index
    %375 = vector.load %arg17[%c384, %c0_98] : memref<512x256xf32, #tpu.memory_space<vmem>>, vector<64x256xf32>
    %376 = vector.extract_strided_slice %208 {offsets = [6, 0], sizes = [1, 256], strides = [1, 1]} : vector<8x256xf32> to vector<1x256xf32>
    %377 = vector.broadcast %376 : vector<1x256xf32> to vector<64x256xf32>
    %378 = arith.mulf %375, %377 : vector<64x256xf32>
    %379 = arith.addf %374, %378 : vector<64x256xf32>
    %380 = vector.extract_strided_slice %214 {offsets = [6, 0], sizes = [1, 256], strides = [1, 1]} : vector<8x256xf32> to vector<1x256xf32>
    %381 = vector.broadcast %380 : vector<1x256xf32> to vector<64x256xf32>
    %382 = arith.mulf %371, %381 : vector<64x256xf32>
    %383 = arith.addf %379, %382 : vector<64x256xf32>
    %c384_99 = arith.constant 384 : index
    %c0_100 = arith.constant 0 : index
    %384 = vector.load %arg16[%c384_99, %c0_100] : memref<512x256xf32, #tpu.memory_space<vmem>>, vector<64x256xf32>
    tpu.vector_store %arg16[%c384_99, %c0_100], %383 {strides = array<i32>} : memref<512x256xf32, #tpu.memory_space<vmem>>, vector<64x256xf32>,
    %385 = vector.extract_strided_slice %211 {offsets = [7, 0], sizes = [1, 256], strides = [1, 1]} : vector<8x256xf32> to vector<1x256xf32>
    %386 = vector.broadcast %385 : vector<1x256xf32> to vector<64x256xf32>
    %387 = arith.mulf %383, %386 : vector<64x256xf32>
    %388 = arith.truncf %387 : vector<64x256xf32> to vector<64x256xbf16>
    %c0_101 = arith.constant 0 : index
    %c0_102 = arith.constant 0 : index
    %389 = vector.load %arg3[%c0_101, %c0_102] : memref<256x256xbf16, #tpu.memory_space<vmem>>, vector<256x256xbf16>
    %cst_103 = arith.constant dense<0.000000e+00> : vector<64x256xf32>
    %390 = tpu.matmul %388, %389, %cst_103 {dimension_numbers = #tpu.dot_dimension_numbers<[1], [0], [0], [1], [0, 0, 1, 1], [], []>} : vector<64x256xbf16>, vector<256x256xbf16>, vector<64x256xf32> -> vector<64x256xf32>
    %391 = vector.extract_strided_slice %205 {offsets = [7, 0], sizes = [1, 256], strides = [1, 1]} : vector<8x256xf32> to vector<1x256xf32>
    %392 = vector.broadcast %391 : vector<1x256xf32> to vector<64x256xf32>
    %393 = arith.mulf %383, %392 : vector<64x256xf32>
    %c448 = arith.constant 448 : index
    %c0_104 = arith.constant 0 : index
    %394 = vector.load %arg17[%c448, %c0_104] : memref<512x256xf32, #tpu.memory_space<vmem>>, vector<64x256xf32>
    %395 = vector.extract_strided_slice %208 {offsets = [7, 0], sizes = [1, 256], strides = [1, 1]} : vector<8x256xf32> to vector<1x256xf32>
    %396 = vector.broadcast %395 : vector<1x256xf32> to vector<64x256xf32>
    %397 = arith.mulf %394, %396 : vector<64x256xf32>
    %398 = arith.addf %393, %397 : vector<64x256xf32>
    %399 = vector.extract_strided_slice %214 {offsets = [7, 0], sizes = [1, 256], strides = [1, 1]} : vector<8x256xf32> to vector<1x256xf32>
    %400 = vector.broadcast %399 : vector<1x256xf32> to vector<64x256xf32>
    %401 = arith.mulf %390, %400 : vector<64x256xf32>
    %402 = arith.addf %398, %401 : vector<64x256xf32>
    %c448_105 = arith.constant 448 : index
    %c0_106 = arith.constant 0 : index
    %403 = vector.load %arg16[%c448_105, %c0_106] : memref<512x256xf32, #tpu.memory_space<vmem>>, vector<64x256xf32>
    tpu.vector_store %arg16[%c448_105, %c0_106], %402 {strides = array<i32>} : memref<512x256xf32, #tpu.memory_space<vmem>>, vector<64x256xf32>,
    %c0_107 = arith.constant 0 : index
    %c0_108 = arith.constant 0 : index
    %404 = vector.load %arg16[%c0_107, %c0_108] : memref<512x256xf32, #tpu.memory_space<vmem>>, vector<64x256xf32>
    %405 = vector.extract_strided_slice %217 {offsets = [0, 0], sizes = [1, 256], strides = [1, 1]} : vector<8x256xf32> to vector<1x256xf32>
    %406 = vector.broadcast %405 : vector<1x256xf32> to vector<64x256xf32>
    %407 = arith.mulf %404, %406 : vector<64x256xf32>
    %408 = arith.truncf %407 : vector<64x256xf32> to vector<64x256xbf16>
    %c0_109 = arith.constant 0 : index
    %c0_110 = arith.constant 0 : index
    %409 = vector.load %arg3[%c0_109, %c0_110] : memref<256x256xbf16, #tpu.memory_space<vmem>>, vector<256x256xbf16>
    %cst_111 = arith.constant dense<0.000000e+00> : vector<64x256xf32>
    %410 = tpu.matmul %408, %409, %cst_111 {dimension_numbers = #tpu.dot_dimension_numbers<[1], [0], [0], [1], [0, 0, 1, 1], [], []>} : vector<64x256xbf16>, vector<256x256xbf16>, vector<64x256xf32> -> vector<64x256xf32>
    %411 = arith.mulf %410, %221 : vector<64x256xf32>
    %cst_112 = arith.constant dense<0.000000e+00> : vector<256xf32>
    %412 = vector.multi_reduction <add>, %411, %cst_112 [0] : vector<64x256xf32> to vector<256xf32>
    %413 = vector.shape_cast %412 : vector<256xf32> to vector<1x256xf32>
    %c64_113 = arith.constant 64 : index
    %c0_114 = arith.constant 0 : index
    %414 = vector.load %arg16[%c64_113, %c0_114] : memref<512x256xf32, #tpu.memory_space<vmem>>, vector<64x256xf32>
    %415 = vector.extract_strided_slice %217 {offsets = [1, 0], sizes = [1, 256], strides = [1, 1]} : vector<8x256xf32> to vector<1x256xf32>
    %416 = vector.broadcast %415 : vector<1x256xf32> to vector<64x256xf32>
    %417 = arith.mulf %414, %416 : vector<64x256xf32>
    %418 = arith.truncf %417 : vector<64x256xf32> to vector<64x256xbf16>
    %c0_115 = arith.constant 0 : index
    %c0_116 = arith.constant 0 : index
    %419 = vector.load %arg3[%c0_115, %c0_116] : memref<256x256xbf16, #tpu.memory_space<vmem>>, vector<256x256xbf16>
    %cst_117 = arith.constant dense<0.000000e+00> : vector<64x256xf32>
    %420 = tpu.matmul %418, %419, %cst_117 {dimension_numbers = #tpu.dot_dimension_numbers<[1], [0], [0], [1], [0, 0, 1, 1], [], []>} : vector<64x256xbf16>, vector<256x256xbf16>, vector<64x256xf32> -> vector<64x256xf32>
    %421 = arith.mulf %420, %221 : vector<64x256xf32>
    %cst_118 = arith.constant dense<0.000000e+00> : vector<256xf32>
    %422 = vector.multi_reduction <add>, %421, %cst_118 [0] : vector<64x256xf32> to vector<256xf32>
    %423 = vector.shape_cast %422 : vector<256xf32> to vector<1x256xf32>
    %c128_119 = arith.constant 128 : index
    %c0_120 = arith.constant 0 : index
    %424 = vector.load %arg16[%c128_119, %c0_120] : memref<512x256xf32, #tpu.memory_space<vmem>>, vector<64x256xf32>
    %425 = vector.extract_strided_slice %217 {offsets = [2, 0], sizes = [1, 256], strides = [1, 1]} : vector<8x256xf32> to vector<1x256xf32>
    %426 = vector.broadcast %425 : vector<1x256xf32> to vector<64x256xf32>
    %427 = arith.mulf %424, %426 : vector<64x256xf32>
    %428 = arith.truncf %427 : vector<64x256xf32> to vector<64x256xbf16>
    %c0_121 = arith.constant 0 : index
    %c0_122 = arith.constant 0 : index
    %429 = vector.load %arg3[%c0_121, %c0_122] : memref<256x256xbf16, #tpu.memory_space<vmem>>, vector<256x256xbf16>
    %cst_123 = arith.constant dense<0.000000e+00> : vector<64x256xf32>
    %430 = tpu.matmul %428, %429, %cst_123 {dimension_numbers = #tpu.dot_dimension_numbers<[1], [0], [0], [1], [0, 0, 1, 1], [], []>} : vector<64x256xbf16>, vector<256x256xbf16>, vector<64x256xf32> -> vector<64x256xf32>
    %431 = arith.mulf %430, %221 : vector<64x256xf32>
    %cst_124 = arith.constant dense<0.000000e+00> : vector<256xf32>
    %432 = vector.multi_reduction <add>, %431, %cst_124 [0] : vector<64x256xf32> to vector<256xf32>
    %433 = vector.shape_cast %432 : vector<256xf32> to vector<1x256xf32>
    %c192_125 = arith.constant 192 : index
    %c0_126 = arith.constant 0 : index
    %434 = vector.load %arg16[%c192_125, %c0_126] : memref<512x256xf32, #tpu.memory_space<vmem>>, vector<64x256xf32>
    %435 = vector.extract_strided_slice %217 {offsets = [3, 0], sizes = [1, 256], strides = [1, 1]} : vector<8x256xf32> to vector<1x256xf32>
    %436 = vector.broadcast %435 : vector<1x256xf32> to vector<64x256xf32>
    %437 = arith.mulf %434, %436 : vector<64x256xf32>
    %438 = arith.truncf %437 : vector<64x256xf32> to vector<64x256xbf16>
    %c0_127 = arith.constant 0 : index
    %c0_128 = arith.constant 0 : index
    %439 = vector.load %arg3[%c0_127, %c0_128] : memref<256x256xbf16, #tpu.memory_space<vmem>>, vector<256x256xbf16>
    %cst_129 = arith.constant dense<0.000000e+00> : vector<64x256xf32>
    %440 = tpu.matmul %438, %439, %cst_129 {dimension_numbers = #tpu.dot_dimension_numbers<[1], [0], [0], [1], [0, 0, 1, 1], [], []>} : vector<64x256xbf16>, vector<256x256xbf16>, vector<64x256xf32> -> vector<64x256xf32>
    %441 = arith.mulf %440, %221 : vector<64x256xf32>
    %cst_130 = arith.constant dense<0.000000e+00> : vector<256xf32>
    %442 = vector.multi_reduction <add>, %441, %cst_130 [0] : vector<64x256xf32> to vector<256xf32>
    %443 = vector.shape_cast %442 : vector<256xf32> to vector<1x256xf32>
    %c256_131 = arith.constant 256 : index
    %c0_132 = arith.constant 0 : index
    %444 = vector.load %arg16[%c256_131, %c0_132] : memref<512x256xf32, #tpu.memory_space<vmem>>, vector<64x256xf32>
    %445 = vector.extract_strided_slice %217 {offsets = [4, 0], sizes = [1, 256], strides = [1, 1]} : vector<8x256xf32> to vector<1x256xf32>
    %446 = vector.broadcast %445 : vector<1x256xf32> to vector<64x256xf32>
    %447 = arith.mulf %444, %446 : vector<64x256xf32>
    %448 = arith.truncf %447 : vector<64x256xf32> to vector<64x256xbf16>
    %c0_133 = arith.constant 0 : index
    %c0_134 = arith.constant 0 : index
    %449 = vector.load %arg3[%c0_133, %c0_134] : memref<256x256xbf16, #tpu.memory_space<vmem>>, vector<256x256xbf16>
    %cst_135 = arith.constant dense<0.000000e+00> : vector<64x256xf32>
    %450 = tpu.matmul %448, %449, %cst_135 {dimension_numbers = #tpu.dot_dimension_numbers<[1], [0], [0], [1], [0, 0, 1, 1], [], []>} : vector<64x256xbf16>, vector<256x256xbf16>, vector<64x256xf32> -> vector<64x256xf32>
    %451 = arith.mulf %450, %221 : vector<64x256xf32>
    %cst_136 = arith.constant dense<0.000000e+00> : vector<256xf32>
    %452 = vector.multi_reduction <add>, %451, %cst_136 [0] : vector<64x256xf32> to vector<256xf32>
    %453 = vector.shape_cast %452 : vector<256xf32> to vector<1x256xf32>
    %c320_137 = arith.constant 320 : index
    %c0_138 = arith.constant 0 : index
    %454 = vector.load %arg16[%c320_137, %c0_138] : memref<512x256xf32, #tpu.memory_space<vmem>>, vector<64x256xf32>
    %455 = vector.extract_strided_slice %217 {offsets = [5, 0], sizes = [1, 256], strides = [1, 1]} : vector<8x256xf32> to vector<1x256xf32>
    %456 = vector.broadcast %455 : vector<1x256xf32> to vector<64x256xf32>
    %457 = arith.mulf %454, %456 : vector<64x256xf32>
    %458 = arith.truncf %457 : vector<64x256xf32> to vector<64x256xbf16>
    %c0_139 = arith.constant 0 : index
    %c0_140 = arith.constant 0 : index
    %459 = vector.load %arg3[%c0_139, %c0_140] : memref<256x256xbf16, #tpu.memory_space<vmem>>, vector<256x256xbf16>
    %cst_141 = arith.constant dense<0.000000e+00> : vector<64x256xf32>
    %460 = tpu.matmul %458, %459, %cst_141 {dimension_numbers = #tpu.dot_dimension_numbers<[1], [0], [0], [1], [0, 0, 1, 1], [], []>} : vector<64x256xbf16>, vector<256x256xbf16>, vector<64x256xf32> -> vector<64x256xf32>
    %461 = arith.mulf %460, %221 : vector<64x256xf32>
    %cst_142 = arith.constant dense<0.000000e+00> : vector<256xf32>
    %462 = vector.multi_reduction <add>, %461, %cst_142 [0] : vector<64x256xf32> to vector<256xf32>
    %463 = vector.shape_cast %462 : vector<256xf32> to vector<1x256xf32>
    %c384_143 = arith.constant 384 : index
    %c0_144 = arith.constant 0 : index
    %464 = vector.load %arg16[%c384_143, %c0_144] : memref<512x256xf32, #tpu.memory_space<vmem>>, vector<64x256xf32>
    %465 = vector.extract_strided_slice %217 {offsets = [6, 0], sizes = [1, 256], strides = [1, 1]} : vector<8x256xf32> to vector<1x256xf32>
    %466 = vector.broadcast %465 : vector<1x256xf32> to vector<64x256xf32>
    %467 = arith.mulf %464, %466 : vector<64x256xf32>
    %468 = arith.truncf %467 : vector<64x256xf32> to vector<64x256xbf16>
    %c0_145 = arith.constant 0 : index
    %c0_146 = arith.constant 0 : index
    %469 = vector.load %arg3[%c0_145, %c0_146] : memref<256x256xbf16, #tpu.memory_space<vmem>>, vector<256x256xbf16>
    %cst_147 = arith.constant dense<0.000000e+00> : vector<64x256xf32>
    %470 = tpu.matmul %468, %469, %cst_147 {dimension_numbers = #tpu.dot_dimension_numbers<[1], [0], [0], [1], [0, 0, 1, 1], [], []>} : vector<64x256xbf16>, vector<256x256xbf16>, vector<64x256xf32> -> vector<64x256xf32>
    %471 = arith.mulf %470, %221 : vector<64x256xf32>
    %cst_148 = arith.constant dense<0.000000e+00> : vector<256xf32>
    %472 = vector.multi_reduction <add>, %471, %cst_148 [0] : vector<64x256xf32> to vector<256xf32>
    %473 = vector.shape_cast %472 : vector<256xf32> to vector<1x256xf32>
    %c448_149 = arith.constant 448 : index
    %c0_150 = arith.constant 0 : index
    %474 = vector.load %arg16[%c448_149, %c0_150] : memref<512x256xf32, #tpu.memory_space<vmem>>, vector<64x256xf32>
    %475 = vector.extract_strided_slice %217 {offsets = [7, 0], sizes = [1, 256], strides = [1, 1]} : vector<8x256xf32> to vector<1x256xf32>
    %476 = vector.broadcast %475 : vector<1x256xf32> to vector<64x256xf32>
    %477 = arith.mulf %474, %476 : vector<64x256xf32>
    %478 = arith.truncf %477 : vector<64x256xf32> to vector<64x256xbf16>
    %c0_151 = arith.constant 0 : index
    %c0_152 = arith.constant 0 : index
    %479 = vector.load %arg3[%c0_151, %c0_152] : memref<256x256xbf16, #tpu.memory_space<vmem>>, vector<256x256xbf16>
    %cst_153 = arith.constant dense<0.000000e+00> : vector<64x256xf32>
    %480 = tpu.matmul %478, %479, %cst_153 {dimension_numbers = #tpu.dot_dimension_numbers<[1], [0], [0], [1], [0, 0, 1, 1], [], []>} : vector<64x256xbf16>, vector<256x256xbf16>, vector<64x256xf32> -> vector<64x256xf32>
    %481 = arith.mulf %480, %221 : vector<64x256xf32>
    %cst_154 = arith.constant dense<0.000000e+00> : vector<256xf32>
    %482 = vector.multi_reduction <add>, %481, %cst_154 [0] : vector<64x256xf32> to vector<256xf32>
    %483 = vector.shape_cast %482 : vector<256xf32> to vector<1x256xf32>
    %484 = tpu.concatenate %413, %423, %433, %443, %453, %463, %473, %483 in 0 : vector<1x256xf32>, vector<1x256xf32>, vector<1x256xf32>, vector<1x256xf32>, vector<1x256xf32>, vector<1x256xf32>, vector<1x256xf32>, vector<1x256xf32> -> vector<8x256xf32>
    %485 = vector.extract_strided_slice %484 {offsets = [0, 0], sizes = [8, 128], strides = [1, 1]} : vector<8x256xf32> to vector<8x128xf32>
    %486 = vector.extract_strided_slice %484 {offsets = [0, 128], sizes = [8, 128], strides = [1, 1]} : vector<8x256xf32> to vector<8x128xf32>
    %487 = tpu.concatenate %485, %486 in 0 : vector<8x128xf32>, vector<8x128xf32> -> vector<16x128xf32>
    %cst_155 = arith.constant 0.000000e+00 : f32
    %488 = vector.broadcast %cst_155 : f32 to vector<16x128xf32>
    %489 = arith.mulf %487, %8 : vector<16x128xf32>
    %cst_156 = arith.constant dense<0.000000e+00> : vector<16xf32>
    %490 = vector.multi_reduction <add>, %489, %cst_156 [1] : vector<16x128xf32> to vector<16xf32>
    %491 = vector.shape_cast %490 : vector<16xf32> to vector<16x1xf32>
    %492 = vector.broadcast %491 : vector<16x1xf32> to vector<16x128xf32>
    %493 = arith.mulf %8, %492 : vector<16x128xf32>
    %494 = arith.addf %488, %493 : vector<16x128xf32>
    %495 = arith.mulf %487, %15 : vector<16x128xf32>
    %cst_157 = arith.constant dense<0.000000e+00> : vector<16xf32>
    %496 = vector.multi_reduction <add>, %495, %cst_157 [1] : vector<16x128xf32> to vector<16xf32>
    %497 = vector.shape_cast %496 : vector<16xf32> to vector<16x1xf32>
    %498 = vector.broadcast %497 : vector<16x1xf32> to vector<16x128xf32>
    %499 = arith.mulf %15, %498 : vector<16x128xf32>
    %500 = arith.addf %494, %499 : vector<16x128xf32>
    %cst_158 = arith.constant 1.562500e-02 : f32
    %501 = vector.broadcast %cst_158 : f32 to vector<16x128xf32>
    %502 = arith.mulf %500, %501 : vector<16x128xf32>
    %503 = arith.subf %487, %502 : vector<16x128xf32>
    %504 = arith.mulf %503, %503 : vector<16x128xf32>
    %cst_159 = arith.constant 0.000000e+00 : f32
    %505 = vector.broadcast %cst_159 : f32 to vector<16x128xf32>
    %506 = arith.mulf %504, %8 : vector<16x128xf32>
    %cst_160 = arith.constant dense<0.000000e+00> : vector<16xf32>
    %507 = vector.multi_reduction <add>, %506, %cst_160 [1] : vector<16x128xf32> to vector<16xf32>
    %508 = vector.shape_cast %507 : vector<16xf32> to vector<16x1xf32>
    %509 = vector.broadcast %508 : vector<16x1xf32> to vector<16x128xf32>
    %510 = arith.mulf %8, %509 : vector<16x128xf32>
    %511 = arith.addf %505, %510 : vector<16x128xf32>
    %512 = arith.mulf %504, %15 : vector<16x128xf32>
    %cst_161 = arith.constant dense<0.000000e+00> : vector<16xf32>
    %513 = vector.multi_reduction <add>, %512, %cst_161 [1] : vector<16x128xf32> to vector<16xf32>
    %514 = vector.shape_cast %513 : vector<16xf32> to vector<16x1xf32>
    %515 = vector.broadcast %514 : vector<16x1xf32> to vector<16x128xf32>
    %516 = arith.mulf %15, %515 : vector<16x128xf32>
    %517 = arith.addf %511, %516 : vector<16x128xf32>
    %cst_162 = arith.constant 1.562500e-02 : f32
    %518 = vector.broadcast %cst_162 : f32 to vector<16x128xf32>
    %519 = arith.mulf %517, %518 : vector<16x128xf32>
    %cst_163 = arith.constant 6.400000e-04 : f32
    %520 = vector.broadcast %cst_163 : f32 to vector<16x128xf32>
    %521 = arith.addf %519, %520 : vector<16x128xf32>
    %522 = math.rsqrt %521 : vector<16x128xf32>
    %523 = arith.mulf %503, %522 : vector<16x128xf32>
    %524 = vector.broadcast %31 : vector<1x128xf32> to vector<16x128xf32>
    %525 = arith.mulf %523, %524 : vector<16x128xf32>
    %526 = vector.broadcast %32 : vector<1x128xf32> to vector<16x128xf32>
    %527 = arith.addf %525, %526 : vector<16x128xf32>
    %528 = arith.mulf %100, %199 : vector<16x128xf32>
    %529 = vector.broadcast %30 : vector<1x128xf32> to vector<16x128xf32>
    %530 = arith.mulf %528, %529 : vector<16x128xf32>
    %cst_164 = arith.constant 0.000000e+00 : f32
    %531 = vector.broadcast %cst_164 : f32 to vector<16x128xf32>
    %532 = arith.mulf %530, %8 : vector<16x128xf32>
    %cst_165 = arith.constant dense<0.000000e+00> : vector<16xf32>
    %533 = vector.multi_reduction <add>, %532, %cst_165 [1] : vector<16x128xf32> to vector<16xf32>
    %534 = vector.shape_cast %533 : vector<16xf32> to vector<16x1xf32>
    %535 = vector.broadcast %534 : vector<16x1xf32> to vector<16x128xf32>
    %536 = arith.mulf %8, %535 : vector<16x128xf32>
    %537 = arith.addf %531, %536 : vector<16x128xf32>
    %538 = arith.mulf %530, %15 : vector<16x128xf32>
    %cst_166 = arith.constant dense<0.000000e+00> : vector<16xf32>
    %539 = vector.multi_reduction <add>, %538, %cst_166 [1] : vector<16x128xf32> to vector<16xf32>
    %540 = vector.shape_cast %539 : vector<16xf32> to vector<16x1xf32>
    %541 = vector.broadcast %540 : vector<16x1xf32> to vector<16x128xf32>
    %542 = arith.mulf %15, %541 : vector<16x128xf32>
    %543 = arith.addf %537, %542 : vector<16x128xf32>
    %544 = arith.mulf %543, %172 : vector<16x128xf32>
    %545 = arith.addf %527, %544 : vector<16x128xf32>
    %546 = arith.mulf %545, %128 : vector<16x128xf32>
    %c0_167 = arith.constant 0 : index
    %c0_168 = arith.constant 0 : index
    %c0_169 = arith.constant 0 : index
    %547 = vector.load %arg8[%c0_167, %c0_168, %c0_169] : memref<1x128x128xbf16, #tpu.memory_space<vmem>>, vector<1x128x128xbf16>
    %548 = vector.shape_cast %547 : vector<1x128x128xbf16> to vector<128x128xbf16>
    %549 = arith.truncf %546 : vector<16x128xf32> to vector<16x128xbf16>
    %cst_170 = arith.constant dense<0.000000e+00> : vector<16x128xf32>
    %550 = tpu.matmul %549, %548, %cst_170 {dimension_numbers = #tpu.dot_dimension_numbers<[1], [0], [0], [1], [0, 0, 1, 1], [], []>} : vector<16x128xbf16>, vector<128x128xbf16>, vector<16x128xf32> -> vector<16x128xf32>
    %551 = arith.addf %36, %550 : vector<16x128xf32>
    %552 = arith.mulf %551, %551 : vector<16x128xf32>
    %cst_171 = arith.constant dense<0.000000e+00> : vector<16xf32>
    %553 = vector.multi_reduction <add>, %552, %cst_171 [1] : vector<16x128xf32> to vector<16xf32>
    %554 = vector.shape_cast %553 : vector<16xf32> to vector<16x1xf32>
    %cst_172 = arith.constant 1.280000e+02 : f32
    %555 = vector.broadcast %cst_172 : f32 to vector<16x1xf32>
    %556 = arith.divf %554, %555 : vector<16x1xf32>
    %cst_173 = arith.constant 9.99999997E-7 : f32
    %557 = vector.broadcast %cst_173 : f32 to vector<16x1xf32>
    %558 = arith.addf %556, %557 : vector<16x1xf32>
    %559 = math.rsqrt %558 : vector<16x1xf32>
    %560 = vector.broadcast %559 : vector<16x1xf32> to vector<16x128xf32>
    %561 = arith.mulf %551, %560 : vector<16x128xf32>
    %562 = vector.broadcast %33 : vector<1x128xf32> to vector<16x128xf32>
    %563 = arith.mulf %561, %562 : vector<16x128xf32>
    %c0_174 = arith.constant 0 : index
    %c0_175 = arith.constant 0 : index
    %c0_176 = arith.constant 0 : index
    %564 = vector.load %arg9[%c0_174, %c0_175, %c0_176] : memref<1x128x512xbf16, #tpu.memory_space<vmem>>, vector<1x128x512xbf16>
    %565 = vector.shape_cast %564 : vector<1x128x512xbf16> to vector<128x512xbf16>
    %566 = arith.truncf %563 : vector<16x128xf32> to vector<16x128xbf16>
    %cst_177 = arith.constant dense<0.000000e+00> : vector<16x512xf32>
    %567 = tpu.matmul %566, %565, %cst_177 {dimension_numbers = #tpu.dot_dimension_numbers<[1], [0], [0], [1], [0, 0, 1, 1], [], []>} : vector<16x128xbf16>, vector<128x512xbf16>, vector<16x512xf32> -> vector<16x512xf32>
    %568 = vector.extract_strided_slice %567 {offsets = [0, 0], sizes = [16, 256], strides = [1, 1]} : vector<16x512xf32> to vector<16x256xf32>
    %569 = vector.extract_strided_slice %567 {offsets = [0, 256], sizes = [16, 256], strides = [1, 1]} : vector<16x512xf32> to vector<16x256xf32>
    %cst_178 = arith.constant 0.000000e+00 : f32
    %570 = vector.broadcast %cst_178 : f32 to vector<16x256xf32>
    %571 = arith.subf %570, %568 : vector<16x256xf32>
    %572 = math.exp %571 : vector<16x256xf32>
    %cst_179 = arith.constant 1.000000e+00 : f32
    %573 = vector.broadcast %cst_179 : f32 to vector<16x256xf32>
    %574 = arith.addf %573, %572 : vector<16x256xf32>
    %575 = tpu.reciprocal %574 {approx = true} : vector<16x256xf32> -> vector<16x256xf32>
    %576 = arith.mulf %568, %575 : vector<16x256xf32>
    %577 = arith.mulf %576, %569 : vector<16x256xf32>
    %c0_180 = arith.constant 0 : index
    %c0_181 = arith.constant 0 : index
    %c0_182 = arith.constant 0 : index
    %578 = vector.load %arg10[%c0_180, %c0_181, %c0_182] : memref<1x256x128xbf16, #tpu.memory_space<vmem>>, vector<1x256x128xbf16>
    %579 = vector.shape_cast %578 : vector<1x256x128xbf16> to vector<256x128xbf16>
    %580 = arith.truncf %577 : vector<16x256xf32> to vector<16x256xbf16>
    %cst_183 = arith.constant dense<0.000000e+00> : vector<16x128xf32>
    %581 = tpu.matmul %580, %579, %cst_183 {dimension_numbers = #tpu.dot_dimension_numbers<[1], [0], [0], [1], [0, 0, 1, 1], [], []>} : vector<16x256xbf16>, vector<256x128xbf16>, vector<16x128xf32> -> vector<16x128xf32>
    %582 = arith.addf %551, %581 : vector<16x128xf32>
    %c0_184 = arith.constant 0 : index
    %c0_185 = arith.constant 0 : index
    %583 = vector.load %arg14[%c0_184, %c0_185] : memref<16x128xf32, #tpu.memory_space<vmem>>, vector<16x128xf32>
    tpu.vector_store %arg14[%c0_184, %c0_185], %582 {strides = array<i32>} : memref<16x128xf32, #tpu.memory_space<vmem>>, vector<16x128xf32>,
    %584 = arith.mulf %582, %582 : vector<16x128xf32>
    %cst_186 = arith.constant dense<0.000000e+00> : vector<16xf32>
    %585 = vector.multi_reduction <add>, %584, %cst_186 [1] : vector<16x128xf32> to vector<16xf32>
    %586 = vector.shape_cast %585 : vector<16xf32> to vector<16x1xf32>
    %cst_187 = arith.constant 1.280000e+02 : f32
    %587 = vector.broadcast %cst_187 : f32 to vector<16x1xf32>
    %588 = arith.divf %586, %587 : vector<16x1xf32>
    %cst_188 = arith.constant 9.99999997E-7 : f32
    %589 = vector.broadcast %cst_188 : f32 to vector<16x1xf32>
    %590 = arith.addf %588, %589 : vector<16x1xf32>
    %591 = math.rsqrt %590 : vector<16x1xf32>
    %592 = vector.broadcast %591 : vector<16x1xf32> to vector<16x128xf32>
    %593 = arith.mulf %582, %592 : vector<16x128xf32>
    %c0_189 = arith.constant 0 : index
    %c0_190 = arith.constant 0 : index
    %594 = vector.load %arg11[%c0_189, %c0_190] : memref<1x128xf32, #tpu.memory_space<vmem>>, vector<1x128xf32>
    %595 = vector.broadcast %594 : vector<1x128xf32> to vector<16x128xf32>
    %596 = arith.mulf %593, %595 : vector<16x128xf32>
    %c0_191 = arith.constant 0 : index
    %c0_192 = arith.constant 0 : index
    %597 = vector.load %arg12[%c0_191, %c0_192] : memref<128x256xbf16, #tpu.memory_space<vmem>>, vector<128x256xbf16>
    %598 = arith.truncf %596 : vector<16x128xf32> to vector<16x128xbf16>
    %cst_193 = arith.constant dense<0.000000e+00> : vector<16x256xf32>
    %599 = tpu.matmul %598, %597, %cst_193 {dimension_numbers = #tpu.dot_dimension_numbers<[1], [0], [0], [1], [0, 0, 1, 1], [], []>} : vector<16x128xbf16>, vector<128x256xbf16>, vector<16x256xf32> -> vector<16x256xf32>
    %c0_194 = arith.constant 0 : index
    %c0_195 = arith.constant 0 : index
    %600 = vector.load %arg13[%c0_194, %c0_195] : memref<16x256xf32, #tpu.memory_space<vmem>>, vector<16x256xf32>
    tpu.vector_store %arg13[%c0_194, %c0_195], %599 {strides = array<i32>} : memref<16x256xf32, #tpu.memory_space<vmem>>, vector<16x256xf32>,
    return
  }
  func.func @transform_0(%arg0: i32) -> (i32, i32) {
    %c0_i32 = arith.constant 0 : i32
    %c0_i32_0 = arith.constant 0 : i32
    %c0_i32_1 = arith.constant 0 : i32
    return %c0_i32, %c0_i32_0 : i32, i32
  }
  func.func @transform_1(%arg0: i32) -> (i32, i32) {
    %c0_i32 = arith.constant 0 : i32
    %c0_i32_0 = arith.constant 0 : i32
    %c0_i32_1 = arith.constant 0 : i32
    return %c0_i32, %c0_i32_0 : i32, i32
  }
  func.func @transform_2(%arg0: i32) -> (i32, i32) {
    %c0_i32 = arith.constant 0 : i32
    %c0_i32_0 = arith.constant 0 : i32
    %c0_i32_1 = arith.constant 0 : i32
    return %c0_i32, %c0_i32_0 : i32, i32
  }
  func.func @transform_3(%arg0: i32) -> (i32, i32) {
    %c0_i32 = arith.constant 0 : i32
    %c0_i32_0 = arith.constant 0 : i32
    %c0_i32_1 = arith.constant 0 : i32
    return %c0_i32, %c0_i32_0 : i32, i32
  }
  func.func @transform_4(%arg0: i32) -> (i32, i32, i32) {
    %c0_i32 = arith.constant 0 : i32
    %c0_i32_0 = arith.constant 0 : i32
    %c0_i32_1 = arith.constant 0 : i32
    return %arg0, %c0_i32, %c0_i32_0 : i32, i32, i32
  }
  func.func @transform_5(%arg0: i32) -> (i32, i32, i32) {
    %c0_i32 = arith.constant 0 : i32
    %c0_i32_0 = arith.constant 0 : i32
    %c0_i32_1 = arith.constant 0 : i32
    return %arg0, %c0_i32, %c0_i32_0 : i32, i32, i32
  }
  func.func @transform_6(%arg0: i32) -> (i32, i32, i32) {
    %c0_i32 = arith.constant 0 : i32
    %c0_i32_0 = arith.constant 0 : i32
    %c0_i32_1 = arith.constant 0 : i32
    return %arg0, %c0_i32, %c0_i32_0 : i32, i32, i32
  }
  func.func @transform_7(%arg0: i32) -> (i32, i32, i32) {
    %c0_i32 = arith.constant 0 : i32
    %c0_i32_0 = arith.constant 0 : i32
    %c0_i32_1 = arith.constant 0 : i32
    return %arg0, %c0_i32, %c0_i32_0 : i32, i32, i32
  }
  func.func @transform_8(%arg0: i32) -> (i32, i32, i32) {
    %c0_i32 = arith.constant 0 : i32
    %c0_i32_0 = arith.constant 0 : i32
    %c0_i32_1 = arith.constant 0 : i32
    return %arg0, %c0_i32, %c0_i32_0 : i32, i32, i32
  }
  func.func @transform_9(%arg0: i32) -> (i32, i32, i32) {
    %c0_i32 = arith.constant 0 : i32
    %c0_i32_0 = arith.constant 0 : i32
    %c0_i32_1 = arith.constant 0 : i32
    return %arg0, %c0_i32, %c0_i32_0 : i32, i32, i32
  }
  func.func @transform_10(%arg0: i32) -> (i32, i32) {
    %c0_i32 = arith.constant 0 : i32
    %c0_i32_0 = arith.constant 0 : i32
    %c0_i32_1 = arith.constant 0 : i32
    return %c0_i32, %c0_i32_0 : i32, i32
  }
  func.func @transform_11(%arg0: i32) -> (i32, i32) {
    %c0_i32 = arith.constant 0 : i32
    %c0_i32_0 = arith.constant 0 : i32
    %c0_i32_1 = arith.constant 0 : i32
    return %c0_i32, %c0_i32_0 : i32, i32
  }
  func.func @transform_12(%arg0: i32) -> (i32, i32) {
    %c0_i32 = arith.constant 0 : i32
    %c0_i32_0 = arith.constant 0 : i32
    %c0_i32_1 = arith.constant 0 : i32
    return %c0_i32, %c0_i32_0 : i32, i32
  }
}

</mosaic_0001>

<llo_original>
// kernel: hybrid_forward.1
$region0: #{hybrid_forward.1}
  #allocation0 [shape = 'u32[]', space=smem, size = 0x4, offset = 0x4, fixed_abs, tag = 'smem constant byte address 0x4 - core index']
  #allocation1 [shape = 'u32[144,128]{1,0:T(1,128)}', space=vmem, size = 0x12000, scoped, tag = 'internal scratch']
  #allocation2 [shape = 'f32[16,128]{1,0:T(8,128)}', space=vmem, size = 0x2000, scoped, tag = 'scratch operand']
  #allocation3 [shape = 'f32[16,128]{1,0:T(8,128)}', space=vmem, size = 0x2000, scoped, tag = 'scratch operand']
  #allocation4 [shape = 'f32[512,256]{1,0:T(8,128)}', space=vmem, size = 0x80000, scoped, tag = 'scratch operand']
  #allocation5 [shape = 'f32[512,256]{1,0:T(8,128)}', space=vmem, size = 0x80000, scoped, tag = 'scratch operand']
  %s0 = inlined_call_operand.vmem [shape: f32[16,128], index: 0, kind: input, shape index: {}]
  %s1 = inlined_call_operand.vmem [shape: f32[16,1], index: 1, kind: input, shape index: {}]
  %s2 = inlined_call_operand.hbm [shape: bf16[256,256], index: 2, kind: input, shape index: {}]
  %s3 = inlined_call_operand.hbm [shape: f32[64,256], index: 3, kind: input, shape index: {}]
  %s4 = inlined_call_operand.hbm [shape: f32[2,16,128], index: 4, kind: input, shape index: {}]
  %s5 = inlined_call_operand.hbm [shape: bf16[2,768,512], index: 5, kind: input, shape index: {}]
  %s6 = inlined_call_operand.hbm [shape: bf16[2,128,512], index: 6, kind: input, shape index: {}]
  %s7 = inlined_call_operand.hbm [shape: bf16[2,128,128], index: 7, kind: input, shape index: {}]
  %s8 = inlined_call_operand.hbm [shape: bf16[2,128,512], index: 8, kind: input, shape index: {}]
  %s9 = inlined_call_operand.hbm [shape: bf16[2,256,128], index: 9, kind: input, shape index: {}]
  %s10 = inlined_call_operand.hbm [shape: f32[1,128], index: 10, kind: input, shape index: {}]
  %s11 = inlined_call_operand.hbm [shape: bf16[128,256], index: 11, kind: input, shape index: {}]
  %s12 = inlined_call_operand.hbm [shape: f32[16,256], index: 12, kind: output, shape index: {}]
  %s13 = sld [smem:[#allocation0]]
  $region129: #{hybrid_forward.1} parent=0
    _
  %s15 = ssub.s32 1, %s13
  %s16 = scalar_select 0, %s15, %s13
  $region1: #{hybrid_forward.1} parent=0
    #allocation6 [shape = 'u8[131072]{0}', space=vmem, size = 0x20000, scoped, tag = 'input window, operand 2, single buffered']
    #allocation7 [shape = 's32[2]{0}', space=sflag, size = 0x8, scoped, tag = 'scoped memory for hybrid_forward.1']
    #allocation8 [shape = 's32[2]{0}', space=sflag, size = 0x8, scoped, tag = 'scoped memory for hybrid_forward.1']
    #allocation9 [shape = 'u8[65536]{0}', space=vmem, size = 0x10000, scoped, tag = 'input window, operand 3, single buffered']
    #allocation10 [shape = 's32[1]{0}', space=sflag, size = 0x4, scoped, tag = 'scoped memory for hybrid_forward.1']
    #allocation11 [shape = 'u8[16384]{0}', space=vmem, size = 0x4000, scoped, tag = 'input window, operand 4']
    #allocation12 [shape = 'u8[1572864]{0}', space=vmem, size = 0x180000, scoped, tag = 'input window, operand 5']
    #allocation13 [shape = 'u8[262144]{0}', space=vmem, size = 0x40000, scoped, tag = 'input window, operand 6']
    #allocation14 [shape = 'u8[65536]{0}', space=vmem, size = 0x10000, scoped, tag = 'input window, operand 7']
    #allocation15 [shape = 'u8[262144]{0}', space=vmem, size = 0x40000, scoped, tag = 'input window, operand 8']
    #allocation16 [shape = 'u8[131072]{0}', space=vmem, size = 0x20000, scoped, tag = 'input window, operand 9']
    #allocation17 [shape = 'u8[512]{0}', space=vmem, size = 0x400, scoped, tag = 'input window, operand 10, single buffered']
    #allocation18 [shape = 'u8[65536]{0}', space=vmem, size = 0x10000, scoped, tag = 'input window, operand 11, single buffered']
    #allocation19 [shape = 's32[1]{0}', space=sflag, size = 0x4, scoped, tag = 'scoped memory for hybrid_forward.1']
    #allocation20 [shape = 'u8[16384]{0}', space=vmem, size = 0x4000, scoped, tag = 'output window, operand 0, single buffered']
    %17 = vsyncpa [#allocation7], 0
    %18 = vsyncpa [#allocation10], 0
    %19 = vsyncpa [#allocation19], 0
    %20 = vsyncpa [#allocation8], 0
    loop: start=0, step=1, limit=4
    $region2: #{hybrid_forward.1} parent=1 // loop_pre_header
      _
    $region3: #{hybrid_forward.1} parent=1 // loop_header
      %s22 = sphi 0, %s26
      %p23 = scmp.ge.s32.totalorder %s22, 4
      %s30 = sphi 0, %s30
      %s32 = sphi 0, %s30
      %s33 = sphi 0, %s32
      %s47 = sphi 0, %s33
      %s51 = sphi 0, %s51
      %s53 = sphi 0, %s51
      %s54 = sphi 0, %s53
      %s68 = sphi 0, %s54
      %s72 = sphi 0, %s72
      %s74 = sphi 0, %s72
      %s75 = sphi 0, %s74
      %s89 = sphi 0, %s75
      %s93 = sphi 0, %s93
      %s95 = sphi 0, %s93
      %s96 = sphi 0, %s95
      %s110 = sphi 0, %s96
      %s116 = sphi 0, %s118
      %s119 = sphi 0, %s116
      %s120 = sphi 0, %s119
      %s136 = sphi 0, %s120
      %s142 = sphi 0, %s144
      %s145 = sphi 0, %s142
      %s146 = sphi 0, %s145
      %s162 = sphi 0, %s146
      %s168 = sphi 0, %s170
      %s171 = sphi 0, %s168
      %s172 = sphi 0, %s171
      %s188 = sphi 0, %s172
      %s194 = sphi 0, %s196
      %s197 = sphi 0, %s194
      %s198 = sphi 0, %s197
      %s214 = sphi 0, %s198
      %s220 = sphi 0, %s222
      %s223 = sphi 0, %s220
      %s224 = sphi 0, %s223
      %s240 = sphi 0, %s224
      %s246 = sphi 0, %s248
      %s249 = sphi 0, %s246
      %s250 = sphi 0, %s249
      %s266 = sphi 0, %s250
      %s270 = sphi 0, %s270
      %s272 = sphi 0, %s270
      %s273 = sphi 0, %s272
      %s287 = sphi 0, %s273
      %s291 = sphi 0, %s291
      %s293 = sphi 0, %s291
      %s294 = sphi 0, %s293
      %s308 = sphi 0, %s294
      %s312 = sphi 0, %s312
      %s314 = sphi 0, %s312
      %s315 = sphi 0, %s314
      %s329 = sphi 0, %s315
    $region4: #{hybrid_forward.1} parent=1 // loop_header_branch
      %25 = sbr.rel (%p23) target = $region8
    $region5: #{hybrid_forward.1} parent=1 // loop_body
      %s27 = ssub.s32 %s22, 1
      %s28 = ssub.s32 %s22, 2
      %s29 = sadd.s32 %s22, 1
      %s31 = sadd.s32 %s30, 1
      %p34 = scmp.eq.s32.totalorder %s22, 1
      %p35 = scmp.ne.s32.totalorder %s30, %s32
      %p36 = scmp.eq.s32.totalorder %s22, 0
      %p37 = por %p35, %p36
      %p38 = scmp.ne.s32.totalorder %s30, %s32
      %p39 = scmp.eq.s32.totalorder %s27, 1
      %p40 = por %p38, %p39
      %p41 = scmp.ne.s32.totalorder %s32, %s33
      %p42 = scmp.eq.s32.totalorder %s27, 0
      %p43 = por %p41, %p42
      %p44 = scmp.ne.s32.totalorder %s32, %s33
      %p45 = scmp.eq.s32.totalorder %s28, 1
      %p46 = por %p44, %p45
      %p48 = scmp.ne.s32.totalorder %s33, %s47
      %p49 = scmp.eq.s32.totalorder %s28, 0
      %p50 = por %p48, %p49
      %s52 = sadd.s32 %s51, 1
      %p55 = scmp.eq.s32.totalorder %s22, 1
      %p56 = scmp.ne.s32.totalorder %s51, %s53
      %p57 = scmp.eq.s32.totalorder %s22, 0
      %p58 = por %p56, %p57
      %p59 = scmp.ne.s32.totalorder %s51, %s53
      %p60 = scmp.eq.s32.totalorder %s27, 1
      %p61 = por %p59, %p60
      %p62 = scmp.ne.s32.totalorder %s53, %s54
      %p63 = scmp.eq.s32.totalorder %s27, 0
      %p64 = por %p62, %p63
      %p65 = scmp.ne.s32.totalorder %s53, %s54
      %p66 = scmp.eq.s32.totalorder %s28, 1
      %p67 = por %p65, %p66
      %p69 = scmp.ne.s32.totalorder %s54, %s68
      %p70 = scmp.eq.s32.totalorder %s28, 0
      %p71 = por %p69, %p70
      %s73 = sadd.s32 %s72, 1
      %p76 = scmp.eq.s32.totalorder %s22, 1
      %p77 = scmp.ne.s32.totalorder %s72, %s74
      %p78 = scmp.eq.s32.totalorder %s22, 0
      %p79 = por %p77, %p78
      %p80 = scmp.ne.s32.totalorder %s72, %s74
      %p81 = scmp.eq.s32.totalorder %s27, 1
      %p82 = por %p80, %p81
      %p83 = scmp.ne.s32.totalorder %s74, %s75
      %p84 = scmp.eq.s32.totalorder %s27, 0
      %p85 = por %p83, %p84
      %p86 = scmp.ne.s32.totalorder %s74, %s75
      %p87 = scmp.eq.s32.totalorder %s28, 1
      %p88 = por %p86, %p87
      %p90 = scmp.ne.s32.totalorder %s75, %s89
      %p91 = scmp.eq.s32.totalorder %s28, 0
      %p92 = por %p90, %p91
      %s94 = sadd.s32 %s93, 1
      %p97 = scmp.eq.s32.totalorder %s22, 1
      %p98 = scmp.ne.s32.totalorder %s93, %s95
      %p99 = scmp.eq.s32.totalorder %s22, 0
      %p100 = por %p98, %p99
      %p101 = scmp.ne.s32.totalorder %s93, %s95
      %p102 = scmp.eq.s32.totalorder %s27, 1
      %p103 = por %p101, %p102
      %p104 = scmp.ne.s32.totalorder %s95, %s96
      %p105 = scmp.eq.s32.totalorder %s27, 0
      %p106 = por %p104, %p105
      %p107 = scmp.ne.s32.totalorder %s95, %s96
      %p108 = scmp.eq.s32.totalorder %s28, 1
      %p109 = por %p107, %p108
      %p111 = scmp.ne.s32.totalorder %s96, %s110
      %p112 = scmp.eq.s32.totalorder %s28, 0
      %p113 = por %p111, %p112
      %s114 = ssub.s32 %s22, %s29
      %p115 = scmp.eq.s32.totalorder %s114, 0
      %s117 = sadd.s32 %s116, 1
      %s118 = scalar_select %p115, %s116, %s117
      %p121 = pneg %p115
      %p122 = scmp.eq.s32.totalorder %s22, 1
      %p123 = por %p121, %p122
      %p124 = scmp.ne.s32.totalorder %s116, %s119
      %p125 = scmp.eq.s32.totalorder %s22, 0
      %p126 = por %p124, %p125
      %p127 = scmp.ne.s32.totalorder %s116, %s119
      %p128 = scmp.eq.s32.totalorder %s27, 1
      %p129 = por %p127, %p128
      %p130 = scmp.ne.s32.totalorder %s119, %s120
      %p131 = scmp.eq.s32.totalorder %s27, 0
      %p132 = por %p130, %p131
      %p133 = scmp.ne.s32.totalorder %s119, %s120
      %p134 = scmp.eq.s32.totalorder %s28, 1
      %p135 = por %p133, %p134
      %p137 = scmp.ne.s32.totalorder %s120, %s136
      %p138 = scmp.eq.s32.totalorder %s28, 0
      %p139 = por %p137, %p138
      %s140 = ssub.s32 %s22, %s29
      %p141 = scmp.eq.s32.totalorder %s140, 0
      %s143 = sadd.s32 %s142, 1
      %s144 = scalar_select %p141, %s142, %s143
      %p147 = pneg %p141
      %p148 = scmp.eq.s32.totalorder %s22, 1
      %p149 = por %p147, %p148
      %p150 = scmp.ne.s32.totalorder %s142, %s145
      %p151 = scmp.eq.s32.totalorder %s22, 0
      %p152 = por %p150, %p151
      %p153 = scmp.ne.s32.totalorder %s142, %s145
      %p154 = scmp.eq.s32.totalorder %s27, 1
      %p155 = por %p153, %p154
      %p156 = scmp.ne.s32.totalorder %s145, %s146
      %p157 = scmp.eq.s32.totalorder %s27, 0
      %p158 = por %p156, %p157
      %p159 = scmp.ne.s32.totalorder %s145, %s146
      %p160 = scmp.eq.s32.totalorder %s28, 1
      %p161 = por %p159, %p160
      %p163 = scmp.ne.s32.totalorder %s146, %s162
      %p164 = scmp.eq.s32.totalorder %s28, 0
      %p165 = por %p163, %p164
      %s166 = ssub.s32 %s22, %s29
      %p167 = scmp.eq.s32.totalorder %s166, 0
      %s169 = sadd.s32 %s168, 1
      %s170 = scalar_select %p167, %s168, %s169
      %p173 = pneg %p167
      %p174 = scmp.eq.s32.totalorder %s22, 1
      %p175 = por %p173, %p174
      %p176 = scmp.ne.s32.totalorder %s168, %s171
      %p177 = scmp.eq.s32.totalorder %s22, 0
      %p178 = por %p176, %p177
      %p179 = scmp.ne.s32.totalorder %s168, %s171
      %p180 = scmp.eq.s32.totalorder %s27, 1
      %p181 = por %p179, %p180
      %p182 = scmp.ne.s32.totalorder %s171, %s172
      %p183 = scmp.eq.s32.totalorder %s27, 0
      %p184 = por %p182, %p183
      %p185 = scmp.ne.s32.totalorder %s171, %s172
      %p186 = scmp.eq.s32.totalorder %s28, 1
      %p187 = por %p185, %p186
      %p189 = scmp.ne.s32.totalorder %s172, %s188
      %p190 = scmp.eq.s32.totalorder %s28, 0
      %p191 = por %p189, %p190
      %s192 = ssub.s32 %s22, %s29
      %p193 = scmp.eq.s32.totalorder %s192, 0
      %s195 = sadd.s32 %s194, 1
      %s196 = scalar_select %p193, %s194, %s195
      %p199 = pneg %p193
      %p200 = scmp.eq.s32.totalorder %s22, 1
      %p201 = por %p199, %p200
      %p202 = scmp.ne.s32.totalorder %s194, %s197
      %p203 = scmp.eq.s32.totalorder %s22, 0
      %p204 = por %p202, %p203
      %p205 = scmp.ne.s32.totalorder %s194, %s197
      %p206 = scmp.eq.s32.totalorder %s27, 1
      %p207 = por %p205, %p206
      %p208 = scmp.ne.s32.totalorder %s197, %s198
      %p209 = scmp.eq.s32.totalorder %s27, 0
      %p210 = por %p208, %p209
      %p211 = scmp.ne.s32.totalorder %s197, %s198
      %p212 = scmp.eq.s32.totalorder %s28, 1
      %p213 = por %p211, %p212
      %p215 = scmp.ne.s32.totalorder %s198, %s214
      %p216 = scmp.eq.s32.totalorder %s28, 0
      %p217 = por %p215, %p216
      %s218 = ssub.s32 %s22, %s29
      %p219 = scmp.eq.s32.totalorder %s218, 0
      %s221 = sadd.s32 %s220, 1
      %s222 = scalar_select %p219, %s220, %s221
      %p225 = pneg %p219
      %p226 = scmp.eq.s32.totalorder %s22, 1
      %p227 = por %p225, %p226
      %p228 = scmp.ne.s32.totalorder %s220, %s223
      %p229 = scmp.eq.s32.totalorder %s22, 0
      %p230 = por %p228, %p229
      %p231 = scmp.ne.s32.totalorder %s220, %s223
      %p232 = scmp.eq.s32.totalorder %s27, 1
      %p233 = por %p231, %p232
      %p234 = scmp.ne.s32.totalorder %s223, %s224
      %p235 = scmp.eq.s32.totalorder %s27, 0
      %p236 = por %p234, %p235
      %p237 = scmp.ne.s32.totalorder %s223, %s224
      %p238 = scmp.eq.s32.totalorder %s28, 1
      %p239 = por %p237, %p238
      %p241 = scmp.ne.s32.totalorder %s224, %s240
      %p242 = scmp.eq.s32.totalorder %s28, 0
      %p243 = por %p241, %p242
      %s244 = ssub.s32 %s22, %s29
      %p245 = scmp.eq.s32.totalorder %s244, 0
      %s247 = sadd.s32 %s246, 1
      %s248 = scalar_select %p245, %s246, %s247
      %p251 = pneg %p245
      %p252 = scmp.eq.s32.totalorder %s22, 1
      %p253 = por %p251, %p252
      %p254 = scmp.ne.s32.totalorder %s246, %s249
      %p255 = scmp.eq.s32.totalorder %s22, 0
      %p256 = por %p254, %p255
      %p257 = scmp.ne.s32.totalorder %s246, %s249
      %p258 = scmp.eq.s32.totalorder %s27, 1
      %p259 = por %p257, %p258
      %p260 = scmp.ne.s32.totalorder %s249, %s250
      %p261 = scmp.eq.s32.totalorder %s27, 0
      %p262 = por %p260, %p261
      %p263 = scmp.ne.s32.totalorder %s249, %s250
      %p264 = scmp.eq.s32.totalorder %s28, 1
      %p265 = por %p263, %p264
      %p267 = scmp.ne.s32.totalorder %s250, %s266
      %p268 = scmp.eq.s32.totalorder %s28, 0
      %p269 = por %p267, %p268
      %s271 = sadd.s32 %s270, 1
      %p274 = scmp.eq.s32.totalorder %s22, 1
      %p275 = scmp.ne.s32.totalorder %s270, %s272
      %p276 = scmp.eq.s32.totalorder %s22, 0
      %p277 = por %p275, %p276
      %p278 = scmp.ne.s32.totalorder %s270, %s272
      %p279 = scmp.eq.s32.totalorder %s27, 1
      %p280 = por %p278, %p279
      %p281 = scmp.ne.s32.totalorder %s272, %s273
      %p282 = scmp.eq.s32.totalorder %s27, 0
      %p283 = por %p281, %p282
      %p284 = scmp.ne.s32.totalorder %s272, %s273
      %p285 = scmp.eq.s32.totalorder %s28, 1
      %p286 = por %p284, %p285
      %p288 = scmp.ne.s32.totalorder %s273, %s287
      %p289 = scmp.eq.s32.totalorder %s28, 0
      %p290 = por %p288, %p289
      %s292 = sadd.s32 %s291, 1
      %p295 = scmp.eq.s32.totalorder %s22, 1
      %p296 = scmp.ne.s32.totalorder %s291, %s293
      %p297 = scmp.eq.s32.totalorder %s22, 0
      %p298 = por %p296, %p297
      %p299 = scmp.ne.s32.totalorder %s291, %s293
      %p300 = scmp.eq.s32.totalorder %s27, 1
      %p301 = por %p299, %p300
      %p302 = scmp.ne.s32.totalorder %s293, %s294
      %p303 = scmp.eq.s32.totalorder %s27, 0
      %p304 = por %p302, %p303
      %p305 = scmp.ne.s32.totalorder %s293, %s294
      %p306 = scmp.eq.s32.totalorder %s28, 1
      %p307 = por %p305, %p306
      %p309 = scmp.ne.s32.totalorder %s294, %s308
      %p310 = scmp.eq.s32.totalorder %s28, 0
      %p311 = por %p309, %p310
      %s313 = sadd.s32 %s312, 1
      %p316 = scmp.eq.s32.totalorder %s22, 1
      %p317 = scmp.ne.s32.totalorder %s312, %s314
      %p318 = scmp.eq.s32.totalorder %s22, 0
      %p319 = por %p317, %p318
      %p320 = scmp.ne.s32.totalorder %s312, %s314
      %p321 = scmp.eq.s32.totalorder %s27, 1
      %p322 = por %p320, %p321
      %p323 = scmp.ne.s32.totalorder %s314, %s315
      %p324 = scmp.eq.s32.totalorder %s27, 0
      %p325 = por %p323, %p324
      %p326 = scmp.ne.s32.totalorder %s314, %s315
      %p327 = scmp.eq.s32.totalorder %s28, 1
      %p328 = por %p326, %p327
      %p330 = scmp.ne.s32.totalorder %s315, %s329
      %p331 = scmp.eq.s32.totalorder %s28, 0
      %p332 = por %p330, %p331
      %p333 = scmp.le.s32.totalorder 1, %s22
      %p334 = scmp.lt.s32.totalorder %s22, 3
      %p335 = pnand %p333, %p334
      %p336 = pneg %p335
      // Predicated region
      $region9: #{hybrid_forward.1} parent=5 // pred_check
        _
      $region10: #{hybrid_forward.1} parent=5 // pred_check_branch
        %338 = sbr.rel (%p335) target = $region12
      $region11: #{hybrid_forward.1} parent=5 // pred_region
        %s339 = ssub.s32 %s22, 1
        // Predicated region
        $region13: #{hybrid_forward.1} parent=11 // pred_check
          %p340 = pneg %p43
        $region14: #{hybrid_forward.1} parent=11 // pred_check_branch
          %342 = sbr.rel (%p340) target = $region16
        $region15: #{hybrid_forward.1} parent=11 // pred_region
          _
        $region16: #{hybrid_forward.1} parent=11 // pred_fallthru
          _
        // Predicated region
        $region17: #{hybrid_forward.1} parent=11 // pred_check
          %p343 = pneg %p64
        $region18: #{hybrid_forward.1} parent=11 // pred_check_branch
          %345 = sbr.rel (%p343) target = $region20
        $region19: #{hybrid_forward.1} parent=11 // pred_region
          _
        $region20: #{hybrid_forward.1} parent=11 // pred_fallthru
          _
        // Predicated region
        $region21: #{hybrid_forward.1} parent=11 // pred_check
          %p346 = pneg %p85
        $region22: #{hybrid_forward.1} parent=11 // pred_check_branch
          %348 = sbr.rel (%p346) target = $region24
        $region23: #{hybrid_forward.1} parent=11 // pred_region
          %s350 = ssub.s32 4096, 4096
          %351 = vsyncadd [#allocation7], %s350
          %s352 = sshll.u32 [#allocation6], 4
          %s353 = int_to_ptr.vmem [resolvable:$true] %s352
          %358 = dma.hbm_to_vmem [thread:$0]  %s2, 4096, %s353, [#allocation7], 128, 128, 8
        $region24: #{hybrid_forward.1} parent=11 // pred_fallthru
          _
        // Predicated region
        $region25: #{hybrid_forward.1} parent=11 // pred_check
          %p359 = pneg %p106
        $region26: #{hybrid_forward.1} parent=11 // pred_check_branch
          %361 = sbr.rel (%p359) target = $region28
        $region27: #{hybrid_forward.1} parent=11 // pred_region
          %s363 = ssub.s32 2048, 2048
          %364 = vsyncadd [#allocation10], %s363
          %s365 = sshll.u32 [#allocation9], 4
          %s366 = int_to_ptr.vmem [resolvable:$true] %s365
          %371 = dma.hbm_to_vmem [thread:$0]  %s3, 2048, %s366, [#allocation10], 256, 256, 16
        $region28: #{hybrid_forward.1} parent=11 // pred_fallthru
          _
        // Predicated region
        $region29: #{hybrid_forward.1} parent=11 // pred_check
          %p372 = pneg %p283
        $region30: #{hybrid_forward.1} parent=11 // pred_check_branch
          %374 = sbr.rel (%p372) target = $region32
        $region31: #{hybrid_forward.1} parent=11 // pred_region
          %s376 = ssub.s32 16, 16
          %377 = vsyncadd [#allocation10], %s376
          %s379 = sshll.u32 [#allocation17], 4
          %s380 = int_to_ptr.vmem [resolvable:$true] %s379
          %382 = dma.hbm_to_vmem [thread:$0]  %s10, 16, %s380, [#allocation10]
        $region32: #{hybrid_forward.1} parent=11 // pred_fallthru
          _
        // Predicated region
        $region33: #{hybrid_forward.1} parent=11 // pred_check
          %p383 = pneg %p304
        $region34: #{hybrid_forward.1} parent=11 // pred_check_branch
          %385 = sbr.rel (%p383) target = $region36
        $region35: #{hybrid_forward.1} parent=11 // pred_region
          %s387 = ssub.s32 2048, 2048
          %388 = vsyncadd [#allocation19], %s387
          %s389 = sshll.u32 [#allocation18], 4
          %s390 = int_to_ptr.vmem [resolvable:$true] %s389
          %395 = dma.hbm_to_vmem [thread:$0]  %s11, 2048, %s390, [#allocation19], 128, 128, 8
        $region36: #{hybrid_forward.1} parent=11 // pred_fallthru
          _
      $region12: #{hybrid_forward.1} parent=5 // pred_fallthru
        _
      %p396 = scmp.lt.s32.totalorder %s22, 2
      // Predicated region
      $region37: #{hybrid_forward.1} parent=5 // pred_check
        %p397 = pneg %p396
      $region38: #{hybrid_forward.1} parent=5 // pred_check_branch
        %399 = sbr.rel (%p397) target = $region40
      $region39: #{hybrid_forward.1} parent=5 // pred_region
        // Predicated region
        $region41: #{hybrid_forward.1} parent=39 // pred_check
          %p400 = pneg %p126
        $region42: #{hybrid_forward.1} parent=39 // pred_check_branch
          %402 = sbr.rel (%p400) target = $region44
        $region43: #{hybrid_forward.1} parent=39 // pred_region
          %s403 = sand.u32 %s22, 1
          %s404 = scalar_lea.sflag [#allocation7], %s403
          %s405 = sand.u32 %s116, 1
          %s406 = smul.addr %s405, 16
          %s407 = scalar_lea.vmem [#allocation11], %s406
          %s409 = ssub.s32 256, 256
          %410 = vsyncadd %s404, %s409
          %s411 = smul.addr %s22, 2
          %s412 = smul.addr %s411, 128
          %s413 = scalar_lea.hbm %s4, %s412
          %s414 = sshll.u32 %s407, 4
          %s415 = int_to_ptr.vmem [resolvable:$true] %s414
          %420 = dma.hbm_to_vmem [thread:$0]  %s413, 256, %s415, %s404, 128, 128, 8
        $region44: #{hybrid_forward.1} parent=39 // pred_fallthru
          _
        // Predicated region
        $region45: #{hybrid_forward.1} parent=39 // pred_check
          %p421 = pneg %p152
        $region46: #{hybrid_forward.1} parent=39 // pred_check_branch
          %423 = sbr.rel (%p421) target = $region48
        $region47: #{hybrid_forward.1} parent=39 // pred_region
          %s424 = sand.u32 %s22, 1
          %s425 = scalar_lea.sflag [#allocation7], %s424
          %s426 = sand.u32 %s142, 1
          %s427 = smul.addr %s426, 1536
          %s428 = scalar_lea.vmem [#allocation12], %s427
          %s430 = ssub.s32 24576, 24576
          %431 = vsyncadd %s425, %s430
          %s432 = smul.addr %s22, 384
          %s433 = smul.addr %s432, 64
          %s434 = scalar_lea.hbm %s5, %s433
          %s435 = sshll.u32 %s428, 4
          %s436 = int_to_ptr.vmem [resolvable:$true] %s435
          %441 = dma.hbm_to_vmem [thread:$0]  %s434, 24576, %s436, %s425, 256, 256, 16
        $region48: #{hybrid_forward.1} parent=39 // pred_fallthru
          _
        // Predicated region
        $region49: #{hybrid_forward.1} parent=39 // pred_check
          %p442 = pneg %p178
        $region50: #{hybrid_forward.1} parent=39 // pred_check_branch
          %444 = sbr.rel (%p442) target = $region52
        $region51: #{hybrid_forward.1} parent=39 // pred_region
          %s445 = sand.u32 %s22, 1
          %s446 = scalar_lea.sflag [#allocation7], %s445
          %s447 = sand.u32 %s168, 1
          %s448 = smul.addr %s447, 256
          %s449 = scalar_lea.vmem [#allocation13], %s448
          %s451 = ssub.s32 4096, 4096
          %452 = vsyncadd %s446, %s451
          %s453 = smul.addr %s22, 64
          %s454 = smul.addr %s453, 64
          %s455 = scalar_lea.hbm %s6, %s454
          %s456 = sshll.u32 %s449, 4
          %s457 = int_to_ptr.vmem [resolvable:$true] %s456
          %462 = dma.hbm_to_vmem [thread:$0]  %s455, 4096, %s457, %s446, 256, 256, 16
        $region52: #{hybrid_forward.1} parent=39 // pred_fallthru
          _
        // Predicated region
        $region53: #{hybrid_forward.1} parent=39 // pred_check
          %p463 = pneg %p204
        $region54: #{hybrid_forward.1} parent=39 // pred_check_branch
          %465 = sbr.rel (%p463) target = $region56
        $region55: #{hybrid_forward.1} parent=39 // pred_region
          %s466 = sand.u32 %s22, 1
          %s467 = scalar_lea.sflag [#allocation7], %s466
          %s468 = sand.u32 %s194, 1
          %s469 = smul.addr %s468, 64
          %s470 = scalar_lea.vmem [#allocation14], %s469
          %s472 = ssub.s32 1024, 1024
          %473 = vsyncadd %s467, %s472
          %s474 = smul.addr %s22, 16
          %s475 = smul.addr %s474, 64
          %s476 = scalar_lea.hbm %s7, %s475
          %s477 = sshll.u32 %s470, 4
          %s478 = int_to_ptr.vmem [resolvable:$true] %s477
          %483 = dma.hbm_to_vmem [thread:$0]  %s476, 1024, %s478, %s467, 64, 64, 4
        $region56: #{hybrid_forward.1} parent=39 // pred_fallthru
          _
        // Predicated region
        $region57: #{hybrid_forward.1} parent=39 // pred_check
          %p484 = pneg %p230
        $region58: #{hybrid_forward.1} parent=39 // pred_check_branch
          %486 = sbr.rel (%p484) target = $region60
        $region59: #{hybrid_forward.1} parent=39 // pred_region
          %s487 = sand.u32 %s22, 1
          %s488 = scalar_lea.sflag [#allocation7], %s487
          %s489 = sand.u32 %s220, 1
          %s490 = smul.addr %s489, 256
          %s491 = scalar_lea.vmem [#allocation15], %s490
          %s493 = ssub.s32 4096, 4096
          %494 = vsyncadd %s488, %s493
          %s495 = smul.addr %s22, 64
          %s496 = smul.addr %s495, 64
          %s497 = scalar_lea.hbm %s8, %s496
          %s498 = sshll.u32 %s491, 4
          %s499 = int_to_ptr.vmem [resolvable:$true] %s498
          %504 = dma.hbm_to_vmem [thread:$0]  %s497, 4096, %s499, %s488, 256, 256, 16
        $region60: #{hybrid_forward.1} parent=39 // pred_fallthru
          _
        // Predicated region
        $region61: #{hybrid_forward.1} parent=39 // pred_check
          %p505 = pneg %p256
        $region62: #{hybrid_forward.1} parent=39 // pred_check_branch
          %507 = sbr.rel (%p505) target = $region64
        $region63: #{hybrid_forward.1} parent=39 // pred_region
          %s508 = sand.u32 %s22, 1
          %s509 = scalar_lea.sflag [#allocation7], %s508
          %s510 = sand.u32 %s246, 1
          %s511 = smul.addr %s510, 128
          %s512 = scalar_lea.vmem [#allocation16], %s511
          %s514 = ssub.s32 2048, 2048
          %515 = vsyncadd %s509, %s514
          %s516 = smul.addr %s22, 32
          %s517 = smul.addr %s516, 64
          %s518 = scalar_lea.hbm %s9, %s517
          %s519 = sshll.u32 %s512, 4
          %s520 = int_to_ptr.vmem [resolvable:$true] %s519
          %525 = dma.hbm_to_vmem [thread:$0]  %s518, 2048, %s520, %s509, 64, 64, 4
        $region64: #{hybrid_forward.1} parent=39 // pred_fallthru
          _
      $region40: #{hybrid_forward.1} parent=5 // pred_fallthru
        _
      %p526 = scmp.le.s32.totalorder 1, %s22
      %p527 = scmp.lt.s32.totalorder %s22, 3
      %p528 = pnand %p526, %p527
      %p529 = pneg %p528
      // Predicated region
      $region65: #{hybrid_forward.1} parent=5 // pred_check
        _
      $region66: #{hybrid_forward.1} parent=5 // pred_check_branch
        %531 = sbr.rel (%p528) target = $region68
      $region67: #{hybrid_forward.1} parent=5 // pred_region
        %s532 = ssub.s32 %s22, 1
        // Predicated region
        $region69: #{hybrid_forward.1} parent=67 // pred_check
          %p533 = pneg %p85
        $region70: #{hybrid_forward.1} parent=67 // pred_check_branch
          %535 = sbr.rel (%p533) target = $region72
        $region71: #{hybrid_forward.1} parent=67 // pred_region
          %536 = dma.done [#allocation7], 4096
        $region72: #{hybrid_forward.1} parent=67 // pred_fallthru
          _
        // Predicated region
        $region73: #{hybrid_forward.1} parent=67 // pred_check
          %p537 = pneg %p106
        $region74: #{hybrid_forward.1} parent=67 // pred_check_branch
          %539 = sbr.rel (%p537) target = $region76
        $region75: #{hybrid_forward.1} parent=67 // pred_region
          %540 = dma.done [#allocation10], 2048
        $region76: #{hybrid_forward.1} parent=67 // pred_fallthru
          _
        %s541 = sand.u32 %s27, 1
        %s542 = scalar_lea.sflag [#allocation7], %s541
        %s543 = sand.u32 %s119, 1
        %s544 = smul.addr %s543, 16
        %s545 = scalar_lea.vmem [#allocation11], %s544
        // Predicated region
        $region77: #{hybrid_forward.1} parent=67 // pred_check
          %p546 = pneg %p132
        $region78: #{hybrid_forward.1} parent=67 // pred_check_branch
          %548 = sbr.rel (%p546) target = $region80
        $region79: #{hybrid_forward.1} parent=67 // pred_region
          %549 = dma.done %s542, 256
        $region80: #{hybrid_forward.1} parent=67 // pred_fallthru
          _
        %s550 = sand.u32 %s27, 1
        %s551 = scalar_lea.sflag [#allocation7], %s550
        %s552 = sand.u32 %s145, 1
        %s553 = smul.addr %s552, 1536
        %s554 = scalar_lea.vmem [#allocation12], %s553
        // Predicated region
        $region81: #{hybrid_forward.1} parent=67 // pred_check
          %p555 = pneg %p158
        $region82: #{hybrid_forward.1} parent=67 // pred_check_branch
          %557 = sbr.rel (%p555) target = $region84
        $region83: #{hybrid_forward.1} parent=67 // pred_region
          %558 = dma.done %s551, 24576
        $region84: #{hybrid_forward.1} parent=67 // pred_fallthru
          _
        %s559 = sand.u32 %s27, 1
        %s560 = scalar_lea.sflag [#allocation7], %s559
        %s561 = sand.u32 %s171, 1
        %s562 = smul.addr %s561, 256
        %s563 = scalar_lea.vmem [#allocation13], %s562
        // Predicated region
        $region85: #{hybrid_forward.1} parent=67 // pred_check
          %p564 = pneg %p184
        $region86: #{hybrid_forward.1} parent=67 // pred_check_branch
          %566 = sbr.rel (%p564) target = $region88
        $region87: #{hybrid_forward.1} parent=67 // pred_region
          %567 = dma.done %s560, 4096
        $region88: #{hybrid_forward.1} parent=67 // pred_fallthru
          _
        %s568 = sand.u32 %s27, 1
        %s569 = scalar_lea.sflag [#allocation7], %s568
        %s570 = sand.u32 %s197, 1
        %s571 = smul.addr %s570, 64
        %s572 = scalar_lea.vmem [#allocation14], %s571
        // Predicated region
        $region89: #{hybrid_forward.1} parent=67 // pred_check
          %p573 = pneg %p210
        $region90: #{hybrid_forward.1} parent=67 // pred_check_branch
          %575 = sbr.rel (%p573) target = $region92
        $region91: #{hybrid_forward.1} parent=67 // pred_region
          %576 = dma.done %s569, 1024
        $region92: #{hybrid_forward.1} parent=67 // pred_fallthru
          _
        %s577 = sand.u32 %s27, 1
        %s578 = scalar_lea.sflag [#allocation7], %s577
        %s579 = sand.u32 %s223, 1
        %s580 = smul.addr %s579, 256
        %s581 = scalar_lea.vmem [#allocation15], %s580
        // Predicated region
        $region93: #{hybrid_forward.1} parent=67 // pred_check
          %p582 = pneg %p236
        $region94: #{hybrid_forward.1} parent=67 // pred_check_branch
          %584 = sbr.rel (%p582) target = $region96
        $region95: #{hybrid_forward.1} parent=67 // pred_region
          %585 = dma.done %s578, 4096
        $region96: #{hybrid_forward.1} parent=67 // pred_fallthru
          _
        %s586 = sand.u32 %s27, 1
        %s587 = scalar_lea.sflag [#allocation7], %s586
        %s588 = sand.u32 %s249, 1
        %s589 = smul.addr %s588, 128
        %s590 = scalar_lea.vmem [#allocation16], %s589
        // Predicated region
        $region97: #{hybrid_forward.1} parent=67 // pred_check
          %p591 = pneg %p262
        $region98: #{hybrid_forward.1} parent=67 // pred_check_branch
          %593 = sbr.rel (%p591) target = $region100
        $region99: #{hybrid_forward.1} parent=67 // pred_region
          %594 = dma.done %s587, 2048
        $region100: #{hybrid_forward.1} parent=67 // pred_fallthru
          _
        // Predicated region
        $region101: #{hybrid_forward.1} parent=67 // pred_check
          %p595 = pneg %p283
        $region102: #{hybrid_forward.1} parent=67 // pred_check_branch
          %597 = sbr.rel (%p595) target = $region104
        $region103: #{hybrid_forward.1} parent=67 // pred_region
          %598 = dma.done [#allocation10], 16
        $region104: #{hybrid_forward.1} parent=67 // pred_fallthru
          _
        // Predicated region
        $region105: #{hybrid_forward.1} parent=67 // pred_check
          %p599 = pneg %p304
        $region106: #{hybrid_forward.1} parent=67 // pred_check_branch
          %601 = sbr.rel (%p599) target = $region108
        $region107: #{hybrid_forward.1} parent=67 // pred_region
          %602 = dma.done [#allocation19], 2048
        $region108: #{hybrid_forward.1} parent=67 // pred_fallthru
          _
        %p603 = pneg %p43
        %p604 = pneg %p40
        %p605 = pneg %p64
        %p606 = pneg %p61
        %p607 = pneg %p85
        %p608 = pneg %p82
        %p609 = pneg %p106
        %p610 = pneg %p103
        %s611 = sand.u32 %s27, 1
        %s612 = scalar_lea.sflag [#allocation7], %s611
        %s613 = sand.u32 %s119, 1
        %s614 = smul.addr %s613, 16
        %s615 = scalar_lea.vmem [#allocation11], %s614
        %p616 = pneg %p132
        %p617 = pneg %p129
        %s618 = sand.u32 %s27, 1
        %s619 = scalar_lea.sflag [#allocation7], %s618
        %s620 = sand.u32 %s145, 1
        %s621 = smul.addr %s620, 1536
        %s622 = scalar_lea.vmem [#allocation12], %s621
        %p623 = pneg %p158
        %p624 = pneg %p155
        %s625 = sand.u32 %s27, 1
        %s626 = scalar_lea.sflag [#allocation7], %s625
        %s627 = sand.u32 %s171, 1
        %s628 = smul.addr %s627, 256
        %s629 = scalar_lea.vmem [#allocation13], %s628
        %p630 = pneg %p184
        %p631 = pneg %p181
        %s632 = sand.u32 %s27, 1
        %s633 = scalar_lea.sflag [#allocation7], %s632
        %s634 = sand.u32 %s197, 1
        %s635 = smul.addr %s634, 64
        %s636 = scalar_lea.vmem [#allocation14], %s635
        %p637 = pneg %p210
        %p638 = pneg %p207
        %s639 = sand.u32 %s27, 1
        %s640 = scalar_lea.sflag [#allocation7], %s639
        %s641 = sand.u32 %s223, 1
        %s642 = smul.addr %s641, 256
        %s643 = scalar_lea.vmem [#allocation15], %s642
        %p644 = pneg %p236
        %p645 = pneg %p233
        %s646 = sand.u32 %s27, 1
        %s647 = scalar_lea.sflag [#allocation7], %s646
        %s648 = sand.u32 %s249, 1
        %s649 = smul.addr %s648, 128
        %s650 = scalar_lea.vmem [#allocation16], %s649
        %p651 = pneg %p262
        %p652 = pneg %p259
        %p653 = pneg %p283
        %p654 = pneg %p280
        %p655 = pneg %p304
        %p656 = pneg %p301
        %p657 = pneg %p325
        %p658 = pneg %p322
        %p660 = scmp.eq.s32.totalorder %s27, 0
        %v661 = vlaneseq
        %v662 = vand.u32 %v661, 127
        %vm663 = vcmp.ge.s32.totalorder %v662, 0
        %vm664 = vcmp.lt.s32.totalorder %v662, 64
        %vm665 = vmand %vm663, %vm664
        %v666 = vsel %vm665, 1, 0
        %v667 = vcvt.s32.f32 %v666
        %vm668 = vcmp.ge.s32.totalorder %v662, 64
        %vm669 = vcmp.lt.s32.totalorder %v662, 128
        %vm670 = vmand %vm668, %vm669
        %v671 = vsel %vm670, 1, 0
        %v672 = vcvt.s32.f32 %v671
        %v673 = vld [vmem:[%s545] sm:$0xff]
        %v674 = vld [vmem:[%s545 + $0x8] sm:$0xff]
        // Predicated region
        $region109: #{hybrid_forward.1} parent=67 // pred_check
          %p675 = pneg %p660
        $region110: #{hybrid_forward.1} parent=67 // pred_check_branch
          %677 = sbr.rel (%p675) target = $region112
        $region111: #{hybrid_forward.1} parent=67 // pred_region
          %v678 = vld [vmem:[%s0] sm:$0xff]
          %v679 = vld [vmem:[%s0 + $0x8] sm:$0xff]
          %680 = vst [vmem:[#allocation2] sm:$0xff] %v678
          %681 = vst [vmem:[#allocation2 + $0x8] sm:$0xff] %v679
        $region112: #{hybrid_forward.1} parent=67 // pred_fallthru
          _
        %v682 = vld [vmem:[#allocation2] sm:$0xff]
        %v683 = vld [vmem:[#allocation2 + $0x8] sm:$0xff]
        %v684 = vld [vmem:[%s1] sm:$0xff]
        %v685 = vld [vmem:[%s1 + $0x8] sm:$0xff]
        %v686 = vmul.f32 %v682, %v682
        %v687 = vmul.f32 %v683, %v683
        %688 = vadd.xlane.f32.xlu0 %v686
        %v689 = vpop.xlane.xlu0 %688
        %690 = vadd.xlane.f32.xlu0 %v687
        %v691 = vpop.xlane.xlu0 %690
        %v692 = vrcp.pop 128.0
        %v693 = vmul.f32 %v689, %v692
        %v694 = vmul.f32 %v691, %v692
        %v695 = vadd.f32 %v693, 1e-06
        %v696 = vadd.f32 %v694, 1e-06
        %v697 = vrsqrt.pop %v695
        %v698 = vrsqrt.pop %v696
        %v699 = vmul.f32 %v682, %v697
        %v700 = vmul.f32 %v683, %v698
        %v701 = vlaneseq
        %v702 = vshrl.u32 %v701, 7
        %v703 = vsub.s32 0, %v702
        %v704 = vrot.slane %v673, %v703
        %v705 = vmul.f32 %v699, %v704
        %v706 = vmul.f32 %v700, %v704
        %708 = vset.pattern.permute.xlu0 0
        %709 = vperm.xlu0 %708, %v684
        %v710 = vpop.permute.xlu0 %709
        %713 = vset.pattern.permute.xlu0 0
        %714 = vperm.xlu0 %713, %v685
        %v715 = vpop.permute.xlu0 %714
        %v717 = vmul.f32 %v705, %v710
        %v718 = vmul.f32 %v706, %v715
        %v719 = vlaneseq
        %v720 = vshrl.u32 %v719, 7
        %v721 = vadd.s32 %v720, 8
        %vm722 = vcmp.lt.s32.totalorder %v720, 0
        %v723 = vsub.s32 0, %v720
        %v724 = vsel %vm722, %v723, %v720
        %v725 = vshrl.u32 %v724, 3
        %v726 = vand.u32 %v724, 7
        %v727 = vsub.s32 0, %v726
        %v728 = vsel %vm722, %v727, %v726
        %vm729 = vcmp.lt.s32.totalorder %v721, 0
        %v730 = vsub.s32 0, %v721
        %v731 = vsel %vm729, %v730, %v721
        %v732 = vshrl.u32 %v731, 3
        %v733 = vand.u32 %v731, 7
        %v734 = vsub.s32 0, %v733
        %v735 = vsel %vm729, %v734, %v733
        %vm736 = vcmp.ne.s32.totalorder %v728, 0
        %vm737 = vcmp.ne.s32.totalorder %v735, 0
        %vm738 = vcmp.lt.s32.totalorder %v728, 0
        %vm739 = vcmp.lt.s32.totalorder %v735, 0
        %vm740 = vmand %vm738, %vm736
        %vm741 = vmand %vm739, %vm737
        %v742 = vadd.s32 %v728, 8
        %v743 = vadd.s32 %v735, 8
        %v744 = vsel %vm740, %v742, %v728
        %v745 = vsel %vm741, %v743, %v735
        %vm746 = vcmp.eq.s32.totalorder %v744, 0
        %vm747 = vcmp.eq.s32.totalorder %v745, 0
        %v748 = vrot.slane %v717, 7
        %v749 = vrot.slane %v718, 7
        %vm750 = vcmp.lt.s32.totalorder %v720, 1
        %v751 = vsel %vm750, %v748, %v749
        %v752 = vsel %vm750, %v749, %v748
        %v753 = vsel %vm746, 1, 0
        %v754 = vsel %vm747, 1, 0
        %vm755 = vcmp.eq.s32.totalorder %v753, 1
        %vm756 = vcmp.eq.s32.totalorder %v754, 1
        %v757 = vsel %vm755, 0.0, %v752
        %v758 = vsel %vm756, 0.0, %v751
        %v759 = vsub.f32 %v757, %v717
        %v760 = vsub.f32 %v758, %v718
        %v761 = vlaneseq
        %v762 = vshrl.u32 %v761, 7
        %v763 = vsub.s32 1, %v762
        %v764 = vrot.slane %v673, %v763
        %v765 = vmul.f32 %v759, %v764
        %v766 = vmul.f32 %v760, %v764
        %v767 = vadd.f32 %v717, %v765
        %v768 = vadd.f32 %v718, %v766
        %v769 = vlaneseq
        %v770 = vshrl.u32 %v769, 7
        %v771 = vsub.s32 3, %v770
        %v772 = vrot.slane %v673, %v771
        %v773 = vmul.f32 %v759, %v772
        %v774 = vmul.f32 %v760, %v772
        %v775 = vadd.f32 %v717, %v773
        %v776 = vadd.f32 %v718, %v774
        %v777 = vlaneseq
        %v778 = vshrl.u32 %v777, 7
        %v779 = vsub.s32 4, %v778
        %v780 = vrot.slane %v673, %v779
        %v781 = vmul.f32 %v759, %v780
        %v782 = vmul.f32 %v760, %v780
        %v783 = vadd.f32 %v717, %v781
        %v784 = vadd.f32 %v718, %v782
        %v785 = vlaneseq
        %v786 = vshrl.u32 %v785, 7
        %v787 = vsub.s32 2, %v786
        %v788 = vrot.slane %v673, %v787
        %v789 = vmul.f32 %v759, %v788
        %v790 = vmul.f32 %v760, %v788
        %v791 = vadd.f32 %v717, %v789
        %v792 = vadd.f32 %v718, %v790
        %v793 = vlaneseq
        %v794 = vshrl.u32 %v793, 7
        %v795 = vsub.s32 5, %v794
        %v796 = vrot.slane %v673, %v795
        %v797 = vmul.f32 %v759, %v796
        %v798 = vmul.f32 %v760, %v796
        %v799 = vadd.f32 %v717, %v797
        %v800 = vadd.f32 %v718, %v798
        %v801 = vlaneseq
        %v802 = vshrl.u32 %v801, 7
        %v803 = vsub.s32 6, %v802
        %v804 = vrot.slane %v673, %v803
        %v805 = vmul.f32 %v759, %v804
        %v806 = vmul.f32 %v760, %v804
        %v807 = vadd.f32 %v717, %v805
        %v808 = vadd.f32 %v718, %v806
        %v809 = vld [vmem:[%s554] sm:$0xff]
        %v810 = vld [vmem:[%s554 + $0x8] sm:$0xff]
        %v811 = vld [vmem:[%s554 + $0x10] sm:$0xff]
        %v812 = vld [vmem:[%s554 + $0x18] sm:$0xff]
        %v813 = vld [vmem:[%s554 + $0x20] sm:$0xff]
        %v814 = vld [vmem:[%s554 + $0x28] sm:$0xff]
        %v815 = vld [vmem:[%s554 + $0x30] sm:$0xff]
        %v816 = vld [vmem:[%s554 + $0x38] sm:$0xff]
        %v817 = vld [vmem:[%s554 + $0x40] sm:$0xff]
        %v818 = vld [vmem:[%s554 + $0x48] sm:$0xff]
        %v819 = vld [vmem:[%s554 + $0x50] sm:$0xff]
        %v820 = vld [vmem:[%s554 + $0x58] sm:$0xff]
        %v821 = vld [vmem:[%s554 + $0x60] sm:$0xff]
        %v822 = vld [vmem:[%s554 + $0x68] sm:$0xff]
        %v823 = vld [vmem:[%s554 + $0x70] sm:$0xff]
        %v824 = vld [vmem:[%s554 + $0x78] sm:$0xff]
        %v825 = vld [vmem:[%s554 + $0x80] sm:$0xff]
        %v826 = vld [vmem:[%s554 + $0x88] sm:$0xff]
        %v827 = vld [vmem:[%s554 + $0x90] sm:$0xff]
        %v828 = vld [vmem:[%s554 + $0x98] sm:$0xff]
        %v829 = vld [vmem:[%s554 + $0xa0] sm:$0xff]
        %v830 = vld [vmem:[%s554 + $0xa8] sm:$0xff]
        %v831 = vld [vmem:[%s554 + $0xb0] sm:$0xff]
        %v832 = vld [vmem:[%s554 + $0xb8] sm:$0xff]
        %v833 = vld [vmem:[%s554 + $0xc0] sm:$0xff]
        %v834 = vld [vmem:[%s554 + $0xc8] sm:$0xff]
        %v835 = vld [vmem:[%s554 + $0xd0] sm:$0xff]
        %v836 = vld [vmem:[%s554 + $0xd8] sm:$0xff]
        %v837 = vld [vmem:[%s554 + $0xe0] sm:$0xff]
        %v838 = vld [vmem:[%s554 + $0xe8] sm:$0xff]
        %v839 = vld [vmem:[%s554 + $0xf0] sm:$0xff]
        %v840 = vld [vmem:[%s554 + $0xf8] sm:$0xff]
        %v841 = vld [vmem:[%s554 + $0x100] sm:$0xff]
        %v842 = vld [vmem:[%s554 + $0x108] sm:$0xff]
        %v843 = vld [vmem:[%s554 + $0x110] sm:$0xff]
        %v844 = vld [vmem:[%s554 + $0x118] sm:$0xff]
        %v845 = vld [vmem:[%s554 + $0x120] sm:$0xff]
        %v846 = vld [vmem:[%s554 + $0x128] sm:$0xff]
        %v847 = vld [vmem:[%s554 + $0x130] sm:$0xff]
        %v848 = vld [vmem:[%s554 + $0x138] sm:$0xff]
        %v849 = vld [vmem:[%s554 + $0x140] sm:$0xff]
        %v850 = vld [vmem:[%s554 + $0x148] sm:$0xff]
        %v851 = vld [vmem:[%s554 + $0x150] sm:$0xff]
        %v852 = vld [vmem:[%s554 + $0x158] sm:$0xff]
        %v853 = vld [vmem:[%s554 + $0x160] sm:$0xff]
        %v854 = vld [vmem:[%s554 + $0x168] sm:$0xff]
        %v855 = vld [vmem:[%s554 + $0x170] sm:$0xff]
        %v856 = vld [vmem:[%s554 + $0x178] sm:$0xff]
        %v857 = vld [vmem:[%s554 + $0x180] sm:$0xff]
        %v858 = vld [vmem:[%s554 + $0x188] sm:$0xff]
        %v859 = vld [vmem:[%s554 + $0x190] sm:$0xff]
        %v860 = vld [vmem:[%s554 + $0x198] sm:$0xff]
        %v861 = vld [vmem:[%s554 + $0x1a0] sm:$0xff]
        %v862 = vld [vmem:[%s554 + $0x1a8] sm:$0xff]
        %v863 = vld [vmem:[%s554 + $0x1b0] sm:$0xff]
        %v864 = vld [vmem:[%s554 + $0x1b8] sm:$0xff]
        %v865 = vld [vmem:[%s554 + $0x1c0] sm:$0xff]
        %v866 = vld [vmem:[%s554 + $0x1c8] sm:$0xff]
        %v867 = vld [vmem:[%s554 + $0x1d0] sm:$0xff]
        %v868 = vld [vmem:[%s554 + $0x1d8] sm:$0xff]
        %v869 = vld [vmem:[%s554 + $0x1e0] sm:$0xff]
        %v870 = vld [vmem:[%s554 + $0x1e8] sm:$0xff]
        %v871 = vld [vmem:[%s554 + $0x1f0] sm:$0xff]
        %v872 = vld [vmem:[%s554 + $0x1f8] sm:$0xff]
        %v873 = vld [vmem:[%s554 + $0x200] sm:$0xff]
        %v874 = vld [vmem:[%s554 + $0x208] sm:$0xff]
        %v875 = vld [vmem:[%s554 + $0x210] sm:$0xff]
        %v876 = vld [vmem:[%s554 + $0x218] sm:$0xff]
        %v877 = vld [vmem:[%s554 + $0x220] sm:$0xff]
        %v878 = vld [vmem:[%s554 + $0x228] sm:$0xff]
        %v879 = vld [vmem:[%s554 + $0x230] sm:$0xff]
        %v880 = vld [vmem:[%s554 + $0x238] sm:$0xff]
        %v881 = vld [vmem:[%s554 + $0x240] sm:$0xff]
        %v882 = vld [vmem:[%s554 + $0x248] sm:$0xff]
        %v883 = vld [vmem:[%s554 + $0x250] sm:$0xff]
        %v884 = vld [vmem:[%s554 + $0x258] sm:$0xff]
        %v885 = vld [vmem:[%s554 + $0x260] sm:$0xff]
        %v886 = vld [vmem:[%s554 + $0x268] sm:$0xff]
        %v887 = vld [vmem:[%s554 + $0x270] sm:$0xff]
        %v888 = vld [vmem:[%s554 + $0x278] sm:$0xff]
        %v889 = vld [vmem:[%s554 + $0x280] sm:$0xff]
        %v890 = vld [vmem:[%s554 + $0x288] sm:$0xff]
        %v891 = vld [vmem:[%s554 + $0x290] sm:$0xff]
        %v892 = vld [vmem:[%s554 + $0x298] sm:$0xff]
        %v893 = vld [vmem:[%s554 + $0x2a0] sm:$0xff]
        %v894 = vld [vmem:[%s554 + $0x2a8] sm:$0xff]
        %v895 = vld [vmem:[%s554 + $0x2b0] sm:$0xff]
        %v896 = vld [vmem:[%s554 + $0x2b8] sm:$0xff]
        %v897 = vld [vmem:[%s554 + $0x2c0] sm:$0xff]
        %v898 = vld [vmem:[%s554 + $0x2c8] sm:$0xff]
        %v899 = vld [vmem:[%s554 + $0x2d0] sm:$0xff]
        %v900 = vld [vmem:[%s554 + $0x2d8] sm:$0xff]
        %v901 = vld [vmem:[%s554 + $0x2e0] sm:$0xff]
        %v902 = vld [vmem:[%s554 + $0x2e8] sm:$0xff]
        %v903 = vld [vmem:[%s554 + $0x2f0] sm:$0xff]
        %v904 = vld [vmem:[%s554 + $0x2f8] sm:$0xff]
        %v905 = vld [vmem:[%s554 + $0x300] sm:$0xff]
        %v906 = vld [vmem:[%s554 + $0x308] sm:$0xff]
        %v907 = vld [vmem:[%s554 + $0x310] sm:$0xff]
        %v908 = vld [vmem:[%s554 + $0x318] sm:$0xff]
        %v909 = vld [vmem:[%s554 + $0x320] sm:$0xff]
        %v910 = vld [vmem:[%s554 + $0x328] sm:$0xff]
        %v911 = vld [vmem:[%s554 + $0x330] sm:$0xff]
        %v912 = vld [vmem:[%s554 + $0x338] sm:$0xff]
        %v913 = vld [vmem:[%s554 + $0x340] sm:$0xff]
        %v914 = vld [vmem:[%s554 + $0x348] sm:$0xff]
        %v915 = vld [vmem:[%s554 + $0x350] sm:$0xff]
        %v916 = vld [vmem:[%s554 + $0x358] sm:$0xff]
        %v917 = vld [vmem:[%s554 + $0x360] sm:$0xff]
        %v918 = vld [vmem:[%s554 + $0x368] sm:$0xff]
        %v919 = vld [vmem:[%s554 + $0x370] sm:$0xff]
        %v920 = vld [vmem:[%s554 + $0x378] sm:$0xff]
        %v921 = vld [vmem:[%s554 + $0x380] sm:$0xff]
        %v922 = vld [vmem:[%s554 + $0x388] sm:$0xff]
        %v923 = vld [vmem:[%s554 + $0x390] sm:$0xff]
        %v924 = vld [vmem:[%s554 + $0x398] sm:$0xff]
        %v925 = vld [vmem:[%s554 + $0x3a0] sm:$0xff]
        %v926 = vld [vmem:[%s554 + $0x3a8] sm:$0xff]
        %v927 = vld [vmem:[%s554 + $0x3b0] sm:$0xff]
        %v928 = vld [vmem:[%s554 + $0x3b8] sm:$0xff]
        %v929 = vld [vmem:[%s554 + $0x3c0] sm:$0xff]
        %v930 = vld [vmem:[%s554 + $0x3c8] sm:$0xff]
        %v931 = vld [vmem:[%s554 + $0x3d0] sm:$0xff]
        %v932 = vld [vmem:[%s554 + $0x3d8] sm:$0xff]
        %v933 = vld [vmem:[%s554 + $0x3e0] sm:$0xff]
        %v934 = vld [vmem:[%s554 + $0x3e8] sm:$0xff]
        %v935 = vld [vmem:[%s554 + $0x3f0] sm:$0xff]
        %v936 = vld [vmem:[%s554 + $0x3f8] sm:$0xff]
        %v937 = vld [vmem:[%s554 + $0x400] sm:$0xff]
        %v938 = vld [vmem:[%s554 + $0x408] sm:$0xff]
        %v939 = vld [vmem:[%s554 + $0x410] sm:$0xff]
        %v940 = vld [vmem:[%s554 + $0x418] sm:$0xff]
        %v941 = vld [vmem:[%s554 + $0x420] sm:$0xff]
        %v942 = vld [vmem:[%s554 + $0x428] sm:$0xff]
        %v943 = vld [vmem:[%s554 + $0x430] sm:$0xff]
        %v944 = vld [vmem:[%s554 + $0x438] sm:$0xff]
        %v945 = vld [vmem:[%s554 + $0x440] sm:$0xff]
        %v946 = vld [vmem:[%s554 + $0x448] sm:$0xff]
        %v947 = vld [vmem:[%s554 + $0x450] sm:$0xff]
        %v948 = vld [vmem:[%s554 + $0x458] sm:$0xff]
        %v949 = vld [vmem:[%s554 + $0x460] sm:$0xff]
        %v950 = vld [vmem:[%s554 + $0x468] sm:$0xff]
        %v951 = vld [vmem:[%s554 + $0x470] sm:$0xff]
        %v952 = vld [vmem:[%s554 + $0x478] sm:$0xff]
        %v953 = vld [vmem:[%s554 + $0x480] sm:$0xff]
        %v954 = vld [vmem:[%s554 + $0x488] sm:$0xff]
        %v955 = vld [vmem:[%s554 + $0x490] sm:$0xff]
        %v956 = vld [vmem:[%s554 + $0x498] sm:$0xff]
        %v957 = vld [vmem:[%s554 + $0x4a0] sm:$0xff]
        %v958 = vld [vmem:[%s554 + $0x4a8] sm:$0xff]
        %v959 = vld [vmem:[%s554 + $0x4b0] sm:$0xff]
        %v960 = vld [vmem:[%s554 + $0x4b8] sm:$0xff]
        %v961 = vld [vmem:[%s554 + $0x4c0] sm:$0xff]
        %v962 = vld [vmem:[%s554 + $0x4c8] sm:$0xff]
        %v963 = vld [vmem:[%s554 + $0x4d0] sm:$0xff]
        %v964 = vld [vmem:[%s554 + $0x4d8] sm:$0xff]
        %v965 = vld [vmem:[%s554 + $0x4e0] sm:$0xff]
        %v966 = vld [vmem:[%s554 + $0x4e8] sm:$0xff]
        %v967 = vld [vmem:[%s554 + $0x4f0] sm:$0xff]
        %v968 = vld [vmem:[%s554 + $0x4f8] sm:$0xff]
        %v969 = vld [vmem:[%s554 + $0x500] sm:$0xff]
        %v970 = vld [vmem:[%s554 + $0x508] sm:$0xff]
        %v971 = vld [vmem:[%s554 + $0x510] sm:$0xff]
        %v972 = vld [vmem:[%s554 + $0x518] sm:$0xff]
        %v973 = vld [vmem:[%s554 + $0x520] sm:$0xff]
        %v974 = vld [vmem:[%s554 + $0x528] sm:$0xff]
        %v975 = vld [vmem:[%s554 + $0x530] sm:$0xff]
        %v976 = vld [vmem:[%s554 + $0x538] sm:$0xff]
        %v977 = vld [vmem:[%s554 + $0x540] sm:$0xff]
        %v978 = vld [vmem:[%s554 + $0x548] sm:$0xff]
        %v979 = vld [vmem:[%s554 + $0x550] sm:$0xff]
        %v980 = vld [vmem:[%s554 + $0x558] sm:$0xff]
        %v981 = vld [vmem:[%s554 + $0x560] sm:$0xff]
        %v982 = vld [vmem:[%s554 + $0x568] sm:$0xff]
        %v983 = vld [vmem:[%s554 + $0x570] sm:$0xff]
        %v984 = vld [vmem:[%s554 + $0x578] sm:$0xff]
        %v985 = vld [vmem:[%s554 + $0x580] sm:$0xff]
        %v986 = vld [vmem:[%s554 + $0x588] sm:$0xff]
        %v987 = vld [vmem:[%s554 + $0x590] sm:$0xff]
        %v988 = vld [vmem:[%s554 + $0x598] sm:$0xff]
        %v989 = vld [vmem:[%s554 + $0x5a0] sm:$0xff]
        %v990 = vld [vmem:[%s554 + $0x5a8] sm:$0xff]
        %v991 = vld [vmem:[%s554 + $0x5b0] sm:$0xff]
        %v992 = vld [vmem:[%s554 + $0x5b8] sm:$0xff]
        %v993 = vld [vmem:[%s554 + $0x5c0] sm:$0xff]
        %v994 = vld [vmem:[%s554 + $0x5c8] sm:$0xff]
        %v995 = vld [vmem:[%s554 + $0x5d0] sm:$0xff]
        %v996 = vld [vmem:[%s554 + $0x5d8] sm:$0xff]
        %v997 = vld [vmem:[%s554 + $0x5e0] sm:$0xff]
        %v998 = vld [vmem:[%s554 + $0x5e8] sm:$0xff]
        %v999 = vld [vmem:[%s554 + $0x5f0] sm:$0xff]
        %v1000 = vld [vmem:[%s554 + $0x5f8] sm:$0xff]
        %v1001 = vpack.c.bf16 %v768, %v767
        %v1002 = vpack.c.bf16 %v776, %v775
        %v1003 = vpack.c.bf16 %v784, %v783
        %v1004 = vpack.c.bf16 %v792, %v791
        %v1005 = vpack.c.bf16 %v800, %v799
        %v1006 = vpack.c.bf16 %v808, %v807
        %v1199 = vunpack.c.l.b16 %v809
        %v1200 = vunpack.c.h.b16 %v809
        %v1201 = vunpack.c.l.b16 %v810
        %v1202 = vunpack.c.h.b16 %v810
        %v1203 = vunpack.c.l.b16 %v811
        %v1204 = vunpack.c.h.b16 %v811
        %v1205 = vunpack.c.l.b16 %v812
        %v1206 = vunpack.c.h.b16 %v812
        %v1207 = vunpack.c.l.b16 %v813
        %v1208 = vunpack.c.h.b16 %v813
        %v1209 = vunpack.c.l.b16 %v814
        %v1210 = vunpack.c.h.b16 %v814
        %v1211 = vunpack.c.l.b16 %v815
        %v1212 = vunpack.c.h.b16 %v815
        %v1213 = vunpack.c.l.b16 %v816
        %v1214 = vunpack.c.h.b16 %v816
        %v1215 = vunpack.c.l.b16 %v817
        %v1216 = vunpack.c.h.b16 %v817
        %v1217 = vunpack.c.l.b16 %v818
        %v1218 = vunpack.c.h.b16 %v818
        %v1219 = vunpack.c.l.b16 %v819
        %v1220 = vunpack.c.h.b16 %v819
        %v1221 = vunpack.c.l.b16 %v820
        %v1222 = vunpack.c.h.b16 %v820
        %v1223 = vunpack.c.l.b16 %v821
        %v1224 = vunpack.c.h.b16 %v821
        %v1225 = vunpack.c.l.b16 %v822
        %v1226 = vunpack.c.h.b16 %v822
        %v1227 = vunpack.c.l.b16 %v823
        %v1228 = vunpack.c.h.b16 %v823
        %v1229 = vunpack.c.l.b16 %v824
        %v1230 = vunpack.c.h.b16 %v824
        %v1231 = vunpack.c.l.b16 %v825
        %v1232 = vunpack.c.h.b16 %v825
        %v1233 = vunpack.c.l.b16 %v826
        %v1234 = vunpack.c.h.b16 %v826
        %v1235 = vunpack.c.l.b16 %v827
        %v1236 = vunpack.c.h.b16 %v827
        %v1237 = vunpack.c.l.b16 %v828
        %v1238 = vunpack.c.h.b16 %v828
        %v1239 = vunpack.c.l.b16 %v829
        %v1240 = vunpack.c.h.b16 %v829
        %v1241 = vunpack.c.l.b16 %v830
        %v1242 = vunpack.c.h.b16 %v830
        %v1243 = vunpack.c.l.b16 %v831
        %v1244 = vunpack.c.h.b16 %v831
        %v1245 = vunpack.c.l.b16 %v832
        %v1246 = vunpack.c.h.b16 %v832
        %v1247 = vunpack.c.l.b16 %v833
        %v1248 = vunpack.c.h.b16 %v833
        %v1249 = vunpack.c.l.b16 %v834
        %v1250 = vunpack.c.h.b16 %v834
        %v1251 = vunpack.c.l.b16 %v835
        %v1252 = vunpack.c.h.b16 %v835
        %v1253 = vunpack.c.l.b16 %v836
        %v1254 = vunpack.c.h.b16 %v836
        %v1255 = vunpack.c.l.b16 %v837
        %v1256 = vunpack.c.h.b16 %v837
        %v1257 = vunpack.c.l.b16 %v838
        %v1258 = vunpack.c.h.b16 %v838
        %v1259 = vunpack.c.l.b16 %v839
        %v1260 = vunpack.c.h.b16 %v839
        %v1261 = vunpack.c.l.b16 %v840
        %v1262 = vunpack.c.h.b16 %v840
        %v1263 = vunpack.c.l.b16 %v841
        %v1264 = vunpack.c.h.b16 %v841
        %v1265 = vunpack.c.l.b16 %v842
        %v1266 = vunpack.c.h.b16 %v842
        %v1267 = vunpack.c.l.b16 %v843
        %v1268 = vunpack.c.h.b16 %v843
        %v1269 = vunpack.c.l.b16 %v844
        %v1270 = vunpack.c.h.b16 %v844
        %v1271 = vunpack.c.l.b16 %v845
        %v1272 = vunpack.c.h.b16 %v845
        %v1273 = vunpack.c.l.b16 %v846
        %v1274 = vunpack.c.h.b16 %v846
        %v1275 = vunpack.c.l.b16 %v847
        %v1276 = vunpack.c.h.b16 %v847
        %v1277 = vunpack.c.l.b16 %v848
        %v1278 = vunpack.c.h.b16 %v848
        %v1279 = vunpack.c.l.b16 %v849
        %v1280 = vunpack.c.h.b16 %v849
        %v1281 = vunpack.c.l.b16 %v850
        %v1282 = vunpack.c.h.b16 %v850
        %v1283 = vunpack.c.l.b16 %v851
        %v1284 = vunpack.c.h.b16 %v851
        %v1285 = vunpack.c.l.b16 %v852
        %v1286 = vunpack.c.h.b16 %v852
        %v1287 = vunpack.c.l.b16 %v853
        %v1288 = vunpack.c.h.b16 %v853
        %v1289 = vunpack.c.l.b16 %v854
        %v1290 = vunpack.c.h.b16 %v854
        %v1291 = vunpack.c.l.b16 %v855
        %v1292 = vunpack.c.h.b16 %v855
        %v1293 = vunpack.c.l.b16 %v856
        %v1294 = vunpack.c.h.b16 %v856
        %v1295 = vunpack.c.l.b16 %v857
        %v1296 = vunpack.c.h.b16 %v857
        %v1297 = vunpack.c.l.b16 %v858
        %v1298 = vunpack.c.h.b16 %v858
        %v1299 = vunpack.c.l.b16 %v859
        %v1300 = vunpack.c.h.b16 %v859
        %v1301 = vunpack.c.l.b16 %v860
        %v1302 = vunpack.c.h.b16 %v860
        %v1303 = vunpack.c.l.b16 %v861
        %v1304 = vunpack.c.h.b16 %v861
        %v1305 = vunpack.c.l.b16 %v862
        %v1306 = vunpack.c.h.b16 %v862
        %v1307 = vunpack.c.l.b16 %v863
        %v1308 = vunpack.c.h.b16 %v863
        %v1309 = vunpack.c.l.b16 %v864
        %v1310 = vunpack.c.h.b16 %v864
        %v1311 = vunpack.c.l.b16 %v865
        %v1312 = vunpack.c.h.b16 %v865
        %v1313 = vunpack.c.l.b16 %v866
        %v1314 = vunpack.c.h.b16 %v866
        %v1315 = vunpack.c.l.b16 %v867
        %v1316 = vunpack.c.h.b16 %v867
        %v1317 = vunpack.c.l.b16 %v868
        %v1318 = vunpack.c.h.b16 %v868
        %v1319 = vunpack.c.l.b16 %v869
        %v1320 = vunpack.c.h.b16 %v869
        %v1321 = vunpack.c.l.b16 %v870
        %v1322 = vunpack.c.h.b16 %v870
        %v1323 = vunpack.c.l.b16 %v871
        %v1324 = vunpack.c.h.b16 %v871
        %v1325 = vunpack.c.l.b16 %v872
        %v1326 = vunpack.c.h.b16 %v872
        %v1327 = vunpack.c.l.b16 %v873
        %v1328 = vunpack.c.h.b16 %v873
        %v1329 = vunpack.c.l.b16 %v874
        %v1330 = vunpack.c.h.b16 %v874
        %v1331 = vunpack.c.l.b16 %v875
        %v1332 = vunpack.c.h.b16 %v875
        %v1333 = vunpack.c.l.b16 %v876
        %v1334 = vunpack.c.h.b16 %v876
        %v1335 = vunpack.c.l.b16 %v877
        %v1336 = vunpack.c.h.b16 %v877
        %v1337 = vunpack.c.l.b16 %v878
        %v1338 = vunpack.c.h.b16 %v878
        %v1339 = vunpack.c.l.b16 %v879
        %v1340 = vunpack.c.h.b16 %v879
        %v1341 = vunpack.c.l.b16 %v880
        %v1342 = vunpack.c.h.b16 %v880
        %v1343 = vunpack.c.l.b16 %v881
        %v1344 = vunpack.c.h.b16 %v881
        %v1345 = vunpack.c.l.b16 %v882
        %v1346 = vunpack.c.h.b16 %v882
        %v1347 = vunpack.c.l.b16 %v883
        %v1348 = vunpack.c.h.b16 %v883
        %v1349 = vunpack.c.l.b16 %v884
        %v1350 = vunpack.c.h.b16 %v884
        %v1351 = vunpack.c.l.b16 %v885
        %v1352 = vunpack.c.h.b16 %v885
        %v1353 = vunpack.c.l.b16 %v886
        %v1354 = vunpack.c.h.b16 %v886
        %v1355 = vunpack.c.l.b16 %v887
        %v1356 = vunpack.c.h.b16 %v887
        %v1357 = vunpack.c.l.b16 %v888
        %v1358 = vunpack.c.h.b16 %v888
        %v1359 = vunpack.c.l.b16 %v889
        %v1360 = vunpack.c.h.b16 %v889
        %v1361 = vunpack.c.l.b16 %v890
        %v1362 = vunpack.c.h.b16 %v890
        %v1363 = vunpack.c.l.b16 %v891
        %v1364 = vunpack.c.h.b16 %v891
        %v1365 = vunpack.c.l.b16 %v892
        %v1366 = vunpack.c.h.b16 %v892
        %v1367 = vunpack.c.l.b16 %v893
        %v1368 = vunpack.c.h.b16 %v893
        %v1369 = vunpack.c.l.b16 %v894
        %v1370 = vunpack.c.h.b16 %v894
        %v1371 = vunpack.c.l.b16 %v895
        %v1372 = vunpack.c.h.b16 %v895
        %v1373 = vunpack.c.l.b16 %v896
        %v1374 = vunpack.c.h.b16 %v896
        %v1375 = vunpack.c.l.b16 %v897
        %v1376 = vunpack.c.h.b16 %v897
        %v1377 = vunpack.c.l.b16 %v898
        %v1378 = vunpack.c.h.b16 %v898
        %v1379 = vunpack.c.l.b16 %v899
        %v1380 = vunpack.c.h.b16 %v899
        %v1381 = vunpack.c.l.b16 %v900
        %v1382 = vunpack.c.h.b16 %v900
        %v1383 = vunpack.c.l.b16 %v901
        %v1384 = vunpack.c.h.b16 %v901
        %v1385 = vunpack.c.l.b16 %v902
        %v1386 = vunpack.c.h.b16 %v902
        %v1387 = vunpack.c.l.b16 %v903
        %v1388 = vunpack.c.h.b16 %v903
        %v1389 = vunpack.c.l.b16 %v904
        %v1390 = vunpack.c.h.b16 %v904
        %v1391 = vunpack.c.l.b16 %v905
        %v1392 = vunpack.c.h.b16 %v905
        %v1393 = vunpack.c.l.b16 %v906
        %v1394 = vunpack.c.h.b16 %v906
        %v1395 = vunpack.c.l.b16 %v907
        %v1396 = vunpack.c.h.b16 %v907
        %v1397 = vunpack.c.l.b16 %v908
        %v1398 = vunpack.c.h.b16 %v908
        %v1399 = vunpack.c.l.b16 %v909
        %v1400 = vunpack.c.h.b16 %v909
        %v1401 = vunpack.c.l.b16 %v910
        %v1402 = vunpack.c.h.b16 %v910
        %v1403 = vunpack.c.l.b16 %v911
        %v1404 = vunpack.c.h.b16 %v911
        %v1405 = vunpack.c.l.b16 %v912
        %v1406 = vunpack.c.h.b16 %v912
        %v1407 = vunpack.c.l.b16 %v913
        %v1408 = vunpack.c.h.b16 %v913
        %v1409 = vunpack.c.l.b16 %v914
        %v1410 = vunpack.c.h.b16 %v914
        %v1411 = vunpack.c.l.b16 %v915
        %v1412 = vunpack.c.h.b16 %v915
        %v1413 = vunpack.c.l.b16 %v916
        %v1414 = vunpack.c.h.b16 %v916
        %v1415 = vunpack.c.l.b16 %v917
        %v1416 = vunpack.c.h.b16 %v917
        %v1417 = vunpack.c.l.b16 %v918
        %v1418 = vunpack.c.h.b16 %v918
        %v1419 = vunpack.c.l.b16 %v919
        %v1420 = vunpack.c.h.b16 %v919
        %v1421 = vunpack.c.l.b16 %v920
        %v1422 = vunpack.c.h.b16 %v920
        %v1423 = vunpack.c.l.b16 %v921
        %v1424 = vunpack.c.h.b16 %v921
        %v1425 = vunpack.c.l.b16 %v922
        %v1426 = vunpack.c.h.b16 %v922
        %v1427 = vunpack.c.l.b16 %v923
        %v1428 = vunpack.c.h.b16 %v923
        %v1429 = vunpack.c.l.b16 %v924
        %v1430 = vunpack.c.h.b16 %v924
        %v1431 = vunpack.c.l.b16 %v925
        %v1432 = vunpack.c.h.b16 %v925
        %v1433 = vunpack.c.l.b16 %v926
        %v1434 = vunpack.c.h.b16 %v926
        %v1435 = vunpack.c.l.b16 %v927
        %v1436 = vunpack.c.h.b16 %v927
        %v1437 = vunpack.c.l.b16 %v928
        %v1438 = vunpack.c.h.b16 %v928
        %v1439 = vunpack.c.l.b16 %v929
        %v1440 = vunpack.c.h.b16 %v929
        %v1441 = vunpack.c.l.b16 %v930
        %v1442 = vunpack.c.h.b16 %v930
        %v1443 = vunpack.c.l.b16 %v931
        %v1444 = vunpack.c.h.b16 %v931
        %v1445 = vunpack.c.l.b16 %v932
        %v1446 = vunpack.c.h.b16 %v932
        %v1447 = vunpack.c.l.b16 %v933
        %v1448 = vunpack.c.h.b16 %v933
        %v1449 = vunpack.c.l.b16 %v934
        %v1450 = vunpack.c.h.b16 %v934
        %v1451 = vunpack.c.l.b16 %v935
        %v1452 = vunpack.c.h.b16 %v935
        %v1453 = vunpack.c.l.b16 %v936
        %v1454 = vunpack.c.h.b16 %v936
        %v1455 = vunpack.c.l.b16 %v937
        %v1456 = vunpack.c.h.b16 %v937
        %v1457 = vunpack.c.l.b16 %v938
        %v1458 = vunpack.c.h.b16 %v938
        %v1459 = vunpack.c.l.b16 %v939
        %v1460 = vunpack.c.h.b16 %v939
        %v1461 = vunpack.c.l.b16 %v940
        %v1462 = vunpack.c.h.b16 %v940
        %v1463 = vunpack.c.l.b16 %v941
        %v1464 = vunpack.c.h.b16 %v941
        %v1465 = vunpack.c.l.b16 %v942
        %v1466 = vunpack.c.h.b16 %v942
        %v1467 = vunpack.c.l.b16 %v943
        %v1468 = vunpack.c.h.b16 %v943
        %v1469 = vunpack.c.l.b16 %v944
        %v1470 = vunpack.c.h.b16 %v944
        %v1471 = vunpack.c.l.b16 %v945
        %v1472 = vunpack.c.h.b16 %v945
        %v1473 = vunpack.c.l.b16 %v946
        %v1474 = vunpack.c.h.b16 %v946
        %v1475 = vunpack.c.l.b16 %v947
        %v1476 = vunpack.c.h.b16 %v947
        %v1477 = vunpack.c.l.b16 %v948
        %v1478 = vunpack.c.h.b16 %v948
        %v1479 = vunpack.c.l.b16 %v949
        %v1480 = vunpack.c.h.b16 %v949
        %v1481 = vunpack.c.l.b16 %v950
        %v1482 = vunpack.c.h.b16 %v950
        %v1483 = vunpack.c.l.b16 %v951
        %v1484 = vunpack.c.h.b16 %v951
        %v1485 = vunpack.c.l.b16 %v952
        %v1486 = vunpack.c.h.b16 %v952
        %v1487 = vunpack.c.l.b16 %v953
        %v1488 = vunpack.c.h.b16 %v953
        %v1489 = vunpack.c.l.b16 %v954
        %v1490 = vunpack.c.h.b16 %v954
        %v1491 = vunpack.c.l.b16 %v955
        %v1492 = vunpack.c.h.b16 %v955
        %v1493 = vunpack.c.l.b16 %v956
        %v1494 = vunpack.c.h.b16 %v956
        %v1495 = vunpack.c.l.b16 %v957
        %v1496 = vunpack.c.h.b16 %v957
        %v1497 = vunpack.c.l.b16 %v958
        %v1498 = vunpack.c.h.b16 %v958
        %v1499 = vunpack.c.l.b16 %v959
        %v1500 = vunpack.c.h.b16 %v959
        %v1501 = vunpack.c.l.b16 %v960
        %v1502 = vunpack.c.h.b16 %v960
        %v1503 = vunpack.c.l.b16 %v961
        %v1504 = vunpack.c.h.b16 %v961
        %v1505 = vunpack.c.l.b16 %v962
        %v1506 = vunpack.c.h.b16 %v962
        %v1507 = vunpack.c.l.b16 %v963
        %v1508 = vunpack.c.h.b16 %v963
        %v1509 = vunpack.c.l.b16 %v964
        %v1510 = vunpack.c.h.b16 %v964
        %v1511 = vunpack.c.l.b16 %v965
        %v1512 = vunpack.c.h.b16 %v965
        %v1513 = vunpack.c.l.b16 %v966
        %v1514 = vunpack.c.h.b16 %v966
        %v1515 = vunpack.c.l.b16 %v967
        %v1516 = vunpack.c.h.b16 %v967
        %v1517 = vunpack.c.l.b16 %v968
        %v1518 = vunpack.c.h.b16 %v968
        %v1519 = vunpack.c.l.b16 %v969
        %v1520 = vunpack.c.h.b16 %v969
        %v1521 = vunpack.c.l.b16 %v970
        %v1522 = vunpack.c.h.b16 %v970
        %v1523 = vunpack.c.l.b16 %v971
        %v1524 = vunpack.c.h.b16 %v971
        %v1525 = vunpack.c.l.b16 %v972
        %v1526 = vunpack.c.h.b16 %v972
        %v1527 = vunpack.c.l.b16 %v973
        %v1528 = vunpack.c.h.b16 %v973
        %v1529 = vunpack.c.l.b16 %v974
        %v1530 = vunpack.c.h.b16 %v974
        %v1531 = vunpack.c.l.b16 %v975
        %v1532 = vunpack.c.h.b16 %v975
        %v1533 = vunpack.c.l.b16 %v976
        %v1534 = vunpack.c.h.b16 %v976
        %v1535 = vunpack.c.l.b16 %v977
        %v1536 = vunpack.c.h.b16 %v977
        %v1537 = vunpack.c.l.b16 %v978
        %v1538 = vunpack.c.h.b16 %v978
        %v1539 = vunpack.c.l.b16 %v979
        %v1540 = vunpack.c.h.b16 %v979
        %v1541 = vunpack.c.l.b16 %v980
        %v1542 = vunpack.c.h.b16 %v980
        %v1543 = vunpack.c.l.b16 %v981
        %v1544 = vunpack.c.h.b16 %v981
        %v1545 = vunpack.c.l.b16 %v982
        %v1546 = vunpack.c.h.b16 %v982
        %v1547 = vunpack.c.l.b16 %v983
        %v1548 = vunpack.c.h.b16 %v983
        %v1549 = vunpack.c.l.b16 %v984
        %v1550 = vunpack.c.h.b16 %v984
        %v1551 = vunpack.c.l.b16 %v985
        %v1552 = vunpack.c.h.b16 %v985
        %v1553 = vunpack.c.l.b16 %v986
        %v1554 = vunpack.c.h.b16 %v986
        %v1555 = vunpack.c.l.b16 %v987
        %v1556 = vunpack.c.h.b16 %v987
        %v1557 = vunpack.c.l.b16 %v988
        %v1558 = vunpack.c.h.b16 %v988
        %v1559 = vunpack.c.l.b16 %v989
        %v1560 = vunpack.c.h.b16 %v989
        %v1561 = vunpack.c.l.b16 %v990
        %v1562 = vunpack.c.h.b16 %v990
        %v1563 = vunpack.c.l.b16 %v991
        %v1564 = vunpack.c.h.b16 %v991
        %v1565 = vunpack.c.l.b16 %v992
        %v1566 = vunpack.c.h.b16 %v992
        %v1567 = vunpack.c.l.b16 %v993
        %v1568 = vunpack.c.h.b16 %v993
        %v1569 = vunpack.c.l.b16 %v994
        %v1570 = vunpack.c.h.b16 %v994
        %v1571 = vunpack.c.l.b16 %v995
        %v1572 = vunpack.c.h.b16 %v995
        %v1573 = vunpack.c.l.b16 %v996
        %v1574 = vunpack.c.h.b16 %v996
        %v1575 = vunpack.c.l.b16 %v997
        %v1576 = vunpack.c.h.b16 %v997
        %v1577 = vunpack.c.l.b16 %v998
        %v1578 = vunpack.c.h.b16 %v998
        %v1579 = vunpack.c.l.b16 %v999
        %v1580 = vunpack.c.h.b16 %v999
        %v1581 = vunpack.c.l.b16 %v1000
        %v1582 = vunpack.c.h.b16 %v1000
        %v1583 = vpack.c.b16 %v1203, %v1199
        %v1584 = vpack.c.b16 %v1204, %v1200
        %v1585 = vpack.c.b16 %v1205, %v1201
        %v1586 = vpack.c.b16 %v1206, %v1202
        %v1587 = vpack.c.b16 %v1211, %v1207
        %v1588 = vpack.c.b16 %v1212, %v1208
        %v1589 = vpack.c.b16 %v1213, %v1209
        %v1590 = vpack.c.b16 %v1214, %v1210
        %v1591 = vpack.c.b16 %v1219, %v1215
        %v1592 = vpack.c.b16 %v1220, %v1216
        %v1593 = vpack.c.b16 %v1221, %v1217
        %v1594 = vpack.c.b16 %v1222, %v1218
        %v1595 = vpack.c.b16 %v1227, %v1223
        %v1596 = vpack.c.b16 %v1228, %v1224
        %v1597 = vpack.c.b16 %v1229, %v1225
        %v1598 = vpack.c.b16 %v1230, %v1226
        %v1599 = vpack.c.b16 %v1235, %v1231
        %v1600 = vpack.c.b16 %v1236, %v1232
        %v1601 = vpack.c.b16 %v1237, %v1233
        %v1602 = vpack.c.b16 %v1238, %v1234
        %v1603 = vpack.c.b16 %v1243, %v1239
        %v1604 = vpack.c.b16 %v1244, %v1240
        %v1605 = vpack.c.b16 %v1245, %v1241
        %v1606 = vpack.c.b16 %v1246, %v1242
        %v1607 = vpack.c.b16 %v1251, %v1247
        %v1608 = vpack.c.b16 %v1252, %v1248
        %v1609 = vpack.c.b16 %v1253, %v1249
        %v1610 = vpack.c.b16 %v1254, %v1250
        %v1611 = vpack.c.b16 %v1259, %v1255
        %v1612 = vpack.c.b16 %v1260, %v1256
        %v1613 = vpack.c.b16 %v1261, %v1257
        %v1614 = vpack.c.b16 %v1262, %v1258
        %v1615 = vpack.c.b16 %v1267, %v1263
        %v1616 = vpack.c.b16 %v1268, %v1264
        %v1617 = vpack.c.b16 %v1269, %v1265
        %v1618 = vpack.c.b16 %v1270, %v1266
        %v1619 = vpack.c.b16 %v1275, %v1271
        %v1620 = vpack.c.b16 %v1276, %v1272
        %v1621 = vpack.c.b16 %v1277, %v1273
        %v1622 = vpack.c.b16 %v1278, %v1274
        %v1623 = vpack.c.b16 %v1283, %v1279
        %v1624 = vpack.c.b16 %v1284, %v1280
        %v1625 = vpack.c.b16 %v1285, %v1281
        %v1626 = vpack.c.b16 %v1286, %v1282
        %v1627 = vpack.c.b16 %v1291, %v1287
        %v1628 = vpack.c.b16 %v1292, %v1288
        %v1629 = vpack.c.b16 %v1293, %v1289
        %v1630 = vpack.c.b16 %v1294, %v1290
        %v1631 = vpack.c.b16 %v1299, %v1295
        %v1632 = vpack.c.b16 %v1300, %v1296
        %v1633 = vpack.c.b16 %v1301, %v1297
        %v1634 = vpack.c.b16 %v1302, %v1298
        %v1635 = vpack.c.b16 %v1307, %v1303
        %v1636 = vpack.c.b16 %v1308, %v1304
        %v1637 = vpack.c.b16 %v1309, %v1305
        %v1638 = vpack.c.b16 %v1310, %v1306
        %v1639 = vpack.c.b16 %v1315, %v1311
        %v1640 = vpack.c.b16 %v1316, %v1312
        %v1641 = vpack.c.b16 %v1317, %v1313
        %v1642 = vpack.c.b16 %v1318, %v1314
        %v1643 = vpack.c.b16 %v1323, %v1319
        %v1644 = vpack.c.b16 %v1324, %v1320
        %v1645 = vpack.c.b16 %v1325, %v1321
        %v1646 = vpack.c.b16 %v1326, %v1322
        %v1647 = vpack.c.b16 %v1331, %v1327
        %v1648 = vpack.c.b16 %v1332, %v1328
        %v1649 = vpack.c.b16 %v1333, %v1329
        %v1650 = vpack.c.b16 %v1334, %v1330
        %v1651 = vpack.c.b16 %v1339, %v1335
        %v1652 = vpack.c.b16 %v1340, %v1336
        %v1653 = vpack.c.b16 %v1341, %v1337
        %v1654 = vpack.c.b16 %v1342, %v1338
        %v1655 = vpack.c.b16 %v1347, %v1343
        %v1656 = vpack.c.b16 %v1348, %v1344
        %v1657 = vpack.c.b16 %v1349, %v1345
        %v1658 = vpack.c.b16 %v1350, %v1346
        %v1659 = vpack.c.b16 %v1355, %v1351
        %v1660 = vpack.c.b16 %v1356, %v1352
        %v1661 = vpack.c.b16 %v1357, %v1353
        %v1662 = vpack.c.b16 %v1358, %v1354
        %v1663 = vpack.c.b16 %v1363, %v1359
        %v1664 = vpack.c.b16 %v1364, %v1360
        %v1665 = vpack.c.b16 %v1365, %v1361
        %v1666 = vpack.c.b16 %v1366, %v1362
        %v1667 = vpack.c.b16 %v1371, %v1367
        %v1668 = vpack.c.b16 %v1372, %v1368
        %v1669 = vpack.c.b16 %v1373, %v1369
        %v1670 = vpack.c.b16 %v1374, %v1370
        %v1671 = vpack.c.b16 %v1379, %v1375
        %v1672 = vpack.c.b16 %v1380, %v1376
        %v1673 = vpack.c.b16 %v1381, %v1377
        %v1674 = vpack.c.b16 %v1382, %v1378
        %v1675 = vpack.c.b16 %v1387, %v1383
        %v1676 = vpack.c.b16 %v1388, %v1384
        %v1677 = vpack.c.b16 %v1389, %v1385
        %v1678 = vpack.c.b16 %v1390, %v1386
        %v1679 = vpack.c.b16 %v1395, %v1391
        %v1680 = vpack.c.b16 %v1396, %v1392
        %v1681 = vpack.c.b16 %v1397, %v1393
        %v1682 = vpack.c.b16 %v1398, %v1394
        %v1683 = vpack.c.b16 %v1403, %v1399
        %v1684 = vpack.c.b16 %v1404, %v1400
        %v1685 = vpack.c.b16 %v1405, %v1401
        %v1686 = vpack.c.b16 %v1406, %v1402
        %v1687 = vpack.c.b16 %v1411, %v1407
        %v1688 = vpack.c.b16 %v1412, %v1408
        %v1689 = vpack.c.b16 %v1413, %v1409
        %v1690 = vpack.c.b16 %v1414, %v1410
        %v1691 = vpack.c.b16 %v1419, %v1415
        %v1692 = vpack.c.b16 %v1420, %v1416
        %v1693 = vpack.c.b16 %v1421, %v1417
        %v1694 = vpack.c.b16 %v1422, %v1418
        %v1695 = vpack.c.b16 %v1427, %v1423
        %v1696 = vpack.c.b16 %v1428, %v1424
        %v1697 = vpack.c.b16 %v1429, %v1425
        %v1698 = vpack.c.b16 %v1430, %v1426
        %v1699 = vpack.c.b16 %v1435, %v1431
        %v1700 = vpack.c.b16 %v1436, %v1432
        %v1701 = vpack.c.b16 %v1437, %v1433
        %v1702 = vpack.c.b16 %v1438, %v1434
        %v1703 = vpack.c.b16 %v1443, %v1439
        %v1704 = vpack.c.b16 %v1444, %v1440
        %v1705 = vpack.c.b16 %v1445, %v1441
        %v1706 = vpack.c.b16 %v1446, %v1442
        %v1707 = vpack.c.b16 %v1451, %v1447
        %v1708 = vpack.c.b16 %v1452, %v1448
        %v1709 = vpack.c.b16 %v1453, %v1449
        %v1710 = vpack.c.b16 %v1454, %v1450
        %v1711 = vpack.c.b16 %v1459, %v1455
        %v1712 = vpack.c.b16 %v1460, %v1456
        %v1713 = vpack.c.b16 %v1461, %v1457
        %v1714 = vpack.c.b16 %v1462, %v1458
        %v1715 = vpack.c.b16 %v1467, %v1463
        %v1716 = vpack.c.b16 %v1468, %v1464
        %v1717 = vpack.c.b16 %v1469, %v1465
        %v1718 = vpack.c.b16 %v1470, %v1466
        %v1719 = vpack.c.b16 %v1475, %v1471
        %v1720 = vpack.c.b16 %v1476, %v1472
        %v1721 = vpack.c.b16 %v1477, %v1473
        %v1722 = vpack.c.b16 %v1478, %v1474
        %v1723 = vpack.c.b16 %v1483, %v1479
        %v1724 = vpack.c.b16 %v1484, %v1480
        %v1725 = vpack.c.b16 %v1485, %v1481
        %v1726 = vpack.c.b16 %v1486, %v1482
        %v1727 = vpack.c.b16 %v1491, %v1487
        %v1728 = vpack.c.b16 %v1492, %v1488
        %v1729 = vpack.c.b16 %v1493, %v1489
        %v1730 = vpack.c.b16 %v1494, %v1490
        %v1731 = vpack.c.b16 %v1499, %v1495
        %v1732 = vpack.c.b16 %v1500, %v1496
        %v1733 = vpack.c.b16 %v1501, %v1497
        %v1734 = vpack.c.b16 %v1502, %v1498
        %v1735 = vpack.c.b16 %v1507, %v1503
        %v1736 = vpack.c.b16 %v1508, %v1504
        %v1737 = vpack.c.b16 %v1509, %v1505
        %v1738 = vpack.c.b16 %v1510, %v1506
        %v1739 = vpack.c.b16 %v1515, %v1511
        %v1740 = vpack.c.b16 %v1516, %v1512
        %v1741 = vpack.c.b16 %v1517, %v1513
        %v1742 = vpack.c.b16 %v1518, %v1514
        %v1743 = vpack.c.b16 %v1523, %v1519
        %v1744 = vpack.c.b16 %v1524, %v1520
        %v1745 = vpack.c.b16 %v1525, %v1521
        %v1746 = vpack.c.b16 %v1526, %v1522
        %v1747 = vpack.c.b16 %v1531, %v1527
        %v1748 = vpack.c.b16 %v1532, %v1528
        %v1749 = vpack.c.b16 %v1533, %v1529
        %v1750 = vpack.c.b16 %v1534, %v1530
        %v1751 = vpack.c.b16 %v1539, %v1535
        %v1752 = vpack.c.b16 %v1540, %v1536
        %v1753 = vpack.c.b16 %v1541, %v1537
        %v1754 = vpack.c.b16 %v1542, %v1538
        %v1755 = vpack.c.b16 %v1547, %v1543
        %v1756 = vpack.c.b16 %v1548, %v1544
        %v1757 = vpack.c.b16 %v1549, %v1545
        %v1758 = vpack.c.b16 %v1550, %v1546
        %v1759 = vpack.c.b16 %v1555, %v1551
        %v1760 = vpack.c.b16 %v1556, %v1552
        %v1761 = vpack.c.b16 %v1557, %v1553
        %v1762 = vpack.c.b16 %v1558, %v1554
        %v1763 = vpack.c.b16 %v1563, %v1559
        %v1764 = vpack.c.b16 %v1564, %v1560
        %v1765 = vpack.c.b16 %v1565, %v1561
        %v1766 = vpack.c.b16 %v1566, %v1562
        %v1767 = vpack.c.b16 %v1571, %v1567
        %v1768 = vpack.c.b16 %v1572, %v1568
        %v1769 = vpack.c.b16 %v1573, %v1569
        %v1770 = vpack.c.b16 %v1574, %v1570
        %v1771 = vpack.c.b16 %v1579, %v1575
        %v1772 = vpack.c.b16 %v1580, %v1576
        %v1773 = vpack.c.b16 %v1581, %v1577
        %v1774 = vpack.c.b16 %v1582, %v1578
        %1967 = vmatprep.subr.bf16.mxu0 %v1584
        %1968 = vmatpush1.bf16.msra.mxu0 %v1583
        %1969 = vmatprep.subr.bf16.mxu0 %v1588
        %1970 = vmatpush1.bf16.msra.mxu0 %v1587
        %1971 = vmatprep.subr.bf16.mxu0 %v1592
        %1972 = vmatpush1.bf16.msra.mxu0 %v1591
        %1973 = vmatprep.subr.bf16.mxu0 %v1596
        %1974 = vmatpush1.bf16.msra.mxu0 %v1595
        %1975 = vmatprep.subr.bf16.mxu0 %v1600
        %1976 = vmatpush1.bf16.msra.mxu0 %v1599
        %1977 = vmatprep.subr.bf16.mxu0 %v1604
        %1978 = vmatpush1.bf16.msra.mxu0 %v1603
        %1979 = vmatprep.subr.bf16.mxu0 %v1608
        %1980 = vmatpush1.bf16.msra.mxu0 %v1607
        %1981 = vmatprep.subr.bf16.mxu0 %v1612
        %1982 = vmatpush1.bf16.msra.mxu0 %v1611
        %1983 = vmatprep.subr.bf16.mxu0 %v1616
        %1984 = vmatpush1.bf16.msra.mxu0 %v1615
        %1985 = vmatprep.subr.bf16.mxu0 %v1620
        %1986 = vmatpush1.bf16.msra.mxu0 %v1619
        %1987 = vmatprep.subr.bf16.mxu0 %v1624
        %1988 = vmatpush1.bf16.msra.mxu0 %v1623
        %1989 = vmatprep.subr.bf16.mxu0 %v1628
        %1990 = vmatpush1.bf16.msra.mxu0 %v1627
        %1991 = vmatprep.subr.bf16.mxu0 %v1632
        %1992 = vmatpush1.bf16.msra.mxu0 %v1631
        %1993 = vmatprep.subr.bf16.mxu0 %v1636
        %1994 = vmatpush1.bf16.msra.mxu0 %v1635
        %1995 = vmatprep.subr.bf16.mxu0 %v1640
        %1996 = vmatpush1.bf16.msra.mxu0 %v1639
        %1997 = vmatprep.subr.bf16.mxu0 %v1644
        %1998 = vmatpush1.bf16.msra.mxu0 %v1643
        %1999 = vmatprep.mubr.bf16.mxu0 %v1002
        %2000 = vmatmul.mubr.bf16.gmra.mrb[0].mxu0 %v1001
        %v2001 = vpop.f32.mrb[0].mxu0
        %v2002 = vadd.f32 0.0, %v2001
        %v2003 = vpop.f32.mrb[0].mxu0
        %v2004 = vadd.f32 0.0, %v2003
        %v2005 = vpop.f32.mrb[0].mxu0
        %v2006 = vadd.f32 0.0, %v2005
        %v2007 = vpop.f32.mrb[0].mxu0
        %v2008 = vadd.f32 0.0, %v2007
        %2009 = vdwg.mxu0
        %2010 = vmatprep.subr.bf16.mxu0 %v1648
        %2011 = vmatpush1.bf16.msra.mxu0 %v1647
        %2012 = vmatprep.subr.bf16.mxu0 %v1652
        %2013 = vmatpush1.bf16.msra.mxu0 %v1651
        %2014 = vmatprep.subr.bf16.mxu0 %v1656
        %2015 = vmatpush1.bf16.msra.mxu0 %v1655
        %2016 = vmatprep.subr.bf16.mxu0 %v1660
        %2017 = vmatpush1.bf16.msra.mxu0 %v1659
        %2018 = vmatprep.subr.bf16.mxu0 %v1664
        %2019 = vmatpush1.bf16.msra.mxu0 %v1663
        %2020 = vmatprep.subr.bf16.mxu0 %v1668
        %2021 = vmatpush1.bf16.msra.mxu0 %v1667
        %2022 = vmatprep.subr.bf16.mxu0 %v1672
        %2023 = vmatpush1.bf16.msra.mxu0 %v1671
        %2024 = vmatprep.subr.bf16.mxu0 %v1676
        %2025 = vmatpush1.bf16.msra.mxu0 %v1675
        %2026 = vmatprep.subr.bf16.mxu0 %v1680
        %2027 = vmatpush1.bf16.msra.mxu0 %v1679
        %2028 = vmatprep.subr.bf16.mxu0 %v1684
        %2029 = vmatpush1.bf16.msra.mxu0 %v1683
        %2030 = vmatprep.subr.bf16.mxu0 %v1688
        %2031 = vmatpush1.bf16.msra.mxu0 %v1687
        %2032 = vmatprep.subr.bf16.mxu0 %v1692
        %2033 = vmatpush1.bf16.msra.mxu0 %v1691
        %2034 = vmatprep.subr.bf16.mxu0 %v1696
        %2035 = vmatpush1.bf16.msra.mxu0 %v1695
        %2036 = vmatprep.subr.bf16.mxu0 %v1700
        %2037 = vmatpush1.bf16.msra.mxu0 %v1699
        %2038 = vmatprep.subr.bf16.mxu0 %v1704
        %2039 = vmatpush1.bf16.msra.mxu0 %v1703
        %2040 = vmatprep.subr.bf16.mxu0 %v1708
        %2041 = vmatpush1.bf16.msra.mxu0 %v1707
        %2042 = vmatprep.mubr.bf16.mxu0 %v1004
        %2043 = vmatmul.mubr.bf16.gmra.mrb[0].mxu0 %v1003
        %v2044 = vpop.f32.mrb[0].mxu0
        %v2045 = vadd.f32 %v2002, %v2044
        %v2046 = vpop.f32.mrb[0].mxu0
        %v2047 = vadd.f32 %v2004, %v2046
        %v2048 = vpop.f32.mrb[0].mxu0
        %v2049 = vadd.f32 %v2006, %v2048
        %v2050 = vpop.f32.mrb[0].mxu0
        %v2051 = vadd.f32 %v2008, %v2050
        %2052 = vdwg.mxu0
        %2053 = vmatprep.subr.bf16.mxu0 %v1712
        %2054 = vmatpush1.bf16.msra.mxu0 %v1711
        %2055 = vmatprep.subr.bf16.mxu0 %v1716
        %2056 = vmatpush1.bf16.msra.mxu0 %v1715
        %2057 = vmatprep.subr.bf16.mxu0 %v1720
        %2058 = vmatpush1.bf16.msra.mxu0 %v1719
        %2059 = vmatprep.subr.bf16.mxu0 %v1724
        %2060 = vmatpush1.bf16.msra.mxu0 %v1723
        %2061 = vmatprep.subr.bf16.mxu0 %v1728
        %2062 = vmatpush1.bf16.msra.mxu0 %v1727
        %2063 = vmatprep.subr.bf16.mxu0 %v1732
        %2064 = vmatpush1.bf16.msra.mxu0 %v1731
        %2065 = vmatprep.subr.bf16.mxu0 %v1736
        %2066 = vmatpush1.bf16.msra.mxu0 %v1735
        %2067 = vmatprep.subr.bf16.mxu0 %v1740
        %2068 = vmatpush1.bf16.msra.mxu0 %v1739
        %2069 = vmatprep.subr.bf16.mxu0 %v1744
        %2070 = vmatpush1.bf16.msra.mxu0 %v1743
        %2071 = vmatprep.subr.bf16.mxu0 %v1748
        %2072 = vmatpush1.bf16.msra.mxu0 %v1747
        %2073 = vmatprep.subr.bf16.mxu0 %v1752
        %2074 = vmatpush1.bf16.msra.mxu0 %v1751
        %2075 = vmatprep.subr.bf16.mxu0 %v1756
        %2076 = vmatpush1.bf16.msra.mxu0 %v1755
        %2077 = vmatprep.subr.bf16.mxu0 %v1760
        %2078 = vmatpush1.bf16.msra.mxu0 %v1759
        %2079 = vmatprep.subr.bf16.mxu0 %v1764
        %2080 = vmatpush1.bf16.msra.mxu0 %v1763
        %2081 = vmatprep.subr.bf16.mxu0 %v1768
        %2082 = vmatpush1.bf16.msra.mxu0 %v1767
        %2083 = vmatprep.subr.bf16.mxu0 %v1772
        %2084 = vmatpush1.bf16.msra.mxu0 %v1771
        %2085 = vmatprep.mubr.bf16.mxu0 %v1006
        %2086 = vmatmul.mubr.bf16.gmra.mrb[0].mxu0 %v1005
        %v2087 = vpop.f32.mrb[0].mxu0
        %v2088 = vadd.f32 %v2045, %v2087
        %v2089 = vpop.f32.mrb[0].mxu0
        %v2090 = vadd.f32 %v2047, %v2089
        %v2091 = vpop.f32.mrb[0].mxu0
        %v2092 = vadd.f32 %v2049, %v2091
        %v2093 = vpop.f32.mrb[0].mxu0
        %v2094 = vadd.f32 %v2051, %v2093
        %2095 = vdwg.mxu0
        %2096 = vmatprep.subr.bf16.mxu0 %v1586
        %2097 = vmatpush1.bf16.msra.mxu0 %v1585
        %2098 = vmatprep.subr.bf16.mxu0 %v1590
        %2099 = vmatpush1.bf16.msra.mxu0 %v1589
        %2100 = vmatprep.subr.bf16.mxu0 %v1594
        %2101 = vmatpush1.bf16.msra.mxu0 %v1593
        %2102 = vmatprep.subr.bf16.mxu0 %v1598
        %2103 = vmatpush1.bf16.msra.mxu0 %v1597
        %2104 = vmatprep.subr.bf16.mxu0 %v1602
        %2105 = vmatpush1.bf16.msra.mxu0 %v1601
        %2106 = vmatprep.subr.bf16.mxu0 %v1606
        %2107 = vmatpush1.bf16.msra.mxu0 %v1605
        %2108 = vmatprep.subr.bf16.mxu0 %v1610
        %2109 = vmatpush1.bf16.msra.mxu0 %v1609
        %2110 = vmatprep.subr.bf16.mxu0 %v1614
        %2111 = vmatpush1.bf16.msra.mxu0 %v1613
        %2112 = vmatprep.subr.bf16.mxu0 %v1618
        %2113 = vmatpush1.bf16.msra.mxu0 %v1617
        %2114 = vmatprep.subr.bf16.mxu0 %v1622
        %2115 = vmatpush1.bf16.msra.mxu0 %v1621
        %2116 = vmatprep.subr.bf16.mxu0 %v1626
        %2117 = vmatpush1.bf16.msra.mxu0 %v1625
        %2118 = vmatprep.subr.bf16.mxu0 %v1630
        %2119 = vmatpush1.bf16.msra.mxu0 %v1629
        %2120 = vmatprep.subr.bf16.mxu0 %v1634
        %2121 = vmatpush1.bf16.msra.mxu0 %v1633
        %2122 = vmatprep.subr.bf16.mxu0 %v1638
        %2123 = vmatpush1.bf16.msra.mxu0 %v1637
        %2124 = vmatprep.subr.bf16.mxu0 %v1642
        %2125 = vmatpush1.bf16.msra.mxu0 %v1641
        %2126 = vmatprep.subr.bf16.mxu0 %v1646
        %2127 = vmatpush1.bf16.msra.mxu0 %v1645
        %2128 = vmatprep.mubr.bf16.mxu0 %v1002
        %2129 = vmatmul.mubr.bf16.gmra.mrb[0].mxu0 %v1001
        %v2130 = vpop.f32.mrb[0].mxu0
        %v2131 = vadd.f32 0.0, %v2130
        %v2132 = vpop.f32.mrb[0].mxu0
        %v2133 = vadd.f32 0.0, %v2132
        %v2134 = vpop.f32.mrb[0].mxu0
        %v2135 = vadd.f32 0.0, %v2134
        %v2136 = vpop.f32.mrb[0].mxu0
        %v2137 = vadd.f32 0.0, %v2136
        %2138 = vdwg.mxu0
        %2139 = vmatprep.subr.bf16.mxu0 %v1650
        %2140 = vmatpush1.bf16.msra.mxu0 %v1649
        %2141 = vmatprep.subr.bf16.mxu0 %v1654
        %2142 = vmatpush1.bf16.msra.mxu0 %v1653
        %2143 = vmatprep.subr.bf16.mxu0 %v1658
        %2144 = vmatpush1.bf16.msra.mxu0 %v1657
        %2145 = vmatprep.subr.bf16.mxu0 %v1662
        %2146 = vmatpush1.bf16.msra.mxu0 %v1661
        %2147 = vmatprep.subr.bf16.mxu0 %v1666
        %2148 = vmatpush1.bf16.msra.mxu0 %v1665
        %2149 = vmatprep.subr.bf16.mxu0 %v1670
        %2150 = vmatpush1.bf16.msra.mxu0 %v1669
        %2151 = vmatprep.subr.bf16.mxu0 %v1674
        %2152 = vmatpush1.bf16.msra.mxu0 %v1673
        %2153 = vmatprep.subr.bf16.mxu0 %v1678
        %2154 = vmatpush1.bf16.msra.mxu0 %v1677
        %2155 = vmatprep.subr.bf16.mxu0 %v1682
        %2156 = vmatpush1.bf16.msra.mxu0 %v1681
        %2157 = vmatprep.subr.bf16.mxu0 %v1686
        %2158 = vmatpush1.bf16.msra.mxu0 %v1685
        %2159 = vmatprep.subr.bf16.mxu0 %v1690
        %2160 = vmatpush1.bf16.msra.mxu0 %v1689
        %2161 = vmatprep.subr.bf16.mxu0 %v1694
        %2162 = vmatpush1.bf16.msra.mxu0 %v1693
        %2163 = vmatprep.subr.bf16.mxu0 %v1698
        %2164 = vmatpush1.bf16.msra.mxu0 %v1697
        %2165 = vmatprep.subr.bf16.mxu0 %v1702
        %2166 = vmatpush1.bf16.msra.mxu0 %v1701
        %2167 = vmatprep.subr.bf16.mxu0 %v1706
        %2168 = vmatpush1.bf16.msra.mxu0 %v1705
        %2169 = vmatprep.subr.bf16.mxu0 %v1710
        %2170 = vmatpush1.bf16.msra.mxu0 %v1709
        %2171 = vmatprep.mubr.bf16.mxu0 %v1004
        %2172 = vmatmul.mubr.bf16.gmra.mrb[0].mxu0 %v1003
        %v2173 = vpop.f32.mrb[0].mxu0
        %v2174 = vadd.f32 %v2131, %v2173
        %v2175 = vpop.f32.mrb[0].mxu0
        %v2176 = vadd.f32 %v2133, %v2175
        %v2177 = vpop.f32.mrb[0].mxu0
        %v2178 = vadd.f32 %v2135, %v2177
        %v2179 = vpop.f32.mrb[0].mxu0
        %v2180 = vadd.f32 %v2137, %v2179
        %2181 = vdwg.mxu0
        %2182 = vmatprep.subr.bf16.mxu0 %v1714
        %2183 = vmatpush1.bf16.msra.mxu0 %v1713
        %2184 = vmatprep.subr.bf16.mxu0 %v1718
        %2185 = vmatpush1.bf16.msra.mxu0 %v1717
        %2186 = vmatprep.subr.bf16.mxu0 %v1722
        %2187 = vmatpush1.bf16.msra.mxu0 %v1721
        %2188 = vmatprep.subr.bf16.mxu0 %v1726
        %2189 = vmatpush1.bf16.msra.mxu0 %v1725
        %2190 = vmatprep.subr.bf16.mxu0 %v1730
        %2191 = vmatpush1.bf16.msra.mxu0 %v1729
        %2192 = vmatprep.subr.bf16.mxu0 %v1734
        %2193 = vmatpush1.bf16.msra.mxu0 %v1733
        %2194 = vmatprep.subr.bf16.mxu0 %v1738
        %2195 = vmatpush1.bf16.msra.mxu0 %v1737
        %2196 = vmatprep.subr.bf16.mxu0 %v1742
        %2197 = vmatpush1.bf16.msra.mxu0 %v1741
        %2198 = vmatprep.subr.bf16.mxu0 %v1746
        %2199 = vmatpush1.bf16.msra.mxu0 %v1745
        %2200 = vmatprep.subr.bf16.mxu0 %v1750
        %2201 = vmatpush1.bf16.msra.mxu0 %v1749
        %2202 = vmatprep.subr.bf16.mxu0 %v1754
        %2203 = vmatpush1.bf16.msra.mxu0 %v1753
        %2204 = vmatprep.subr.bf16.mxu0 %v1758
        %2205 = vmatpush1.bf16.msra.mxu0 %v1757
        %2206 = vmatprep.subr.bf16.mxu0 %v1762
        %2207 = vmatpush1.bf16.msra.mxu0 %v1761
        %2208 = vmatprep.subr.bf16.mxu0 %v1766
        %2209 = vmatpush1.bf16.msra.mxu0 %v1765
        %2210 = vmatprep.subr.bf16.mxu0 %v1770
        %2211 = vmatpush1.bf16.msra.mxu0 %v1769
        %2212 = vmatprep.subr.bf16.mxu0 %v1774
        %2213 = vmatpush1.bf16.msra.mxu0 %v1773
        %2214 = vmatprep.mubr.bf16.mxu0 %v1006
        %2215 = vmatmul.mubr.bf16.gmra.mrb[0].mxu0 %v1005
        %v2216 = vpop.f32.mrb[0].mxu0
        %v2217 = vadd.f32 %v2174, %v2216
        %v2218 = vpop.f32.mrb[0].mxu0
        %v2219 = vadd.f32 %v2176, %v2218
        %v2220 = vpop.f32.mrb[0].mxu0
        %v2221 = vadd.f32 %v2178, %v2220
        %v2222 = vpop.f32.mrb[0].mxu0
        %v2223 = vadd.f32 %v2180, %v2222
        %2224 = vdwg.mxu0
        %vm2225 = vcmp.ge.s32.totalorder %v662, 32
        %vm2226 = vmand %vm2225, %vm664
        %v2227 = vtanh.pop %v2219
        %v2228 = vtanh.pop %v2223
        %vm2229 = vcmp.ge.s32.totalorder %v662, 96
        %v2230 = vsub.f32 0.0, %v2219
        %v2231 = vsub.f32 0.0, %v2223
        %v2232 = vmul.f32 %v2230, 1.442695
        %v2233 = vpow.pop %v2232
        %v2234 = vmul.f32 %v2231, 1.442695
        %v2235 = vpow.pop %v2234
        %v2236 = vadd.f32 %v2233, 1.0
        %v2237 = vadd.f32 %v2235, 1.0
        %v2238 = vrcp.pop %v2236
        %v2239 = vrcp.pop %v2237
        %v2240 = vsel %vm2229, %v2238, %v2219
        %v2241 = vsel %vm2229, %v2239, %v2223
        %v2242 = vsel %vm2226, %v2227, %v2240
        %v2243 = vsel %vm2226, %v2228, %v2241
        %v2244 = vld [vmem:[%s563] sm:$0xff]
        %v2245 = vld [vmem:[%s563 + $0x8] sm:$0xff]
        %v2246 = vld [vmem:[%s563 + $0x10] sm:$0xff]
        %v2247 = vld [vmem:[%s563 + $0x18] sm:$0xff]
        %v2248 = vld [vmem:[%s563 + $0x20] sm:$0xff]
        %v2249 = vld [vmem:[%s563 + $0x28] sm:$0xff]
        %v2250 = vld [vmem:[%s563 + $0x30] sm:$0xff]
        %v2251 = vld [vmem:[%s563 + $0x38] sm:$0xff]
        %v2252 = vld [vmem:[%s563 + $0x40] sm:$0xff]
        %v2253 = vld [vmem:[%s563 + $0x48] sm:$0xff]
        %v2254 = vld [vmem:[%s563 + $0x50] sm:$0xff]
        %v2255 = vld [vmem:[%s563 + $0x58] sm:$0xff]
        %v2256 = vld [vmem:[%s563 + $0x60] sm:$0xff]
        %v2257 = vld [vmem:[%s563 + $0x68] sm:$0xff]
        %v2258 = vld [vmem:[%s563 + $0x70] sm:$0xff]
        %v2259 = vld [vmem:[%s563 + $0x78] sm:$0xff]
        %v2260 = vld [vmem:[%s563 + $0x80] sm:$0xff]
        %v2261 = vld [vmem:[%s563 + $0x88] sm:$0xff]
        %v2262 = vld [vmem:[%s563 + $0x90] sm:$0xff]
        %v2263 = vld [vmem:[%s563 + $0x98] sm:$0xff]
        %v2264 = vld [vmem:[%s563 + $0xa0] sm:$0xff]
        %v2265 = vld [vmem:[%s563 + $0xa8] sm:$0xff]
        %v2266 = vld [vmem:[%s563 + $0xb0] sm:$0xff]
        %v2267 = vld [vmem:[%s563 + $0xb8] sm:$0xff]
        %v2268 = vld [vmem:[%s563 + $0xc0] sm:$0xff]
        %v2269 = vld [vmem:[%s563 + $0xc8] sm:$0xff]
        %v2270 = vld [vmem:[%s563 + $0xd0] sm:$0xff]
        %v2271 = vld [vmem:[%s563 + $0xd8] sm:$0xff]
        %v2272 = vld [vmem:[%s563 + $0xe0] sm:$0xff]
        %v2273 = vld [vmem:[%s563 + $0xe8] sm:$0xff]
        %v2274 = vld [vmem:[%s563 + $0xf0] sm:$0xff]
        %v2275 = vld [vmem:[%s563 + $0xf8] sm:$0xff]
        %v2276 = vpack.c.bf16 %v2243, %v2242
        %v2309 = vunpack.c.l.b16 %v2244
        %v2310 = vunpack.c.h.b16 %v2244
        %v2311 = vunpack.c.l.b16 %v2245
        %v2312 = vunpack.c.h.b16 %v2245
        %v2313 = vunpack.c.l.b16 %v2246
        %v2314 = vunpack.c.h.b16 %v2246
        %v2315 = vunpack.c.l.b16 %v2247
        %v2316 = vunpack.c.h.b16 %v2247
        %v2317 = vunpack.c.l.b16 %v2248
        %v2318 = vunpack.c.h.b16 %v2248
        %v2319 = vunpack.c.l.b16 %v2249
        %v2320 = vunpack.c.h.b16 %v2249
        %v2321 = vunpack.c.l.b16 %v2250
        %v2322 = vunpack.c.h.b16 %v2250
        %v2323 = vunpack.c.l.b16 %v2251
        %v2324 = vunpack.c.h.b16 %v2251
        %v2325 = vunpack.c.l.b16 %v2252
        %v2326 = vunpack.c.h.b16 %v2252
        %v2327 = vunpack.c.l.b16 %v2253
        %v2328 = vunpack.c.h.b16 %v2253
        %v2329 = vunpack.c.l.b16 %v2254
        %v2330 = vunpack.c.h.b16 %v2254
        %v2331 = vunpack.c.l.b16 %v2255
        %v2332 = vunpack.c.h.b16 %v2255
        %v2333 = vunpack.c.l.b16 %v2256
        %v2334 = vunpack.c.h.b16 %v2256
        %v2335 = vunpack.c.l.b16 %v2257
        %v2336 = vunpack.c.h.b16 %v2257
        %v2337 = vunpack.c.l.b16 %v2258
        %v2338 = vunpack.c.h.b16 %v2258
        %v2339 = vunpack.c.l.b16 %v2259
        %v2340 = vunpack.c.h.b16 %v2259
        %v2341 = vunpack.c.l.b16 %v2260
        %v2342 = vunpack.c.h.b16 %v2260
        %v2343 = vunpack.c.l.b16 %v2261
        %v2344 = vunpack.c.h.b16 %v2261
        %v2345 = vunpack.c.l.b16 %v2262
        %v2346 = vunpack.c.h.b16 %v2262
        %v2347 = vunpack.c.l.b16 %v2263
        %v2348 = vunpack.c.h.b16 %v2263
        %v2349 = vunpack.c.l.b16 %v2264
        %v2350 = vunpack.c.h.b16 %v2264
        %v2351 = vunpack.c.l.b16 %v2265
        %v2352 = vunpack.c.h.b16 %v2265
        %v2353 = vunpack.c.l.b16 %v2266
        %v2354 = vunpack.c.h.b16 %v2266
        %v2355 = vunpack.c.l.b16 %v2267
        %v2356 = vunpack.c.h.b16 %v2267
        %v2357 = vunpack.c.l.b16 %v2268
        %v2358 = vunpack.c.h.b16 %v2268
        %v2359 = vunpack.c.l.b16 %v2269
        %v2360 = vunpack.c.h.b16 %v2269
        %v2361 = vunpack.c.l.b16 %v2270
        %v2362 = vunpack.c.h.b16 %v2270
        %v2363 = vunpack.c.l.b16 %v2271
        %v2364 = vunpack.c.h.b16 %v2271
        %v2365 = vunpack.c.l.b16 %v2272
        %v2366 = vunpack.c.h.b16 %v2272
        %v2367 = vunpack.c.l.b16 %v2273
        %v2368 = vunpack.c.h.b16 %v2273
        %v2369 = vunpack.c.l.b16 %v2274
        %v2370 = vunpack.c.h.b16 %v2274
        %v2371 = vunpack.c.l.b16 %v2275
        %v2372 = vunpack.c.h.b16 %v2275
        %v2373 = vpack.c.b16 %v2313, %v2309
        %v2374 = vpack.c.b16 %v2314, %v2310
        %v2375 = vpack.c.b16 %v2315, %v2311
        %v2376 = vpack.c.b16 %v2316, %v2312
        %v2377 = vpack.c.b16 %v2321, %v2317
        %v2378 = vpack.c.b16 %v2322, %v2318
        %v2379 = vpack.c.b16 %v2323, %v2319
        %v2380 = vpack.c.b16 %v2324, %v2320
        %v2381 = vpack.c.b16 %v2329, %v2325
        %v2382 = vpack.c.b16 %v2330, %v2326
        %v2383 = vpack.c.b16 %v2331, %v2327
        %v2384 = vpack.c.b16 %v2332, %v2328
        %v2385 = vpack.c.b16 %v2337, %v2333
        %v2386 = vpack.c.b16 %v2338, %v2334
        %v2387 = vpack.c.b16 %v2339, %v2335
        %v2388 = vpack.c.b16 %v2340, %v2336
        %v2389 = vpack.c.b16 %v2345, %v2341
        %v2390 = vpack.c.b16 %v2346, %v2342
        %v2391 = vpack.c.b16 %v2347, %v2343
        %v2392 = vpack.c.b16 %v2348, %v2344
        %v2393 = vpack.c.b16 %v2353, %v2349
        %v2394 = vpack.c.b16 %v2354, %v2350
        %v2395 = vpack.c.b16 %v2355, %v2351
        %v2396 = vpack.c.b16 %v2356, %v2352
        %v2397 = vpack.c.b16 %v2361, %v2357
        %v2398 = vpack.c.b16 %v2362, %v2358
        %v2399 = vpack.c.b16 %v2363, %v2359
        %v2400 = vpack.c.b16 %v2364, %v2360
        %v2401 = vpack.c.b16 %v2369, %v2365
        %v2402 = vpack.c.b16 %v2370, %v2366
        %v2403 = vpack.c.b16 %v2371, %v2367
        %v2404 = vpack.c.b16 %v2372, %v2368
        %2437 = vmatprep.subr.bf16.mxu0 %v2374
        %2438 = vmatpush1.bf16.msra.mxu0 %v2373
        %2439 = vmatprep.subr.bf16.mxu0 %v2378
        %2440 = vmatpush1.bf16.msra.mxu0 %v2377
        %2441 = vmatprep.subr.bf16.mxu0 %v2382
        %2442 = vmatpush1.bf16.msra.mxu0 %v2381
        %2443 = vmatprep.subr.bf16.mxu0 %v2386
        %2444 = vmatpush1.bf16.msra.mxu0 %v2385
        %2445 = vmatprep.subr.bf16.mxu0 %v2390
        %2446 = vmatpush1.bf16.msra.mxu0 %v2389
        %2447 = vmatprep.subr.bf16.mxu0 %v2394
        %2448 = vmatpush1.bf16.msra.mxu0 %v2393
        %2449 = vmatprep.subr.bf16.mxu0 %v2398
        %2450 = vmatpush1.bf16.msra.mxu0 %v2397
        %2451 = vmatprep.subr.bf16.mxu0 %v2402
        %2452 = vmatpush1.bf16.msra.mxu0 %v2401
        %2453 = vmatprep.subr.bf16.mxu0 0
        %2454 = vmatpush1.bf16.msra.mxu0 0
        %2455 = vmatprep.subr.bf16.mxu0 0
        %2456 = vmatpush1.bf16.msra.mxu0 0
        %2457 = vmatprep.subr.bf16.mxu0 0
        %2458 = vmatpush1.bf16.msra.mxu0 0
        %2459 = vmatprep.subr.bf16.mxu0 0
        %2460 = vmatpush1.bf16.msra.mxu0 0
        %2461 = vmatprep.subr.bf16.mxu0 0
        %2462 = vmatpush1.bf16.msra.mxu0 0
        %2463 = vmatprep.subr.bf16.mxu0 0
        %2464 = vmatpush1.bf16.msra.mxu0 0
        %2465 = vmatprep.subr.bf16.mxu0 0
        %2466 = vmatpush1.bf16.msra.mxu0 0
        %2467 = vmatprep.subr.bf16.mxu0 0
        %2468 = vmatpush1.bf16.msra.mxu0 0
        %2469 = vmatprep.mubr.bf16.mxu0 0
        %2470 = vmatmul.mubr.bf16.gmra.mrb[0].mxu0 %v2276
        %v2471 = vpop.f32.mrb[0].mxu0
        %v2472 = vadd.f32 0.0, %v2471
        %v2473 = vpop.f32.mrb[0].mxu0
        %v2474 = vadd.f32 0.0, %v2473
        %v2475 = vpop.f32.mrb[0].mxu0
        %v2476 = vadd.f32 0.0, %v2475
        %v2477 = vpop.f32.mrb[0].mxu0
        %v2478 = vadd.f32 0.0, %v2477
        %2479 = vdwg.mxu0
        %2480 = vmatprep.subr.bf16.mxu0 %v2376
        %2481 = vmatpush1.bf16.msra.mxu0 %v2375
        %2482 = vmatprep.subr.bf16.mxu0 %v2380
        %2483 = vmatpush1.bf16.msra.mxu0 %v2379
        %2484 = vmatprep.subr.bf16.mxu0 %v2384
        %2485 = vmatpush1.bf16.msra.mxu0 %v2383
        %2486 = vmatprep.subr.bf16.mxu0 %v2388
        %2487 = vmatpush1.bf16.msra.mxu0 %v2387
        %2488 = vmatprep.subr.bf16.mxu0 %v2392
        %2489 = vmatpush1.bf16.msra.mxu0 %v2391
        %2490 = vmatprep.subr.bf16.mxu0 %v2396
        %2491 = vmatpush1.bf16.msra.mxu0 %v2395
        %2492 = vmatprep.subr.bf16.mxu0 %v2400
        %2493 = vmatpush1.bf16.msra.mxu0 %v2399
        %2494 = vmatprep.subr.bf16.mxu0 %v2404
        %2495 = vmatpush1.bf16.msra.mxu0 %v2403
        %2496 = vmatprep.subr.bf16.mxu0 0
        %2497 = vmatpush1.bf16.msra.mxu0 0
        %2498 = vmatprep.subr.bf16.mxu0 0
        %2499 = vmatpush1.bf16.msra.mxu0 0
        %2500 = vmatprep.subr.bf16.mxu0 0
        %2501 = vmatpush1.bf16.msra.mxu0 0
        %2502 = vmatprep.subr.bf16.mxu0 0
        %2503 = vmatpush1.bf16.msra.mxu0 0
        %2504 = vmatprep.subr.bf16.mxu0 0
        %2505 = vmatpush1.bf16.msra.mxu0 0
        %2506 = vmatprep.subr.bf16.mxu0 0
        %2507 = vmatpush1.bf16.msra.mxu0 0
        %2508 = vmatprep.subr.bf16.mxu0 0
        %2509 = vmatpush1.bf16.msra.mxu0 0
        %2510 = vmatprep.subr.bf16.mxu0 0
        %2511 = vmatpush1.bf16.msra.mxu0 0
        %2512 = vmatprep.mubr.bf16.mxu0 0
        %2513 = vmatmul.mubr.bf16.gmra.mrb[0].mxu0 %v2276
        %v2514 = vpop.f32.mrb[0].mxu0
        %v2515 = vadd.f32 0.0, %v2514
        %v2516 = vpop.f32.mrb[0].mxu0
        %v2517 = vadd.f32 0.0, %v2516
        %v2518 = vpop.f32.mrb[0].mxu0
        %v2519 = vadd.f32 0.0, %v2518
        %v2520 = vpop.f32.mrb[0].mxu0
        %v2521 = vadd.f32 0.0, %v2520
        %2522 = vdwg.mxu0
        %v2523 = vlaneseq
        %v2524 = vshrl.u32 %v2523, 7
        %v2525 = vsub.s32 7, %v2524
        %v2526 = vrot.slane %v673, %v2525
        %v2527 = vadd.f32 %v2526, %v2474
        %v2528 = vadd.f32 %v2526, %v2478
        %v2529 = vsub.f32 0.0, %v2527
        %v2530 = vsub.f32 0.0, %v2528
        %v2531 = vmax.f32 %v2529, 0.0
        %v2532 = vmax.f32 %v2530, 0.0
        %v2533 = vand.u32 2147483647, %v2529
        %v2534 = vand.u32 2147483647, %v2530
        %v2535 = vsub.f32 0.0, %v2533
        %v2536 = vsub.f32 0.0, %v2534
        %v2537 = vmul.f32 %v2535, 1.442695
        %v2538 = vpow.pop %v2537
        %v2539 = vmul.f32 %v2536, 1.442695
        %v2540 = vpow.pop %v2539
        %v2541 = vadd.f32 %v2538, 1.0
        %v2542 = vadd.f32 %v2540, 1.0
        %v2543 = vlog2.pop %v2541
        %v2544 = vmul.f32 %v2543, 0.6931472
        %v2545 = vlog2.pop %v2542
        %v2546 = vmul.f32 %v2545, 0.6931472
        %v2547 = vadd.f32 %v2531, %v2544
        %v2548 = vadd.f32 %v2532, %v2546
        %v2549 = vsub.f32 0.0, %v2547
        %v2550 = vsub.f32 0.0, %v2548
        %v2551 = vsub.f32 %v2549, 0.5
        %v2552 = vsub.f32 %v2550, 0.5
        %v2553 = vmul.f32 %v2551, 1.442695
        %v2554 = vpow.pop %v2553
        %v2555 = vmul.f32 %v2552, 1.442695
        %v2556 = vpow.pop %v2555
        %v2557 = vsub.f32 0.0, %v2554
        %v2558 = vsub.f32 0.0, %v2556
        %v2559 = vmul.f32 %v2557, 1.442695
        %v2560 = vpow.pop %v2559
        %v2561 = vmul.f32 %v2558, 1.442695
        %v2562 = vpow.pop %v2561
        %v2563 = vlaneseq
        %v2564 = vshrl.u32 %v2563, 7
        %v2565 = vsub.s32 0, %v2564
        %v2566 = vrot.slane %v674, %v2565
        %v2567 = vadd.f32 %v2566, %v2515
        %v2568 = vadd.f32 %v2566, %v2519
        %v2569 = vsub.f32 0.0, %v2567
        %v2570 = vsub.f32 0.0, %v2568
        %v2571 = vmul.f32 %v2569, 1.442695
        %v2572 = vpow.pop %v2571
        %v2573 = vmul.f32 %v2570, 1.442695
        %v2574 = vpow.pop %v2573
        %v2575 = vadd.f32 %v2572, 1.0
        %v2576 = vadd.f32 %v2574, 1.0
        %v2577 = vrcp.pop %v2575
        %v2578 = vrcp.pop %v2576
        // Predicated region
        $region113: #{hybrid_forward.1} parent=67 // pred_check
          %p2579 = pneg %p660
        $region114: #{hybrid_forward.1} parent=67 // pred_check_branch
          %2581 = sbr.rel (%p2579) target = $region116
        $region115: #{hybrid_forward.1} parent=67 // pred_region
          %2582 = vst [vmem:[#allocation3] sm:$0xff] %v2217
          %2583 = vst [vmem:[#allocation3 + $0x8] sm:$0xff] %v2221
        $region116: #{hybrid_forward.1} parent=67 // pred_fallthru
          _
        %v2584 = vld [vmem:[#allocation3] sm:$0xff]
        %v2585 = vld [vmem:[#allocation3 + $0x8] sm:$0xff]
        %v2586 = vsub.f32 %v2584, %v2217
        %v2587 = vsub.f32 %v2585, %v2221
        %v2588 = vlaneseq
        %v2589 = vshrl.u32 %v2588, 7
        %v2590 = vsub.s32 1, %v2589
        %v2591 = vrot.slane %v674, %v2590
        %v2592 = vadd.f32 %v2591, %v2472
        %v2593 = vadd.f32 %v2591, %v2476
        %v2594 = vsub.f32 0.0, %v2592
        %v2595 = vsub.f32 0.0, %v2593
        %v2596 = vmul.f32 %v2594, 1.442695
        %v2597 = vpow.pop %v2596
        %v2598 = vmul.f32 %v2595, 1.442695
        %v2599 = vpow.pop %v2598
        %v2600 = vadd.f32 %v2597, 1.0
        %v2601 = vadd.f32 %v2599, 1.0
        %v2602 = vrcp.pop %v2600
        %v2603 = vrcp.pop %v2601
        %v2604 = vmul.f32 %v2586, %v2602
        %v2605 = vmul.f32 %v2587, %v2603
        %v2606 = vadd.f32 %v2217, %v2604
        %v2607 = vadd.f32 %v2221, %v2605
        %v2608 = vlaneseq
        %v2609 = vshrl.u32 %v2608, 7
        %v2610 = vsub.s32 2, %v2609
        %v2611 = vrot.slane %v674, %v2610
        %v2612 = vmul.f32 %v2090, %v2611
        %v2613 = vmul.f32 %v2094, %v2611
        %v2614 = vmul.f32 %v2612, %v2612
        %v2615 = vmul.f32 %v2613, %v2613
        %v2616 = vmul.f32 %v2614, %v667
        %v2617 = vmul.f32 %v2615, %v667
        %2618 = vadd.xlane.f32.xlu0 %v2616
        %v2619 = vpop.xlane.xlu0 %2618
        %2620 = vadd.xlane.f32.xlu0 %v2617
        %v2621 = vpop.xlane.xlu0 %2620
        %v2622 = vmul.f32 %v667, %v2619
        %v2623 = vmul.f32 %v667, %v2621
        %v2624 = vadd.f32 %v2622, 0.0
        %v2625 = vadd.f32 %v2623, 0.0
        %v2626 = vmul.f32 %v2614, %v672
        %v2627 = vmul.f32 %v2615, %v672
        %2628 = vadd.xlane.f32.xlu0 %v2626
        %v2629 = vpop.xlane.xlu0 %2628
        %2630 = vadd.xlane.f32.xlu0 %v2627
        %v2631 = vpop.xlane.xlu0 %2630
        %v2632 = vmul.f32 %v672, %v2629
        %v2633 = vmul.f32 %v672, %v2631
        %v2634 = vadd.f32 %v2624, %v2632
        %v2635 = vadd.f32 %v2625, %v2633
        %v2636 = vmax.f32 %v2634, 1e-24
        %v2637 = vmax.f32 %v2635, 1e-24
        %v2638 = vrsqrt.pop %v2636
        %v2639 = vrsqrt.pop %v2637
        %v2640 = vmul.f32 %v2612, %v2638
        %v2641 = vmul.f32 %v2613, %v2639
        %v2642 = vsub.f32 %v2577, 1.0
        %v2643 = vsub.f32 %v2578, 1.0
        %v2644 = vlaneseq
        %v2645 = vshrl.u32 %v2644, 7
        %v2646 = vsub.s32 3, %v2645
        %v2647 = vrot.slane %v674, %v2646
        %v2648 = vmul.f32 %v2642, %v2647
        %v2649 = vmul.f32 %v2643, %v2647
        %v2650 = vadd.f32 %v2648, 1.0
        %v2651 = vadd.f32 %v2649, 1.0
        %v2652 = vmul.f32 %v2090, %v2650
        %v2653 = vmul.f32 %v2094, %v2651
        %v2654 = vsub.f32 0.0, %v2640
        %v2655 = vsub.f32 0.0, %v2641
        %v2656 = vmul.f32 %v2640, %v2577
        %v2657 = vmul.f32 %v2641, %v2578
        %v2658 = vld [vmem:[#allocation9] sm:$0xff]
        %v2659 = vld [vmem:[#allocation9 + $0x8] sm:$0xff]
        %v2660 = vld [vmem:[#allocation9 + $0x10] sm:$0xff]
        %v2661 = vld [vmem:[#allocation9 + $0x18] sm:$0xff]
        %v2662 = vld [vmem:[#allocation9 + $0x20] sm:$0xff]
        %v2663 = vld [vmem:[#allocation9 + $0x28] sm:$0xff]
        %v2664 = vld [vmem:[#allocation9 + $0x30] sm:$0xff]
        %v2665 = vld [vmem:[#allocation9 + $0x38] sm:$0xff]
        %v2666 = vld [vmem:[#allocation9 + $0x40] sm:$0xff]
        %v2667 = vld [vmem:[#allocation9 + $0x48] sm:$0xff]
        %v2668 = vld [vmem:[#allocation9 + $0x50] sm:$0xff]
        %v2669 = vld [vmem:[#allocation9 + $0x58] sm:$0xff]
        %v2670 = vld [vmem:[#allocation9 + $0x60] sm:$0xff]
        %v2671 = vld [vmem:[#allocation9 + $0x68] sm:$0xff]
        %v2672 = vld [vmem:[#allocation9 + $0x70] sm:$0xff]
        %v2673 = vld [vmem:[#allocation9 + $0x78] sm:$0xff]
        %v2674 = vlaneseq
        %v2675 = vshrl.u32 %v2674, 7
        %v2676 = vsub.s32 0, %v2675
        %v2677 = vrot.slane %v2606, %v2676
        %v2678 = vlaneseq
        %v2679 = vshrl.u32 %v2678, 7
        %v2680 = vsub.s32 0, %v2679
        %v2681 = vrot.slane %v2607, %v2680
        %v2682 = vmul.f32 %v2658, %v2677
        %v2683 = vmul.f32 %v2659, %v2681
        %v2684 = vmul.f32 %v2660, %v2677
        %v2685 = vmul.f32 %v2661, %v2681
        %v2686 = vmul.f32 %v2662, %v2677
        %v2687 = vmul.f32 %v2663, %v2681
        %v2688 = vmul.f32 %v2664, %v2677
        %v2689 = vmul.f32 %v2665, %v2681
        %v2690 = vmul.f32 %v2666, %v2677
        %v2691 = vmul.f32 %v2667, %v2681
        %v2692 = vmul.f32 %v2668, %v2677
        %v2693 = vmul.f32 %v2669, %v2681
        %v2694 = vmul.f32 %v2670, %v2677
        %v2695 = vmul.f32 %v2671, %v2681
        %v2696 = vmul.f32 %v2672, %v2677
        %v2697 = vmul.f32 %v2673, %v2681
        %v2698 = vlaneseq
        %v2699 = vshrl.u32 %v2698, 7
        %v2700 = vsub.s32 1, %v2699
        %v2701 = vrot.slane %v2606, %v2700
        %v2702 = vlaneseq
        %v2703 = vshrl.u32 %v2702, 7
        %v2704 = vsub.s32 1, %v2703
        %v2705 = vrot.slane %v2607, %v2704
        %v2706 = vmul.f32 %v2658, %v2701
        %v2707 = vmul.f32 %v2659, %v2705
        %v2708 = vmul.f32 %v2660, %v2701
        %v2709 = vmul.f32 %v2661, %v2705
        %v2710 = vmul.f32 %v2662, %v2701
        %v2711 = vmul.f32 %v2663, %v2705
        %v2712 = vmul.f32 %v2664, %v2701
        %v2713 = vmul.f32 %v2665, %v2705
        %v2714 = vmul.f32 %v2666, %v2701
        %v2715 = vmul.f32 %v2667, %v2705
        %v2716 = vmul.f32 %v2668, %v2701
        %v2717 = vmul.f32 %v2669, %v2705
        %v2718 = vmul.f32 %v2670, %v2701
        %v2719 = vmul.f32 %v2671, %v2705
        %v2720 = vmul.f32 %v2672, %v2701
        %v2721 = vmul.f32 %v2673, %v2705
        %v2722 = vlaneseq
        %v2723 = vshrl.u32 %v2722, 7
        %v2724 = vsub.s32 2, %v2723
        %v2725 = vrot.slane %v2606, %v2724
        %v2726 = vlaneseq
        %v2727 = vshrl.u32 %v2726, 7
        %v2728 = vsub.s32 2, %v2727
        %v2729 = vrot.slane %v2607, %v2728
        %v2730 = vmul.f32 %v2658, %v2725
        %v2731 = vmul.f32 %v2659, %v2729
        %v2732 = vmul.f32 %v2660, %v2725
        %v2733 = vmul.f32 %v2661, %v2729
        %v2734 = vmul.f32 %v2662, %v2725
        %v2735 = vmul.f32 %v2663, %v2729
        %v2736 = vmul.f32 %v2664, %v2725
        %v2737 = vmul.f32 %v2665, %v2729
        %v2738 = vmul.f32 %v2666, %v2725
        %v2739 = vmul.f32 %v2667, %v2729
        %v2740 = vmul.f32 %v2668, %v2725
        %v2741 = vmul.f32 %v2669, %v2729
        %v2742 = vmul.f32 %v2670, %v2725
        %v2743 = vmul.f32 %v2671, %v2729
        %v2744 = vmul.f32 %v2672, %v2725
        %v2745 = vmul.f32 %v2673, %v2729
        %v2746 = vlaneseq
        %v2747 = vshrl.u32 %v2746, 7
        %v2748 = vsub.s32 3, %v2747
        %v2749 = vrot.slane %v2606, %v2748
        %v2750 = vlaneseq
        %v2751 = vshrl.u32 %v2750, 7
        %v2752 = vsub.s32 3, %v2751
        %v2753 = vrot.slane %v2607, %v2752
        %v2754 = vmul.f32 %v2658, %v2749
        %v2755 = vmul.f32 %v2659, %v2753
        %v2756 = vmul.f32 %v2660, %v2749
        %v2757 = vmul.f32 %v2661, %v2753
        %v2758 = vmul.f32 %v2662, %v2749
        %v2759 = vmul.f32 %v2663, %v2753
        %v2760 = vmul.f32 %v2664, %v2749
        %v2761 = vmul.f32 %v2665, %v2753
        %v2762 = vmul.f32 %v2666, %v2749
        %v2763 = vmul.f32 %v2667, %v2753
        %v2764 = vmul.f32 %v2668, %v2749
        %v2765 = vmul.f32 %v2669, %v2753
        %v2766 = vmul.f32 %v2670, %v2749
        %v2767 = vmul.f32 %v2671, %v2753
        %v2768 = vmul.f32 %v2672, %v2749
        %v2769 = vmul.f32 %v2673, %v2753
        %v2770 = vlaneseq
        %v2771 = vshrl.u32 %v2770, 7
        %v2772 = vsub.s32 4, %v2771
        %v2773 = vrot.slane %v2606, %v2772
        %v2774 = vlaneseq
        %v2775 = vshrl.u32 %v2774, 7
        %v2776 = vsub.s32 4, %v2775
        %v2777 = vrot.slane %v2607, %v2776
        %v2778 = vmul.f32 %v2658, %v2773
        %v2779 = vmul.f32 %v2659, %v2777
        %v2780 = vmul.f32 %v2660, %v2773
        %v2781 = vmul.f32 %v2661, %v2777
        %v2782 = vmul.f32 %v2662, %v2773
        %v2783 = vmul.f32 %v2663, %v2777
        %v2784 = vmul.f32 %v2664, %v2773
        %v2785 = vmul.f32 %v2665, %v2777
        %v2786 = vmul.f32 %v2666, %v2773
        %v2787 = vmul.f32 %v2667, %v2777
        %v2788 = vmul.f32 %v2668, %v2773
        %v2789 = vmul.f32 %v2669, %v2777
        %v2790 = vmul.f32 %v2670, %v2773
        %v2791 = vmul.f32 %v2671, %v2777
        %v2792 = vmul.f32 %v2672, %v2773
        %v2793 = vmul.f32 %v2673, %v2777
        %v2794 = vlaneseq
        %v2795 = vshrl.u32 %v2794, 7
        %v2796 = vsub.s32 5, %v2795
        %v2797 = vrot.slane %v2606, %v2796
        %v2798 = vlaneseq
        %v2799 = vshrl.u32 %v2798, 7
        %v2800 = vsub.s32 5, %v2799
        %v2801 = vrot.slane %v2607, %v2800
        %v2802 = vmul.f32 %v2658, %v2797
        %v2803 = vmul.f32 %v2659, %v2801
        %v2804 = vmul.f32 %v2660, %v2797
        %v2805 = vmul.f32 %v2661, %v2801
        %v2806 = vmul.f32 %v2662, %v2797
        %v2807 = vmul.f32 %v2663, %v2801
        %v2808 = vmul.f32 %v2664, %v2797
        %v2809 = vmul.f32 %v2665, %v2801
        %v2810 = vmul.f32 %v2666, %v2797
        %v2811 = vmul.f32 %v2667, %v2801
        %v2812 = vmul.f32 %v2668, %v2797
        %v2813 = vmul.f32 %v2669, %v2801
        %v2814 = vmul.f32 %v2670, %v2797
        %v2815 = vmul.f32 %v2671, %v2801
        %v2816 = vmul.f32 %v2672, %v2797
        %v2817 = vmul.f32 %v2673, %v2801
        %v2818 = vlaneseq
        %v2819 = vshrl.u32 %v2818, 7
        %v2820 = vsub.s32 6, %v2819
        %v2821 = vrot.slane %v2606, %v2820
        %v2822 = vlaneseq
        %v2823 = vshrl.u32 %v2822, 7
        %v2824 = vsub.s32 6, %v2823
        %v2825 = vrot.slane %v2607, %v2824
        %v2826 = vmul.f32 %v2658, %v2821
        %v2827 = vmul.f32 %v2659, %v2825
        %v2828 = vmul.f32 %v2660, %v2821
        %v2829 = vmul.f32 %v2661, %v2825
        %v2830 = vmul.f32 %v2662, %v2821
        %v2831 = vmul.f32 %v2663, %v2825
        %v2832 = vmul.f32 %v2664, %v2821
        %v2833 = vmul.f32 %v2665, %v2825
        %v2834 = vmul.f32 %v2666, %v2821
        %v2835 = vmul.f32 %v2667, %v2825
        %v2836 = vmul.f32 %v2668, %v2821
        %v2837 = vmul.f32 %v2669, %v2825
        %v2838 = vmul.f32 %v2670, %v2821
        %v2839 = vmul.f32 %v2671, %v2825
        %v2840 = vmul.f32 %v2672, %v2821
        %v2841 = vmul.f32 %v2673, %v2825
        %v2842 = vlaneseq
        %v2843 = vshrl.u32 %v2842, 7
        %v2844 = vsub.s32 7, %v2843
        %v2845 = vrot.slane %v2606, %v2844
        %v2846 = vlaneseq
        %v2847 = vshrl.u32 %v2846, 7
        %v2848 = vsub.s32 7, %v2847
        %v2849 = vrot.slane %v2607, %v2848
        %v2850 = vmul.f32 %v2658, %v2845
        %v2851 = vmul.f32 %v2659, %v2849
        %v2852 = vmul.f32 %v2660, %v2845
        %v2853 = vmul.f32 %v2661, %v2849
        %v2854 = vmul.f32 %v2662, %v2845
        %v2855 = vmul.f32 %v2663, %v2849
        %v2856 = vmul.f32 %v2664, %v2845
        %v2857 = vmul.f32 %v2665, %v2849
        %v2858 = vmul.f32 %v2666, %v2845
        %v2859 = vmul.f32 %v2667, %v2849
        %v2860 = vmul.f32 %v2668, %v2845
        %v2861 = vmul.f32 %v2669, %v2849
        %v2862 = vmul.f32 %v2670, %v2845
        %v2863 = vmul.f32 %v2671, %v2849
        %v2864 = vmul.f32 %v2672, %v2845
        %v2865 = vmul.f32 %v2673, %v2849
        %v2866 = vpack.c.bf16 %v2684, %v2682
        %v2867 = vpack.c.bf16 %v2685, %v2683
        %v2868 = vpack.c.bf16 %v2688, %v2686
        %v2869 = vpack.c.bf16 %v2689, %v2687
        %v2870 = vpack.c.bf16 %v2692, %v2690
        %v2871 = vpack.c.bf16 %v2693, %v2691
        %v2872 = vpack.c.bf16 %v2696, %v2694
        %v2873 = vpack.c.bf16 %v2697, %v2695
        %v2874 = vpack.c.bf16 %v2708, %v2706
        %v2875 = vpack.c.bf16 %v2709, %v2707
        %v2876 = vpack.c.bf16 %v2712, %v2710
        %v2877 = vpack.c.bf16 %v2713, %v2711
        %v2878 = vpack.c.bf16 %v2716, %v2714
        %v2879 = vpack.c.bf16 %v2717, %v2715
        %v2880 = vpack.c.bf16 %v2720, %v2718
        %v2881 = vpack.c.bf16 %v2721, %v2719
        %v2882 = vpack.c.bf16 %v2732, %v2730
        %v2883 = vpack.c.bf16 %v2733, %v2731
        %v2884 = vpack.c.bf16 %v2736, %v2734
        %v2885 = vpack.c.bf16 %v2737, %v2735
        %v2886 = vpack.c.bf16 %v2740, %v2738
        %v2887 = vpack.c.bf16 %v2741, %v2739
        %v2888 = vpack.c.bf16 %v2744, %v2742
        %v2889 = vpack.c.bf16 %v2745, %v2743
        %v2890 = vpack.c.bf16 %v2756, %v2754
        %v2891 = vpack.c.bf16 %v2757, %v2755
        %v2892 = vpack.c.bf16 %v2760, %v2758
        %v2893 = vpack.c.bf16 %v2761, %v2759
        %v2894 = vpack.c.bf16 %v2764, %v2762
        %v2895 = vpack.c.bf16 %v2765, %v2763
        %v2896 = vpack.c.bf16 %v2768, %v2766
        %v2897 = vpack.c.bf16 %v2769, %v2767
        %v2898 = vpack.c.bf16 %v2780, %v2778
        %v2899 = vpack.c.bf16 %v2781, %v2779
        %v2900 = vpack.c.bf16 %v2784, %v2782
        %v2901 = vpack.c.bf16 %v2785, %v2783
        %v2902 = vpack.c.bf16 %v2788, %v2786
        %v2903 = vpack.c.bf16 %v2789, %v2787
        %v2904 = vpack.c.bf16 %v2792, %v2790
        %v2905 = vpack.c.bf16 %v2793, %v2791
        %v2906 = vpack.c.bf16 %v2804, %v2802
        %v2907 = vpack.c.bf16 %v2805, %v2803
        %v2908 = vpack.c.bf16 %v2808, %v2806
        %v2909 = vpack.c.bf16 %v2809, %v2807
        %v2910 = vpack.c.bf16 %v2812, %v2810
        %v2911 = vpack.c.bf16 %v2813, %v2811
        %v2912 = vpack.c.bf16 %v2816, %v2814
        %v2913 = vpack.c.bf16 %v2817, %v2815
        %v2914 = vpack.c.bf16 %v2828, %v2826
        %v2915 = vpack.c.bf16 %v2829, %v2827
        %v2916 = vpack.c.bf16 %v2832, %v2830
        %v2917 = vpack.c.bf16 %v2833, %v2831
        %v2918 = vpack.c.bf16 %v2836, %v2834
        %v2919 = vpack.c.bf16 %v2837, %v2835
        %v2920 = vpack.c.bf16 %v2840, %v2838
        %v2921 = vpack.c.bf16 %v2841, %v2839
        %v2922 = vpack.c.bf16 %v2852, %v2850
        %v2923 = vpack.c.bf16 %v2853, %v2851
        %v2924 = vpack.c.bf16 %v2856, %v2854
        %v2925 = vpack.c.bf16 %v2857, %v2855
        %v2926 = vpack.c.bf16 %v2860, %v2858
        %v2927 = vpack.c.bf16 %v2861, %v2859
        %v2928 = vpack.c.bf16 %v2864, %v2862
        %v2929 = vpack.c.bf16 %v2865, %v2863
        %v2930 = vld [vmem:[#allocation6] sm:$0xff]
        %v2931 = vld [vmem:[#allocation6 + $0x8] sm:$0xff]
        %v2932 = vld [vmem:[#allocation6 + $0x10] sm:$0xff]
        %v2933 = vld [vmem:[#allocation6 + $0x18] sm:$0xff]
        %v2934 = vld [vmem:[#allocation6 + $0x20] sm:$0xff]
        %v2935 = vld [vmem:[#allocation6 + $0x28] sm:$0xff]
        %v2936 = vld [vmem:[#allocation6 + $0x30] sm:$0xff]
        %v2937 = vld [vmem:[#allocation6 + $0x38] sm:$0xff]
        %v2938 = vld [vmem:[#allocation6 + $0x40] sm:$0xff]
        %v2939 = vld [vmem:[#allocation6 + $0x48] sm:$0xff]
        %v2940 = vld [vmem:[#allocation6 + $0x50] sm:$0xff]
        %v2941 = vld [vmem:[#allocation6 + $0x58] sm:$0xff]
        %v2942 = vld [vmem:[#allocation6 + $0x60] sm:$0xff]
        %v2943 = vld [vmem:[#allocation6 + $0x68] sm:$0xff]
        %v2944 = vld [vmem:[#allocation6 + $0x70] sm:$0xff]
        %v2945 = vld [vmem:[#allocation6 + $0x78] sm:$0xff]
        %v2946 = vld [vmem:[#allocation6 + $0x80] sm:$0xff]
        %v2947 = vld [vmem:[#allocation6 + $0x88] sm:$0xff]
        %v2948 = vld [vmem:[#allocation6 + $0x90] sm:$0xff]
        %v2949 = vld [vmem:[#allocation6 + $0x98] sm:$0xff]
        %v2950 = vld [vmem:[#allocation6 + $0xa0] sm:$0xff]
        %v2951 = vld [vmem:[#allocation6 + $0xa8] sm:$0xff]
        %v2952 = vld [vmem:[#allocation6 + $0xb0] sm:$0xff]
        %v2953 = vld [vmem:[#allocation6 + $0xb8] sm:$0xff]
        %v2954 = vld [vmem:[#allocation6 + $0xc0] sm:$0xff]
        %v2955 = vld [vmem:[#allocation6 + $0xc8] sm:$0xff]
        %v2956 = vld [vmem:[#allocation6 + $0xd0] sm:$0xff]
        %v2957 = vld [vmem:[#allocation6 + $0xd8] sm:$0xff]
        %v2958 = vld [vmem:[#allocation6 + $0xe0] sm:$0xff]
        %v2959 = vld [vmem:[#allocation6 + $0xe8] sm:$0xff]
        %v2960 = vld [vmem:[#allocation6 + $0xf0] sm:$0xff]
        %v2961 = vld [vmem:[#allocation6 + $0xf8] sm:$0xff]
        %v2994 = vunpack.c.l.b16 %v2930
        %v2995 = vunpack.c.h.b16 %v2930
        %v2996 = vunpack.c.l.b16 %v2931
        %v2997 = vunpack.c.h.b16 %v2931
        %v2998 = vunpack.c.l.b16 %v2932
        %v2999 = vunpack.c.h.b16 %v2932
        %v3000 = vunpack.c.l.b16 %v2933
        %v3001 = vunpack.c.h.b16 %v2933
        %v3002 = vunpack.c.l.b16 %v2934
        %v3003 = vunpack.c.h.b16 %v2934
        %v3004 = vunpack.c.l.b16 %v2935
        %v3005 = vunpack.c.h.b16 %v2935
        %v3006 = vunpack.c.l.b16 %v2936
        %v3007 = vunpack.c.h.b16 %v2936
        %v3008 = vunpack.c.l.b16 %v2937
        %v3009 = vunpack.c.h.b16 %v2937
        %v3010 = vunpack.c.l.b16 %v2938
        %v3011 = vunpack.c.h.b16 %v2938
        %v3012 = vunpack.c.l.b16 %v2939
        %v3013 = vunpack.c.h.b16 %v2939
        %v3014 = vunpack.c.l.b16 %v2940
        %v3015 = vunpack.c.h.b16 %v2940
        %v3016 = vunpack.c.l.b16 %v2941
        %v3017 = vunpack.c.h.b16 %v2941
        %v3018 = vunpack.c.l.b16 %v2942
        %v3019 = vunpack.c.h.b16 %v2942
        %v3020 = vunpack.c.l.b16 %v2943
        %v3021 = vunpack.c.h.b16 %v2943
        %v3022 = vunpack.c.l.b16 %v2944
        %v3023 = vunpack.c.h.b16 %v2944
        %v3024 = vunpack.c.l.b16 %v2945
        %v3025 = vunpack.c.h.b16 %v2945
        %v3026 = vunpack.c.l.b16 %v2946
        %v3027 = vunpack.c.h.b16 %v2946
        %v3028 = vunpack.c.l.b16 %v2947
        %v3029 = vunpack.c.h.b16 %v2947
        %v3030 = vunpack.c.l.b16 %v2948
        %v3031 = vunpack.c.h.b16 %v2948
        %v3032 = vunpack.c.l.b16 %v2949
        %v3033 = vunpack.c.h.b16 %v2949
        %v3034 = vunpack.c.l.b16 %v2950
        %v3035 = vunpack.c.h.b16 %v2950
        %v3036 = vunpack.c.l.b16 %v2951
        %v3037 = vunpack.c.h.b16 %v2951
        %v3038 = vunpack.c.l.b16 %v2952
        %v3039 = vunpack.c.h.b16 %v2952
        %v3040 = vunpack.c.l.b16 %v2953
        %v3041 = vunpack.c.h.b16 %v2953
        %v3042 = vunpack.c.l.b16 %v2954
        %v3043 = vunpack.c.h.b16 %v2954
        %v3044 = vunpack.c.l.b16 %v2955
        %v3045 = vunpack.c.h.b16 %v2955
        %v3046 = vunpack.c.l.b16 %v2956
        %v3047 = vunpack.c.h.b16 %v2956
        %v3048 = vunpack.c.l.b16 %v2957
        %v3049 = vunpack.c.h.b16 %v2957
        %v3050 = vunpack.c.l.b16 %v2958
        %v3051 = vunpack.c.h.b16 %v2958
        %v3052 = vunpack.c.l.b16 %v2959
        %v3053 = vunpack.c.h.b16 %v2959
        %v3054 = vunpack.c.l.b16 %v2960
        %v3055 = vunpack.c.h.b16 %v2960
        %v3056 = vunpack.c.l.b16 %v2961
        %v3057 = vunpack.c.h.b16 %v2961
        %v3058 = vpack.c.b16 %v2996, %v2994
        %v3059 = vpack.c.b16 %v2997, %v2995
        %v3060 = vpack.c.b16 %v3000, %v2998
        %v3061 = vpack.c.b16 %v3001, %v2999
        %v3062 = vpack.c.b16 %v3004, %v3002
        %v3063 = vpack.c.b16 %v3005, %v3003
        %v3064 = vpack.c.b16 %v3008, %v3006
        %v3065 = vpack.c.b16 %v3009, %v3007
        %v3066 = vpack.c.b16 %v3012, %v3010
        %v3067 = vpack.c.b16 %v3013, %v3011
        %v3068 = vpack.c.b16 %v3016, %v3014
        %v3069 = vpack.c.b16 %v3017, %v3015
        %v3070 = vpack.c.b16 %v3020, %v3018
        %v3071 = vpack.c.b16 %v3021, %v3019
        %v3072 = vpack.c.b16 %v3024, %v3022
        %v3073 = vpack.c.b16 %v3025, %v3023
        %v3074 = vpack.c.b16 %v3028, %v3026
        %v3075 = vpack.c.b16 %v3029, %v3027
        %v3076 = vpack.c.b16 %v3032, %v3030
        %v3077 = vpack.c.b16 %v3033, %v3031
        %v3078 = vpack.c.b16 %v3036, %v3034
        %v3079 = vpack.c.b16 %v3037, %v3035
        %v3080 = vpack.c.b16 %v3040, %v3038
        %v3081 = vpack.c.b16 %v3041, %v3039
        %v3082 = vpack.c.b16 %v3044, %v3042
        %v3083 = vpack.c.b16 %v3045, %v3043
        %v3084 = vpack.c.b16 %v3048, %v3046
        %v3085 = vpack.c.b16 %v3049, %v3047
        %v3086 = vpack.c.b16 %v3052, %v3050
        %v3087 = vpack.c.b16 %v3053, %v3051
        %v3088 = vpack.c.b16 %v3056, %v3054
        %v3089 = vpack.c.b16 %v3057, %v3055
        %3122 = vmatprep.subr.bf16.mxu0 %v3059
        %3123 = vmatpush1.bf16.msra.mxu0 %v3058
        %3124 = vmatprep.subr.bf16.mxu0 %v3061
        %3125 = vmatpush1.bf16.msra.mxu0 %v3060
        %3126 = vmatprep.subr.bf16.mxu0 %v3063
        %3127 = vmatpush1.bf16.msra.mxu0 %v3062
        %3128 = vmatprep.subr.bf16.mxu0 %v3065
        %3129 = vmatpush1.bf16.msra.mxu0 %v3064
        %3130 = vmatprep.subr.bf16.mxu0 %v3067
        %3131 = vmatpush1.bf16.msra.mxu0 %v3066
        %3132 = vmatprep.subr.bf16.mxu0 %v3069
        %3133 = vmatpush1.bf16.msra.mxu0 %v3068
        %3134 = vmatprep.subr.bf16.mxu0 %v3071
        %3135 = vmatpush1.bf16.msra.mxu0 %v3070
        %3136 = vmatprep.subr.bf16.mxu0 %v3073
        %3137 = vmatpush1.bf16.msra.mxu0 %v3072
        %3138 = vmatprep.subr.bf16.mxu0 %v3075
        %3139 = vmatpush1.bf16.msra.mxu0 %v3074
        %3140 = vmatprep.subr.bf16.mxu0 %v3077
        %3141 = vmatpush1.bf16.msra.mxu0 %v3076
        %3142 = vmatprep.subr.bf16.mxu0 %v3079
        %3143 = vmatpush1.bf16.msra.mxu0 %v3078
        %3144 = vmatprep.subr.bf16.mxu0 %v3081
        %3145 = vmatpush1.bf16.msra.mxu0 %v3080
        %3146 = vmatprep.subr.bf16.mxu0 %v3083
        %3147 = vmatpush1.bf16.msra.mxu0 %v3082
        %3148 = vmatprep.subr.bf16.mxu0 %v3085
        %3149 = vmatpush1.bf16.msra.mxu0 %v3084
        %3150 = vmatprep.subr.bf16.mxu0 %v3087
        %3151 = vmatpush1.bf16.msra.mxu0 %v3086
        %3152 = vmatprep.subr.bf16.mxu0 %v3089
        %3153 = vmatpush1.bf16.msra.mxu0 %v3088
        %3154 = vmatprep.mubr.bf16.mxu0 %v2867
        %3155 = vmatmul.mubr.bf16.gmra.mrb[0].mxu0 %v2866
        %v3156 = vpop.f32.mrb[0].mxu0
        %v3157 = vadd.f32 0.0, %v3156
        %v3158 = vpop.f32.mrb[0].mxu0
        %v3159 = vadd.f32 0.0, %v3158
        %v3160 = vpop.f32.mrb[0].mxu0
        %v3161 = vadd.f32 0.0, %v3160
        %v3162 = vpop.f32.mrb[0].mxu0
        %v3163 = vadd.f32 0.0, %v3162
        %3164 = vmatprep.mubr.bf16.mxu0 %v2869
        %3165 = vmatmul.mubr.bf16.gmra.mrb[0].mxu0 %v2868
        %v3166 = vpop.f32.mrb[0].mxu0
        %v3167 = vadd.f32 0.0, %v3166
        %v3168 = vpop.f32.mrb[0].mxu0
        %v3169 = vadd.f32 0.0, %v3168
        %v3170 = vpop.f32.mrb[0].mxu0
        %v3171 = vadd.f32 0.0, %v3170
        %v3172 = vpop.f32.mrb[0].mxu0
        %v3173 = vadd.f32 0.0, %v3172
        %3174 = vmatprep.mubr.bf16.mxu0 %v2871
        %3175 = vmatmul.mubr.bf16.gmra.mrb[0].mxu0 %v2870
        %v3176 = vpop.f32.mrb[0].mxu0
        %v3177 = vadd.f32 0.0, %v3176
        %v3178 = vpop.f32.mrb[0].mxu0
        %v3179 = vadd.f32 0.0, %v3178
        %v3180 = vpop.f32.mrb[0].mxu0
        %v3181 = vadd.f32 0.0, %v3180
        %v3182 = vpop.f32.mrb[0].mxu0
        %v3183 = vadd.f32 0.0, %v3182
        %3184 = vmatprep.mubr.bf16.mxu0 %v2873
        %3185 = vmatmul.mubr.bf16.gmra.mrb[0].mxu0 %v2872
        %v3186 = vpop.f32.mrb[0].mxu0
        %v3187 = vadd.f32 0.0, %v3186
        %v3188 = vpop.f32.mrb[0].mxu0
        %v3189 = vadd.f32 0.0, %v3188
        %v3190 = vpop.f32.mrb[0].mxu0
        %v3191 = vadd.f32 0.0, %v3190
        %v3192 = vpop.f32.mrb[0].mxu0
        %v3193 = vadd.f32 0.0, %v3192
        %3194 = vmatprep.mubr.bf16.mxu0 %v2875
        %3195 = vmatmul.mubr.bf16.gmra.mrb[0].mxu0 %v2874
        %v3196 = vpop.f32.mrb[0].mxu0
        %v3197 = vadd.f32 0.0, %v3196
        %v3198 = vpop.f32.mrb[0].mxu0
        %v3199 = vadd.f32 0.0, %v3198
        %v3200 = vpop.f32.mrb[0].mxu0
        %v3201 = vadd.f32 0.0, %v3200
        %v3202 = vpop.f32.mrb[0].mxu0
        %v3203 = vadd.f32 0.0, %v3202
        %3204 = vmatprep.mubr.bf16.mxu0 %v2877
        %3205 = vmatmul.mubr.bf16.gmra.mrb[0].mxu0 %v2876
        %v3206 = vpop.f32.mrb[0].mxu0
        %v3207 = vadd.f32 0.0, %v3206
        %v3208 = vpop.f32.mrb[0].mxu0
        %v3209 = vadd.f32 0.0, %v3208
        %v3210 = vpop.f32.mrb[0].mxu0
        %v3211 = vadd.f32 0.0, %v3210
        %v3212 = vpop.f32.mrb[0].mxu0
        %v3213 = vadd.f32 0.0, %v3212
        %3214 = vmatprep.mubr.bf16.mxu0 %v2879
        %3215 = vmatmul.mubr.bf16.gmra.mrb[0].mxu0 %v2878
        %v3216 = vpop.f32.mrb[0].mxu0
        %v3217 = vadd.f32 0.0, %v3216
        %v3218 = vpop.f32.mrb[0].mxu0
        %v3219 = vadd.f32 0.0, %v3218
        %v3220 = vpop.f32.mrb[0].mxu0
        %v3221 = vadd.f32 0.0, %v3220
        %v3222 = vpop.f32.mrb[0].mxu0
        %v3223 = vadd.f32 0.0, %v3222
        %3224 = vmatprep.mubr.bf16.mxu0 %v2881
        %3225 = vmatmul.mubr.bf16.gmra.mrb[0].mxu0 %v2880
        %v3226 = vpop.f32.mrb[0].mxu0
        %v3227 = vadd.f32 0.0, %v3226
        %v3228 = vpop.f32.mrb[0].mxu0
        %v3229 = vadd.f32 0.0, %v3228
        %v3230 = vpop.f32.mrb[0].mxu0
        %v3231 = vadd.f32 0.0, %v3230
        %v3232 = vpop.f32.mrb[0].mxu0
        %v3233 = vadd.f32 0.0, %v3232
        %3234 = vmatprep.mubr.bf16.mxu0 %v2883
        %3235 = vmatmul.mubr.bf16.gmra.mrb[0].mxu0 %v2882
        %v3236 = vpop.f32.mrb[0].mxu0
        %v3237 = vadd.f32 0.0, %v3236
        %v3238 = vpop.f32.mrb[0].mxu0
        %v3239 = vadd.f32 0.0, %v3238
        %v3240 = vpop.f32.mrb[0].mxu0
        %v3241 = vadd.f32 0.0, %v3240
        %v3242 = vpop.f32.mrb[0].mxu0
        %v3243 = vadd.f32 0.0, %v3242
        %3244 = vmatprep.mubr.bf16.mxu0 %v2885
        %3245 = vmatmul.mubr.bf16.gmra.mrb[0].mxu0 %v2884
        %v3246 = vpop.f32.mrb[0].mxu0
        %v3247 = vadd.f32 0.0, %v3246
        %v3248 = vpop.f32.mrb[0].mxu0
        %v3249 = vadd.f32 0.0, %v3248
        %v3250 = vpop.f32.mrb[0].mxu0
        %v3251 = vadd.f32 0.0, %v3250
        %v3252 = vpop.f32.mrb[0].mxu0
        %v3253 = vadd.f32 0.0, %v3252
        %3254 = vmatprep.mubr.bf16.mxu0 %v2887
        %3255 = vmatmul.mubr.bf16.gmra.mrb[0].mxu0 %v2886
        %v3256 = vpop.f32.mrb[0].mxu0
        %v3257 = vadd.f32 0.0, %v3256
        %v3258 = vpop.f32.mrb[0].mxu0
        %v3259 = vadd.f32 0.0, %v3258
        %v3260 = vpop.f32.mrb[0].mxu0
        %v3261 = vadd.f32 0.0, %v3260
        %v3262 = vpop.f32.mrb[0].mxu0
        %v3263 = vadd.f32 0.0, %v3262
        %3264 = vmatprep.mubr.bf16.mxu0 %v2889
        %3265 = vmatmul.mubr.bf16.gmra.mrb[0].mxu0 %v2888
        %v3266 = vpop.f32.mrb[0].mxu0
        %v3267 = vadd.f32 0.0, %v3266
        %v3268 = vpop.f32.mrb[0].mxu0
        %v3269 = vadd.f32 0.0, %v3268
        %v3270 = vpop.f32.mrb[0].mxu0
        %v3271 = vadd.f32 0.0, %v3270
        %v3272 = vpop.f32.mrb[0].mxu0
        %v3273 = vadd.f32 0.0, %v3272
        %3274 = vmatprep.mubr.bf16.mxu0 %v2891
        %3275 = vmatmul.mubr.bf16.gmra.mrb[0].mxu0 %v2890
        %v3276 = vpop.f32.mrb[0].mxu0
        %v3277 = vadd.f32 0.0, %v3276
        %v3278 = vpop.f32.mrb[0].mxu0
        %v3279 = vadd.f32 0.0, %v3278
        %v3280 = vpop.f32.mrb[0].mxu0
        %v3281 = vadd.f32 0.0, %v3280
        %v3282 = vpop.f32.mrb[0].mxu0
        %v3283 = vadd.f32 0.0, %v3282
        %3284 = vmatprep.mubr.bf16.mxu0 %v2893
        %3285 = vmatmul.mubr.bf16.gmra.mrb[0].mxu0 %v2892
        %v3286 = vpop.f32.mrb[0].mxu0
        %v3287 = vadd.f32 0.0, %v3286
        %v3288 = vpop.f32.mrb[0].mxu0
        %v3289 = vadd.f32 0.0, %v3288
        %v3290 = vpop.f32.mrb[0].mxu0
        %v3291 = vadd.f32 0.0, %v3290
        %v3292 = vpop.f32.mrb[0].mxu0
        %v3293 = vadd.f32 0.0, %v3292
        %3294 = vmatprep.mubr.bf16.mxu0 %v2895
        %3295 = vmatmul.mubr.bf16.gmra.mrb[0].mxu0 %v2894
        %v3296 = vpop.f32.mrb[0].mxu0
        %v3297 = vadd.f32 0.0, %v3296
        %v3298 = vpop.f32.mrb[0].mxu0
        %v3299 = vadd.f32 0.0, %v3298
        %v3300 = vpop.f32.mrb[0].mxu0
        %v3301 = vadd.f32 0.0, %v3300
        %v3302 = vpop.f32.mrb[0].mxu0
        %v3303 = vadd.f32 0.0, %v3302
        %3304 = vmatprep.mubr.bf16.mxu0 %v2897
        %3305 = vmatmul.mubr.bf16.gmra.mrb[0].mxu0 %v2896
        %v3306 = vpop.f32.mrb[0].mxu0
        %v3307 = vadd.f32 0.0, %v3306
        %v3308 = vpop.f32.mrb[0].mxu0
        %v3309 = vadd.f32 0.0, %v3308
        %v3310 = vpop.f32.mrb[0].mxu0
        %v3311 = vadd.f32 0.0, %v3310
        %v3312 = vpop.f32.mrb[0].mxu0
        %v3313 = vadd.f32 0.0, %v3312
        %3314 = vmatprep.mubr.bf16.mxu0 %v2899
        %3315 = vmatmul.mubr.bf16.gmra.mrb[0].mxu0 %v2898
        %v3316 = vpop.f32.mrb[0].mxu0
        %v3317 = vadd.f32 0.0, %v3316
        %v3318 = vpop.f32.mrb[0].mxu0
        %v3319 = vadd.f32 0.0, %v3318
        %v3320 = vpop.f32.mrb[0].mxu0
        %v3321 = vadd.f32 0.0, %v3320
        %v3322 = vpop.f32.mrb[0].mxu0
        %v3323 = vadd.f32 0.0, %v3322
        %3324 = vmatprep.mubr.bf16.mxu0 %v2901
        %3325 = vmatmul.mubr.bf16.gmra.mrb[0].mxu0 %v2900
        %v3326 = vpop.f32.mrb[0].mxu0
        %v3327 = vadd.f32 0.0, %v3326
        %v3328 = vpop.f32.mrb[0].mxu0
        %v3329 = vadd.f32 0.0, %v3328
        %v3330 = vpop.f32.mrb[0].mxu0
        %v3331 = vadd.f32 0.0, %v3330
        %v3332 = vpop.f32.mrb[0].mxu0
        %v3333 = vadd.f32 0.0, %v3332
        %3334 = vmatprep.mubr.bf16.mxu0 %v2903
        %3335 = vmatmul.mubr.bf16.gmra.mrb[0].mxu0 %v2902
        %v3336 = vpop.f32.mrb[0].mxu0
        %v3337 = vadd.f32 0.0, %v3336
        %v3338 = vpop.f32.mrb[0].mxu0
        %v3339 = vadd.f32 0.0, %v3338
        %v3340 = vpop.f32.mrb[0].mxu0
        %v3341 = vadd.f32 0.0, %v3340
        %v3342 = vpop.f32.mrb[0].mxu0
        %v3343 = vadd.f32 0.0, %v3342
        %3344 = vmatprep.mubr.bf16.mxu0 %v2905
        %3345 = vmatmul.mubr.bf16.gmra.mrb[0].mxu0 %v2904
        %v3346 = vpop.f32.mrb[0].mxu0
        %v3347 = vadd.f32 0.0, %v3346
        %v3348 = vpop.f32.mrb[0].mxu0
        %v3349 = vadd.f32 0.0, %v3348
        %v3350 = vpop.f32.mrb[0].mxu0
        %v3351 = vadd.f32 0.0, %v3350
        %v3352 = vpop.f32.mrb[0].mxu0
        %v3353 = vadd.f32 0.0, %v3352
        %3354 = vmatprep.mubr.bf16.mxu0 %v2907
        %3355 = vmatmul.mubr.bf16.gmra.mrb[0].mxu0 %v2906
        %v3356 = vpop.f32.mrb[0].mxu0
        %v3357 = vadd.f32 0.0, %v3356
        %v3358 = vpop.f32.mrb[0].mxu0
        %v3359 = vadd.f32 0.0, %v3358
        %v3360 = vpop.f32.mrb[0].mxu0
        %v3361 = vadd.f32 0.0, %v3360
        %v3362 = vpop.f32.mrb[0].mxu0
        %v3363 = vadd.f32 0.0, %v3362
        %3364 = vmatprep.mubr.bf16.mxu0 %v2909
        %3365 = vmatmul.mubr.bf16.gmra.mrb[0].mxu0 %v2908
        %v3366 = vpop.f32.mrb[0].mxu0
        %v3367 = vadd.f32 0.0, %v3366
        %v3368 = vpop.f32.mrb[0].mxu0
        %v3369 = vadd.f32 0.0, %v3368
        %v3370 = vpop.f32.mrb[0].mxu0
        %v3371 = vadd.f32 0.0, %v3370
        %v3372 = vpop.f32.mrb[0].mxu0
        %v3373 = vadd.f32 0.0, %v3372
        %3374 = vmatprep.mubr.bf16.mxu0 %v2911
        %3375 = vmatmul.mubr.bf16.gmra.mrb[0].mxu0 %v2910
        %v3376 = vpop.f32.mrb[0].mxu0
        %v3377 = vadd.f32 0.0, %v3376
        %v3378 = vpop.f32.mrb[0].mxu0
        %v3379 = vadd.f32 0.0, %v3378
        %v3380 = vpop.f32.mrb[0].mxu0
        %v3381 = vadd.f32 0.0, %v3380
        %v3382 = vpop.f32.mrb[0].mxu0
        %v3383 = vadd.f32 0.0, %v3382
        %3384 = vmatprep.mubr.bf16.mxu0 %v2913
        %3385 = vmatmul.mubr.bf16.gmra.mrb[0].mxu0 %v2912
        %v3386 = vpop.f32.mrb[0].mxu0
        %v3387 = vadd.f32 0.0, %v3386
        %v3388 = vpop.f32.mrb[0].mxu0
        %v3389 = vadd.f32 0.0, %v3388
        %v3390 = vpop.f32.mrb[0].mxu0
        %v3391 = vadd.f32 0.0, %v3390
        %v3392 = vpop.f32.mrb[0].mxu0
        %v3393 = vadd.f32 0.0, %v3392
        %3394 = vmatprep.mubr.bf16.mxu0 %v2915
        %3395 = vmatmul.mubr.bf16.gmra.mrb[0].mxu0 %v2914
        %v3396 = vpop.f32.mrb[0].mxu0
        %v3397 = vadd.f32 0.0, %v3396
        %v3398 = vpop.f32.mrb[0].mxu0
        %v3399 = vadd.f32 0.0, %v3398
        %v3400 = vpop.f32.mrb[0].mxu0
        %v3401 = vadd.f32 0.0, %v3400
        %v3402 = vpop.f32.mrb[0].mxu0
        %v3403 = vadd.f32 0.0, %v3402
        %3404 = vmatprep.mubr.bf16.mxu0 %v2917
        %3405 = vmatmul.mubr.bf16.gmra.mrb[0].mxu0 %v2916
        %v3406 = vpop.f32.mrb[0].mxu0
        %v3407 = vadd.f32 0.0, %v3406
        %v3408 = vpop.f32.mrb[0].mxu0
        %v3409 = vadd.f32 0.0, %v3408
        %v3410 = vpop.f32.mrb[0].mxu0
        %v3411 = vadd.f32 0.0, %v3410
        %v3412 = vpop.f32.mrb[0].mxu0
        %v3413 = vadd.f32 0.0, %v3412
        %3414 = vmatprep.mubr.bf16.mxu0 %v2919
        %3415 = vmatmul.mubr.bf16.gmra.mrb[0].mxu0 %v2918
        %v3416 = vpop.f32.mrb[0].mxu0
        %v3417 = vadd.f32 0.0, %v3416
        %v3418 = vpop.f32.mrb[0].mxu0
        %v3419 = vadd.f32 0.0, %v3418
        %v3420 = vpop.f32.mrb[0].mxu0
        %v3421 = vadd.f32 0.0, %v3420
        %v3422 = vpop.f32.mrb[0].mxu0
        %v3423 = vadd.f32 0.0, %v3422
        %3424 = vmatprep.mubr.bf16.mxu0 %v2921
        %3425 = vmatmul.mubr.bf16.gmra.mrb[0].mxu0 %v2920
        %v3426 = vpop.f32.mrb[0].mxu0
        %v3427 = vadd.f32 0.0, %v3426
        %v3428 = vpop.f32.mrb[0].mxu0
        %v3429 = vadd.f32 0.0, %v3428
        %v3430 = vpop.f32.mrb[0].mxu0
        %v3431 = vadd.f32 0.0, %v3430
        %v3432 = vpop.f32.mrb[0].mxu0
        %v3433 = vadd.f32 0.0, %v3432
        %3434 = vmatprep.mubr.bf16.mxu0 %v2923
        %3435 = vmatmul.mubr.bf16.gmra.mrb[0].mxu0 %v2922
        %v3436 = vpop.f32.mrb[0].mxu0
        %v3437 = vadd.f32 0.0, %v3436
        %v3438 = vpop.f32.mrb[0].mxu0
        %v3439 = vadd.f32 0.0, %v3438
        %v3440 = vpop.f32.mrb[0].mxu0
        %v3441 = vadd.f32 0.0, %v3440
        %v3442 = vpop.f32.mrb[0].mxu0
        %v3443 = vadd.f32 0.0, %v3442
        %3444 = vmatprep.mubr.bf16.mxu0 %v2925
        %3445 = vmatmul.mubr.bf16.gmra.mrb[0].mxu0 %v2924
        %v3446 = vpop.f32.mrb[0].mxu0
        %v3447 = vadd.f32 0.0, %v3446
        %v3448 = vpop.f32.mrb[0].mxu0
        %v3449 = vadd.f32 0.0, %v3448
        %v3450 = vpop.f32.mrb[0].mxu0
        %v3451 = vadd.f32 0.0, %v3450
        %v3452 = vpop.f32.mrb[0].mxu0
        %v3453 = vadd.f32 0.0, %v3452
        %3454 = vmatprep.mubr.bf16.mxu0 %v2927
        %3455 = vmatmul.mubr.bf16.gmra.mrb[0].mxu0 %v2926
        %v3456 = vpop.f32.mrb[0].mxu0
        %v3457 = vadd.f32 0.0, %v3456
        %v3458 = vpop.f32.mrb[0].mxu0
        %v3459 = vadd.f32 0.0, %v3458
        %v3460 = vpop.f32.mrb[0].mxu0
        %v3461 = vadd.f32 0.0, %v3460
        %v3462 = vpop.f32.mrb[0].mxu0
        %v3463 = vadd.f32 0.0, %v3462
        %3464 = vmatprep.mubr.bf16.mxu0 %v2929
        %3465 = vmatmul.mubr.bf16.gmra.mrb[0].mxu0 %v2928
        %v3466 = vpop.f32.mrb[0].mxu0
        %v3467 = vadd.f32 0.0, %v3466
        %v3468 = vpop.f32.mrb[0].mxu0
        %v3469 = vadd.f32 0.0, %v3468
        %v3470 = vpop.f32.mrb[0].mxu0
        %v3471 = vadd.f32 0.0, %v3470
        %v3472 = vpop.f32.mrb[0].mxu0
        %v3473 = vadd.f32 0.0, %v3472
        %3474 = vdwg.mxu0
        %3475 = vst [vmem:[#allocation5] sm:$0xff] %v3157
        %3476 = vst [vmem:[#allocation5 + $0x8] sm:$0xff] %v3159
        %3477 = vst [vmem:[#allocation5 + $0x10] sm:$0xff] %v3161
        %3478 = vst [vmem:[#allocation5 + $0x18] sm:$0xff] %v3163
        %3479 = vst [vmem:[#allocation5 + $0x20] sm:$0xff] %v3167
        %3480 = vst [vmem:[#allocation5 + $0x28] sm:$0xff] %v3169
        %3481 = vst [vmem:[#allocation5 + $0x30] sm:$0xff] %v3171
        %3482 = vst [vmem:[#allocation5 + $0x38] sm:$0xff] %v3173
        %3483 = vst [vmem:[#allocation5 + $0x40] sm:$0xff] %v3177
        %3484 = vst [vmem:[#allocation5 + $0x48] sm:$0xff] %v3179
        %3485 = vst [vmem:[#allocation5 + $0x50] sm:$0xff] %v3181
        %3486 = vst [vmem:[#allocation5 + $0x58] sm:$0xff] %v3183
        %3487 = vst [vmem:[#allocation5 + $0x60] sm:$0xff] %v3187
        %3488 = vst [vmem:[#allocation5 + $0x68] sm:$0xff] %v3189
        %3489 = vst [vmem:[#allocation5 + $0x70] sm:$0xff] %v3191
        %3490 = vst [vmem:[#allocation5 + $0x78] sm:$0xff] %v3193
        %3491 = vst [vmem:[#allocation5 + $0x80] sm:$0xff] %v3197
        %3492 = vst [vmem:[#allocation5 + $0x88] sm:$0xff] %v3199
        %3493 = vst [vmem:[#allocation5 + $0x90] sm:$0xff] %v3201
        %3494 = vst [vmem:[#allocation5 + $0x98] sm:$0xff] %v3203
        %3495 = vst [vmem:[#allocation5 + $0xa0] sm:$0xff] %v3207
        %3496 = vst [vmem:[#allocation5 + $0xa8] sm:$0xff] %v3209
        %3497 = vst [vmem:[#allocation5 + $0xb0] sm:$0xff] %v3211
        %3498 = vst [vmem:[#allocation5 + $0xb8] sm:$0xff] %v3213
        %3499 = vst [vmem:[#allocation5 + $0xc0] sm:$0xff] %v3217
        %3500 = vst [vmem:[#allocation5 + $0xc8] sm:$0xff] %v3219
        %3501 = vst [vmem:[#allocation5 + $0xd0] sm:$0xff] %v3221
        %3502 = vst [vmem:[#allocation5 + $0xd8] sm:$0xff] %v3223
        %3503 = vst [vmem:[#allocation5 + $0xe0] sm:$0xff] %v3227
        %3504 = vst [vmem:[#allocation5 + $0xe8] sm:$0xff] %v3229
        %3505 = vst [vmem:[#allocation5 + $0xf0] sm:$0xff] %v3231
        %3506 = vst [vmem:[#allocation5 + $0xf8] sm:$0xff] %v3233
        %3507 = vst [vmem:[#allocation5 + $0x100] sm:$0xff] %v3237
        %3508 = vst [vmem:[#allocation5 + $0x108] sm:$0xff] %v3239
        %3509 = vst [vmem:[#allocation5 + $0x110] sm:$0xff] %v3241
        %3510 = vst [vmem:[#allocation5 + $0x118] sm:$0xff] %v3243
        %3511 = vst [vmem:[#allocation5 + $0x120] sm:$0xff] %v3247
        %3512 = vst [vmem:[#allocation5 + $0x128] sm:$0xff] %v3249
        %3513 = vst [vmem:[#allocation5 + $0x130] sm:$0xff] %v3251
        %3514 = vst [vmem:[#allocation5 + $0x138] sm:$0xff] %v3253
        %3515 = vst [vmem:[#allocation5 + $0x140] sm:$0xff] %v3257
        %3516 = vst [vmem:[#allocation5 + $0x148] sm:$0xff] %v3259
        %3517 = vst [vmem:[#allocation5 + $0x150] sm:$0xff] %v3261
        %3518 = vst [vmem:[#allocation5 + $0x158] sm:$0xff] %v3263
        %3519 = vst [vmem:[#allocation5 + $0x160] sm:$0xff] %v3267
        %3520 = vst [vmem:[#allocation5 + $0x168] sm:$0xff] %v3269
        %3521 = vst [vmem:[#allocation5 + $0x170] sm:$0xff] %v3271
        %3522 = vst [vmem:[#allocation5 + $0x178] sm:$0xff] %v3273
        %3523 = vst [vmem:[#allocation5 + $0x180] sm:$0xff] %v3277
        %3524 = vst [vmem:[#allocation5 + $0x188] sm:$0xff] %v3279
        %3525 = vst [vmem:[#allocation5 + $0x190] sm:$0xff] %v3281
        %3526 = vst [vmem:[#allocation5 + $0x198] sm:$0xff] %v3283
        %3527 = vst [vmem:[#allocation5 + $0x1a0] sm:$0xff] %v3287
        %3528 = vst [vmem:[#allocation5 + $0x1a8] sm:$0xff] %v3289
        %3529 = vst [vmem:[#allocation5 + $0x1b0] sm:$0xff] %v3291
        %3530 = vst [vmem:[#allocation5 + $0x1b8] sm:$0xff] %v3293
        %3531 = vst [vmem:[#allocation5 + $0x1c0] sm:$0xff] %v3297
        %3532 = vst [vmem:[#allocation5 + $0x1c8] sm:$0xff] %v3299
        %3533 = vst [vmem:[#allocation5 + $0x1d0] sm:$0xff] %v3301
        %3534 = vst [vmem:[#allocation5 + $0x1d8] sm:$0xff] %v3303
        %3535 = vst [vmem:[#allocation5 + $0x1e0] sm:$0xff] %v3307
        %3536 = vst [vmem:[#allocation5 + $0x1e8] sm:$0xff] %v3309
        %3537 = vst [vmem:[#allocation5 + $0x1f0] sm:$0xff] %v3311
        %3538 = vst [vmem:[#allocation5 + $0x1f8] sm:$0xff] %v3313
        %3539 = vst [vmem:[#allocation5 + $0x200] sm:$0xff] %v3317
        %3540 = vst [vmem:[#allocation5 + $0x208] sm:$0xff] %v3319
        %3541 = vst [vmem:[#allocation5 + $0x210] sm:$0xff] %v3321
        %3542 = vst [vmem:[#allocation5 + $0x218] sm:$0xff] %v3323
        %3543 = vst [vmem:[#allocation5 + $0x220] sm:$0xff] %v3327
        %3544 = vst [vmem:[#allocation5 + $0x228] sm:$0xff] %v3329
        %3545 = vst [vmem:[#allocation5 + $0x230] sm:$0xff] %v3331
        %3546 = vst [vmem:[#allocation5 + $0x238] sm:$0xff] %v3333
        %3547 = vst [vmem:[#allocation5 + $0x240] sm:$0xff] %v3337
        %3548 = vst [vmem:[#allocation5 + $0x248] sm:$0xff] %v3339
        %3549 = vst [vmem:[#allocation5 + $0x250] sm:$0xff] %v3341
        %3550 = vst [vmem:[#allocation5 + $0x258] sm:$0xff] %v3343
        %3551 = vst [vmem:[#allocation5 + $0x260] sm:$0xff] %v3347
        %3552 = vst [vmem:[#allocation5 + $0x268] sm:$0xff] %v3349
        %3553 = vst [vmem:[#allocation5 + $0x270] sm:$0xff] %v3351
        %3554 = vst [vmem:[#allocation5 + $0x278] sm:$0xff] %v3353
        %3555 = vst [vmem:[#allocation5 + $0x280] sm:$0xff] %v3357
        %3556 = vst [vmem:[#allocation5 + $0x288] sm:$0xff] %v3359
        %3557 = vst [vmem:[#allocation5 + $0x290] sm:$0xff] %v3361
        %3558 = vst [vmem:[#allocation5 + $0x298] sm:$0xff] %v3363
        %3559 = vst [vmem:[#allocation5 + $0x2a0] sm:$0xff] %v3367
        %3560 = vst [vmem:[#allocation5 + $0x2a8] sm:$0xff] %v3369
        %3561 = vst [vmem:[#allocation5 + $0x2b0] sm:$0xff] %v3371
        %3562 = vst [vmem:[#allocation5 + $0x2b8] sm:$0xff] %v3373
        %3563 = vst [vmem:[#allocation5 + $0x2c0] sm:$0xff] %v3377
        %3564 = vst [vmem:[#allocation5 + $0x2c8] sm:$0xff] %v3379
        %3565 = vst [vmem:[#allocation5 + $0x2d0] sm:$0xff] %v3381
        %3566 = vst [vmem:[#allocation5 + $0x2d8] sm:$0xff] %v3383
        %3567 = vst [vmem:[#allocation5 + $0x2e0] sm:$0xff] %v3387
        %3568 = vst [vmem:[#allocation5 + $0x2e8] sm:$0xff] %v3389
        %3569 = vst [vmem:[#allocation5 + $0x2f0] sm:$0xff] %v3391
        %3570 = vst [vmem:[#allocation5 + $0x2f8] sm:$0xff] %v3393
        %3571 = vst [vmem:[#allocation5 + $0x300] sm:$0xff] %v3397
        %3572 = vst [vmem:[#allocation5 + $0x308] sm:$0xff] %v3399
        %3573 = vst [vmem:[#allocation5 + $0x310] sm:$0xff] %v3401
        %3574 = vst [vmem:[#allocation5 + $0x318] sm:$0xff] %v3403
        %3575 = vst [vmem:[#allocation5 + $0x320] sm:$0xff] %v3407
        %3576 = vst [vmem:[#allocation5 + $0x328] sm:$0xff] %v3409
        %3577 = vst [vmem:[#allocation5 + $0x330] sm:$0xff] %v3411
        %3578 = vst [vmem:[#allocation5 + $0x338] sm:$0xff] %v3413
        %3579 = vst [vmem:[#allocation5 + $0x340] sm:$0xff] %v3417
        %3580 = vst [vmem:[#allocation5 + $0x348] sm:$0xff] %v3419
        %3581 = vst [vmem:[#allocation5 + $0x350] sm:$0xff] %v3421
        %3582 = vst [vmem:[#allocation5 + $0x358] sm:$0xff] %v3423
        %3583 = vst [vmem:[#allocation5 + $0x360] sm:$0xff] %v3427
        %3584 = vst [vmem:[#allocation5 + $0x368] sm:$0xff] %v3429
        %3585 = vst [vmem:[#allocation5 + $0x370] sm:$0xff] %v3431
        %3586 = vst [vmem:[#allocation5 + $0x378] sm:$0xff] %v3433
        %3587 = vst [vmem:[#allocation5 + $0x380] sm:$0xff] %v3437
        %3588 = vst [vmem:[#allocation5 + $0x388] sm:$0xff] %v3439
        %3589 = vst [vmem:[#allocation5 + $0x390] sm:$0xff] %v3441
        %3590 = vst [vmem:[#allocation5 + $0x398] sm:$0xff] %v3443
        %3591 = vst [vmem:[#allocation5 + $0x3a0] sm:$0xff] %v3447
        %3592 = vst [vmem:[#allocation5 + $0x3a8] sm:$0xff] %v3449
        %3593 = vst [vmem:[#allocation5 + $0x3b0] sm:$0xff] %v3451
        %3594 = vst [vmem:[#allocation5 + $0x3b8] sm:$0xff] %v3453
        %3595 = vst [vmem:[#allocation5 + $0x3c0] sm:$0xff] %v3457
        %3596 = vst [vmem:[#allocation5 + $0x3c8] sm:$0xff] %v3459
        %3597 = vst [vmem:[#allocation5 + $0x3d0] sm:$0xff] %v3461
        %3598 = vst [vmem:[#allocation5 + $0x3d8] sm:$0xff] %v3463
        %3599 = vst [vmem:[#allocation5 + $0x3e0] sm:$0xff] %v3467
        %3600 = vst [vmem:[#allocation5 + $0x3e8] sm:$0xff] %v3469
        %3601 = vst [vmem:[#allocation5 + $0x3f0] sm:$0xff] %v3471
        %3602 = vst [vmem:[#allocation5 + $0x3f8] sm:$0xff] %v3473
        %v3603 = vlaneseq
        %v3604 = vshrl.u32 %v3603, 7
        %v3605 = vsub.s32 0, %v3604
        %v3606 = vrot.slane %v2654, %v3605
        %v3607 = vlaneseq
        %v3608 = vshrl.u32 %v3607, 7
        %v3609 = vsub.s32 0, %v3608
        %v3610 = vrot.slane %v2655, %v3609
        %v3611 = vmul.f32 %v3606, 0.0
        %v3612 = vmul.f32 %v3610, 0.0
        %v3613 = vpack.c.bf16 %v3611, %v3611
        %v3614 = vpack.c.bf16 %v3612, %v3612
        %v3615 = vld [vmem:[#allocation6] sm:$0xff]
        %v3616 = vld [vmem:[#allocation6 + $0x8] sm:$0xff]
        %v3617 = vld [vmem:[#allocation6 + $0x10] sm:$0xff]
        %v3618 = vld [vmem:[#allocation6 + $0x18] sm:$0xff]
        %v3619 = vld [vmem:[#allocation6 + $0x20] sm:$0xff]
        %v3620 = vld [vmem:[#allocation6 + $0x28] sm:$0xff]
        %v3621 = vld [vmem:[#allocation6 + $0x30] sm:$0xff]
        %v3622 = vld [vmem:[#allocation6 + $0x38] sm:$0xff]
        %v3623 = vld [vmem:[#allocation6 + $0x40] sm:$0xff]
        %v3624 = vld [vmem:[#allocation6 + $0x48] sm:$0xff]
        %v3625 = vld [vmem:[#allocation6 + $0x50] sm:$0xff]
        %v3626 = vld [vmem:[#allocation6 + $0x58] sm:$0xff]
        %v3627 = vld [vmem:[#allocation6 + $0x60] sm:$0xff]
        %v3628 = vld [vmem:[#allocation6 + $0x68] sm:$0xff]
        %v3629 = vld [vmem:[#allocation6 + $0x70] sm:$0xff]
        %v3630 = vld [vmem:[#allocation6 + $0x78] sm:$0xff]
        %v3631 = vld [vmem:[#allocation6 + $0x80] sm:$0xff]
        %v3632 = vld [vmem:[#allocation6 + $0x88] sm:$0xff]
        %v3633 = vld [vmem:[#allocation6 + $0x90] sm:$0xff]
        %v3634 = vld [vmem:[#allocation6 + $0x98] sm:$0xff]
        %v3635 = vld [vmem:[#allocation6 + $0xa0] sm:$0xff]
        %v3636 = vld [vmem:[#allocation6 + $0xa8] sm:$0xff]
        %v3637 = vld [vmem:[#allocation6 + $0xb0] sm:$0xff]
        %v3638 = vld [vmem:[#allocation6 + $0xb8] sm:$0xff]
        %v3639 = vld [vmem:[#allocation6 + $0xc0] sm:$0xff]
        %v3640 = vld [vmem:[#allocation6 + $0xc8] sm:$0xff]
        %v3641 = vld [vmem:[#allocation6 + $0xd0] sm:$0xff]
        %v3642 = vld [vmem:[#allocation6 + $0xd8] sm:$0xff]
        %v3643 = vld [vmem:[#allocation6 + $0xe0] sm:$0xff]
        %v3644 = vld [vmem:[#allocation6 + $0xe8] sm:$0xff]
        %v3645 = vld [vmem:[#allocation6 + $0xf0] sm:$0xff]
        %v3646 = vld [vmem:[#allocation6 + $0xf8] sm:$0xff]
        %v3679 = vunpack.c.l.b16 %v3615
        %v3680 = vunpack.c.h.b16 %v3615
        %v3681 = vunpack.c.l.b16 %v3616
        %v3682 = vunpack.c.h.b16 %v3616
        %v3683 = vunpack.c.l.b16 %v3617
        %v3684 = vunpack.c.h.b16 %v3617
        %v3685 = vunpack.c.l.b16 %v3618
        %v3686 = vunpack.c.h.b16 %v3618
        %v3687 = vunpack.c.l.b16 %v3619
        %v3688 = vunpack.c.h.b16 %v3619
        %v3689 = vunpack.c.l.b16 %v3620
        %v3690 = vunpack.c.h.b16 %v3620
        %v3691 = vunpack.c.l.b16 %v3621
        %v3692 = vunpack.c.h.b16 %v3621
        %v3693 = vunpack.c.l.b16 %v3622
        %v3694 = vunpack.c.h.b16 %v3622
        %v3695 = vunpack.c.l.b16 %v3623
        %v3696 = vunpack.c.h.b16 %v3623
        %v3697 = vunpack.c.l.b16 %v3624
        %v3698 = vunpack.c.h.b16 %v3624
        %v3699 = vunpack.c.l.b16 %v3625
        %v3700 = vunpack.c.h.b16 %v3625
        %v3701 = vunpack.c.l.b16 %v3626
        %v3702 = vunpack.c.h.b16 %v3626
        %v3703 = vunpack.c.l.b16 %v3627
        %v3704 = vunpack.c.h.b16 %v3627
        %v3705 = vunpack.c.l.b16 %v3628
        %v3706 = vunpack.c.h.b16 %v3628
        %v3707 = vunpack.c.l.b16 %v3629
        %v3708 = vunpack.c.h.b16 %v3629
        %v3709 = vunpack.c.l.b16 %v3630
        %v3710 = vunpack.c.h.b16 %v3630
        %v3711 = vunpack.c.l.b16 %v3631
        %v3712 = vunpack.c.h.b16 %v3631
        %v3713 = vunpack.c.l.b16 %v3632
        %v3714 = vunpack.c.h.b16 %v3632
        %v3715 = vunpack.c.l.b16 %v3633
        %v3716 = vunpack.c.h.b16 %v3633
        %v3717 = vunpack.c.l.b16 %v3634
        %v3718 = vunpack.c.h.b16 %v3634
        %v3719 = vunpack.c.l.b16 %v3635
        %v3720 = vunpack.c.h.b16 %v3635
        %v3721 = vunpack.c.l.b16 %v3636
        %v3722 = vunpack.c.h.b16 %v3636
        %v3723 = vunpack.c.l.b16 %v3637
        %v3724 = vunpack.c.h.b16 %v3637
        %v3725 = vunpack.c.l.b16 %v3638
        %v3726 = vunpack.c.h.b16 %v3638
        %v3727 = vunpack.c.l.b16 %v3639
        %v3728 = vunpack.c.h.b16 %v3639
        %v3729 = vunpack.c.l.b16 %v3640
        %v3730 = vunpack.c.h.b16 %v3640
        %v3731 = vunpack.c.l.b16 %v3641
        %v3732 = vunpack.c.h.b16 %v3641
        %v3733 = vunpack.c.l.b16 %v3642
        %v3734 = vunpack.c.h.b16 %v3642
        %v3735 = vunpack.c.l.b16 %v3643
        %v3736 = vunpack.c.h.b16 %v3643
        %v3737 = vunpack.c.l.b16 %v3644
        %v3738 = vunpack.c.h.b16 %v3644
        %v3739 = vunpack.c.l.b16 %v3645
        %v3740 = vunpack.c.h.b16 %v3645
        %v3741 = vunpack.c.l.b16 %v3646
        %v3742 = vunpack.c.h.b16 %v3646
        %v3743 = vpack.c.b16 %v3681, %v3679
        %v3744 = vpack.c.b16 %v3682, %v3680
        %v3745 = vpack.c.b16 %v3685, %v3683
        %v3746 = vpack.c.b16 %v3686, %v3684
        %v3747 = vpack.c.b16 %v3689, %v3687
        %v3748 = vpack.c.b16 %v3690, %v3688
        %v3749 = vpack.c.b16 %v3693, %v3691
        %v3750 = vpack.c.b16 %v3694, %v3692
        %v3751 = vpack.c.b16 %v3697, %v3695
        %v3752 = vpack.c.b16 %v3698, %v3696
        %v3753 = vpack.c.b16 %v3701, %v3699
        %v3754 = vpack.c.b16 %v3702, %v3700
        %v3755 = vpack.c.b16 %v3705, %v3703
        %v3756 = vpack.c.b16 %v3706, %v3704
        %v3757 = vpack.c.b16 %v3709, %v3707
        %v3758 = vpack.c.b16 %v3710, %v3708
        %v3759 = vpack.c.b16 %v3713, %v3711
        %v3760 = vpack.c.b16 %v3714, %v3712
        %v3761 = vpack.c.b16 %v3717, %v3715
        %v3762 = vpack.c.b16 %v3718, %v3716
        %v3763 = vpack.c.b16 %v3721, %v3719
        %v3764 = vpack.c.b16 %v3722, %v3720
        %v3765 = vpack.c.b16 %v3725, %v3723
        %v3766 = vpack.c.b16 %v3726, %v3724
        %v3767 = vpack.c.b16 %v3729, %v3727
        %v3768 = vpack.c.b16 %v3730, %v3728
        %v3769 = vpack.c.b16 %v3733, %v3731
        %v3770 = vpack.c.b16 %v3734, %v3732
        %v3771 = vpack.c.b16 %v3737, %v3735
        %v3772 = vpack.c.b16 %v3738, %v3736
        %v3773 = vpack.c.b16 %v3741, %v3739
        %v3774 = vpack.c.b16 %v3742, %v3740
        %3807 = vmatprep.subr.bf16.mxu0 %v3744
        %3808 = vmatpush1.bf16.msra.mxu0 %v3743
        %3809 = vmatprep.subr.bf16.mxu0 %v3746
        %3810 = vmatpush1.bf16.msra.mxu0 %v3745
        %3811 = vmatprep.subr.bf16.mxu0 %v3748
        %3812 = vmatpush1.bf16.msra.mxu0 %v3747
        %3813 = vmatprep.subr.bf16.mxu0 %v3750
        %3814 = vmatpush1.bf16.msra.mxu0 %v3749
        %3815 = vmatprep.subr.bf16.mxu0 %v3752
        %3816 = vmatpush1.bf16.msra.mxu0 %v3751
        %3817 = vmatprep.subr.bf16.mxu0 %v3754
        %3818 = vmatpush1.bf16.msra.mxu0 %v3753
        %3819 = vmatprep.subr.bf16.mxu0 %v3756
        %3820 = vmatpush1.bf16.msra.mxu0 %v3755
        %3821 = vmatprep.subr.bf16.mxu0 %v3758
        %3822 = vmatpush1.bf16.msra.mxu0 %v3757
        %3823 = vmatprep.subr.bf16.mxu0 %v3760
        %3824 = vmatpush1.bf16.msra.mxu0 %v3759
        %3825 = vmatprep.subr.bf16.mxu0 %v3762
        %3826 = vmatpush1.bf16.msra.mxu0 %v3761
        %3827 = vmatprep.subr.bf16.mxu0 %v3764
        %3828 = vmatpush1.bf16.msra.mxu0 %v3763
        %3829 = vmatprep.subr.bf16.mxu0 %v3766
        %3830 = vmatpush1.bf16.msra.mxu0 %v3765
        %3831 = vmatprep.subr.bf16.mxu0 %v3768
        %3832 = vmatpush1.bf16.msra.mxu0 %v3767
        %3833 = vmatprep.subr.bf16.mxu0 %v3770
        %3834 = vmatpush1.bf16.msra.mxu0 %v3769
        %3835 = vmatprep.subr.bf16.mxu0 %v3772
        %3836 = vmatpush1.bf16.msra.mxu0 %v3771
        %3837 = vmatprep.subr.bf16.mxu0 %v3774
        %3838 = vmatpush1.bf16.msra.mxu0 %v3773
        %3839 = vmatprep.mubr.bf16.mxu0 %v3614
        %3840 = vmatmul.mubr.bf16.gmra.mrb[0].mxu0 %v3613
        %v3841 = vpop.f32.mrb[0].mxu0
        %v3842 = vadd.f32 0.0, %v3841
        %v3843 = vpop.f32.mrb[0].mxu0
        %v3844 = vadd.f32 0.0, %v3843
        %v3845 = vpop.f32.mrb[0].mxu0
        %v3846 = vadd.f32 0.0, %v3845
        %v3847 = vpop.f32.mrb[0].mxu0
        %v3848 = vadd.f32 0.0, %v3847
        %3849 = vmatprep.mubr.bf16.mxu0 %v3614
        %3850 = vmatmul.mubr.bf16.gmra.mrb[0].mxu0 %v3613
        %v3851 = vpop.f32.mrb[0].mxu0
        %v3852 = vadd.f32 0.0, %v3851
        %v3853 = vpop.f32.mrb[0].mxu0
        %v3854 = vadd.f32 0.0, %v3853
        %v3855 = vpop.f32.mrb[0].mxu0
        %v3856 = vadd.f32 0.0, %v3855
        %v3857 = vpop.f32.mrb[0].mxu0
        %v3858 = vadd.f32 0.0, %v3857
        %3859 = vmatprep.mubr.bf16.mxu0 %v3614
        %3860 = vmatmul.mubr.bf16.gmra.mrb[0].mxu0 %v3613
        %v3861 = vpop.f32.mrb[0].mxu0
        %v3862 = vadd.f32 0.0, %v3861
        %v3863 = vpop.f32.mrb[0].mxu0
        %v3864 = vadd.f32 0.0, %v3863
        %v3865 = vpop.f32.mrb[0].mxu0
        %v3866 = vadd.f32 0.0, %v3865
        %v3867 = vpop.f32.mrb[0].mxu0
        %v3868 = vadd.f32 0.0, %v3867
        %3869 = vmatprep.mubr.bf16.mxu0 %v3614
        %3870 = vmatmul.mubr.bf16.gmra.mrb[0].mxu0 %v3613
        %v3871 = vpop.f32.mrb[0].mxu0
        %v3872 = vadd.f32 0.0, %v3871
        %v3873 = vpop.f32.mrb[0].mxu0
        %v3874 = vadd.f32 0.0, %v3873
        %v3875 = vpop.f32.mrb[0].mxu0
        %v3876 = vadd.f32 0.0, %v3875
        %v3877 = vpop.f32.mrb[0].mxu0
        %v3878 = vadd.f32 0.0, %v3877
        %3879 = vdwg.mxu0
        %v3880 = vlaneseq
        %v3881 = vshrl.u32 %v3880, 7
        %v3882 = vsub.s32 0, %v3881
        %v3883 = vrot.slane %v2560, %v3882
        %v3884 = vlaneseq
        %v3885 = vshrl.u32 %v3884, 7
        %v3886 = vsub.s32 0, %v3885
        %v3887 = vrot.slane %v2562, %v3886
        %v3888 = vmul.f32 %v3883, 0.0
        %v3889 = vmul.f32 %v3887, 0.0
        %v3890 = vld [vmem:[#allocation5] sm:$0xff]
        %v3891 = vld [vmem:[#allocation5 + $0x8] sm:$0xff]
        %v3892 = vld [vmem:[#allocation5 + $0x10] sm:$0xff]
        %v3893 = vld [vmem:[#allocation5 + $0x18] sm:$0xff]
        %v3894 = vld [vmem:[#allocation5 + $0x20] sm:$0xff]
        %v3895 = vld [vmem:[#allocation5 + $0x28] sm:$0xff]
        %v3896 = vld [vmem:[#allocation5 + $0x30] sm:$0xff]
        %v3897 = vld [vmem:[#allocation5 + $0x38] sm:$0xff]
        %v3898 = vld [vmem:[#allocation5 + $0x40] sm:$0xff]
        %v3899 = vld [vmem:[#allocation5 + $0x48] sm:$0xff]
        %v3900 = vld [vmem:[#allocation5 + $0x50] sm:$0xff]
        %v3901 = vld [vmem:[#allocation5 + $0x58] sm:$0xff]
        %v3902 = vld [vmem:[#allocation5 + $0x60] sm:$0xff]
        %v3903 = vld [vmem:[#allocation5 + $0x68] sm:$0xff]
        %v3904 = vld [vmem:[#allocation5 + $0x70] sm:$0xff]
        %v3905 = vld [vmem:[#allocation5 + $0x78] sm:$0xff]
        %v3906 = vlaneseq
        %v3907 = vshrl.u32 %v3906, 7
        %v3908 = vsub.s32 0, %v3907
        %v3909 = vrot.slane %v2652, %v3908
        %v3910 = vlaneseq
        %v3911 = vshrl.u32 %v3910, 7
        %v3912 = vsub.s32 0, %v3911
        %v3913 = vrot.slane %v2653, %v3912
        %v3914 = vmul.f32 %v3890, %v3909
        %v3915 = vmul.f32 %v3891, %v3913
        %v3916 = vmul.f32 %v3892, %v3909
        %v3917 = vmul.f32 %v3893, %v3913
        %v3918 = vmul.f32 %v3894, %v3909
        %v3919 = vmul.f32 %v3895, %v3913
        %v3920 = vmul.f32 %v3896, %v3909
        %v3921 = vmul.f32 %v3897, %v3913
        %v3922 = vmul.f32 %v3898, %v3909
        %v3923 = vmul.f32 %v3899, %v3913
        %v3924 = vmul.f32 %v3900, %v3909
        %v3925 = vmul.f32 %v3901, %v3913
        %v3926 = vmul.f32 %v3902, %v3909
        %v3927 = vmul.f32 %v3903, %v3913
        %v3928 = vmul.f32 %v3904, %v3909
        %v3929 = vmul.f32 %v3905, %v3913
        %v3930 = vadd.f32 %v3888, %v3914
        %v3931 = vadd.f32 %v3889, %v3915
        %v3932 = vadd.f32 %v3888, %v3916
        %v3933 = vadd.f32 %v3889, %v3917
        %v3934 = vadd.f32 %v3888, %v3918
        %v3935 = vadd.f32 %v3889, %v3919
        %v3936 = vadd.f32 %v3888, %v3920
        %v3937 = vadd.f32 %v3889, %v3921
        %v3938 = vadd.f32 %v3888, %v3922
        %v3939 = vadd.f32 %v3889, %v3923
        %v3940 = vadd.f32 %v3888, %v3924
        %v3941 = vadd.f32 %v3889, %v3925
        %v3942 = vadd.f32 %v3888, %v3926
        %v3943 = vadd.f32 %v3889, %v3927
        %v3944 = vadd.f32 %v3888, %v3928
        %v3945 = vadd.f32 %v3889, %v3929
        %v3946 = vlaneseq
        %v3947 = vshrl.u32 %v3946, 7
        %v3948 = vsub.s32 0, %v3947
        %v3949 = vrot.slane %v2656, %v3948
        %v3950 = vlaneseq
        %v3951 = vshrl.u32 %v3950, 7
        %v3952 = vsub.s32 0, %v3951
        %v3953 = vrot.slane %v2657, %v3952
        %v3954 = vmul.f32 %v3842, %v3949
        %v3955 = vmul.f32 %v3844, %v3953
        %v3956 = vmul.f32 %v3846, %v3949
        %v3957 = vmul.f32 %v3848, %v3953
        %v3958 = vmul.f32 %v3852, %v3949
        %v3959 = vmul.f32 %v3854, %v3953
        %v3960 = vmul.f32 %v3856, %v3949
        %v3961 = vmul.f32 %v3858, %v3953
        %v3962 = vmul.f32 %v3862, %v3949
        %v3963 = vmul.f32 %v3864, %v3953
        %v3964 = vmul.f32 %v3866, %v3949
        %v3965 = vmul.f32 %v3868, %v3953
        %v3966 = vmul.f32 %v3872, %v3949
        %v3967 = vmul.f32 %v3874, %v3953
        %v3968 = vmul.f32 %v3876, %v3949
        %v3969 = vmul.f32 %v3878, %v3953
        %v3970 = vadd.f32 %v3930, %v3954
        %v3971 = vadd.f32 %v3931, %v3955
        %v3972 = vadd.f32 %v3932, %v3956
        %v3973 = vadd.f32 %v3933, %v3957
        %v3974 = vadd.f32 %v3934, %v3958
        %v3975 = vadd.f32 %v3935, %v3959
        %v3976 = vadd.f32 %v3936, %v3960
        %v3977 = vadd.f32 %v3937, %v3961
        %v3978 = vadd.f32 %v3938, %v3962
        %v3979 = vadd.f32 %v3939, %v3963
        %v3980 = vadd.f32 %v3940, %v3964
        %v3981 = vadd.f32 %v3941, %v3965
        %v3982 = vadd.f32 %v3942, %v3966
        %v3983 = vadd.f32 %v3943, %v3967
        %v3984 = vadd.f32 %v3944, %v3968
        %v3985 = vadd.f32 %v3945, %v3969
        %3986 = vst [vmem:[#allocation4] sm:$0xff] %v3970
        %3987 = vst [vmem:[#allocation4 + $0x8] sm:$0xff] %v3971
        %3988 = vst [vmem:[#allocation4 + $0x10] sm:$0xff] %v3972
        %3989 = vst [vmem:[#allocation4 + $0x18] sm:$0xff] %v3973
        %3990 = vst [vmem:[#allocation4 + $0x20] sm:$0xff] %v3974
        %3991 = vst [vmem:[#allocation4 + $0x28] sm:$0xff] %v3975
        %3992 = vst [vmem:[#allocation4 + $0x30] sm:$0xff] %v3976
        %3993 = vst [vmem:[#allocation4 + $0x38] sm:$0xff] %v3977
        %3994 = vst [vmem:[#allocation4 + $0x40] sm:$0xff] %v3978
        %3995 = vst [vmem:[#allocation4 + $0x48] sm:$0xff] %v3979
        %3996 = vst [vmem:[#allocation4 + $0x50] sm:$0xff] %v3980
        %3997 = vst [vmem:[#allocation4 + $0x58] sm:$0xff] %v3981
        %3998 = vst [vmem:[#allocation4 + $0x60] sm:$0xff] %v3982
        %3999 = vst [vmem:[#allocation4 + $0x68] sm:$0xff] %v3983
        %4000 = vst [vmem:[#allocation4 + $0x70] sm:$0xff] %v3984
        %4001 = vst [vmem:[#allocation4 + $0x78] sm:$0xff] %v3985
        %v4002 = vlaneseq
        %v4003 = vshrl.u32 %v4002, 7
        %v4004 = vsub.s32 1, %v4003
        %v4005 = vrot.slane %v2654, %v4004
        %v4006 = vlaneseq
        %v4007 = vshrl.u32 %v4006, 7
        %v4008 = vsub.s32 1, %v4007
        %v4009 = vrot.slane %v2655, %v4008
        %v4010 = vmul.f32 %v3970, %v4005
        %v4011 = vmul.f32 %v3971, %v4009
        %v4012 = vmul.f32 %v3972, %v4005
        %v4013 = vmul.f32 %v3973, %v4009
        %v4014 = vmul.f32 %v3974, %v4005
        %v4015 = vmul.f32 %v3975, %v4009
        %v4016 = vmul.f32 %v3976, %v4005
        %v4017 = vmul.f32 %v3977, %v4009
        %v4018 = vmul.f32 %v3978, %v4005
        %v4019 = vmul.f32 %v3979, %v4009
        %v4020 = vmul.f32 %v3980, %v4005
        %v4021 = vmul.f32 %v3981, %v4009
        %v4022 = vmul.f32 %v3982, %v4005
        %v4023 = vmul.f32 %v3983, %v4009
        %v4024 = vmul.f32 %v3984, %v4005
        %v4025 = vmul.f32 %v3985, %v4009
        %v4026 = vpack.c.bf16 %v4012, %v4010
        %v4027 = vpack.c.bf16 %v4013, %v4011
        %v4028 = vpack.c.bf16 %v4016, %v4014
        %v4029 = vpack.c.bf16 %v4017, %v4015
        %v4030 = vpack.c.bf16 %v4020, %v4018
        %v4031 = vpack.c.bf16 %v4021, %v4019
        %v4032 = vpack.c.bf16 %v4024, %v4022
        %v4033 = vpack.c.bf16 %v4025, %v4023
        %v4034 = vld [vmem:[#allocation6] sm:$0xff]
        %v4035 = vld [vmem:[#allocation6 + $0x8] sm:$0xff]
        %v4036 = vld [vmem:[#allocation6 + $0x10] sm:$0xff]
        %v4037 = vld [vmem:[#allocation6 + $0x18] sm:$0xff]
        %v4038 = vld [vmem:[#allocation6 + $0x20] sm:$0xff]
        %v4039 = vld [vmem:[#allocation6 + $0x28] sm:$0xff]
        %v4040 = vld [vmem:[#allocation6 + $0x30] sm:$0xff]
        %v4041 = vld [vmem:[#allocation6 + $0x38] sm:$0xff]
        %v4042 = vld [vmem:[#allocation6 + $0x40] sm:$0xff]
        %v4043 = vld [vmem:[#allocation6 + $0x48] sm:$0xff]
        %v4044 = vld [vmem:[#allocation6 + $0x50] sm:$0xff]
        %v4045 = vld [vmem:[#allocation6 + $0x58] sm:$0xff]
        %v4046 = vld [vmem:[#allocation6 + $0x60] sm:$0xff]
        %v4047 = vld [vmem:[#allocation6 + $0x68] sm:$0xff]
        %v4048 = vld [vmem:[#allocation6 + $0x70] sm:$0xff]
        %v4049 = vld [vmem:[#allocation6 + $0x78] sm:$0xff]
        %v4050 = vld [vmem:[#allocation6 + $0x80] sm:$0xff]
        %v4051 = vld [vmem:[#allocation6 + $0x88] sm:$0xff]
        %v4052 = vld [vmem:[#allocation6 + $0x90] sm:$0xff]
        %v4053 = vld [vmem:[#allocation6 + $0x98] sm:$0xff]
        %v4054 = vld [vmem:[#allocation6 + $0xa0] sm:$0xff]
        %v4055 = vld [vmem:[#allocation6 + $0xa8] sm:$0xff]
        %v4056 = vld [vmem:[#allocation6 + $0xb0] sm:$0xff]
        %v4057 = vld [vmem:[#allocation6 + $0xb8] sm:$0xff]
        %v4058 = vld [vmem:[#allocation6 + $0xc0] sm:$0xff]
        %v4059 = vld [vmem:[#allocation6 + $0xc8] sm:$0xff]
        %v4060 = vld [vmem:[#allocation6 + $0xd0] sm:$0xff]
        %v4061 = vld [vmem:[#allocation6 + $0xd8] sm:$0xff]
        %v4062 = vld [vmem:[#allocation6 + $0xe0] sm:$0xff]
        %v4063 = vld [vmem:[#allocation6 + $0xe8] sm:$0xff]
        %v4064 = vld [vmem:[#allocation6 + $0xf0] sm:$0xff]
        %v4065 = vld [vmem:[#allocation6 + $0xf8] sm:$0xff]
        %v4098 = vunpack.c.l.b16 %v4034
        %v4099 = vunpack.c.h.b16 %v4034
        %v4100 = vunpack.c.l.b16 %v4035
        %v4101 = vunpack.c.h.b16 %v4035
        %v4102 = vunpack.c.l.b16 %v4036
        %v4103 = vunpack.c.h.b16 %v4036
        %v4104 = vunpack.c.l.b16 %v4037
        %v4105 = vunpack.c.h.b16 %v4037
        %v4106 = vunpack.c.l.b16 %v4038
        %v4107 = vunpack.c.h.b16 %v4038
        %v4108 = vunpack.c.l.b16 %v4039
        %v4109 = vunpack.c.h.b16 %v4039
        %v4110 = vunpack.c.l.b16 %v4040
        %v4111 = vunpack.c.h.b16 %v4040
        %v4112 = vunpack.c.l.b16 %v4041
        %v4113 = vunpack.c.h.b16 %v4041
        %v4114 = vunpack.c.l.b16 %v4042
        %v4115 = vunpack.c.h.b16 %v4042
        %v4116 = vunpack.c.l.b16 %v4043
        %v4117 = vunpack.c.h.b16 %v4043
        %v4118 = vunpack.c.l.b16 %v4044
        %v4119 = vunpack.c.h.b16 %v4044
        %v4120 = vunpack.c.l.b16 %v4045
        %v4121 = vunpack.c.h.b16 %v4045
        %v4122 = vunpack.c.l.b16 %v4046
        %v4123 = vunpack.c.h.b16 %v4046
        %v4124 = vunpack.c.l.b16 %v4047
        %v4125 = vunpack.c.h.b16 %v4047
        %v4126 = vunpack.c.l.b16 %v4048
        %v4127 = vunpack.c.h.b16 %v4048
        %v4128 = vunpack.c.l.b16 %v4049
        %v4129 = vunpack.c.h.b16 %v4049
        %v4130 = vunpack.c.l.b16 %v4050
        %v4131 = vunpack.c.h.b16 %v4050
        %v4132 = vunpack.c.l.b16 %v4051
        %v4133 = vunpack.c.h.b16 %v4051
        %v4134 = vunpack.c.l.b16 %v4052
        %v4135 = vunpack.c.h.b16 %v4052
        %v4136 = vunpack.c.l.b16 %v4053
        %v4137 = vunpack.c.h.b16 %v4053
        %v4138 = vunpack.c.l.b16 %v4054
        %v4139 = vunpack.c.h.b16 %v4054
        %v4140 = vunpack.c.l.b16 %v4055
        %v4141 = vunpack.c.h.b16 %v4055
        %v4142 = vunpack.c.l.b16 %v4056
        %v4143 = vunpack.c.h.b16 %v4056
        %v4144 = vunpack.c.l.b16 %v4057
        %v4145 = vunpack.c.h.b16 %v4057
        %v4146 = vunpack.c.l.b16 %v4058
        %v4147 = vunpack.c.h.b16 %v4058
        %v4148 = vunpack.c.l.b16 %v4059
        %v4149 = vunpack.c.h.b16 %v4059
        %v4150 = vunpack.c.l.b16 %v4060
        %v4151 = vunpack.c.h.b16 %v4060
        %v4152 = vunpack.c.l.b16 %v4061
        %v4153 = vunpack.c.h.b16 %v4061
        %v4154 = vunpack.c.l.b16 %v4062
        %v4155 = vunpack.c.h.b16 %v4062
        %v4156 = vunpack.c.l.b16 %v4063
        %v4157 = vunpack.c.h.b16 %v4063
        %v4158 = vunpack.c.l.b16 %v4064
        %v4159 = vunpack.c.h.b16 %v4064
        %v4160 = vunpack.c.l.b16 %v4065
        %v4161 = vunpack.c.h.b16 %v4065
        %v4162 = vpack.c.b16 %v4100, %v4098
        %v4163 = vpack.c.b16 %v4101, %v4099
        %v4164 = vpack.c.b16 %v4104, %v4102
        %v4165 = vpack.c.b16 %v4105, %v4103
        %v4166 = vpack.c.b16 %v4108, %v4106
        %v4167 = vpack.c.b16 %v4109, %v4107
        %v4168 = vpack.c.b16 %v4112, %v4110
        %v4169 = vpack.c.b16 %v4113, %v4111
        %v4170 = vpack.c.b16 %v4116, %v4114
        %v4171 = vpack.c.b16 %v4117, %v4115
        %v4172 = vpack.c.b16 %v4120, %v4118
        %v4173 = vpack.c.b16 %v4121, %v4119
        %v4174 = vpack.c.b16 %v4124, %v4122
        %v4175 = vpack.c.b16 %v4125, %v4123
        %v4176 = vpack.c.b16 %v4128, %v4126
        %v4177 = vpack.c.b16 %v4129, %v4127
        %v4178 = vpack.c.b16 %v4132, %v4130
        %v4179 = vpack.c.b16 %v4133, %v4131
        %v4180 = vpack.c.b16 %v4136, %v4134
        %v4181 = vpack.c.b16 %v4137, %v4135
        %v4182 = vpack.c.b16 %v4140, %v4138
        %v4183 = vpack.c.b16 %v4141, %v4139
        %v4184 = vpack.c.b16 %v4144, %v4142
        %v4185 = vpack.c.b16 %v4145, %v4143
        %v4186 = vpack.c.b16 %v4148, %v4146
        %v4187 = vpack.c.b16 %v4149, %v4147
        %v4188 = vpack.c.b16 %v4152, %v4150
        %v4189 = vpack.c.b16 %v4153, %v4151
        %v4190 = vpack.c.b16 %v4156, %v4154
        %v4191 = vpack.c.b16 %v4157, %v4155
        %v4192 = vpack.c.b16 %v4160, %v4158
        %v4193 = vpack.c.b16 %v4161, %v4159
        %4226 = vmatprep.subr.bf16.mxu0 %v4163
        %4227 = vmatpush1.bf16.msra.mxu0 %v4162
        %4228 = vmatprep.subr.bf16.mxu0 %v4165
        %4229 = vmatpush1.bf16.msra.mxu0 %v4164
        %4230 = vmatprep.subr.bf16.mxu0 %v4167
        %4231 = vmatpush1.bf16.msra.mxu0 %v4166
        %4232 = vmatprep.subr.bf16.mxu0 %v4169
        %4233 = vmatpush1.bf16.msra.mxu0 %v4168
        %4234 = vmatprep.subr.bf16.mxu0 %v4171
        %4235 = vmatpush1.bf16.msra.mxu0 %v4170
        %4236 = vmatprep.subr.bf16.mxu0 %v4173
        %4237 = vmatpush1.bf16.msra.mxu0 %v4172
        %4238 = vmatprep.subr.bf16.mxu0 %v4175
        %4239 = vmatpush1.bf16.msra.mxu0 %v4174
        %4240 = vmatprep.subr.bf16.mxu0 %v4177
        %4241 = vmatpush1.bf16.msra.mxu0 %v4176
        %4242 = vmatprep.subr.bf16.mxu0 %v4179
        %4243 = vmatpush1.bf16.msra.mxu0 %v4178
        %4244 = vmatprep.subr.bf16.mxu0 %v4181
        %4245 = vmatpush1.bf16.msra.mxu0 %v4180
        %4246 = vmatprep.subr.bf16.mxu0 %v4183
        %4247 = vmatpush1.bf16.msra.mxu0 %v4182
        %4248 = vmatprep.subr.bf16.mxu0 %v4185
        %4249 = vmatpush1.bf16.msra.mxu0 %v4184
        %4250 = vmatprep.subr.bf16.mxu0 %v4187
        %4251 = vmatpush1.bf16.msra.mxu0 %v4186
        %4252 = vmatprep.subr.bf16.mxu0 %v4189
        %4253 = vmatpush1.bf16.msra.mxu0 %v4188
        %4254 = vmatprep.subr.bf16.mxu0 %v4191
        %4255 = vmatpush1.bf16.msra.mxu0 %v4190
        %4256 = vmatprep.subr.bf16.mxu0 %v4193
        %4257 = vmatpush1.bf16.msra.mxu0 %v4192
        %4258 = vmatprep.mubr.bf16.mxu0 %v4027
        %4259 = vmatmul.mubr.bf16.gmra.mrb[0].mxu0 %v4026
        %v4260 = vpop.f32.mrb[0].mxu0
        %v4261 = vadd.f32 0.0, %v4260
        %v4262 = vpop.f32.mrb[0].mxu0
        %v4263 = vadd.f32 0.0, %v4262
        %v4264 = vpop.f32.mrb[0].mxu0
        %v4265 = vadd.f32 0.0, %v4264
        %v4266 = vpop.f32.mrb[0].mxu0
        %v4267 = vadd.f32 0.0, %v4266
        %4268 = vmatprep.mubr.bf16.mxu0 %v4029
        %4269 = vmatmul.mubr.bf16.gmra.mrb[0].mxu0 %v4028
        %v4270 = vpop.f32.mrb[0].mxu0
        %v4271 = vadd.f32 0.0, %v4270
        %v4272 = vpop.f32.mrb[0].mxu0
        %v4273 = vadd.f32 0.0, %v4272
        %v4274 = vpop.f32.mrb[0].mxu0
        %v4275 = vadd.f32 0.0, %v4274
        %v4276 = vpop.f32.mrb[0].mxu0
        %v4277 = vadd.f32 0.0, %v4276
        %4278 = vmatprep.mubr.bf16.mxu0 %v4031
        %4279 = vmatmul.mubr.bf16.gmra.mrb[0].mxu0 %v4030
        %v4280 = vpop.f32.mrb[0].mxu0
        %v4281 = vadd.f32 0.0, %v4280
        %v4282 = vpop.f32.mrb[0].mxu0
        %v4283 = vadd.f32 0.0, %v4282
        %v4284 = vpop.f32.mrb[0].mxu0
        %v4285 = vadd.f32 0.0, %v4284
        %v4286 = vpop.f32.mrb[0].mxu0
        %v4287 = vadd.f32 0.0, %v4286
        %4288 = vmatprep.mubr.bf16.mxu0 %v4033
        %4289 = vmatmul.mubr.bf16.gmra.mrb[0].mxu0 %v4032
        %v4290 = vpop.f32.mrb[0].mxu0
        %v4291 = vadd.f32 0.0, %v4290
        %v4292 = vpop.f32.mrb[0].mxu0
        %v4293 = vadd.f32 0.0, %v4292
        %v4294 = vpop.f32.mrb[0].mxu0
        %v4295 = vadd.f32 0.0, %v4294
        %v4296 = vpop.f32.mrb[0].mxu0
        %v4297 = vadd.f32 0.0, %v4296
        %4298 = vdwg.mxu0
        %v4299 = vlaneseq
        %v4300 = vshrl.u32 %v4299, 7
        %v4301 = vsub.s32 1, %v4300
        %v4302 = vrot.slane %v2560, %v4301
        %v4303 = vlaneseq
        %v4304 = vshrl.u32 %v4303, 7
        %v4305 = vsub.s32 1, %v4304
        %v4306 = vrot.slane %v2562, %v4305
        %v4307 = vmul.f32 %v3970, %v4302
        %v4308 = vmul.f32 %v3971, %v4306
        %v4309 = vmul.f32 %v3972, %v4302
        %v4310 = vmul.f32 %v3973, %v4306
        %v4311 = vmul.f32 %v3974, %v4302
        %v4312 = vmul.f32 %v3975, %v4306
        %v4313 = vmul.f32 %v3976, %v4302
        %v4314 = vmul.f32 %v3977, %v4306
        %v4315 = vmul.f32 %v3978, %v4302
        %v4316 = vmul.f32 %v3979, %v4306
        %v4317 = vmul.f32 %v3980, %v4302
        %v4318 = vmul.f32 %v3981, %v4306
        %v4319 = vmul.f32 %v3982, %v4302
        %v4320 = vmul.f32 %v3983, %v4306
        %v4321 = vmul.f32 %v3984, %v4302
        %v4322 = vmul.f32 %v3985, %v4306
        %v4323 = vld [vmem:[#allocation5 + $0x80] sm:$0xff]
        %v4324 = vld [vmem:[#allocation5 + $0x88] sm:$0xff]
        %v4325 = vld [vmem:[#allocation5 + $0x90] sm:$0xff]
        %v4326 = vld [vmem:[#allocation5 + $0x98] sm:$0xff]
        %v4327 = vld [vmem:[#allocation5 + $0xa0] sm:$0xff]
        %v4328 = vld [vmem:[#allocation5 + $0xa8] sm:$0xff]
        %v4329 = vld [vmem:[#allocation5 + $0xb0] sm:$0xff]
        %v4330 = vld [vmem:[#allocation5 + $0xb8] sm:$0xff]
        %v4331 = vld [vmem:[#allocation5 + $0xc0] sm:$0xff]
        %v4332 = vld [vmem:[#allocation5 + $0xc8] sm:$0xff]
        %v4333 = vld [vmem:[#allocation5 + $0xd0] sm:$0xff]
        %v4334 = vld [vmem:[#allocation5 + $0xd8] sm:$0xff]
        %v4335 = vld [vmem:[#allocation5 + $0xe0] sm:$0xff]
        %v4336 = vld [vmem:[#allocation5 + $0xe8] sm:$0xff]
        %v4337 = vld [vmem:[#allocation5 + $0xf0] sm:$0xff]
        %v4338 = vld [vmem:[#allocation5 + $0xf8] sm:$0xff]
        %v4339 = vlaneseq
        %v4340 = vshrl.u32 %v4339, 7
        %v4341 = vsub.s32 1, %v4340
        %v4342 = vrot.slane %v2652, %v4341
        %v4343 = vlaneseq
        %v4344 = vshrl.u32 %v4343, 7
        %v4345 = vsub.s32 1, %v4344
        %v4346 = vrot.slane %v2653, %v4345
        %v4347 = vmul.f32 %v4323, %v4342
        %v4348 = vmul.f32 %v4324, %v4346
        %v4349 = vmul.f32 %v4325, %v4342
        %v4350 = vmul.f32 %v4326, %v4346
        %v4351 = vmul.f32 %v4327, %v4342
        %v4352 = vmul.f32 %v4328, %v4346
        %v4353 = vmul.f32 %v4329, %v4342
        %v4354 = vmul.f32 %v4330, %v4346
        %v4355 = vmul.f32 %v4331, %v4342
        %v4356 = vmul.f32 %v4332, %v4346
        %v4357 = vmul.f32 %v4333, %v4342
        %v4358 = vmul.f32 %v4334, %v4346
        %v4359 = vmul.f32 %v4335, %v4342
        %v4360 = vmul.f32 %v4336, %v4346
        %v4361 = vmul.f32 %v4337, %v4342
        %v4362 = vmul.f32 %v4338, %v4346
        %v4363 = vadd.f32 %v4307, %v4347
        %v4364 = vadd.f32 %v4308, %v4348
        %v4365 = vadd.f32 %v4309, %v4349
        %v4366 = vadd.f32 %v4310, %v4350
        %v4367 = vadd.f32 %v4311, %v4351
        %v4368 = vadd.f32 %v4312, %v4352
        %v4369 = vadd.f32 %v4313, %v4353
        %v4370 = vadd.f32 %v4314, %v4354
        %v4371 = vadd.f32 %v4315, %v4355
        %v4372 = vadd.f32 %v4316, %v4356
        %v4373 = vadd.f32 %v4317, %v4357
        %v4374 = vadd.f32 %v4318, %v4358
        %v4375 = vadd.f32 %v4319, %v4359
        %v4376 = vadd.f32 %v4320, %v4360
        %v4377 = vadd.f32 %v4321, %v4361
        %v4378 = vadd.f32 %v4322, %v4362
        %v4379 = vlaneseq
        %v4380 = vshrl.u32 %v4379, 7
        %v4381 = vsub.s32 1, %v4380
        %v4382 = vrot.slane %v2656, %v4381
        %v4383 = vlaneseq
        %v4384 = vshrl.u32 %v4383, 7
        %v4385 = vsub.s32 1, %v4384
        %v4386 = vrot.slane %v2657, %v4385
        %v4387 = vmul.f32 %v4261, %v4382
        %v4388 = vmul.f32 %v4263, %v4386
        %v4389 = vmul.f32 %v4265, %v4382
        %v4390 = vmul.f32 %v4267, %v4386
        %v4391 = vmul.f32 %v4271, %v4382
        %v4392 = vmul.f32 %v4273, %v4386
        %v4393 = vmul.f32 %v4275, %v4382
        %v4394 = vmul.f32 %v4277, %v4386
        %v4395 = vmul.f32 %v4281, %v4382
        %v4396 = vmul.f32 %v4283, %v4386
        %v4397 = vmul.f32 %v4285, %v4382
        %v4398 = vmul.f32 %v4287, %v4386
        %v4399 = vmul.f32 %v4291, %v4382
        %v4400 = vmul.f32 %v4293, %v4386
        %v4401 = vmul.f32 %v4295, %v4382
        %v4402 = vmul.f32 %v4297, %v4386
        %v4403 = vadd.f32 %v4363, %v4387
        %v4404 = vadd.f32 %v4364, %v4388
        %v4405 = vadd.f32 %v4365, %v4389
        %v4406 = vadd.f32 %v4366, %v4390
        %v4407 = vadd.f32 %v4367, %v4391
        %v4408 = vadd.f32 %v4368, %v4392
        %v4409 = vadd.f32 %v4369, %v4393
        %v4410 = vadd.f32 %v4370, %v4394
        %v4411 = vadd.f32 %v4371, %v4395
        %v4412 = vadd.f32 %v4372, %v4396
        %v4413 = vadd.f32 %v4373, %v4397
        %v4414 = vadd.f32 %v4374, %v4398
        %v4415 = vadd.f32 %v4375, %v4399
        %v4416 = vadd.f32 %v4376, %v4400
        %v4417 = vadd.f32 %v4377, %v4401
        %v4418 = vadd.f32 %v4378, %v4402
        %4419 = vst [vmem:[#allocation4 + $0x80] sm:$0xff] %v4403
        %4420 = vst [vmem:[#allocation4 + $0x88] sm:$0xff] %v4404
        %4421 = vst [vmem:[#allocation4 + $0x90] sm:$0xff] %v4405
        %4422 = vst [vmem:[#allocation4 + $0x98] sm:$0xff] %v4406
        %4423 = vst [vmem:[#allocation4 + $0xa0] sm:$0xff] %v4407
        %4424 = vst [vmem:[#allocation4 + $0xa8] sm:$0xff] %v4408
        %4425 = vst [vmem:[#allocation4 + $0xb0] sm:$0xff] %v4409
        %4426 = vst [vmem:[#allocation4 + $0xb8] sm:$0xff] %v4410
        %4427 = vst [vmem:[#allocation4 + $0xc0] sm:$0xff] %v4411
        %4428 = vst [vmem:[#allocation4 + $0xc8] sm:$0xff] %v4412
        %4429 = vst [vmem:[#allocation4 + $0xd0] sm:$0xff] %v4413
        %4430 = vst [vmem:[#allocation4 + $0xd8] sm:$0xff] %v4414
        %4431 = vst [vmem:[#allocation4 + $0xe0] sm:$0xff] %v4415
        %4432 = vst [vmem:[#allocation4 + $0xe8] sm:$0xff] %v4416
        %4433 = vst [vmem:[#allocation4 + $0xf0] sm:$0xff] %v4417
        %4434 = vst [vmem:[#allocation4 + $0xf8] sm:$0xff] %v4418
        %v4435 = vlaneseq
        %v4436 = vshrl.u32 %v4435, 7
        %v4437 = vsub.s32 2, %v4436
        %v4438 = vrot.slane %v2654, %v4437
        %v4439 = vlaneseq
        %v4440 = vshrl.u32 %v4439, 7
        %v4441 = vsub.s32 2, %v4440
        %v4442 = vrot.slane %v2655, %v4441
        %v4443 = vmul.f32 %v4403, %v4438
        %v4444 = vmul.f32 %v4404, %v4442
        %v4445 = vmul.f32 %v4405, %v4438
        %v4446 = vmul.f32 %v4406, %v4442
        %v4447 = vmul.f32 %v4407, %v4438
        %v4448 = vmul.f32 %v4408, %v4442
        %v4449 = vmul.f32 %v4409, %v4438
        %v4450 = vmul.f32 %v4410, %v4442
        %v4451 = vmul.f32 %v4411, %v4438
        %v4452 = vmul.f32 %v4412, %v4442
        %v4453 = vmul.f32 %v4413, %v4438
        %v4454 = vmul.f32 %v4414, %v4442
        %v4455 = vmul.f32 %v4415, %v4438
        %v4456 = vmul.f32 %v4416, %v4442
        %v4457 = vmul.f32 %v4417, %v4438
        %v4458 = vmul.f32 %v4418, %v4442
        %v4459 = vpack.c.bf16 %v4445, %v4443
        %v4460 = vpack.c.bf16 %v4446, %v4444
        %v4461 = vpack.c.bf16 %v4449, %v4447
        %v4462 = vpack.c.bf16 %v4450, %v4448
        %v4463 = vpack.c.bf16 %v4453, %v4451
        %v4464 = vpack.c.bf16 %v4454, %v4452
        %v4465 = vpack.c.bf16 %v4457, %v4455
        %v4466 = vpack.c.bf16 %v4458, %v4456
        %v4467 = vld [vmem:[#allocation6] sm:$0xff]
        %v4468 = vld [vmem:[#allocation6 + $0x8] sm:$0xff]
        %v4469 = vld [vmem:[#allocation6 + $0x10] sm:$0xff]
        %v4470 = vld [vmem:[#allocation6 + $0x18] sm:$0xff]
        %v4471 = vld [vmem:[#allocation6 + $0x20] sm:$0xff]
        %v4472 = vld [vmem:[#allocation6 + $0x28] sm:$0xff]
        %v4473 = vld [vmem:[#allocation6 + $0x30] sm:$0xff]
        %v4474 = vld [vmem:[#allocation6 + $0x38] sm:$0xff]
        %v4475 = vld [vmem:[#allocation6 + $0x40] sm:$0xff]
        %v4476 = vld [vmem:[#allocation6 + $0x48] sm:$0xff]
        %v4477 = vld [vmem:[#allocation6 + $0x50] sm:$0xff]
        %v4478 = vld [vmem:[#allocation6 + $0x58] sm:$0xff]
        %v4479 = vld [vmem:[#allocation6 + $0x60] sm:$0xff]
        %v4480 = vld [vmem:[#allocation6 + $0x68] sm:$0xff]
        %v4481 = vld [vmem:[#allocation6 + $0x70] sm:$0xff]
        %v4482 = vld [vmem:[#allocation6 + $0x78] sm:$0xff]
        %v4483 = vld [vmem:[#allocation6 + $0x80] sm:$0xff]
        %v4484 = vld [vmem:[#allocation6 + $0x88] sm:$0xff]
        %v4485 = vld [vmem:[#allocation6 + $0x90] sm:$0xff]
        %v4486 = vld [vmem:[#allocation6 + $0x98] sm:$0xff]
        %v4487 = vld [vmem:[#allocation6 + $0xa0] sm:$0xff]
        %v4488 = vld [vmem:[#allocation6 + $0xa8] sm:$0xff]
        %v4489 = vld [vmem:[#allocation6 + $0xb0] sm:$0xff]
        %v4490 = vld [vmem:[#allocation6 + $0xb8] sm:$0xff]
        %v4491 = vld [vmem:[#allocation6 + $0xc0] sm:$0xff]
        %v4492 = vld [vmem:[#allocation6 + $0xc8] sm:$0xff]
        %v4493 = vld [vmem:[#allocation6 + $0xd0] sm:$0xff]
        %v4494 = vld [vmem:[#allocation6 + $0xd8] sm:$0xff]
        %v4495 = vld [vmem:[#allocation6 + $0xe0] sm:$0xff]
        %v4496 = vld [vmem:[#allocation6 + $0xe8] sm:$0xff]
        %v4497 = vld [vmem:[#allocation6 + $0xf0] sm:$0xff]
        %v4498 = vld [vmem:[#allocation6 + $0xf8] sm:$0xff]
        %v4531 = vunpack.c.l.b16 %v4467
        %v4532 = vunpack.c.h.b16 %v4467
        %v4533 = vunpack.c.l.b16 %v4468
        %v4534 = vunpack.c.h.b16 %v4468
        %v4535 = vunpack.c.l.b16 %v4469
        %v4536 = vunpack.c.h.b16 %v4469
        %v4537 = vunpack.c.l.b16 %v4470
        %v4538 = vunpack.c.h.b16 %v4470
        %v4539 = vunpack.c.l.b16 %v4471
        %v4540 = vunpack.c.h.b16 %v4471
        %v4541 = vunpack.c.l.b16 %v4472
        %v4542 = vunpack.c.h.b16 %v4472
        %v4543 = vunpack.c.l.b16 %v4473
        %v4544 = vunpack.c.h.b16 %v4473
        %v4545 = vunpack.c.l.b16 %v4474
        %v4546 = vunpack.c.h.b16 %v4474
        %v4547 = vunpack.c.l.b16 %v4475
        %v4548 = vunpack.c.h.b16 %v4475
        %v4549 = vunpack.c.l.b16 %v4476
        %v4550 = vunpack.c.h.b16 %v4476
        %v4551 = vunpack.c.l.b16 %v4477
        %v4552 = vunpack.c.h.b16 %v4477
        %v4553 = vunpack.c.l.b16 %v4478
        %v4554 = vunpack.c.h.b16 %v4478
        %v4555 = vunpack.c.l.b16 %v4479
        %v4556 = vunpack.c.h.b16 %v4479
        %v4557 = vunpack.c.l.b16 %v4480
        %v4558 = vunpack.c.h.b16 %v4480
        %v4559 = vunpack.c.l.b16 %v4481
        %v4560 = vunpack.c.h.b16 %v4481
        %v4561 = vunpack.c.l.b16 %v4482
        %v4562 = vunpack.c.h.b16 %v4482
        %v4563 = vunpack.c.l.b16 %v4483
        %v4564 = vunpack.c.h.b16 %v4483
        %v4565 = vunpack.c.l.b16 %v4484
        %v4566 = vunpack.c.h.b16 %v4484
        %v4567 = vunpack.c.l.b16 %v4485
        %v4568 = vunpack.c.h.b16 %v4485
        %v4569 = vunpack.c.l.b16 %v4486
        %v4570 = vunpack.c.h.b16 %v4486
        %v4571 = vunpack.c.l.b16 %v4487
        %v4572 = vunpack.c.h.b16 %v4487
        %v4573 = vunpack.c.l.b16 %v4488
        %v4574 = vunpack.c.h.b16 %v4488
        %v4575 = vunpack.c.l.b16 %v4489
        %v4576 = vunpack.c.h.b16 %v4489
        %v4577 = vunpack.c.l.b16 %v4490
        %v4578 = vunpack.c.h.b16 %v4490
        %v4579 = vunpack.c.l.b16 %v4491
        %v4580 = vunpack.c.h.b16 %v4491
        %v4581 = vunpack.c.l.b16 %v4492
        %v4582 = vunpack.c.h.b16 %v4492
        %v4583 = vunpack.c.l.b16 %v4493
        %v4584 = vunpack.c.h.b16 %v4493
        %v4585 = vunpack.c.l.b16 %v4494
        %v4586 = vunpack.c.h.b16 %v4494
        %v4587 = vunpack.c.l.b16 %v4495
        %v4588 = vunpack.c.h.b16 %v4495
        %v4589 = vunpack.c.l.b16 %v4496
        %v4590 = vunpack.c.h.b16 %v4496
        %v4591 = vunpack.c.l.b16 %v4497
        %v4592 = vunpack.c.h.b16 %v4497
        %v4593 = vunpack.c.l.b16 %v4498
        %v4594 = vunpack.c.h.b16 %v4498
        %v4595 = vpack.c.b16 %v4533, %v4531
        %v4596 = vpack.c.b16 %v4534, %v4532
        %v4597 = vpack.c.b16 %v4537, %v4535
        %v4598 = vpack.c.b16 %v4538, %v4536
        %v4599 = vpack.c.b16 %v4541, %v4539
        %v4600 = vpack.c.b16 %v4542, %v4540
        %v4601 = vpack.c.b16 %v4545, %v4543
        %v4602 = vpack.c.b16 %v4546, %v4544
        %v4603 = vpack.c.b16 %v4549, %v4547
        %v4604 = vpack.c.b16 %v4550, %v4548
        %v4605 = vpack.c.b16 %v4553, %v4551
        %v4606 = vpack.c.b16 %v4554, %v4552
        %v4607 = vpack.c.b16 %v4557, %v4555
        %v4608 = vpack.c.b16 %v4558, %v4556
        %v4609 = vpack.c.b16 %v4561, %v4559
        %v4610 = vpack.c.b16 %v4562, %v4560
        %v4611 = vpack.c.b16 %v4565, %v4563
        %v4612 = vpack.c.b16 %v4566, %v4564
        %v4613 = vpack.c.b16 %v4569, %v4567
        %v4614 = vpack.c.b16 %v4570, %v4568
        %v4615 = vpack.c.b16 %v4573, %v4571
        %v4616 = vpack.c.b16 %v4574, %v4572
        %v4617 = vpack.c.b16 %v4577, %v4575
        %v4618 = vpack.c.b16 %v4578, %v4576
        %v4619 = vpack.c.b16 %v4581, %v4579
        %v4620 = vpack.c.b16 %v4582, %v4580
        %v4621 = vpack.c.b16 %v4585, %v4583
        %v4622 = vpack.c.b16 %v4586, %v4584
        %v4623 = vpack.c.b16 %v4589, %v4587
        %v4624 = vpack.c.b16 %v4590, %v4588
        %v4625 = vpack.c.b16 %v4593, %v4591
        %v4626 = vpack.c.b16 %v4594, %v4592
        %4659 = vmatprep.subr.bf16.mxu0 %v4596
        %4660 = vmatpush1.bf16.msra.mxu0 %v4595
        %4661 = vmatprep.subr.bf16.mxu0 %v4598
        %4662 = vmatpush1.bf16.msra.mxu0 %v4597
        %4663 = vmatprep.subr.bf16.mxu0 %v4600
        %4664 = vmatpush1.bf16.msra.mxu0 %v4599
        %4665 = vmatprep.subr.bf16.mxu0 %v4602
        %4666 = vmatpush1.bf16.msra.mxu0 %v4601
        %4667 = vmatprep.subr.bf16.mxu0 %v4604
        %4668 = vmatpush1.bf16.msra.mxu0 %v4603
        %4669 = vmatprep.subr.bf16.mxu0 %v4606
        %4670 = vmatpush1.bf16.msra.mxu0 %v4605
        %4671 = vmatprep.subr.bf16.mxu0 %v4608
        %4672 = vmatpush1.bf16.msra.mxu0 %v4607
        %4673 = vmatprep.subr.bf16.mxu0 %v4610
        %4674 = vmatpush1.bf16.msra.mxu0 %v4609
        %4675 = vmatprep.subr.bf16.mxu0 %v4612
        %4676 = vmatpush1.bf16.msra.mxu0 %v4611
        %4677 = vmatprep.subr.bf16.mxu0 %v4614
        %4678 = vmatpush1.bf16.msra.mxu0 %v4613
        %4679 = vmatprep.subr.bf16.mxu0 %v4616
        %4680 = vmatpush1.bf16.msra.mxu0 %v4615
        %4681 = vmatprep.subr.bf16.mxu0 %v4618
        %4682 = vmatpush1.bf16.msra.mxu0 %v4617
        %4683 = vmatprep.subr.bf16.mxu0 %v4620
        %4684 = vmatpush1.bf16.msra.mxu0 %v4619
        %4685 = vmatprep.subr.bf16.mxu0 %v4622
        %4686 = vmatpush1.bf16.msra.mxu0 %v4621
        %4687 = vmatprep.subr.bf16.mxu0 %v4624
        %4688 = vmatpush1.bf16.msra.mxu0 %v4623
        %4689 = vmatprep.subr.bf16.mxu0 %v4626
        %4690 = vmatpush1.bf16.msra.mxu0 %v4625
        %4691 = vmatprep.mubr.bf16.mxu0 %v4460
        %4692 = vmatmul.mubr.bf16.gmra.mrb[0].mxu0 %v4459
        %v4693 = vpop.f32.mrb[0].mxu0
        %v4694 = vadd.f32 0.0, %v4693
        %v4695 = vpop.f32.mrb[0].mxu0
        %v4696 = vadd.f32 0.0, %v4695
        %v4697 = vpop.f32.mrb[0].mxu0
        %v4698 = vadd.f32 0.0, %v4697
        %v4699 = vpop.f32.mrb[0].mxu0
        %v4700 = vadd.f32 0.0, %v4699
        %4701 = vmatprep.mubr.bf16.mxu0 %v4462
        %4702 = vmatmul.mubr.bf16.gmra.mrb[0].mxu0 %v4461
        %v4703 = vpop.f32.mrb[0].mxu0
        %v4704 = vadd.f32 0.0, %v4703
        %v4705 = vpop.f32.mrb[0].mxu0
        %v4706 = vadd.f32 0.0, %v4705
        %v4707 = vpop.f32.mrb[0].mxu0
        %v4708 = vadd.f32 0.0, %v4707
        %v4709 = vpop.f32.mrb[0].mxu0
        %v4710 = vadd.f32 0.0, %v4709
        %4711 = vmatprep.mubr.bf16.mxu0 %v4464
        %4712 = vmatmul.mubr.bf16.gmra.mrb[0].mxu0 %v4463
        %v4713 = vpop.f32.mrb[0].mxu0
        %v4714 = vadd.f32 0.0, %v4713
        %v4715 = vpop.f32.mrb[0].mxu0
        %v4716 = vadd.f32 0.0, %v4715
        %v4717 = vpop.f32.mrb[0].mxu0
        %v4718 = vadd.f32 0.0, %v4717
        %v4719 = vpop.f32.mrb[0].mxu0
        %v4720 = vadd.f32 0.0, %v4719
        %4721 = vmatprep.mubr.bf16.mxu0 %v4466
        %4722 = vmatmul.mubr.bf16.gmra.mrb[0].mxu0 %v4465
        %v4723 = vpop.f32.mrb[0].mxu0
        %v4724 = vadd.f32 0.0, %v4723
        %v4725 = vpop.f32.mrb[0].mxu0
        %v4726 = vadd.f32 0.0, %v4725
        %v4727 = vpop.f32.mrb[0].mxu0
        %v4728 = vadd.f32 0.0, %v4727
        %v4729 = vpop.f32.mrb[0].mxu0
        %v4730 = vadd.f32 0.0, %v4729
        %4731 = vdwg.mxu0
        %v4732 = vlaneseq
        %v4733 = vshrl.u32 %v4732, 7
        %v4734 = vsub.s32 2, %v4733
        %v4735 = vrot.slane %v2560, %v4734
        %v4736 = vlaneseq
        %v4737 = vshrl.u32 %v4736, 7
        %v4738 = vsub.s32 2, %v4737
        %v4739 = vrot.slane %v2562, %v4738
        %v4740 = vmul.f32 %v4403, %v4735
        %v4741 = vmul.f32 %v4404, %v4739
        %v4742 = vmul.f32 %v4405, %v4735
        %v4743 = vmul.f32 %v4406, %v4739
        %v4744 = vmul.f32 %v4407, %v4735
        %v4745 = vmul.f32 %v4408, %v4739
        %v4746 = vmul.f32 %v4409, %v4735
        %v4747 = vmul.f32 %v4410, %v4739
        %v4748 = vmul.f32 %v4411, %v4735
        %v4749 = vmul.f32 %v4412, %v4739
        %v4750 = vmul.f32 %v4413, %v4735
        %v4751 = vmul.f32 %v4414, %v4739
        %v4752 = vmul.f32 %v4415, %v4735
        %v4753 = vmul.f32 %v4416, %v4739
        %v4754 = vmul.f32 %v4417, %v4735
        %v4755 = vmul.f32 %v4418, %v4739
        %v4756 = vld [vmem:[#allocation5 + $0x100] sm:$0xff]
        %v4757 = vld [vmem:[#allocation5 + $0x108] sm:$0xff]
        %v4758 = vld [vmem:[#allocation5 + $0x110] sm:$0xff]
        %v4759 = vld [vmem:[#allocation5 + $0x118] sm:$0xff]
        %v4760 = vld [vmem:[#allocation5 + $0x120] sm:$0xff]
        %v4761 = vld [vmem:[#allocation5 + $0x128] sm:$0xff]
        %v4762 = vld [vmem:[#allocation5 + $0x130] sm:$0xff]
        %v4763 = vld [vmem:[#allocation5 + $0x138] sm:$0xff]
        %v4764 = vld [vmem:[#allocation5 + $0x140] sm:$0xff]
        %v4765 = vld [vmem:[#allocation5 + $0x148] sm:$0xff]
        %v4766 = vld [vmem:[#allocation5 + $0x150] sm:$0xff]
        %v4767 = vld [vmem:[#allocation5 + $0x158] sm:$0xff]
        %v4768 = vld [vmem:[#allocation5 + $0x160] sm:$0xff]
        %v4769 = vld [vmem:[#allocation5 + $0x168] sm:$0xff]
        %v4770 = vld [vmem:[#allocation5 + $0x170] sm:$0xff]
        %v4771 = vld [vmem:[#allocation5 + $0x178] sm:$0xff]
        %v4772 = vlaneseq
        %v4773 = vshrl.u32 %v4772, 7
        %v4774 = vsub.s32 2, %v4773
        %v4775 = vrot.slane %v2652, %v4774
        %v4776 = vlaneseq
        %v4777 = vshrl.u32 %v4776, 7
        %v4778 = vsub.s32 2, %v4777
        %v4779 = vrot.slane %v2653, %v4778
        %v4780 = vmul.f32 %v4756, %v4775
        %v4781 = vmul.f32 %v4757, %v4779
        %v4782 = vmul.f32 %v4758, %v4775
        %v4783 = vmul.f32 %v4759, %v4779
        %v4784 = vmul.f32 %v4760, %v4775
        %v4785 = vmul.f32 %v4761, %v4779
        %v4786 = vmul.f32 %v4762, %v4775
        %v4787 = vmul.f32 %v4763, %v4779
        %v4788 = vmul.f32 %v4764, %v4775
        %v4789 = vmul.f32 %v4765, %v4779
        %v4790 = vmul.f32 %v4766, %v4775
        %v4791 = vmul.f32 %v4767, %v4779
        %v4792 = vmul.f32 %v4768, %v4775
        %v4793 = vmul.f32 %v4769, %v4779
        %v4794 = vmul.f32 %v4770, %v4775
        %v4795 = vmul.f32 %v4771, %v4779
        %v4796 = vadd.f32 %v4740, %v4780
        %v4797 = vadd.f32 %v4741, %v4781
        %v4798 = vadd.f32 %v4742, %v4782
        %v4799 = vadd.f32 %v4743, %v4783
        %v4800 = vadd.f32 %v4744, %v4784
        %v4801 = vadd.f32 %v4745, %v4785
        %v4802 = vadd.f32 %v4746, %v4786
        %v4803 = vadd.f32 %v4747, %v4787
        %v4804 = vadd.f32 %v4748, %v4788
        %v4805 = vadd.f32 %v4749, %v4789
        %v4806 = vadd.f32 %v4750, %v4790
        %v4807 = vadd.f32 %v4751, %v4791
        %v4808 = vadd.f32 %v4752, %v4792
        %v4809 = vadd.f32 %v4753, %v4793
        %v4810 = vadd.f32 %v4754, %v4794
        %v4811 = vadd.f32 %v4755, %v4795
        %v4812 = vlaneseq
        %v4813 = vshrl.u32 %v4812, 7
        %v4814 = vsub.s32 2, %v4813
        %v4815 = vrot.slane %v2656, %v4814
        %v4816 = vlaneseq
        %v4817 = vshrl.u32 %v4816, 7
        %v4818 = vsub.s32 2, %v4817
        %v4819 = vrot.slane %v2657, %v4818
        %v4820 = vmul.f32 %v4694, %v4815
        %v4821 = vmul.f32 %v4696, %v4819
        %v4822 = vmul.f32 %v4698, %v4815
        %v4823 = vmul.f32 %v4700, %v4819
        %v4824 = vmul.f32 %v4704, %v4815
        %v4825 = vmul.f32 %v4706, %v4819
        %v4826 = vmul.f32 %v4708, %v4815
        %v4827 = vmul.f32 %v4710, %v4819
        %v4828 = vmul.f32 %v4714, %v4815
        %v4829 = vmul.f32 %v4716, %v4819
        %v4830 = vmul.f32 %v4718, %v4815
        %v4831 = vmul.f32 %v4720, %v4819
        %v4832 = vmul.f32 %v4724, %v4815
        %v4833 = vmul.f32 %v4726, %v4819
        %v4834 = vmul.f32 %v4728, %v4815
        %v4835 = vmul.f32 %v4730, %v4819
        %v4836 = vadd.f32 %v4796, %v4820
        %v4837 = vadd.f32 %v4797, %v4821
        %v4838 = vadd.f32 %v4798, %v4822
        %v4839 = vadd.f32 %v4799, %v4823
        %v4840 = vadd.f32 %v4800, %v4824
        %v4841 = vadd.f32 %v4801, %v4825
        %v4842 = vadd.f32 %v4802, %v4826
        %v4843 = vadd.f32 %v4803, %v4827
        %v4844 = vadd.f32 %v4804, %v4828
        %v4845 = vadd.f32 %v4805, %v4829
        %v4846 = vadd.f32 %v4806, %v4830
        %v4847 = vadd.f32 %v4807, %v4831
        %v4848 = vadd.f32 %v4808, %v4832
        %v4849 = vadd.f32 %v4809, %v4833
        %v4850 = vadd.f32 %v4810, %v4834
        %v4851 = vadd.f32 %v4811, %v4835
        %4852 = vst [vmem:[#allocation4 + $0x100] sm:$0xff] %v4836
        %4853 = vst [vmem:[#allocation4 + $0x108] sm:$0xff] %v4837
        %4854 = vst [vmem:[#allocation4 + $0x110] sm:$0xff] %v4838
        %4855 = vst [vmem:[#allocation4 + $0x118] sm:$0xff] %v4839
        %4856 = vst [vmem:[#allocation4 + $0x120] sm:$0xff] %v4840
        %4857 = vst [vmem:[#allocation4 + $0x128] sm:$0xff] %v4841
        %4858 = vst [vmem:[#allocation4 + $0x130] sm:$0xff] %v4842
        %4859 = vst [vmem:[#allocation4 + $0x138] sm:$0xff] %v4843
        %4860 = vst [vmem:[#allocation4 + $0x140] sm:$0xff] %v4844
        %4861 = vst [vmem:[#allocation4 + $0x148] sm:$0xff] %v4845
        %4862 = vst [vmem:[#allocation4 + $0x150] sm:$0xff] %v4846
        %4863 = vst [vmem:[#allocation4 + $0x158] sm:$0xff] %v4847
        %4864 = vst [vmem:[#allocation4 + $0x160] sm:$0xff] %v4848
        %4865 = vst [vmem:[#allocation4 + $0x168] sm:$0xff] %v4849
        %4866 = vst [vmem:[#allocation4 + $0x170] sm:$0xff] %v4850
        %4867 = vst [vmem:[#allocation4 + $0x178] sm:$0xff] %v4851
        %v4868 = vlaneseq
        %v4869 = vshrl.u32 %v4868, 7
        %v4870 = vsub.s32 3, %v4869
        %v4871 = vrot.slane %v2654, %v4870
        %v4872 = vlaneseq
        %v4873 = vshrl.u32 %v4872, 7
        %v4874 = vsub.s32 3, %v4873
        %v4875 = vrot.slane %v2655, %v4874
        %v4876 = vmul.f32 %v4836, %v4871
        %v4877 = vmul.f32 %v4837, %v4875
        %v4878 = vmul.f32 %v4838, %v4871
        %v4879 = vmul.f32 %v4839, %v4875
        %v4880 = vmul.f32 %v4840, %v4871
        %v4881 = vmul.f32 %v4841, %v4875
        %v4882 = vmul.f32 %v4842, %v4871
        %v4883 = vmul.f32 %v4843, %v4875
        %v4884 = vmul.f32 %v4844, %v4871
        %v4885 = vmul.f32 %v4845, %v4875
        %v4886 = vmul.f32 %v4846, %v4871
        %v4887 = vmul.f32 %v4847, %v4875
        %v4888 = vmul.f32 %v4848, %v4871
        %v4889 = vmul.f32 %v4849, %v4875
        %v4890 = vmul.f32 %v4850, %v4871
        %v4891 = vmul.f32 %v4851, %v4875
        %v4892 = vpack.c.bf16 %v4878, %v4876
        %v4893 = vpack.c.bf16 %v4879, %v4877
        %v4894 = vpack.c.bf16 %v4882, %v4880
        %v4895 = vpack.c.bf16 %v4883, %v4881
        %v4896 = vpack.c.bf16 %v4886, %v4884
        %v4897 = vpack.c.bf16 %v4887, %v4885
        %v4898 = vpack.c.bf16 %v4890, %v4888
        %v4899 = vpack.c.bf16 %v4891, %v4889
        %v4900 = vld [vmem:[#allocation6] sm:$0xff]
        %v4901 = vld [vmem:[#allocation6 + $0x8] sm:$0xff]
        %v4902 = vld [vmem:[#allocation6 + $0x10] sm:$0xff]
        %v4903 = vld [vmem:[#allocation6 + $0x18] sm:$0xff]
        %v4904 = vld [vmem:[#allocation6 + $0x20] sm:$0xff]
        %v4905 = vld [vmem:[#allocation6 + $0x28] sm:$0xff]
        %v4906 = vld [vmem:[#allocation6 + $0x30] sm:$0xff]
        %v4907 = vld [vmem:[#allocation6 + $0x38] sm:$0xff]
        %v4908 = vld [vmem:[#allocation6 + $0x40] sm:$0xff]
        %v4909 = vld [vmem:[#allocation6 + $0x48] sm:$0xff]
        %v4910 = vld [vmem:[#allocation6 + $0x50] sm:$0xff]
        %v4911 = vld [vmem:[#allocation6 + $0x58] sm:$0xff]
        %v4912 = vld [vmem:[#allocation6 + $0x60] sm:$0xff]
        %v4913 = vld [vmem:[#allocation6 + $0x68] sm:$0xff]
        %v4914 = vld [vmem:[#allocation6 + $0x70] sm:$0xff]
        %v4915 = vld [vmem:[#allocation6 + $0x78] sm:$0xff]
        %v4916 = vld [vmem:[#allocation6 + $0x80] sm:$0xff]
        %v4917 = vld [vmem:[#allocation6 + $0x88] sm:$0xff]
        %v4918 = vld [vmem:[#allocation6 + $0x90] sm:$0xff]
        %v4919 = vld [vmem:[#allocation6 + $0x98] sm:$0xff]
        %v4920 = vld [vmem:[#allocation6 + $0xa0] sm:$0xff]
        %v4921 = vld [vmem:[#allocation6 + $0xa8] sm:$0xff]
        %v4922 = vld [vmem:[#allocation6 + $0xb0] sm:$0xff]
        %v4923 = vld [vmem:[#allocation6 + $0xb8] sm:$0xff]
        %v4924 = vld [vmem:[#allocation6 + $0xc0] sm:$0xff]
        %v4925 = vld [vmem:[#allocation6 + $0xc8] sm:$0xff]
        %v4926 = vld [vmem:[#allocation6 + $0xd0] sm:$0xff]
        %v4927 = vld [vmem:[#allocation6 + $0xd8] sm:$0xff]
        %v4928 = vld [vmem:[#allocation6 + $0xe0] sm:$0xff]
        %v4929 = vld [vmem:[#allocation6 + $0xe8] sm:$0xff]
        %v4930 = vld [vmem:[#allocation6 + $0xf0] sm:$0xff]
        %v4931 = vld [vmem:[#allocation6 + $0xf8] sm:$0xff]
        %v4964 = vunpack.c.l.b16 %v4900
        %v4965 = vunpack.c.h.b16 %v4900
        %v4966 = vunpack.c.l.b16 %v4901
        %v4967 = vunpack.c.h.b16 %v4901
        %v4968 = vunpack.c.l.b16 %v4902
        %v4969 = vunpack.c.h.b16 %v4902
        %v4970 = vunpack.c.l.b16 %v4903
        %v4971 = vunpack.c.h.b16 %v4903
        %v4972 = vunpack.c.l.b16 %v4904
        %v4973 = vunpack.c.h.b16 %v4904
        %v4974 = vunpack.c.l.b16 %v4905
        %v4975 = vunpack.c.h.b16 %v4905
        %v4976 = vunpack.c.l.b16 %v4906
        %v4977 = vunpack.c.h.b16 %v4906
        %v4978 = vunpack.c.l.b16 %v4907
        %v4979 = vunpack.c.h.b16 %v4907
        %v4980 = vunpack.c.l.b16 %v4908
        %v4981 = vunpack.c.h.b16 %v4908
        %v4982 = vunpack.c.l.b16 %v4909
        %v4983 = vunpack.c.h.b16 %v4909
        %v4984 = vunpack.c.l.b16 %v4910
        %v4985 = vunpack.c.h.b16 %v4910
        %v4986 = vunpack.c.l.b16 %v4911
        %v4987 = vunpack.c.h.b16 %v4911
        %v4988 = vunpack.c.l.b16 %v4912
        %v4989 = vunpack.c.h.b16 %v4912
        %v4990 = vunpack.c.l.b16 %v4913
        %v4991 = vunpack.c.h.b16 %v4913
        %v4992 = vunpack.c.l.b16 %v4914
        %v4993 = vunpack.c.h.b16 %v4914
        %v4994 = vunpack.c.l.b16 %v4915
        %v4995 = vunpack.c.h.b16 %v4915
        %v4996 = vunpack.c.l.b16 %v4916
        %v4997 = vunpack.c.h.b16 %v4916
        %v4998 = vunpack.c.l.b16 %v4917
        %v4999 = vunpack.c.h.b16 %v4917
        %v5000 = vunpack.c.l.b16 %v4918
        %v5001 = vunpack.c.h.b16 %v4918
        %v5002 = vunpack.c.l.b16 %v4919
        %v5003 = vunpack.c.h.b16 %v4919
        %v5004 = vunpack.c.l.b16 %v4920
        %v5005 = vunpack.c.h.b16 %v4920
        %v5006 = vunpack.c.l.b16 %v4921
        %v5007 = vunpack.c.h.b16 %v4921
        %v5008 = vunpack.c.l.b16 %v4922
        %v5009 = vunpack.c.h.b16 %v4922
        %v5010 = vunpack.c.l.b16 %v4923
        %v5011 = vunpack.c.h.b16 %v4923
        %v5012 = vunpack.c.l.b16 %v4924
        %v5013 = vunpack.c.h.b16 %v4924
        %v5014 = vunpack.c.l.b16 %v4925
        %v5015 = vunpack.c.h.b16 %v4925
        %v5016 = vunpack.c.l.b16 %v4926
        %v5017 = vunpack.c.h.b16 %v4926
        %v5018 = vunpack.c.l.b16 %v4927
        %v5019 = vunpack.c.h.b16 %v4927
        %v5020 = vunpack.c.l.b16 %v4928
        %v5021 = vunpack.c.h.b16 %v4928
        %v5022 = vunpack.c.l.b16 %v4929
        %v5023 = vunpack.c.h.b16 %v4929
        %v5024 = vunpack.c.l.b16 %v4930
        %v5025 = vunpack.c.h.b16 %v4930
        %v5026 = vunpack.c.l.b16 %v4931
        %v5027 = vunpack.c.h.b16 %v4931
        %v5028 = vpack.c.b16 %v4966, %v4964
        %v5029 = vpack.c.b16 %v4967, %v4965
        %v5030 = vpack.c.b16 %v4970, %v4968
        %v5031 = vpack.c.b16 %v4971, %v4969
        %v5032 = vpack.c.b16 %v4974, %v4972
        %v5033 = vpack.c.b16 %v4975, %v4973
        %v5034 = vpack.c.b16 %v4978, %v4976
        %v5035 = vpack.c.b16 %v4979, %v4977
        %v5036 = vpack.c.b16 %v4982, %v4980
        %v5037 = vpack.c.b16 %v4983, %v4981
        %v5038 = vpack.c.b16 %v4986, %v4984
        %v5039 = vpack.c.b16 %v4987, %v4985
        %v5040 = vpack.c.b16 %v4990, %v4988
        %v5041 = vpack.c.b16 %v4991, %v4989
        %v5042 = vpack.c.b16 %v4994, %v4992
        %v5043 = vpack.c.b16 %v4995, %v4993
        %v5044 = vpack.c.b16 %v4998, %v4996
        %v5045 = vpack.c.b16 %v4999, %v4997
        %v5046 = vpack.c.b16 %v5002, %v5000
        %v5047 = vpack.c.b16 %v5003, %v5001
        %v5048 = vpack.c.b16 %v5006, %v5004
        %v5049 = vpack.c.b16 %v5007, %v5005
        %v5050 = vpack.c.b16 %v5010, %v5008
        %v5051 = vpack.c.b16 %v5011, %v5009
        %v5052 = vpack.c.b16 %v5014, %v5012
        %v5053 = vpack.c.b16 %v5015, %v5013
        %v5054 = vpack.c.b16 %v5018, %v5016
        %v5055 = vpack.c.b16 %v5019, %v5017
        %v5056 = vpack.c.b16 %v5022, %v5020
        %v5057 = vpack.c.b16 %v5023, %v5021
        %v5058 = vpack.c.b16 %v5026, %v5024
        %v5059 = vpack.c.b16 %v5027, %v5025
        %5092 = vmatprep.subr.bf16.mxu0 %v5029
        %5093 = vmatpush1.bf16.msra.mxu0 %v5028
        %5094 = vmatprep.subr.bf16.mxu0 %v5031
        %5095 = vmatpush1.bf16.msra.mxu0 %v5030
        %5096 = vmatprep.subr.bf16.mxu0 %v5033
        %5097 = vmatpush1.bf16.msra.mxu0 %v5032
        %5098 = vmatprep.subr.bf16.mxu0 %v5035
        %5099 = vmatpush1.bf16.msra.mxu0 %v5034
        %5100 = vmatprep.subr.bf16.mxu0 %v5037
        %5101 = vmatpush1.bf16.msra.mxu0 %v5036
        %5102 = vmatprep.subr.bf16.mxu0 %v5039
        %5103 = vmatpush1.bf16.msra.mxu0 %v5038
        %5104 = vmatprep.subr.bf16.mxu0 %v5041
        %5105 = vmatpush1.bf16.msra.mxu0 %v5040
        %5106 = vmatprep.subr.bf16.mxu0 %v5043
        %5107 = vmatpush1.bf16.msra.mxu0 %v5042
        %5108 = vmatprep.subr.bf16.mxu0 %v5045
        %5109 = vmatpush1.bf16.msra.mxu0 %v5044
        %5110 = vmatprep.subr.bf16.mxu0 %v5047
        %5111 = vmatpush1.bf16.msra.mxu0 %v5046
        %5112 = vmatprep.subr.bf16.mxu0 %v5049
        %5113 = vmatpush1.bf16.msra.mxu0 %v5048
        %5114 = vmatprep.subr.bf16.mxu0 %v5051
        %5115 = vmatpush1.bf16.msra.mxu0 %v5050
        %5116 = vmatprep.subr.bf16.mxu0 %v5053
        %5117 = vmatpush1.bf16.msra.mxu0 %v5052
        %5118 = vmatprep.subr.bf16.mxu0 %v5055
        %5119 = vmatpush1.bf16.msra.mxu0 %v5054
        %5120 = vmatprep.subr.bf16.mxu0 %v5057
        %5121 = vmatpush1.bf16.msra.mxu0 %v5056
        %5122 = vmatprep.subr.bf16.mxu0 %v5059
        %5123 = vmatpush1.bf16.msra.mxu0 %v5058
        %5124 = vmatprep.mubr.bf16.mxu0 %v4893
        %5125 = vmatmul.mubr.bf16.gmra.mrb[0].mxu0 %v4892
        %v5126 = vpop.f32.mrb[0].mxu0
        %v5127 = vadd.f32 0.0, %v5126
        %v5128 = vpop.f32.mrb[0].mxu0
        %v5129 = vadd.f32 0.0, %v5128
        %v5130 = vpop.f32.mrb[0].mxu0
        %v5131 = vadd.f32 0.0, %v5130
        %v5132 = vpop.f32.mrb[0].mxu0
        %v5133 = vadd.f32 0.0, %v5132
        %5134 = vmatprep.mubr.bf16.mxu0 %v4895
        %5135 = vmatmul.mubr.bf16.gmra.mrb[0].mxu0 %v4894
        %v5136 = vpop.f32.mrb[0].mxu0
        %v5137 = vadd.f32 0.0, %v5136
        %v5138 = vpop.f32.mrb[0].mxu0
        %v5139 = vadd.f32 0.0, %v5138
        %v5140 = vpop.f32.mrb[0].mxu0
        %v5141 = vadd.f32 0.0, %v5140
        %v5142 = vpop.f32.mrb[0].mxu0
        %v5143 = vadd.f32 0.0, %v5142
        %5144 = vmatprep.mubr.bf16.mxu0 %v4897
        %5145 = vmatmul.mubr.bf16.gmra.mrb[0].mxu0 %v4896
        %v5146 = vpop.f32.mrb[0].mxu0
        %v5147 = vadd.f32 0.0, %v5146
        %v5148 = vpop.f32.mrb[0].mxu0
        %v5149 = vadd.f32 0.0, %v5148
        %v5150 = vpop.f32.mrb[0].mxu0
        %v5151 = vadd.f32 0.0, %v5150
        %v5152 = vpop.f32.mrb[0].mxu0
        %v5153 = vadd.f32 0.0, %v5152
        %5154 = vmatprep.mubr.bf16.mxu0 %v4899
        %5155 = vmatmul.mubr.bf16.gmra.mrb[0].mxu0 %v4898
        %v5156 = vpop.f32.mrb[0].mxu0
        %v5157 = vadd.f32 0.0, %v5156
        %v5158 = vpop.f32.mrb[0].mxu0
        %v5159 = vadd.f32 0.0, %v5158
        %v5160 = vpop.f32.mrb[0].mxu0
        %v5161 = vadd.f32 0.0, %v5160
        %v5162 = vpop.f32.mrb[0].mxu0
        %v5163 = vadd.f32 0.0, %v5162
        %5164 = vdwg.mxu0
        %v5165 = vlaneseq
        %v5166 = vshrl.u32 %v5165, 7
        %v5167 = vsub.s32 3, %v5166
        %v5168 = vrot.slane %v2560, %v5167
        %v5169 = vlaneseq
        %v5170 = vshrl.u32 %v5169, 7
        %v5171 = vsub.s32 3, %v5170
        %v5172 = vrot.slane %v2562, %v5171
        %v5173 = vmul.f32 %v4836, %v5168
        %v5174 = vmul.f32 %v4837, %v5172
        %v5175 = vmul.f32 %v4838, %v5168
        %v5176 = vmul.f32 %v4839, %v5172
        %v5177 = vmul.f32 %v4840, %v5168
        %v5178 = vmul.f32 %v4841, %v5172
        %v5179 = vmul.f32 %v4842, %v5168
        %v5180 = vmul.f32 %v4843, %v5172
        %v5181 = vmul.f32 %v4844, %v5168
        %v5182 = vmul.f32 %v4845, %v5172
        %v5183 = vmul.f32 %v4846, %v5168
        %v5184 = vmul.f32 %v4847, %v5172
        %v5185 = vmul.f32 %v4848, %v5168
        %v5186 = vmul.f32 %v4849, %v5172
        %v5187 = vmul.f32 %v4850, %v5168
        %v5188 = vmul.f32 %v4851, %v5172
        %v5189 = vld [vmem:[#allocation5 + $0x180] sm:$0xff]
        %v5190 = vld [vmem:[#allocation5 + $0x188] sm:$0xff]
        %v5191 = vld [vmem:[#allocation5 + $0x190] sm:$0xff]
        %v5192 = vld [vmem:[#allocation5 + $0x198] sm:$0xff]
        %v5193 = vld [vmem:[#allocation5 + $0x1a0] sm:$0xff]
        %v5194 = vld [vmem:[#allocation5 + $0x1a8] sm:$0xff]
        %v5195 = vld [vmem:[#allocation5 + $0x1b0] sm:$0xff]
        %v5196 = vld [vmem:[#allocation5 + $0x1b8] sm:$0xff]
        %v5197 = vld [vmem:[#allocation5 + $0x1c0] sm:$0xff]
        %v5198 = vld [vmem:[#allocation5 + $0x1c8] sm:$0xff]
        %v5199 = vld [vmem:[#allocation5 + $0x1d0] sm:$0xff]
        %v5200 = vld [vmem:[#allocation5 + $0x1d8] sm:$0xff]
        %v5201 = vld [vmem:[#allocation5 + $0x1e0] sm:$0xff]
        %v5202 = vld [vmem:[#allocation5 + $0x1e8] sm:$0xff]
        %v5203 = vld [vmem:[#allocation5 + $0x1f0] sm:$0xff]
        %v5204 = vld [vmem:[#allocation5 + $0x1f8] sm:$0xff]
        %v5205 = vlaneseq
        %v5206 = vshrl.u32 %v5205, 7
        %v5207 = vsub.s32 3, %v5206
        %v5208 = vrot.slane %v2652, %v5207
        %v5209 = vlaneseq
        %v5210 = vshrl.u32 %v5209, 7
        %v5211 = vsub.s32 3, %v5210
        %v5212 = vrot.slane %v2653, %v5211
        %v5213 = vmul.f32 %v5189, %v5208
        %v5214 = vmul.f32 %v5190, %v5212
        %v5215 = vmul.f32 %v5191, %v5208
        %v5216 = vmul.f32 %v5192, %v5212
        %v5217 = vmul.f32 %v5193, %v5208
        %v5218 = vmul.f32 %v5194, %v5212
        %v5219 = vmul.f32 %v5195, %v5208
        %v5220 = vmul.f32 %v5196, %v5212
        %v5221 = vmul.f32 %v5197, %v5208
        %v5222 = vmul.f32 %v5198, %v5212
        %v5223 = vmul.f32 %v5199, %v5208
        %v5224 = vmul.f32 %v5200, %v5212
        %v5225 = vmul.f32 %v5201, %v5208
        %v5226 = vmul.f32 %v5202, %v5212
        %v5227 = vmul.f32 %v5203, %v5208
        %v5228 = vmul.f32 %v5204, %v5212
        %v5229 = vadd.f32 %v5173, %v5213
        %v5230 = vadd.f32 %v5174, %v5214
        %v5231 = vadd.f32 %v5175, %v5215
        %v5232 = vadd.f32 %v5176, %v5216
        %v5233 = vadd.f32 %v5177, %v5217
        %v5234 = vadd.f32 %v5178, %v5218
        %v5235 = vadd.f32 %v5179, %v5219
        %v5236 = vadd.f32 %v5180, %v5220
        %v5237 = vadd.f32 %v5181, %v5221
        %v5238 = vadd.f32 %v5182, %v5222
        %v5239 = vadd.f32 %v5183, %v5223
        %v5240 = vadd.f32 %v5184, %v5224
        %v5241 = vadd.f32 %v5185, %v5225
        %v5242 = vadd.f32 %v5186, %v5226
        %v5243 = vadd.f32 %v5187, %v5227
        %v5244 = vadd.f32 %v5188, %v5228
        %v5245 = vlaneseq
        %v5246 = vshrl.u32 %v5245, 7
        %v5247 = vsub.s32 3, %v5246
        %v5248 = vrot.slane %v2656, %v5247
        %v5249 = vlaneseq
        %v5250 = vshrl.u32 %v5249, 7
        %v5251 = vsub.s32 3, %v5250
        %v5252 = vrot.slane %v2657, %v5251
        %v5253 = vmul.f32 %v5127, %v5248
        %v5254 = vmul.f32 %v5129, %v5252
        %v5255 = vmul.f32 %v5131, %v5248
        %v5256 = vmul.f32 %v5133, %v5252
        %v5257 = vmul.f32 %v5137, %v5248
        %v5258 = vmul.f32 %v5139, %v5252
        %v5259 = vmul.f32 %v5141, %v5248
        %v5260 = vmul.f32 %v5143, %v5252
        %v5261 = vmul.f32 %v5147, %v5248
        %v5262 = vmul.f32 %v5149, %v5252
        %v5263 = vmul.f32 %v5151, %v5248
        %v5264 = vmul.f32 %v5153, %v5252
        %v5265 = vmul.f32 %v5157, %v5248
        %v5266 = vmul.f32 %v5159, %v5252
        %v5267 = vmul.f32 %v5161, %v5248
        %v5268 = vmul.f32 %v5163, %v5252
        %v5269 = vadd.f32 %v5229, %v5253
        %v5270 = vadd.f32 %v5230, %v5254
        %v5271 = vadd.f32 %v5231, %v5255
        %v5272 = vadd.f32 %v5232, %v5256
        %v5273 = vadd.f32 %v5233, %v5257
        %v5274 = vadd.f32 %v5234, %v5258
        %v5275 = vadd.f32 %v5235, %v5259
        %v5276 = vadd.f32 %v5236, %v5260
        %v5277 = vadd.f32 %v5237, %v5261
        %v5278 = vadd.f32 %v5238, %v5262
        %v5279 = vadd.f32 %v5239, %v5263
        %v5280 = vadd.f32 %v5240, %v5264
        %v5281 = vadd.f32 %v5241, %v5265
        %v5282 = vadd.f32 %v5242, %v5266
        %v5283 = vadd.f32 %v5243, %v5267
        %v5284 = vadd.f32 %v5244, %v5268
        %5285 = vst [vmem:[#allocation4 + $0x180] sm:$0xff] %v5269
        %5286 = vst [vmem:[#allocation4 + $0x188] sm:$0xff] %v5270
        %5287 = vst [vmem:[#allocation4 + $0x190] sm:$0xff] %v5271
        %5288 = vst [vmem:[#allocation4 + $0x198] sm:$0xff] %v5272
        %5289 = vst [vmem:[#allocation4 + $0x1a0] sm:$0xff] %v5273
        %5290 = vst [vmem:[#allocation4 + $0x1a8] sm:$0xff] %v5274
        %5291 = vst [vmem:[#allocation4 + $0x1b0] sm:$0xff] %v5275
        %5292 = vst [vmem:[#allocation4 + $0x1b8] sm:$0xff] %v5276
        %5293 = vst [vmem:[#allocation4 + $0x1c0] sm:$0xff] %v5277
        %5294 = vst [vmem:[#allocation4 + $0x1c8] sm:$0xff] %v5278
        %5295 = vst [vmem:[#allocation4 + $0x1d0] sm:$0xff] %v5279
        %5296 = vst [vmem:[#allocation4 + $0x1d8] sm:$0xff] %v5280
        %5297 = vst [vmem:[#allocation4 + $0x1e0] sm:$0xff] %v5281
        %5298 = vst [vmem:[#allocation4 + $0x1e8] sm:$0xff] %v5282
        %5299 = vst [vmem:[#allocation4 + $0x1f0] sm:$0xff] %v5283
        %5300 = vst [vmem:[#allocation4 + $0x1f8] sm:$0xff] %v5284
        %v5301 = vlaneseq
        %v5302 = vshrl.u32 %v5301, 7
        %v5303 = vsub.s32 4, %v5302
        %v5304 = vrot.slane %v2654, %v5303
        %v5305 = vlaneseq
        %v5306 = vshrl.u32 %v5305, 7
        %v5307 = vsub.s32 4, %v5306
        %v5308 = vrot.slane %v2655, %v5307
        %v5309 = vmul.f32 %v5269, %v5304
        %v5310 = vmul.f32 %v5270, %v5308
        %v5311 = vmul.f32 %v5271, %v5304
        %v5312 = vmul.f32 %v5272, %v5308
        %v5313 = vmul.f32 %v5273, %v5304
        %v5314 = vmul.f32 %v5274, %v5308
        %v5315 = vmul.f32 %v5275, %v5304
        %v5316 = vmul.f32 %v5276, %v5308
        %v5317 = vmul.f32 %v5277, %v5304
        %v5318 = vmul.f32 %v5278, %v5308
        %v5319 = vmul.f32 %v5279, %v5304
        %v5320 = vmul.f32 %v5280, %v5308
        %v5321 = vmul.f32 %v5281, %v5304
        %v5322 = vmul.f32 %v5282, %v5308
        %v5323 = vmul.f32 %v5283, %v5304
        %v5324 = vmul.f32 %v5284, %v5308
        %v5325 = vpack.c.bf16 %v5311, %v5309
        %v5326 = vpack.c.bf16 %v5312, %v5310
        %v5327 = vpack.c.bf16 %v5315, %v5313
        %v5328 = vpack.c.bf16 %v5316, %v5314
        %v5329 = vpack.c.bf16 %v5319, %v5317
        %v5330 = vpack.c.bf16 %v5320, %v5318
        %v5331 = vpack.c.bf16 %v5323, %v5321
        %v5332 = vpack.c.bf16 %v5324, %v5322
        %v5333 = vld [vmem:[#allocation6] sm:$0xff]
        %v5334 = vld [vmem:[#allocation6 + $0x8] sm:$0xff]
        %v5335 = vld [vmem:[#allocation6 + $0x10] sm:$0xff]
        %v5336 = vld [vmem:[#allocation6 + $0x18] sm:$0xff]
        %v5337 = vld [vmem:[#allocation6 + $0x20] sm:$0xff]
        %v5338 = vld [vmem:[#allocation6 + $0x28] sm:$0xff]
        %v5339 = vld [vmem:[#allocation6 + $0x30] sm:$0xff]
        %v5340 = vld [vmem:[#allocation6 + $0x38] sm:$0xff]
        %v5341 = vld [vmem:[#allocation6 + $0x40] sm:$0xff]
        %v5342 = vld [vmem:[#allocation6 + $0x48] sm:$0xff]
        %v5343 = vld [vmem:[#allocation6 + $0x50] sm:$0xff]
        %v5344 = vld [vmem:[#allocation6 + $0x58] sm:$0xff]
        %v5345 = vld [vmem:[#allocation6 + $0x60] sm:$0xff]
        %v5346 = vld [vmem:[#allocation6 + $0x68] sm:$0xff]
        %v5347 = vld [vmem:[#allocation6 + $0x70] sm:$0xff]
        %v5348 = vld [vmem:[#allocation6 + $0x78] sm:$0xff]
        %v5349 = vld [vmem:[#allocation6 + $0x80] sm:$0xff]
        %v5350 = vld [vmem:[#allocation6 + $0x88] sm:$0xff]
        %v5351 = vld [vmem:[#allocation6 + $0x90] sm:$0xff]
        %v5352 = vld [vmem:[#allocation6 + $0x98] sm:$0xff]
        %v5353 = vld [vmem:[#allocation6 + $0xa0] sm:$0xff]
        %v5354 = vld [vmem:[#allocation6 + $0xa8] sm:$0xff]
        %v5355 = vld [vmem:[#allocation6 + $0xb0] sm:$0xff]
        %v5356 = vld [vmem:[#allocation6 + $0xb8] sm:$0xff]
        %v5357 = vld [vmem:[#allocation6 + $0xc0] sm:$0xff]
        %v5358 = vld [vmem:[#allocation6 + $0xc8] sm:$0xff]
        %v5359 = vld [vmem:[#allocation6 + $0xd0] sm:$0xff]
        %v5360 = vld [vmem:[#allocation6 + $0xd8] sm:$0xff]
        %v5361 = vld [vmem:[#allocation6 + $0xe0] sm:$0xff]
        %v5362 = vld [vmem:[#allocation6 + $0xe8] sm:$0xff]
        %v5363 = vld [vmem:[#allocation6 + $0xf0] sm:$0xff]
        %v5364 = vld [vmem:[#allocation6 + $0xf8] sm:$0xff]
        %v5397 = vunpack.c.l.b16 %v5333
        %v5398 = vunpack.c.h.b16 %v5333
        %v5399 = vunpack.c.l.b16 %v5334
        %v5400 = vunpack.c.h.b16 %v5334
        %v5401 = vunpack.c.l.b16 %v5335
        %v5402 = vunpack.c.h.b16 %v5335
        %v5403 = vunpack.c.l.b16 %v5336
        %v5404 = vunpack.c.h.b16 %v5336
        %v5405 = vunpack.c.l.b16 %v5337
        %v5406 = vunpack.c.h.b16 %v5337
        %v5407 = vunpack.c.l.b16 %v5338
        %v5408 = vunpack.c.h.b16 %v5338
        %v5409 = vunpack.c.l.b16 %v5339
        %v5410 = vunpack.c.h.b16 %v5339
        %v5411 = vunpack.c.l.b16 %v5340
        %v5412 = vunpack.c.h.b16 %v5340
        %v5413 = vunpack.c.l.b16 %v5341
        %v5414 = vunpack.c.h.b16 %v5341
        %v5415 = vunpack.c.l.b16 %v5342
        %v5416 = vunpack.c.h.b16 %v5342
        %v5417 = vunpack.c.l.b16 %v5343
        %v5418 = vunpack.c.h.b16 %v5343
        %v5419 = vunpack.c.l.b16 %v5344
        %v5420 = vunpack.c.h.b16 %v5344
        %v5421 = vunpack.c.l.b16 %v5345
        %v5422 = vunpack.c.h.b16 %v5345
        %v5423 = vunpack.c.l.b16 %v5346
        %v5424 = vunpack.c.h.b16 %v5346
        %v5425 = vunpack.c.l.b16 %v5347
        %v5426 = vunpack.c.h.b16 %v5347
        %v5427 = vunpack.c.l.b16 %v5348
        %v5428 = vunpack.c.h.b16 %v5348
        %v5429 = vunpack.c.l.b16 %v5349
        %v5430 = vunpack.c.h.b16 %v5349
        %v5431 = vunpack.c.l.b16 %v5350
        %v5432 = vunpack.c.h.b16 %v5350
        %v5433 = vunpack.c.l.b16 %v5351
        %v5434 = vunpack.c.h.b16 %v5351
        %v5435 = vunpack.c.l.b16 %v5352
        %v5436 = vunpack.c.h.b16 %v5352
        %v5437 = vunpack.c.l.b16 %v5353
        %v5438 = vunpack.c.h.b16 %v5353
        %v5439 = vunpack.c.l.b16 %v5354
        %v5440 = vunpack.c.h.b16 %v5354
        %v5441 = vunpack.c.l.b16 %v5355
        %v5442 = vunpack.c.h.b16 %v5355
        %v5443 = vunpack.c.l.b16 %v5356
        %v5444 = vunpack.c.h.b16 %v5356
        %v5445 = vunpack.c.l.b16 %v5357
        %v5446 = vunpack.c.h.b16 %v5357
        %v5447 = vunpack.c.l.b16 %v5358
        %v5448 = vunpack.c.h.b16 %v5358
        %v5449 = vunpack.c.l.b16 %v5359
        %v5450 = vunpack.c.h.b16 %v5359
        %v5451 = vunpack.c.l.b16 %v5360
        %v5452 = vunpack.c.h.b16 %v5360
        %v5453 = vunpack.c.l.b16 %v5361
        %v5454 = vunpack.c.h.b16 %v5361
        %v5455 = vunpack.c.l.b16 %v5362
        %v5456 = vunpack.c.h.b16 %v5362
        %v5457 = vunpack.c.l.b16 %v5363
        %v5458 = vunpack.c.h.b16 %v5363
        %v5459 = vunpack.c.l.b16 %v5364
        %v5460 = vunpack.c.h.b16 %v5364
        %v5461 = vpack.c.b16 %v5399, %v5397
        %v5462 = vpack.c.b16 %v5400, %v5398
        %v5463 = vpack.c.b16 %v5403, %v5401
        %v5464 = vpack.c.b16 %v5404, %v5402
        %v5465 = vpack.c.b16 %v5407, %v5405
        %v5466 = vpack.c.b16 %v5408, %v5406
        %v5467 = vpack.c.b16 %v5411, %v5409
        %v5468 = vpack.c.b16 %v5412, %v5410
        %v5469 = vpack.c.b16 %v5415, %v5413
        %v5470 = vpack.c.b16 %v5416, %v5414
        %v5471 = vpack.c.b16 %v5419, %v5417
        %v5472 = vpack.c.b16 %v5420, %v5418
        %v5473 = vpack.c.b16 %v5423, %v5421
        %v5474 = vpack.c.b16 %v5424, %v5422
        %v5475 = vpack.c.b16 %v5427, %v5425
        %v5476 = vpack.c.b16 %v5428, %v5426
        %v5477 = vpack.c.b16 %v5431, %v5429
        %v5478 = vpack.c.b16 %v5432, %v5430
        %v5479 = vpack.c.b16 %v5435, %v5433
        %v5480 = vpack.c.b16 %v5436, %v5434
        %v5481 = vpack.c.b16 %v5439, %v5437
        %v5482 = vpack.c.b16 %v5440, %v5438
        %v5483 = vpack.c.b16 %v5443, %v5441
        %v5484 = vpack.c.b16 %v5444, %v5442
        %v5485 = vpack.c.b16 %v5447, %v5445
        %v5486 = vpack.c.b16 %v5448, %v5446
        %v5487 = vpack.c.b16 %v5451, %v5449
        %v5488 = vpack.c.b16 %v5452, %v5450
        %v5489 = vpack.c.b16 %v5455, %v5453
        %v5490 = vpack.c.b16 %v5456, %v5454
        %v5491 = vpack.c.b16 %v5459, %v5457
        %v5492 = vpack.c.b16 %v5460, %v5458
        %5525 = vmatprep.subr.bf16.mxu0 %v5462
        %5526 = vmatpush1.bf16.msra.mxu0 %v5461
        %5527 = vmatprep.subr.bf16.mxu0 %v5464
        %5528 = vmatpush1.bf16.msra.mxu0 %v5463
        %5529 = vmatprep.subr.bf16.mxu0 %v5466
        %5530 = vmatpush1.bf16.msra.mxu0 %v5465
        %5531 = vmatprep.subr.bf16.mxu0 %v5468
        %5532 = vmatpush1.bf16.msra.mxu0 %v5467
        %5533 = vmatprep.subr.bf16.mxu0 %v5470
        %5534 = vmatpush1.bf16.msra.mxu0 %v5469
        %5535 = vmatprep.subr.bf16.mxu0 %v5472
        %5536 = vmatpush1.bf16.msra.mxu0 %v5471
        %5537 = vmatprep.subr.bf16.mxu0 %v5474
        %5538 = vmatpush1.bf16.msra.mxu0 %v5473
        %5539 = vmatprep.subr.bf16.mxu0 %v5476
        %5540 = vmatpush1.bf16.msra.mxu0 %v5475
        %5541 = vmatprep.subr.bf16.mxu0 %v5478
        %5542 = vmatpush1.bf16.msra.mxu0 %v5477
        %5543 = vmatprep.subr.bf16.mxu0 %v5480
        %5544 = vmatpush1.bf16.msra.mxu0 %v5479
        %5545 = vmatprep.subr.bf16.mxu0 %v5482
        %5546 = vmatpush1.bf16.msra.mxu0 %v5481
        %5547 = vmatprep.subr.bf16.mxu0 %v5484
        %5548 = vmatpush1.bf16.msra.mxu0 %v5483
        %5549 = vmatprep.subr.bf16.mxu0 %v5486
        %5550 = vmatpush1.bf16.msra.mxu0 %v5485
        %5551 = vmatprep.subr.bf16.mxu0 %v5488
        %5552 = vmatpush1.bf16.msra.mxu0 %v5487
        %5553 = vmatprep.subr.bf16.mxu0 %v5490
        %5554 = vmatpush1.bf16.msra.mxu0 %v5489
        %5555 = vmatprep.subr.bf16.mxu0 %v5492
        %5556 = vmatpush1.bf16.msra.mxu0 %v5491
        %5557 = vmatprep.mubr.bf16.mxu0 %v5326
        %5558 = vmatmul.mubr.bf16.gmra.mrb[0].mxu0 %v5325
        %v5559 = vpop.f32.mrb[0].mxu0
        %v5560 = vadd.f32 0.0, %v5559
        %v5561 = vpop.f32.mrb[0].mxu0
        %v5562 = vadd.f32 0.0, %v5561
        %v5563 = vpop.f32.mrb[0].mxu0
        %v5564 = vadd.f32 0.0, %v5563
        %v5565 = vpop.f32.mrb[0].mxu0
        %v5566 = vadd.f32 0.0, %v5565
        %5567 = vmatprep.mubr.bf16.mxu0 %v5328
        %5568 = vmatmul.mubr.bf16.gmra.mrb[0].mxu0 %v5327
        %v5569 = vpop.f32.mrb[0].mxu0
        %v5570 = vadd.f32 0.0, %v5569
        %v5571 = vpop.f32.mrb[0].mxu0
        %v5572 = vadd.f32 0.0, %v5571
        %v5573 = vpop.f32.mrb[0].mxu0
        %v5574 = vadd.f32 0.0, %v5573
        %v5575 = vpop.f32.mrb[0].mxu0
        %v5576 = vadd.f32 0.0, %v5575
        %5577 = vmatprep.mubr.bf16.mxu0 %v5330
        %5578 = vmatmul.mubr.bf16.gmra.mrb[0].mxu0 %v5329
        %v5579 = vpop.f32.mrb[0].mxu0
        %v5580 = vadd.f32 0.0, %v5579
        %v5581 = vpop.f32.mrb[0].mxu0
        %v5582 = vadd.f32 0.0, %v5581
        %v5583 = vpop.f32.mrb[0].mxu0
        %v5584 = vadd.f32 0.0, %v5583
        %v5585 = vpop.f32.mrb[0].mxu0
        %v5586 = vadd.f32 0.0, %v5585
        %5587 = vmatprep.mubr.bf16.mxu0 %v5332
        %5588 = vmatmul.mubr.bf16.gmra.mrb[0].mxu0 %v5331
        %v5589 = vpop.f32.mrb[0].mxu0
        %v5590 = vadd.f32 0.0, %v5589
        %v5591 = vpop.f32.mrb[0].mxu0
        %v5592 = vadd.f32 0.0, %v5591
        %v5593 = vpop.f32.mrb[0].mxu0
        %v5594 = vadd.f32 0.0, %v5593
        %v5595 = vpop.f32.mrb[0].mxu0
        %v5596 = vadd.f32 0.0, %v5595
        %5597 = vdwg.mxu0
        %v5598 = vlaneseq
        %v5599 = vshrl.u32 %v5598, 7
        %v5600 = vsub.s32 4, %v5599
        %v5601 = vrot.slane %v2560, %v5600
        %v5602 = vlaneseq
        %v5603 = vshrl.u32 %v5602, 7
        %v5604 = vsub.s32 4, %v5603
        %v5605 = vrot.slane %v2562, %v5604
        %v5606 = vmul.f32 %v5269, %v5601
        %v5607 = vmul.f32 %v5270, %v5605
        %v5608 = vmul.f32 %v5271, %v5601
        %v5609 = vmul.f32 %v5272, %v5605
        %v5610 = vmul.f32 %v5273, %v5601
        %v5611 = vmul.f32 %v5274, %v5605
        %v5612 = vmul.f32 %v5275, %v5601
        %v5613 = vmul.f32 %v5276, %v5605
        %v5614 = vmul.f32 %v5277, %v5601
        %v5615 = vmul.f32 %v5278, %v5605
        %v5616 = vmul.f32 %v5279, %v5601
        %v5617 = vmul.f32 %v5280, %v5605
        %v5618 = vmul.f32 %v5281, %v5601
        %v5619 = vmul.f32 %v5282, %v5605
        %v5620 = vmul.f32 %v5283, %v5601
        %v5621 = vmul.f32 %v5284, %v5605
        %v5622 = vld [vmem:[#allocation5 + $0x200] sm:$0xff]
        %v5623 = vld [vmem:[#allocation5 + $0x208] sm:$0xff]
        %v5624 = vld [vmem:[#allocation5 + $0x210] sm:$0xff]
        %v5625 = vld [vmem:[#allocation5 + $0x218] sm:$0xff]
        %v5626 = vld [vmem:[#allocation5 + $0x220] sm:$0xff]
        %v5627 = vld [vmem:[#allocation5 + $0x228] sm:$0xff]
        %v5628 = vld [vmem:[#allocation5 + $0x230] sm:$0xff]
        %v5629 = vld [vmem:[#allocation5 + $0x238] sm:$0xff]
        %v5630 = vld [vmem:[#allocation5 + $0x240] sm:$0xff]
        %v5631 = vld [vmem:[#allocation5 + $0x248] sm:$0xff]
        %v5632 = vld [vmem:[#allocation5 + $0x250] sm:$0xff]
        %v5633 = vld [vmem:[#allocation5 + $0x258] sm:$0xff]
        %v5634 = vld [vmem:[#allocation5 + $0x260] sm:$0xff]
        %v5635 = vld [vmem:[#allocation5 + $0x268] sm:$0xff]
        %v5636 = vld [vmem:[#allocation5 + $0x270] sm:$0xff]
        %v5637 = vld [vmem:[#allocation5 + $0x278] sm:$0xff]
        %v5638 = vlaneseq
        %v5639 = vshrl.u32 %v5638, 7
        %v5640 = vsub.s32 4, %v5639
        %v5641 = vrot.slane %v2652, %v5640
        %v5642 = vlaneseq
        %v5643 = vshrl.u32 %v5642, 7
        %v5644 = vsub.s32 4, %v5643
        %v5645 = vrot.slane %v2653, %v5644
        %v5646 = vmul.f32 %v5622, %v5641
        %v5647 = vmul.f32 %v5623, %v5645
        %v5648 = vmul.f32 %v5624, %v5641
        %v5649 = vmul.f32 %v5625, %v5645
        %v5650 = vmul.f32 %v5626, %v5641
        %v5651 = vmul.f32 %v5627, %v5645
        %v5652 = vmul.f32 %v5628, %v5641
        %v5653 = vmul.f32 %v5629, %v5645
        %v5654 = vmul.f32 %v5630, %v5641
        %v5655 = vmul.f32 %v5631, %v5645
        %v5656 = vmul.f32 %v5632, %v5641
        %v5657 = vmul.f32 %v5633, %v5645
        %v5658 = vmul.f32 %v5634, %v5641
        %v5659 = vmul.f32 %v5635, %v5645
        %v5660 = vmul.f32 %v5636, %v5641
        %v5661 = vmul.f32 %v5637, %v5645
        %v5662 = vadd.f32 %v5606, %v5646
        %v5663 = vadd.f32 %v5607, %v5647
        %v5664 = vadd.f32 %v5608, %v5648
        %v5665 = vadd.f32 %v5609, %v5649
        %v5666 = vadd.f32 %v5610, %v5650
        %v5667 = vadd.f32 %v5611, %v5651
        %v5668 = vadd.f32 %v5612, %v5652
        %v5669 = vadd.f32 %v5613, %v5653
        %v5670 = vadd.f32 %v5614, %v5654
        %v5671 = vadd.f32 %v5615, %v5655
        %v5672 = vadd.f32 %v5616, %v5656
        %v5673 = vadd.f32 %v5617, %v5657
        %v5674 = vadd.f32 %v5618, %v5658
        %v5675 = vadd.f32 %v5619, %v5659
        %v5676 = vadd.f32 %v5620, %v5660
        %v5677 = vadd.f32 %v5621, %v5661
        %v5678 = vlaneseq
        %v5679 = vshrl.u32 %v5678, 7
        %v5680 = vsub.s32 4, %v5679
        %v5681 = vrot.slane %v2656, %v5680
        %v5682 = vlaneseq
        %v5683 = vshrl.u32 %v5682, 7
        %v5684 = vsub.s32 4, %v5683
        %v5685 = vrot.slane %v2657, %v5684
        %v5686 = vmul.f32 %v5560, %v5681
        %v5687 = vmul.f32 %v5562, %v5685
        %v5688 = vmul.f32 %v5564, %v5681
        %v5689 = vmul.f32 %v5566, %v5685
        %v5690 = vmul.f32 %v5570, %v5681
        %v5691 = vmul.f32 %v5572, %v5685
        %v5692 = vmul.f32 %v5574, %v5681
        %v5693 = vmul.f32 %v5576, %v5685
        %v5694 = vmul.f32 %v5580, %v5681
        %v5695 = vmul.f32 %v5582, %v5685
        %v5696 = vmul.f32 %v5584, %v5681
        %v5697 = vmul.f32 %v5586, %v5685
        %v5698 = vmul.f32 %v5590, %v5681
        %v5699 = vmul.f32 %v5592, %v5685
        %v5700 = vmul.f32 %v5594, %v5681
        %v5701 = vmul.f32 %v5596, %v5685
        %v5702 = vadd.f32 %v5662, %v5686
        %v5703 = vadd.f32 %v5663, %v5687
        %v5704 = vadd.f32 %v5664, %v5688
        %v5705 = vadd.f32 %v5665, %v5689
        %v5706 = vadd.f32 %v5666, %v5690
        %v5707 = vadd.f32 %v5667, %v5691
        %v5708 = vadd.f32 %v5668, %v5692
        %v5709 = vadd.f32 %v5669, %v5693
        %v5710 = vadd.f32 %v5670, %v5694
        %v5711 = vadd.f32 %v5671, %v5695
        %v5712 = vadd.f32 %v5672, %v5696
        %v5713 = vadd.f32 %v5673, %v5697
        %v5714 = vadd.f32 %v5674, %v5698
        %v5715 = vadd.f32 %v5675, %v5699
        %v5716 = vadd.f32 %v5676, %v5700
        %v5717 = vadd.f32 %v5677, %v5701
        %5718 = vst [vmem:[#allocation4 + $0x200] sm:$0xff] %v5702
        %5719 = vst [vmem:[#allocation4 + $0x208] sm:$0xff] %v5703
        %5720 = vst [vmem:[#allocation4 + $0x210] sm:$0xff] %v5704
        %5721 = vst [vmem:[#allocation4 + $0x218] sm:$0xff] %v5705
        %5722 = vst [vmem:[#allocation4 + $0x220] sm:$0xff] %v5706
        %5723 = vst [vmem:[#allocation4 + $0x228] sm:$0xff] %v5707
        %5724 = vst [vmem:[#allocation4 + $0x230] sm:$0xff] %v5708
        %5725 = vst [vmem:[#allocation4 + $0x238] sm:$0xff] %v5709
        %5726 = vst [vmem:[#allocation4 + $0x240] sm:$0xff] %v5710
        %5727 = vst [vmem:[#allocation4 + $0x248] sm:$0xff] %v5711
        %5728 = vst [vmem:[#allocation4 + $0x250] sm:$0xff] %v5712
        %5729 = vst [vmem:[#allocation4 + $0x258] sm:$0xff] %v5713
        %5730 = vst [vmem:[#allocation4 + $0x260] sm:$0xff] %v5714
        %5731 = vst [vmem:[#allocation4 + $0x268] sm:$0xff] %v5715
        %5732 = vst [vmem:[#allocation4 + $0x270] sm:$0xff] %v5716
        %5733 = vst [vmem:[#allocation4 + $0x278] sm:$0xff] %v5717
        %v5734 = vlaneseq
        %v5735 = vshrl.u32 %v5734, 7
        %v5736 = vsub.s32 5, %v5735
        %v5737 = vrot.slane %v2654, %v5736
        %v5738 = vlaneseq
        %v5739 = vshrl.u32 %v5738, 7
        %v5740 = vsub.s32 5, %v5739
        %v5741 = vrot.slane %v2655, %v5740
        %v5742 = vmul.f32 %v5702, %v5737
        %v5743 = vmul.f32 %v5703, %v5741
        %v5744 = vmul.f32 %v5704, %v5737
        %v5745 = vmul.f32 %v5705, %v5741
        %v5746 = vmul.f32 %v5706, %v5737
        %v5747 = vmul.f32 %v5707, %v5741
        %v5748 = vmul.f32 %v5708, %v5737
        %v5749 = vmul.f32 %v5709, %v5741
        %v5750 = vmul.f32 %v5710, %v5737
        %v5751 = vmul.f32 %v5711, %v5741
        %v5752 = vmul.f32 %v5712, %v5737
        %v5753 = vmul.f32 %v5713, %v5741
        %v5754 = vmul.f32 %v5714, %v5737
        %v5755 = vmul.f32 %v5715, %v5741
        %v5756 = vmul.f32 %v5716, %v5737
        %v5757 = vmul.f32 %v5717, %v5741
        %v5758 = vpack.c.bf16 %v5744, %v5742
        %v5759 = vpack.c.bf16 %v5745, %v5743
        %v5760 = vpack.c.bf16 %v5748, %v5746
        %v5761 = vpack.c.bf16 %v5749, %v5747
        %v5762 = vpack.c.bf16 %v5752, %v5750
        %v5763 = vpack.c.bf16 %v5753, %v5751
        %v5764 = vpack.c.bf16 %v5756, %v5754
        %v5765 = vpack.c.bf16 %v5757, %v5755
        %v5766 = vld [vmem:[#allocation6] sm:$0xff]
        %v5767 = vld [vmem:[#allocation6 + $0x8] sm:$0xff]
        %v5768 = vld [vmem:[#allocation6 + $0x10] sm:$0xff]
        %v5769 = vld [vmem:[#allocation6 + $0x18] sm:$0xff]
        %v5770 = vld [vmem:[#allocation6 + $0x20] sm:$0xff]
        %v5771 = vld [vmem:[#allocation6 + $0x28] sm:$0xff]
        %v5772 = vld [vmem:[#allocation6 + $0x30] sm:$0xff]
        %v5773 = vld [vmem:[#allocation6 + $0x38] sm:$0xff]
        %v5774 = vld [vmem:[#allocation6 + $0x40] sm:$0xff]
        %v5775 = vld [vmem:[#allocation6 + $0x48] sm:$0xff]
        %v5776 = vld [vmem:[#allocation6 + $0x50] sm:$0xff]
        %v5777 = vld [vmem:[#allocation6 + $0x58] sm:$0xff]
        %v5778 = vld [vmem:[#allocation6 + $0x60] sm:$0xff]
        %v5779 = vld [vmem:[#allocation6 + $0x68] sm:$0xff]
        %v5780 = vld [vmem:[#allocation6 + $0x70] sm:$0xff]
        %v5781 = vld [vmem:[#allocation6 + $0x78] sm:$0xff]
        %v5782 = vld [vmem:[#allocation6 + $0x80] sm:$0xff]
        %v5783 = vld [vmem:[#allocation6 + $0x88] sm:$0xff]
        %v5784 = vld [vmem:[#allocation6 + $0x90] sm:$0xff]
        %v5785 = vld [vmem:[#allocation6 + $0x98] sm:$0xff]
        %v5786 = vld [vmem:[#allocation6 + $0xa0] sm:$0xff]
        %v5787 = vld [vmem:[#allocation6 + $0xa8] sm:$0xff]
        %v5788 = vld [vmem:[#allocation6 + $0xb0] sm:$0xff]
        %v5789 = vld [vmem:[#allocation6 + $0xb8] sm:$0xff]
        %v5790 = vld [vmem:[#allocation6 + $0xc0] sm:$0xff]
        %v5791 = vld [vmem:[#allocation6 + $0xc8] sm:$0xff]
        %v5792 = vld [vmem:[#allocation6 + $0xd0] sm:$0xff]
        %v5793 = vld [vmem:[#allocation6 + $0xd8] sm:$0xff]
        %v5794 = vld [vmem:[#allocation6 + $0xe0] sm:$0xff]
        %v5795 = vld [vmem:[#allocation6 + $0xe8] sm:$0xff]
        %v5796 = vld [vmem:[#allocation6 + $0xf0] sm:$0xff]
        %v5797 = vld [vmem:[#allocation6 + $0xf8] sm:$0xff]
        %v5830 = vunpack.c.l.b16 %v5766
        %v5831 = vunpack.c.h.b16 %v5766
        %v5832 = vunpack.c.l.b16 %v5767
        %v5833 = vunpack.c.h.b16 %v5767
        %v5834 = vunpack.c.l.b16 %v5768
        %v5835 = vunpack.c.h.b16 %v5768
        %v5836 = vunpack.c.l.b16 %v5769
        %v5837 = vunpack.c.h.b16 %v5769
        %v5838 = vunpack.c.l.b16 %v5770
        %v5839 = vunpack.c.h.b16 %v5770
        %v5840 = vunpack.c.l.b16 %v5771
        %v5841 = vunpack.c.h.b16 %v5771
        %v5842 = vunpack.c.l.b16 %v5772
        %v5843 = vunpack.c.h.b16 %v5772
        %v5844 = vunpack.c.l.b16 %v5773
        %v5845 = vunpack.c.h.b16 %v5773
        %v5846 = vunpack.c.l.b16 %v5774
        %v5847 = vunpack.c.h.b16 %v5774
        %v5848 = vunpack.c.l.b16 %v5775
        %v5849 = vunpack.c.h.b16 %v5775
        %v5850 = vunpack.c.l.b16 %v5776
        %v5851 = vunpack.c.h.b16 %v5776
        %v5852 = vunpack.c.l.b16 %v5777
        %v5853 = vunpack.c.h.b16 %v5777
        %v5854 = vunpack.c.l.b16 %v5778
        %v5855 = vunpack.c.h.b16 %v5778
        %v5856 = vunpack.c.l.b16 %v5779
        %v5857 = vunpack.c.h.b16 %v5779
        %v5858 = vunpack.c.l.b16 %v5780
        %v5859 = vunpack.c.h.b16 %v5780
        %v5860 = vunpack.c.l.b16 %v5781
        %v5861 = vunpack.c.h.b16 %v5781
        %v5862 = vunpack.c.l.b16 %v5782
        %v5863 = vunpack.c.h.b16 %v5782
        %v5864 = vunpack.c.l.b16 %v5783
        %v5865 = vunpack.c.h.b16 %v5783
        %v5866 = vunpack.c.l.b16 %v5784
        %v5867 = vunpack.c.h.b16 %v5784
        %v5868 = vunpack.c.l.b16 %v5785
        %v5869 = vunpack.c.h.b16 %v5785
        %v5870 = vunpack.c.l.b16 %v5786
        %v5871 = vunpack.c.h.b16 %v5786
        %v5872 = vunpack.c.l.b16 %v5787
        %v5873 = vunpack.c.h.b16 %v5787
        %v5874 = vunpack.c.l.b16 %v5788
        %v5875 = vunpack.c.h.b16 %v5788
        %v5876 = vunpack.c.l.b16 %v5789
        %v5877 = vunpack.c.h.b16 %v5789
        %v5878 = vunpack.c.l.b16 %v5790
        %v5879 = vunpack.c.h.b16 %v5790
        %v5880 = vunpack.c.l.b16 %v5791
        %v5881 = vunpack.c.h.b16 %v5791
        %v5882 = vunpack.c.l.b16 %v5792
        %v5883 = vunpack.c.h.b16 %v5792
        %v5884 = vunpack.c.l.b16 %v5793
        %v5885 = vunpack.c.h.b16 %v5793
        %v5886 = vunpack.c.l.b16 %v5794
        %v5887 = vunpack.c.h.b16 %v5794
        %v5888 = vunpack.c.l.b16 %v5795
        %v5889 = vunpack.c.h.b16 %v5795
        %v5890 = vunpack.c.l.b16 %v5796
        %v5891 = vunpack.c.h.b16 %v5796
        %v5892 = vunpack.c.l.b16 %v5797
        %v5893 = vunpack.c.h.b16 %v5797
        %v5894 = vpack.c.b16 %v5832, %v5830
        %v5895 = vpack.c.b16 %v5833, %v5831
        %v5896 = vpack.c.b16 %v5836, %v5834
        %v5897 = vpack.c.b16 %v5837, %v5835
        %v5898 = vpack.c.b16 %v5840, %v5838
        %v5899 = vpack.c.b16 %v5841, %v5839
        %v5900 = vpack.c.b16 %v5844, %v5842
        %v5901 = vpack.c.b16 %v5845, %v5843
        %v5902 = vpack.c.b16 %v5848, %v5846
        %v5903 = vpack.c.b16 %v5849, %v5847
        %v5904 = vpack.c.b16 %v5852, %v5850
        %v5905 = vpack.c.b16 %v5853, %v5851
        %v5906 = vpack.c.b16 %v5856, %v5854
        %v5907 = vpack.c.b16 %v5857, %v5855
        %v5908 = vpack.c.b16 %v5860, %v5858
        %v5909 = vpack.c.b16 %v5861, %v5859
        %v5910 = vpack.c.b16 %v5864, %v5862
        %v5911 = vpack.c.b16 %v5865, %v5863
        %v5912 = vpack.c.b16 %v5868, %v5866
        %v5913 = vpack.c.b16 %v5869, %v5867
        %v5914 = vpack.c.b16 %v5872, %v5870
        %v5915 = vpack.c.b16 %v5873, %v5871
        %v5916 = vpack.c.b16 %v5876, %v5874
        %v5917 = vpack.c.b16 %v5877, %v5875
        %v5918 = vpack.c.b16 %v5880, %v5878
        %v5919 = vpack.c.b16 %v5881, %v5879
        %v5920 = vpack.c.b16 %v5884, %v5882
        %v5921 = vpack.c.b16 %v5885, %v5883
        %v5922 = vpack.c.b16 %v5888, %v5886
        %v5923 = vpack.c.b16 %v5889, %v5887
        %v5924 = vpack.c.b16 %v5892, %v5890
        %v5925 = vpack.c.b16 %v5893, %v5891
        %5958 = vmatprep.subr.bf16.mxu0 %v5895
        %5959 = vmatpush1.bf16.msra.mxu0 %v5894
        %5960 = vmatprep.subr.bf16.mxu0 %v5897
        %5961 = vmatpush1.bf16.msra.mxu0 %v5896
        %5962 = vmatprep.subr.bf16.mxu0 %v5899
        %5963 = vmatpush1.bf16.msra.mxu0 %v5898
        %5964 = vmatprep.subr.bf16.mxu0 %v5901
        %5965 = vmatpush1.bf16.msra.mxu0 %v5900
        %5966 = vmatprep.subr.bf16.mxu0 %v5903
        %5967 = vmatpush1.bf16.msra.mxu0 %v5902
        %5968 = vmatprep.subr.bf16.mxu0 %v5905
        %5969 = vmatpush1.bf16.msra.mxu0 %v5904
        %5970 = vmatprep.subr.bf16.mxu0 %v5907
        %5971 = vmatpush1.bf16.msra.mxu0 %v5906
        %5972 = vmatprep.subr.bf16.mxu0 %v5909
        %5973 = vmatpush1.bf16.msra.mxu0 %v5908
        %5974 = vmatprep.subr.bf16.mxu0 %v5911
        %5975 = vmatpush1.bf16.msra.mxu0 %v5910
        %5976 = vmatprep.subr.bf16.mxu0 %v5913
        %5977 = vmatpush1.bf16.msra.mxu0 %v5912
        %5978 = vmatprep.subr.bf16.mxu0 %v5915
        %5979 = vmatpush1.bf16.msra.mxu0 %v5914
        %5980 = vmatprep.subr.bf16.mxu0 %v5917
        %5981 = vmatpush1.bf16.msra.mxu0 %v5916
        %5982 = vmatprep.subr.bf16.mxu0 %v5919
        %5983 = vmatpush1.bf16.msra.mxu0 %v5918
        %5984 = vmatprep.subr.bf16.mxu0 %v5921
        %5985 = vmatpush1.bf16.msra.mxu0 %v5920
        %5986 = vmatprep.subr.bf16.mxu0 %v5923
        %5987 = vmatpush1.bf16.msra.mxu0 %v5922
        %5988 = vmatprep.subr.bf16.mxu0 %v5925
        %5989 = vmatpush1.bf16.msra.mxu0 %v5924
        %5990 = vmatprep.mubr.bf16.mxu0 %v5759
        %5991 = vmatmul.mubr.bf16.gmra.mrb[0].mxu0 %v5758
        %v5992 = vpop.f32.mrb[0].mxu0
        %v5993 = vadd.f32 0.0, %v5992
        %v5994 = vpop.f32.mrb[0].mxu0
        %v5995 = vadd.f32 0.0, %v5994
        %v5996 = vpop.f32.mrb[0].mxu0
        %v5997 = vadd.f32 0.0, %v5996
        %v5998 = vpop.f32.mrb[0].mxu0
        %v5999 = vadd.f32 0.0, %v5998
        %6000 = vmatprep.mubr.bf16.mxu0 %v5761
        %6001 = vmatmul.mubr.bf16.gmra.mrb[0].mxu0 %v5760
        %v6002 = vpop.f32.mrb[0].mxu0
        %v6003 = vadd.f32 0.0, %v6002
        %v6004 = vpop.f32.mrb[0].mxu0
        %v6005 = vadd.f32 0.0, %v6004
        %v6006 = vpop.f32.mrb[0].mxu0
        %v6007 = vadd.f32 0.0, %v6006
        %v6008 = vpop.f32.mrb[0].mxu0
        %v6009 = vadd.f32 0.0, %v6008
        %6010 = vmatprep.mubr.bf16.mxu0 %v5763
        %6011 = vmatmul.mubr.bf16.gmra.mrb[0].mxu0 %v5762
        %v6012 = vpop.f32.mrb[0].mxu0
        %v6013 = vadd.f32 0.0, %v6012
        %v6014 = vpop.f32.mrb[0].mxu0
        %v6015 = vadd.f32 0.0, %v6014
        %v6016 = vpop.f32.mrb[0].mxu0
        %v6017 = vadd.f32 0.0, %v6016
        %v6018 = vpop.f32.mrb[0].mxu0
        %v6019 = vadd.f32 0.0, %v6018
        %6020 = vmatprep.mubr.bf16.mxu0 %v5765
        %6021 = vmatmul.mubr.bf16.gmra.mrb[0].mxu0 %v5764
        %v6022 = vpop.f32.mrb[0].mxu0
        %v6023 = vadd.f32 0.0, %v6022
        %v6024 = vpop.f32.mrb[0].mxu0
        %v6025 = vadd.f32 0.0, %v6024
        %v6026 = vpop.f32.mrb[0].mxu0
        %v6027 = vadd.f32 0.0, %v6026
        %v6028 = vpop.f32.mrb[0].mxu0
        %v6029 = vadd.f32 0.0, %v6028
        %6030 = vdwg.mxu0
        %v6031 = vlaneseq
        %v6032 = vshrl.u32 %v6031, 7
        %v6033 = vsub.s32 5, %v6032
        %v6034 = vrot.slane %v2560, %v6033
        %v6035 = vlaneseq
        %v6036 = vshrl.u32 %v6035, 7
        %v6037 = vsub.s32 5, %v6036
        %v6038 = vrot.slane %v2562, %v6037
        %v6039 = vmul.f32 %v5702, %v6034
        %v6040 = vmul.f32 %v5703, %v6038
        %v6041 = vmul.f32 %v5704, %v6034
        %v6042 = vmul.f32 %v5705, %v6038
        %v6043 = vmul.f32 %v5706, %v6034
        %v6044 = vmul.f32 %v5707, %v6038
        %v6045 = vmul.f32 %v5708, %v6034
        %v6046 = vmul.f32 %v5709, %v6038
        %v6047 = vmul.f32 %v5710, %v6034
        %v6048 = vmul.f32 %v5711, %v6038
        %v6049 = vmul.f32 %v5712, %v6034
        %v6050 = vmul.f32 %v5713, %v6038
        %v6051 = vmul.f32 %v5714, %v6034
        %v6052 = vmul.f32 %v5715, %v6038
        %v6053 = vmul.f32 %v5716, %v6034
        %v6054 = vmul.f32 %v5717, %v6038
        %v6055 = vld [vmem:[#allocation5 + $0x280] sm:$0xff]
        %v6056 = vld [vmem:[#allocation5 + $0x288] sm:$0xff]
        %v6057 = vld [vmem:[#allocation5 + $0x290] sm:$0xff]
        %v6058 = vld [vmem:[#allocation5 + $0x298] sm:$0xff]
        %v6059 = vld [vmem:[#allocation5 + $0x2a0] sm:$0xff]
        %v6060 = vld [vmem:[#allocation5 + $0x2a8] sm:$0xff]
        %v6061 = vld [vmem:[#allocation5 + $0x2b0] sm:$0xff]
        %v6062 = vld [vmem:[#allocation5 + $0x2b8] sm:$0xff]
        %v6063 = vld [vmem:[#allocation5 + $0x2c0] sm:$0xff]
        %v6064 = vld [vmem:[#allocation5 + $0x2c8] sm:$0xff]
        %v6065 = vld [vmem:[#allocation5 + $0x2d0] sm:$0xff]
        %v6066 = vld [vmem:[#allocation5 + $0x2d8] sm:$0xff]
        %v6067 = vld [vmem:[#allocation5 + $0x2e0] sm:$0xff]
        %v6068 = vld [vmem:[#allocation5 + $0x2e8] sm:$0xff]
        %v6069 = vld [vmem:[#allocation5 + $0x2f0] sm:$0xff]
        %v6070 = vld [vmem:[#allocation5 + $0x2f8] sm:$0xff]
        %v6071 = vlaneseq
        %v6072 = vshrl.u32 %v6071, 7
        %v6073 = vsub.s32 5, %v6072
        %v6074 = vrot.slane %v2652, %v6073
        %v6075 = vlaneseq
        %v6076 = vshrl.u32 %v6075, 7
        %v6077 = vsub.s32 5, %v6076
        %v6078 = vrot.slane %v2653, %v6077
        %v6079 = vmul.f32 %v6055, %v6074
        %v6080 = vmul.f32 %v6056, %v6078
        %v6081 = vmul.f32 %v6057, %v6074
        %v6082 = vmul.f32 %v6058, %v6078
        %v6083 = vmul.f32 %v6059, %v6074
        %v6084 = vmul.f32 %v6060, %v6078
        %v6085 = vmul.f32 %v6061, %v6074
        %v6086 = vmul.f32 %v6062, %v6078
        %v6087 = vmul.f32 %v6063, %v6074
        %v6088 = vmul.f32 %v6064, %v6078
        %v6089 = vmul.f32 %v6065, %v6074
        %v6090 = vmul.f32 %v6066, %v6078
        %v6091 = vmul.f32 %v6067, %v6074
        %v6092 = vmul.f32 %v6068, %v6078
        %v6093 = vmul.f32 %v6069, %v6074
        %v6094 = vmul.f32 %v6070, %v6078
        %v6095 = vadd.f32 %v6039, %v6079
        %v6096 = vadd.f32 %v6040, %v6080
        %v6097 = vadd.f32 %v6041, %v6081
        %v6098 = vadd.f32 %v6042, %v6082
        %v6099 = vadd.f32 %v6043, %v6083
        %v6100 = vadd.f32 %v6044, %v6084
        %v6101 = vadd.f32 %v6045, %v6085
        %v6102 = vadd.f32 %v6046, %v6086
        %v6103 = vadd.f32 %v6047, %v6087
        %v6104 = vadd.f32 %v6048, %v6088
        %v6105 = vadd.f32 %v6049, %v6089
        %v6106 = vadd.f32 %v6050, %v6090
        %v6107 = vadd.f32 %v6051, %v6091
        %v6108 = vadd.f32 %v6052, %v6092
        %v6109 = vadd.f32 %v6053, %v6093
        %v6110 = vadd.f32 %v6054, %v6094
        %v6111 = vlaneseq
        %v6112 = vshrl.u32 %v6111, 7
        %v6113 = vsub.s32 5, %v6112
        %v6114 = vrot.slane %v2656, %v6113
        %v6115 = vlaneseq
        %v6116 = vshrl.u32 %v6115, 7
        %v6117 = vsub.s32 5, %v6116
        %v6118 = vrot.slane %v2657, %v6117
        %v6119 = vmul.f32 %v5993, %v6114
        %v6120 = vmul.f32 %v5995, %v6118
        %v6121 = vmul.f32 %v5997, %v6114
        %v6122 = vmul.f32 %v5999, %v6118
        %v6123 = vmul.f32 %v6003, %v6114
        %v6124 = vmul.f32 %v6005, %v6118
        %v6125 = vmul.f32 %v6007, %v6114
        %v6126 = vmul.f32 %v6009, %v6118
        %v6127 = vmul.f32 %v6013, %v6114
        %v6128 = vmul.f32 %v6015, %v6118
        %v6129 = vmul.f32 %v6017, %v6114
        %v6130 = vmul.f32 %v6019, %v6118
        %v6131 = vmul.f32 %v6023, %v6114
        %v6132 = vmul.f32 %v6025, %v6118
        %v6133 = vmul.f32 %v6027, %v6114
        %v6134 = vmul.f32 %v6029, %v6118
        %v6135 = vadd.f32 %v6095, %v6119
        %v6136 = vadd.f32 %v6096, %v6120
        %v6137 = vadd.f32 %v6097, %v6121
        %v6138 = vadd.f32 %v6098, %v6122
        %v6139 = vadd.f32 %v6099, %v6123
        %v6140 = vadd.f32 %v6100, %v6124
        %v6141 = vadd.f32 %v6101, %v6125
        %v6142 = vadd.f32 %v6102, %v6126
        %v6143 = vadd.f32 %v6103, %v6127
        %v6144 = vadd.f32 %v6104, %v6128
        %v6145 = vadd.f32 %v6105, %v6129
        %v6146 = vadd.f32 %v6106, %v6130
        %v6147 = vadd.f32 %v6107, %v6131
        %v6148 = vadd.f32 %v6108, %v6132
        %v6149 = vadd.f32 %v6109, %v6133
        %v6150 = vadd.f32 %v6110, %v6134
        %6151 = vst [vmem:[#allocation4 + $0x280] sm:$0xff] %v6135
        %6152 = vst [vmem:[#allocation4 + $0x288] sm:$0xff] %v6136
        %6153 = vst [vmem:[#allocation4 + $0x290] sm:$0xff] %v6137
        %6154 = vst [vmem:[#allocation4 + $0x298] sm:$0xff] %v6138
        %6155 = vst [vmem:[#allocation4 + $0x2a0] sm:$0xff] %v6139
        %6156 = vst [vmem:[#allocation4 + $0x2a8] sm:$0xff] %v6140
        %6157 = vst [vmem:[#allocation4 + $0x2b0] sm:$0xff] %v6141
        %6158 = vst [vmem:[#allocation4 + $0x2b8] sm:$0xff] %v6142
        %6159 = vst [vmem:[#allocation4 + $0x2c0] sm:$0xff] %v6143
        %6160 = vst [vmem:[#allocation4 + $0x2c8] sm:$0xff] %v6144
        %6161 = vst [vmem:[#allocation4 + $0x2d0] sm:$0xff] %v6145
        %6162 = vst [vmem:[#allocation4 + $0x2d8] sm:$0xff] %v6146
        %6163 = vst [vmem:[#allocation4 + $0x2e0] sm:$0xff] %v6147
        %6164 = vst [vmem:[#allocation4 + $0x2e8] sm:$0xff] %v6148
        %6165 = vst [vmem:[#allocation4 + $0x2f0] sm:$0xff] %v6149
        %6166 = vst [vmem:[#allocation4 + $0x2f8] sm:$0xff] %v6150
        %v6167 = vlaneseq
        %v6168 = vshrl.u32 %v6167, 7
        %v6169 = vsub.s32 6, %v6168
        %v6170 = vrot.slane %v2654, %v6169
        %v6171 = vlaneseq
        %v6172 = vshrl.u32 %v6171, 7
        %v6173 = vsub.s32 6, %v6172
        %v6174 = vrot.slane %v2655, %v6173
        %v6175 = vmul.f32 %v6135, %v6170
        %v6176 = vmul.f32 %v6136, %v6174
        %v6177 = vmul.f32 %v6137, %v6170
        %v6178 = vmul.f32 %v6138, %v6174
        %v6179 = vmul.f32 %v6139, %v6170
        %v6180 = vmul.f32 %v6140, %v6174
        %v6181 = vmul.f32 %v6141, %v6170
        %v6182 = vmul.f32 %v6142, %v6174
        %v6183 = vmul.f32 %v6143, %v6170
        %v6184 = vmul.f32 %v6144, %v6174
        %v6185 = vmul.f32 %v6145, %v6170
        %v6186 = vmul.f32 %v6146, %v6174
        %v6187 = vmul.f32 %v6147, %v6170
        %v6188 = vmul.f32 %v6148, %v6174
        %v6189 = vmul.f32 %v6149, %v6170
        %v6190 = vmul.f32 %v6150, %v6174
        %v6191 = vpack.c.bf16 %v6177, %v6175
        %v6192 = vpack.c.bf16 %v6178, %v6176
        %v6193 = vpack.c.bf16 %v6181, %v6179
        %v6194 = vpack.c.bf16 %v6182, %v6180
        %v6195 = vpack.c.bf16 %v6185, %v6183
        %v6196 = vpack.c.bf16 %v6186, %v6184
        %v6197 = vpack.c.bf16 %v6189, %v6187
        %v6198 = vpack.c.bf16 %v6190, %v6188
        %v6199 = vld [vmem:[#allocation6] sm:$0xff]
        %v6200 = vld [vmem:[#allocation6 + $0x8] sm:$0xff]
        %v6201 = vld [vmem:[#allocation6 + $0x10] sm:$0xff]
        %v6202 = vld [vmem:[#allocation6 + $0x18] sm:$0xff]
        %v6203 = vld [vmem:[#allocation6 + $0x20] sm:$0xff]
        %v6204 = vld [vmem:[#allocation6 + $0x28] sm:$0xff]
        %v6205 = vld [vmem:[#allocation6 + $0x30] sm:$0xff]
        %v6206 = vld [vmem:[#allocation6 + $0x38] sm:$0xff]
        %v6207 = vld [vmem:[#allocation6 + $0x40] sm:$0xff]
        %v6208 = vld [vmem:[#allocation6 + $0x48] sm:$0xff]
        %v6209 = vld [vmem:[#allocation6 + $0x50] sm:$0xff]
        %v6210 = vld [vmem:[#allocation6 + $0x58] sm:$0xff]
        %v6211 = vld [vmem:[#allocation6 + $0x60] sm:$0xff]
        %v6212 = vld [vmem:[#allocation6 + $0x68] sm:$0xff]
        %v6213 = vld [vmem:[#allocation6 + $0x70] sm:$0xff]
        %v6214 = vld [vmem:[#allocation6 + $0x78] sm:$0xff]
        %v6215 = vld [vmem:[#allocation6 + $0x80] sm:$0xff]
        %v6216 = vld [vmem:[#allocation6 + $0x88] sm:$0xff]
        %v6217 = vld [vmem:[#allocation6 + $0x90] sm:$0xff]
        %v6218 = vld [vmem:[#allocation6 + $0x98] sm:$0xff]
        %v6219 = vld [vmem:[#allocation6 + $0xa0] sm:$0xff]
        %v6220 = vld [vmem:[#allocation6 + $0xa8] sm:$0xff]
        %v6221 = vld [vmem:[#allocation6 + $0xb0] sm:$0xff]
        %v6222 = vld [vmem:[#allocation6 + $0xb8] sm:$0xff]
        %v6223 = vld [vmem:[#allocation6 + $0xc0] sm:$0xff]
        %v6224 = vld [vmem:[#allocation6 + $0xc8] sm:$0xff]
        %v6225 = vld [vmem:[#allocation6 + $0xd0] sm:$0xff]
        %v6226 = vld [vmem:[#allocation6 + $0xd8] sm:$0xff]
        %v6227 = vld [vmem:[#allocation6 + $0xe0] sm:$0xff]
        %v6228 = vld [vmem:[#allocation6 + $0xe8] sm:$0xff]
        %v6229 = vld [vmem:[#allocation6 + $0xf0] sm:$0xff]
        %v6230 = vld [vmem:[#allocation6 + $0xf8] sm:$0xff]
        %v6263 = vunpack.c.l.b16 %v6199
        %v6264 = vunpack.c.h.b16 %v6199
        %v6265 = vunpack.c.l.b16 %v6200
        %v6266 = vunpack.c.h.b16 %v6200
        %v6267 = vunpack.c.l.b16 %v6201
        %v6268 = vunpack.c.h.b16 %v6201
        %v6269 = vunpack.c.l.b16 %v6202
        %v6270 = vunpack.c.h.b16 %v6202
        %v6271 = vunpack.c.l.b16 %v6203
        %v6272 = vunpack.c.h.b16 %v6203
        %v6273 = vunpack.c.l.b16 %v6204
        %v6274 = vunpack.c.h.b16 %v6204
        %v6275 = vunpack.c.l.b16 %v6205
        %v6276 = vunpack.c.h.b16 %v6205
        %v6277 = vunpack.c.l.b16 %v6206
        %v6278 = vunpack.c.h.b16 %v6206
        %v6279 = vunpack.c.l.b16 %v6207
        %v6280 = vunpack.c.h.b16 %v6207
        %v6281 = vunpack.c.l.b16 %v6208
        %v6282 = vunpack.c.h.b16 %v6208
        %v6283 = vunpack.c.l.b16 %v6209
        %v6284 = vunpack.c.h.b16 %v6209
        %v6285 = vunpack.c.l.b16 %v6210
        %v6286 = vunpack.c.h.b16 %v6210
        %v6287 = vunpack.c.l.b16 %v6211
        %v6288 = vunpack.c.h.b16 %v6211
        %v6289 = vunpack.c.l.b16 %v6212
        %v6290 = vunpack.c.h.b16 %v6212
        %v6291 = vunpack.c.l.b16 %v6213
        %v6292 = vunpack.c.h.b16 %v6213
        %v6293 = vunpack.c.l.b16 %v6214
        %v6294 = vunpack.c.h.b16 %v6214
        %v6295 = vunpack.c.l.b16 %v6215
        %v6296 = vunpack.c.h.b16 %v6215
        %v6297 = vunpack.c.l.b16 %v6216
        %v6298 = vunpack.c.h.b16 %v6216
        %v6299 = vunpack.c.l.b16 %v6217
        %v6300 = vunpack.c.h.b16 %v6217
        %v6301 = vunpack.c.l.b16 %v6218
        %v6302 = vunpack.c.h.b16 %v6218
        %v6303 = vunpack.c.l.b16 %v6219
        %v6304 = vunpack.c.h.b16 %v6219
        %v6305 = vunpack.c.l.b16 %v6220
        %v6306 = vunpack.c.h.b16 %v6220
        %v6307 = vunpack.c.l.b16 %v6221
        %v6308 = vunpack.c.h.b16 %v6221
        %v6309 = vunpack.c.l.b16 %v6222
        %v6310 = vunpack.c.h.b16 %v6222
        %v6311 = vunpack.c.l.b16 %v6223
        %v6312 = vunpack.c.h.b16 %v6223
        %v6313 = vunpack.c.l.b16 %v6224
        %v6314 = vunpack.c.h.b16 %v6224
        %v6315 = vunpack.c.l.b16 %v6225
        %v6316 = vunpack.c.h.b16 %v6225
        %v6317 = vunpack.c.l.b16 %v6226
        %v6318 = vunpack.c.h.b16 %v6226
        %v6319 = vunpack.c.l.b16 %v6227
        %v6320 = vunpack.c.h.b16 %v6227
        %v6321 = vunpack.c.l.b16 %v6228
        %v6322 = vunpack.c.h.b16 %v6228
        %v6323 = vunpack.c.l.b16 %v6229
        %v6324 = vunpack.c.h.b16 %v6229
        %v6325 = vunpack.c.l.b16 %v6230
        %v6326 = vunpack.c.h.b16 %v6230
        %v6327 = vpack.c.b16 %v6265, %v6263
        %v6328 = vpack.c.b16 %v6266, %v6264
        %v6329 = vpack.c.b16 %v6269, %v6267
        %v6330 = vpack.c.b16 %v6270, %v6268
        %v6331 = vpack.c.b16 %v6273, %v6271
        %v6332 = vpack.c.b16 %v6274, %v6272
        %v6333 = vpack.c.b16 %v6277, %v6275
        %v6334 = vpack.c.b16 %v6278, %v6276
        %v6335 = vpack.c.b16 %v6281, %v6279
        %v6336 = vpack.c.b16 %v6282, %v6280
        %v6337 = vpack.c.b16 %v6285, %v6283
        %v6338 = vpack.c.b16 %v6286, %v6284
        %v6339 = vpack.c.b16 %v6289, %v6287
        %v6340 = vpack.c.b16 %v6290, %v6288
        %v6341 = vpack.c.b16 %v6293, %v6291
        %v6342 = vpack.c.b16 %v6294, %v6292
        %v6343 = vpack.c.b16 %v6297, %v6295
        %v6344 = vpack.c.b16 %v6298, %v6296
        %v6345 = vpack.c.b16 %v6301, %v6299
        %v6346 = vpack.c.b16 %v6302, %v6300
        %v6347 = vpack.c.b16 %v6305, %v6303
        %v6348 = vpack.c.b16 %v6306, %v6304
        %v6349 = vpack.c.b16 %v6309, %v6307
        %v6350 = vpack.c.b16 %v6310, %v6308
        %v6351 = vpack.c.b16 %v6313, %v6311
        %v6352 = vpack.c.b16 %v6314, %v6312
        %v6353 = vpack.c.b16 %v6317, %v6315
        %v6354 = vpack.c.b16 %v6318, %v6316
        %v6355 = vpack.c.b16 %v6321, %v6319
        %v6356 = vpack.c.b16 %v6322, %v6320
        %v6357 = vpack.c.b16 %v6325, %v6323
        %v6358 = vpack.c.b16 %v6326, %v6324
        %6391 = vmatprep.subr.bf16.mxu0 %v6328
        %6392 = vmatpush1.bf16.msra.mxu0 %v6327
        %6393 = vmatprep.subr.bf16.mxu0 %v6330
        %6394 = vmatpush1.bf16.msra.mxu0 %v6329
        %6395 = vmatprep.subr.bf16.mxu0 %v6332
        %6396 = vmatpush1.bf16.msra.mxu0 %v6331
        %6397 = vmatprep.subr.bf16.mxu0 %v6334
        %6398 = vmatpush1.bf16.msra.mxu0 %v6333
        %6399 = vmatprep.subr.bf16.mxu0 %v6336
        %6400 = vmatpush1.bf16.msra.mxu0 %v6335
        %6401 = vmatprep.subr.bf16.mxu0 %v6338
        %6402 = vmatpush1.bf16.msra.mxu0 %v6337
        %6403 = vmatprep.subr.bf16.mxu0 %v6340
        %6404 = vmatpush1.bf16.msra.mxu0 %v6339
        %6405 = vmatprep.subr.bf16.mxu0 %v6342
        %6406 = vmatpush1.bf16.msra.mxu0 %v6341
        %6407 = vmatprep.subr.bf16.mxu0 %v6344
        %6408 = vmatpush1.bf16.msra.mxu0 %v6343
        %6409 = vmatprep.subr.bf16.mxu0 %v6346
        %6410 = vmatpush1.bf16.msra.mxu0 %v6345
        %6411 = vmatprep.subr.bf16.mxu0 %v6348
        %6412 = vmatpush1.bf16.msra.mxu0 %v6347
        %6413 = vmatprep.subr.bf16.mxu0 %v6350
        %6414 = vmatpush1.bf16.msra.mxu0 %v6349
        %6415 = vmatprep.subr.bf16.mxu0 %v6352
        %6416 = vmatpush1.bf16.msra.mxu0 %v6351
        %6417 = vmatprep.subr.bf16.mxu0 %v6354
        %6418 = vmatpush1.bf16.msra.mxu0 %v6353
        %6419 = vmatprep.subr.bf16.mxu0 %v6356
        %6420 = vmatpush1.bf16.msra.mxu0 %v6355
        %6421 = vmatprep.subr.bf16.mxu0 %v6358
        %6422 = vmatpush1.bf16.msra.mxu0 %v6357
        %6423 = vmatprep.mubr.bf16.mxu0 %v6192
        %6424 = vmatmul.mubr.bf16.gmra.mrb[0].mxu0 %v6191
        %v6425 = vpop.f32.mrb[0].mxu0
        %v6426 = vadd.f32 0.0, %v6425
        %v6427 = vpop.f32.mrb[0].mxu0
        %v6428 = vadd.f32 0.0, %v6427
        %v6429 = vpop.f32.mrb[0].mxu0
        %v6430 = vadd.f32 0.0, %v6429
        %v6431 = vpop.f32.mrb[0].mxu0
        %v6432 = vadd.f32 0.0, %v6431
        %6433 = vmatprep.mubr.bf16.mxu0 %v6194
        %6434 = vmatmul.mubr.bf16.gmra.mrb[0].mxu0 %v6193
        %v6435 = vpop.f32.mrb[0].mxu0
        %v6436 = vadd.f32 0.0, %v6435
        %v6437 = vpop.f32.mrb[0].mxu0
        %v6438 = vadd.f32 0.0, %v6437
        %v6439 = vpop.f32.mrb[0].mxu0
        %v6440 = vadd.f32 0.0, %v6439
        %v6441 = vpop.f32.mrb[0].mxu0
        %v6442 = vadd.f32 0.0, %v6441
        %6443 = vmatprep.mubr.bf16.mxu0 %v6196
        %6444 = vmatmul.mubr.bf16.gmra.mrb[0].mxu0 %v6195
        %v6445 = vpop.f32.mrb[0].mxu0
        %v6446 = vadd.f32 0.0, %v6445
        %v6447 = vpop.f32.mrb[0].mxu0
        %v6448 = vadd.f32 0.0, %v6447
        %v6449 = vpop.f32.mrb[0].mxu0
        %v6450 = vadd.f32 0.0, %v6449
        %v6451 = vpop.f32.mrb[0].mxu0
        %v6452 = vadd.f32 0.0, %v6451
        %6453 = vmatprep.mubr.bf16.mxu0 %v6198
        %6454 = vmatmul.mubr.bf16.gmra.mrb[0].mxu0 %v6197
        %v6455 = vpop.f32.mrb[0].mxu0
        %v6456 = vadd.f32 0.0, %v6455
        %v6457 = vpop.f32.mrb[0].mxu0
        %v6458 = vadd.f32 0.0, %v6457
        %v6459 = vpop.f32.mrb[0].mxu0
        %v6460 = vadd.f32 0.0, %v6459
        %v6461 = vpop.f32.mrb[0].mxu0
        %v6462 = vadd.f32 0.0, %v6461
        %6463 = vdwg.mxu0
        %v6464 = vlaneseq
        %v6465 = vshrl.u32 %v6464, 7
        %v6466 = vsub.s32 6, %v6465
        %v6467 = vrot.slane %v2560, %v6466
        %v6468 = vlaneseq
        %v6469 = vshrl.u32 %v6468, 7
        %v6470 = vsub.s32 6, %v6469
        %v6471 = vrot.slane %v2562, %v6470
        %v6472 = vmul.f32 %v6135, %v6467
        %v6473 = vmul.f32 %v6136, %v6471
        %v6474 = vmul.f32 %v6137, %v6467
        %v6475 = vmul.f32 %v6138, %v6471
        %v6476 = vmul.f32 %v6139, %v6467
        %v6477 = vmul.f32 %v6140, %v6471
        %v6478 = vmul.f32 %v6141, %v6467
        %v6479 = vmul.f32 %v6142, %v6471
        %v6480 = vmul.f32 %v6143, %v6467
        %v6481 = vmul.f32 %v6144, %v6471
        %v6482 = vmul.f32 %v6145, %v6467
        %v6483 = vmul.f32 %v6146, %v6471
        %v6484 = vmul.f32 %v6147, %v6467
        %v6485 = vmul.f32 %v6148, %v6471
        %v6486 = vmul.f32 %v6149, %v6467
        %v6487 = vmul.f32 %v6150, %v6471
        %v6488 = vld [vmem:[#allocation5 + $0x300] sm:$0xff]
        %v6489 = vld [vmem:[#allocation5 + $0x308] sm:$0xff]
        %v6490 = vld [vmem:[#allocation5 + $0x310] sm:$0xff]
        %v6491 = vld [vmem:[#allocation5 + $0x318] sm:$0xff]
        %v6492 = vld [vmem:[#allocation5 + $0x320] sm:$0xff]
        %v6493 = vld [vmem:[#allocation5 + $0x328] sm:$0xff]
        %v6494 = vld [vmem:[#allocation5 + $0x330] sm:$0xff]
        %v6495 = vld [vmem:[#allocation5 + $0x338] sm:$0xff]
        %v6496 = vld [vmem:[#allocation5 + $0x340] sm:$0xff]
        %v6497 = vld [vmem:[#allocation5 + $0x348] sm:$0xff]
        %v6498 = vld [vmem:[#allocation5 + $0x350] sm:$0xff]
        %v6499 = vld [vmem:[#allocation5 + $0x358] sm:$0xff]
        %v6500 = vld [vmem:[#allocation5 + $0x360] sm:$0xff]
        %v6501 = vld [vmem:[#allocation5 + $0x368] sm:$0xff]
        %v6502 = vld [vmem:[#allocation5 + $0x370] sm:$0xff]
        %v6503 = vld [vmem:[#allocation5 + $0x378] sm:$0xff]
        %v6504 = vlaneseq
        %v6505 = vshrl.u32 %v6504, 7
        %v6506 = vsub.s32 6, %v6505
        %v6507 = vrot.slane %v2652, %v6506
        %v6508 = vlaneseq
        %v6509 = vshrl.u32 %v6508, 7
        %v6510 = vsub.s32 6, %v6509
        %v6511 = vrot.slane %v2653, %v6510
        %v6512 = vmul.f32 %v6488, %v6507
        %v6513 = vmul.f32 %v6489, %v6511
        %v6514 = vmul.f32 %v6490, %v6507
        %v6515 = vmul.f32 %v6491, %v6511
        %v6516 = vmul.f32 %v6492, %v6507
        %v6517 = vmul.f32 %v6493, %v6511
        %v6518 = vmul.f32 %v6494, %v6507
        %v6519 = vmul.f32 %v6495, %v6511
        %v6520 = vmul.f32 %v6496, %v6507
        %v6521 = vmul.f32 %v6497, %v6511
        %v6522 = vmul.f32 %v6498, %v6507
        %v6523 = vmul.f32 %v6499, %v6511
        %v6524 = vmul.f32 %v6500, %v6507
        %v6525 = vmul.f32 %v6501, %v6511
        %v6526 = vmul.f32 %v6502, %v6507
        %v6527 = vmul.f32 %v6503, %v6511
        %v6528 = vadd.f32 %v6472, %v6512
        %v6529 = vadd.f32 %v6473, %v6513
        %v6530 = vadd.f32 %v6474, %v6514
        %v6531 = vadd.f32 %v6475, %v6515
        %v6532 = vadd.f32 %v6476, %v6516
        %v6533 = vadd.f32 %v6477, %v6517
        %v6534 = vadd.f32 %v6478, %v6518
        %v6535 = vadd.f32 %v6479, %v6519
        %v6536 = vadd.f32 %v6480, %v6520
        %v6537 = vadd.f32 %v6481, %v6521
        %v6538 = vadd.f32 %v6482, %v6522
        %v6539 = vadd.f32 %v6483, %v6523
        %v6540 = vadd.f32 %v6484, %v6524
        %v6541 = vadd.f32 %v6485, %v6525
        %v6542 = vadd.f32 %v6486, %v6526
        %v6543 = vadd.f32 %v6487, %v6527
        %v6544 = vlaneseq
        %v6545 = vshrl.u32 %v6544, 7
        %v6546 = vsub.s32 6, %v6545
        %v6547 = vrot.slane %v2656, %v6546
        %v6548 = vlaneseq
        %v6549 = vshrl.u32 %v6548, 7
        %v6550 = vsub.s32 6, %v6549
        %v6551 = vrot.slane %v2657, %v6550
        %v6552 = vmul.f32 %v6426, %v6547
        %v6553 = vmul.f32 %v6428, %v6551
        %v6554 = vmul.f32 %v6430, %v6547
        %v6555 = vmul.f32 %v6432, %v6551
        %v6556 = vmul.f32 %v6436, %v6547
        %v6557 = vmul.f32 %v6438, %v6551
        %v6558 = vmul.f32 %v6440, %v6547
        %v6559 = vmul.f32 %v6442, %v6551
        %v6560 = vmul.f32 %v6446, %v6547
        %v6561 = vmul.f32 %v6448, %v6551
        %v6562 = vmul.f32 %v6450, %v6547
        %v6563 = vmul.f32 %v6452, %v6551
        %v6564 = vmul.f32 %v6456, %v6547
        %v6565 = vmul.f32 %v6458, %v6551
        %v6566 = vmul.f32 %v6460, %v6547
        %v6567 = vmul.f32 %v6462, %v6551
        %v6568 = vadd.f32 %v6528, %v6552
        %v6569 = vadd.f32 %v6529, %v6553
        %v6570 = vadd.f32 %v6530, %v6554
        %v6571 = vadd.f32 %v6531, %v6555
        %v6572 = vadd.f32 %v6532, %v6556
        %v6573 = vadd.f32 %v6533, %v6557
        %v6574 = vadd.f32 %v6534, %v6558
        %v6575 = vadd.f32 %v6535, %v6559
        %v6576 = vadd.f32 %v6536, %v6560
        %v6577 = vadd.f32 %v6537, %v6561
        %v6578 = vadd.f32 %v6538, %v6562
        %v6579 = vadd.f32 %v6539, %v6563
        %v6580 = vadd.f32 %v6540, %v6564
        %v6581 = vadd.f32 %v6541, %v6565
        %v6582 = vadd.f32 %v6542, %v6566
        %v6583 = vadd.f32 %v6543, %v6567
        %6584 = vst [vmem:[#allocation4 + $0x300] sm:$0xff] %v6568
        %6585 = vst [vmem:[#allocation4 + $0x308] sm:$0xff] %v6569
        %6586 = vst [vmem:[#allocation4 + $0x310] sm:$0xff] %v6570
        %6587 = vst [vmem:[#allocation4 + $0x318] sm:$0xff] %v6571
        %6588 = vst [vmem:[#allocation4 + $0x320] sm:$0xff] %v6572
        %6589 = vst [vmem:[#allocation4 + $0x328] sm:$0xff] %v6573
        %6590 = vst [vmem:[#allocation4 + $0x330] sm:$0xff] %v6574
        %6591 = vst [vmem:[#allocation4 + $0x338] sm:$0xff] %v6575
        %6592 = vst [vmem:[#allocation4 + $0x340] sm:$0xff] %v6576
        %6593 = vst [vmem:[#allocation4 + $0x348] sm:$0xff] %v6577
        %6594 = vst [vmem:[#allocation4 + $0x350] sm:$0xff] %v6578
        %6595 = vst [vmem:[#allocation4 + $0x358] sm:$0xff] %v6579
        %6596 = vst [vmem:[#allocation4 + $0x360] sm:$0xff] %v6580
        %6597 = vst [vmem:[#allocation4 + $0x368] sm:$0xff] %v6581
        %6598 = vst [vmem:[#allocation4 + $0x370] sm:$0xff] %v6582
        %6599 = vst [vmem:[#allocation4 + $0x378] sm:$0xff] %v6583
        %v6600 = vlaneseq
        %v6601 = vshrl.u32 %v6600, 7
        %v6602 = vsub.s32 7, %v6601
        %v6603 = vrot.slane %v2654, %v6602
        %v6604 = vlaneseq
        %v6605 = vshrl.u32 %v6604, 7
        %v6606 = vsub.s32 7, %v6605
        %v6607 = vrot.slane %v2655, %v6606
        %v6608 = vmul.f32 %v6568, %v6603
        %v6609 = vmul.f32 %v6569, %v6607
        %v6610 = vmul.f32 %v6570, %v6603
        %v6611 = vmul.f32 %v6571, %v6607
        %v6612 = vmul.f32 %v6572, %v6603
        %v6613 = vmul.f32 %v6573, %v6607
        %v6614 = vmul.f32 %v6574, %v6603
        %v6615 = vmul.f32 %v6575, %v6607
        %v6616 = vmul.f32 %v6576, %v6603
        %v6617 = vmul.f32 %v6577, %v6607
        %v6618 = vmul.f32 %v6578, %v6603
        %v6619 = vmul.f32 %v6579, %v6607
        %v6620 = vmul.f32 %v6580, %v6603
        %v6621 = vmul.f32 %v6581, %v6607
        %v6622 = vmul.f32 %v6582, %v6603
        %v6623 = vmul.f32 %v6583, %v6607
        %v6624 = vpack.c.bf16 %v6610, %v6608
        %v6625 = vpack.c.bf16 %v6611, %v6609
        %v6626 = vpack.c.bf16 %v6614, %v6612
        %v6627 = vpack.c.bf16 %v6615, %v6613
        %v6628 = vpack.c.bf16 %v6618, %v6616
        %v6629 = vpack.c.bf16 %v6619, %v6617
        %v6630 = vpack.c.bf16 %v6622, %v6620
        %v6631 = vpack.c.bf16 %v6623, %v6621
        %v6632 = vld [vmem:[#allocation6] sm:$0xff]
        %v6633 = vld [vmem:[#allocation6 + $0x8] sm:$0xff]
        %v6634 = vld [vmem:[#allocation6 + $0x10] sm:$0xff]
        %v6635 = vld [vmem:[#allocation6 + $0x18] sm:$0xff]
        %v6636 = vld [vmem:[#allocation6 + $0x20] sm:$0xff]
        %v6637 = vld [vmem:[#allocation6 + $0x28] sm:$0xff]
        %v6638 = vld [vmem:[#allocation6 + $0x30] sm:$0xff]
        %v6639 = vld [vmem:[#allocation6 + $0x38] sm:$0xff]
        %v6640 = vld [vmem:[#allocation6 + $0x40] sm:$0xff]
        %v6641 = vld [vmem:[#allocation6 + $0x48] sm:$0xff]
        %v6642 = vld [vmem:[#allocation6 + $0x50] sm:$0xff]
        %v6643 = vld [vmem:[#allocation6 + $0x58] sm:$0xff]
        %v6644 = vld [vmem:[#allocation6 + $0x60] sm:$0xff]
        %v6645 = vld [vmem:[#allocation6 + $0x68] sm:$0xff]
        %v6646 = vld [vmem:[#allocation6 + $0x70] sm:$0xff]
        %v6647 = vld [vmem:[#allocation6 + $0x78] sm:$0xff]
        %v6648 = vld [vmem:[#allocation6 + $0x80] sm:$0xff]
        %v6649 = vld [vmem:[#allocation6 + $0x88] sm:$0xff]
        %v6650 = vld [vmem:[#allocation6 + $0x90] sm:$0xff]
        %v6651 = vld [vmem:[#allocation6 + $0x98] sm:$0xff]
        %v6652 = vld [vmem:[#allocation6 + $0xa0] sm:$0xff]
        %v6653 = vld [vmem:[#allocation6 + $0xa8] sm:$0xff]
        %v6654 = vld [vmem:[#allocation6 + $0xb0] sm:$0xff]
        %v6655 = vld [vmem:[#allocation6 + $0xb8] sm:$0xff]
        %v6656 = vld [vmem:[#allocation6 + $0xc0] sm:$0xff]
        %v6657 = vld [vmem:[#allocation6 + $0xc8] sm:$0xff]
        %v6658 = vld [vmem:[#allocation6 + $0xd0] sm:$0xff]
        %v6659 = vld [vmem:[#allocation6 + $0xd8] sm:$0xff]
        %v6660 = vld [vmem:[#allocation6 + $0xe0] sm:$0xff]
        %v6661 = vld [vmem:[#allocation6 + $0xe8] sm:$0xff]
        %v6662 = vld [vmem:[#allocation6 + $0xf0] sm:$0xff]
        %v6663 = vld [vmem:[#allocation6 + $0xf8] sm:$0xff]
        %v6696 = vunpack.c.l.b16 %v6632
        %v6697 = vunpack.c.h.b16 %v6632
        %v6698 = vunpack.c.l.b16 %v6633
        %v6699 = vunpack.c.h.b16 %v6633
        %v6700 = vunpack.c.l.b16 %v6634
        %v6701 = vunpack.c.h.b16 %v6634
        %v6702 = vunpack.c.l.b16 %v6635
        %v6703 = vunpack.c.h.b16 %v6635
        %v6704 = vunpack.c.l.b16 %v6636
        %v6705 = vunpack.c.h.b16 %v6636
        %v6706 = vunpack.c.l.b16 %v6637
        %v6707 = vunpack.c.h.b16 %v6637
        %v6708 = vunpack.c.l.b16 %v6638
        %v6709 = vunpack.c.h.b16 %v6638
        %v6710 = vunpack.c.l.b16 %v6639
        %v6711 = vunpack.c.h.b16 %v6639
        %v6712 = vunpack.c.l.b16 %v6640
        %v6713 = vunpack.c.h.b16 %v6640
        %v6714 = vunpack.c.l.b16 %v6641
        %v6715 = vunpack.c.h.b16 %v6641
        %v6716 = vunpack.c.l.b16 %v6642
        %v6717 = vunpack.c.h.b16 %v6642
        %v6718 = vunpack.c.l.b16 %v6643
        %v6719 = vunpack.c.h.b16 %v6643
        %v6720 = vunpack.c.l.b16 %v6644
        %v6721 = vunpack.c.h.b16 %v6644
        %v6722 = vunpack.c.l.b16 %v6645
        %v6723 = vunpack.c.h.b16 %v6645
        %v6724 = vunpack.c.l.b16 %v6646
        %v6725 = vunpack.c.h.b16 %v6646
        %v6726 = vunpack.c.l.b16 %v6647
        %v6727 = vunpack.c.h.b16 %v6647
        %v6728 = vunpack.c.l.b16 %v6648
        %v6729 = vunpack.c.h.b16 %v6648
        %v6730 = vunpack.c.l.b16 %v6649
        %v6731 = vunpack.c.h.b16 %v6649
        %v6732 = vunpack.c.l.b16 %v6650
        %v6733 = vunpack.c.h.b16 %v6650
        %v6734 = vunpack.c.l.b16 %v6651
        %v6735 = vunpack.c.h.b16 %v6651
        %v6736 = vunpack.c.l.b16 %v6652
        %v6737 = vunpack.c.h.b16 %v6652
        %v6738 = vunpack.c.l.b16 %v6653
        %v6739 = vunpack.c.h.b16 %v6653
        %v6740 = vunpack.c.l.b16 %v6654
        %v6741 = vunpack.c.h.b16 %v6654
        %v6742 = vunpack.c.l.b16 %v6655
        %v6743 = vunpack.c.h.b16 %v6655
        %v6744 = vunpack.c.l.b16 %v6656
        %v6745 = vunpack.c.h.b16 %v6656
        %v6746 = vunpack.c.l.b16 %v6657
        %v6747 = vunpack.c.h.b16 %v6657
        %v6748 = vunpack.c.l.b16 %v6658
        %v6749 = vunpack.c.h.b16 %v6658
        %v6750 = vunpack.c.l.b16 %v6659
        %v6751 = vunpack.c.h.b16 %v6659
        %v6752 = vunpack.c.l.b16 %v6660
        %v6753 = vunpack.c.h.b16 %v6660
        %v6754 = vunpack.c.l.b16 %v6661
        %v6755 = vunpack.c.h.b16 %v6661
        %v6756 = vunpack.c.l.b16 %v6662
        %v6757 = vunpack.c.h.b16 %v6662
        %v6758 = vunpack.c.l.b16 %v6663
        %v6759 = vunpack.c.h.b16 %v6663
        %v6760 = vpack.c.b16 %v6698, %v6696
        %v6761 = vpack.c.b16 %v6699, %v6697
        %v6762 = vpack.c.b16 %v6702, %v6700
        %v6763 = vpack.c.b16 %v6703, %v6701
        %v6764 = vpack.c.b16 %v6706, %v6704
        %v6765 = vpack.c.b16 %v6707, %v6705
        %v6766 = vpack.c.b16 %v6710, %v6708
        %v6767 = vpack.c.b16 %v6711, %v6709
        %v6768 = vpack.c.b16 %v6714, %v6712
        %v6769 = vpack.c.b16 %v6715, %v6713
        %v6770 = vpack.c.b16 %v6718, %v6716
        %v6771 = vpack.c.b16 %v6719, %v6717
        %v6772 = vpack.c.b16 %v6722, %v6720
        %v6773 = vpack.c.b16 %v6723, %v6721
        %v6774 = vpack.c.b16 %v6726, %v6724
        %v6775 = vpack.c.b16 %v6727, %v6725
        %v6776 = vpack.c.b16 %v6730, %v6728
        %v6777 = vpack.c.b16 %v6731, %v6729
        %v6778 = vpack.c.b16 %v6734, %v6732
        %v6779 = vpack.c.b16 %v6735, %v6733
        %v6780 = vpack.c.b16 %v6738, %v6736
        %v6781 = vpack.c.b16 %v6739, %v6737
        %v6782 = vpack.c.b16 %v6742, %v6740
        %v6783 = vpack.c.b16 %v6743, %v6741
        %v6784 = vpack.c.b16 %v6746, %v6744
        %v6785 = vpack.c.b16 %v6747, %v6745
        %v6786 = vpack.c.b16 %v6750, %v6748
        %v6787 = vpack.c.b16 %v6751, %v6749
        %v6788 = vpack.c.b16 %v6754, %v6752
        %v6789 = vpack.c.b16 %v6755, %v6753
        %v6790 = vpack.c.b16 %v6758, %v6756
        %v6791 = vpack.c.b16 %v6759, %v6757
        %6824 = vmatprep.subr.bf16.mxu0 %v6761
        %6825 = vmatpush1.bf16.msra.mxu0 %v6760
        %6826 = vmatprep.subr.bf16.mxu0 %v6763
        %6827 = vmatpush1.bf16.msra.mxu0 %v6762
        %6828 = vmatprep.subr.bf16.mxu0 %v6765
        %6829 = vmatpush1.bf16.msra.mxu0 %v6764
        %6830 = vmatprep.subr.bf16.mxu0 %v6767
        %6831 = vmatpush1.bf16.msra.mxu0 %v6766
        %6832 = vmatprep.subr.bf16.mxu0 %v6769
        %6833 = vmatpush1.bf16.msra.mxu0 %v6768
        %6834 = vmatprep.subr.bf16.mxu0 %v6771
        %6835 = vmatpush1.bf16.msra.mxu0 %v6770
        %6836 = vmatprep.subr.bf16.mxu0 %v6773
        %6837 = vmatpush1.bf16.msra.mxu0 %v6772
        %6838 = vmatprep.subr.bf16.mxu0 %v6775
        %6839 = vmatpush1.bf16.msra.mxu0 %v6774
        %6840 = vmatprep.subr.bf16.mxu0 %v6777
        %6841 = vmatpush1.bf16.msra.mxu0 %v6776
        %6842 = vmatprep.subr.bf16.mxu0 %v6779
        %6843 = vmatpush1.bf16.msra.mxu0 %v6778
        %6844 = vmatprep.subr.bf16.mxu0 %v6781
        %6845 = vmatpush1.bf16.msra.mxu0 %v6780
        %6846 = vmatprep.subr.bf16.mxu0 %v6783
        %6847 = vmatpush1.bf16.msra.mxu0 %v6782
        %6848 = vmatprep.subr.bf16.mxu0 %v6785
        %6849 = vmatpush1.bf16.msra.mxu0 %v6784
        %6850 = vmatprep.subr.bf16.mxu0 %v6787
        %6851 = vmatpush1.bf16.msra.mxu0 %v6786
        %6852 = vmatprep.subr.bf16.mxu0 %v6789
        %6853 = vmatpush1.bf16.msra.mxu0 %v6788
        %6854 = vmatprep.subr.bf16.mxu0 %v6791
        %6855 = vmatpush1.bf16.msra.mxu0 %v6790
        %6856 = vmatprep.mubr.bf16.mxu0 %v6625
        %6857 = vmatmul.mubr.bf16.gmra.mrb[0].mxu0 %v6624
        %v6858 = vpop.f32.mrb[0].mxu0
        %v6859 = vadd.f32 0.0, %v6858
        %v6860 = vpop.f32.mrb[0].mxu0
        %v6861 = vadd.f32 0.0, %v6860
        %v6862 = vpop.f32.mrb[0].mxu0
        %v6863 = vadd.f32 0.0, %v6862
        %v6864 = vpop.f32.mrb[0].mxu0
        %v6865 = vadd.f32 0.0, %v6864
        %6866 = vmatprep.mubr.bf16.mxu0 %v6627
        %6867 = vmatmul.mubr.bf16.gmra.mrb[0].mxu0 %v6626
        %v6868 = vpop.f32.mrb[0].mxu0
        %v6869 = vadd.f32 0.0, %v6868
        %v6870 = vpop.f32.mrb[0].mxu0
        %v6871 = vadd.f32 0.0, %v6870
        %v6872 = vpop.f32.mrb[0].mxu0
        %v6873 = vadd.f32 0.0, %v6872
        %v6874 = vpop.f32.mrb[0].mxu0
        %v6875 = vadd.f32 0.0, %v6874
        %6876 = vmatprep.mubr.bf16.mxu0 %v6629
        %6877 = vmatmul.mubr.bf16.gmra.mrb[0].mxu0 %v6628
        %v6878 = vpop.f32.mrb[0].mxu0
        %v6879 = vadd.f32 0.0, %v6878
        %v6880 = vpop.f32.mrb[0].mxu0
        %v6881 = vadd.f32 0.0, %v6880
        %v6882 = vpop.f32.mrb[0].mxu0
        %v6883 = vadd.f32 0.0, %v6882
        %v6884 = vpop.f32.mrb[0].mxu0
        %v6885 = vadd.f32 0.0, %v6884
        %6886 = vmatprep.mubr.bf16.mxu0 %v6631
        %6887 = vmatmul.mubr.bf16.gmra.mrb[0].mxu0 %v6630
        %v6888 = vpop.f32.mrb[0].mxu0
        %v6889 = vadd.f32 0.0, %v6888
        %v6890 = vpop.f32.mrb[0].mxu0
        %v6891 = vadd.f32 0.0, %v6890
        %v6892 = vpop.f32.mrb[0].mxu0
        %v6893 = vadd.f32 0.0, %v6892
        %v6894 = vpop.f32.mrb[0].mxu0
        %v6895 = vadd.f32 0.0, %v6894
        %6896 = vdwg.mxu0
        %v6897 = vlaneseq
        %v6898 = vshrl.u32 %v6897, 7
        %v6899 = vsub.s32 7, %v6898
        %v6900 = vrot.slane %v2560, %v6899
        %v6901 = vlaneseq
        %v6902 = vshrl.u32 %v6901, 7
        %v6903 = vsub.s32 7, %v6902
        %v6904 = vrot.slane %v2562, %v6903
        %v6905 = vmul.f32 %v6568, %v6900
        %v6906 = vmul.f32 %v6569, %v6904
        %v6907 = vmul.f32 %v6570, %v6900
        %v6908 = vmul.f32 %v6571, %v6904
        %v6909 = vmul.f32 %v6572, %v6900
        %v6910 = vmul.f32 %v6573, %v6904
        %v6911 = vmul.f32 %v6574, %v6900
        %v6912 = vmul.f32 %v6575, %v6904
        %v6913 = vmul.f32 %v6576, %v6900
        %v6914 = vmul.f32 %v6577, %v6904
        %v6915 = vmul.f32 %v6578, %v6900
        %v6916 = vmul.f32 %v6579, %v6904
        %v6917 = vmul.f32 %v6580, %v6900
        %v6918 = vmul.f32 %v6581, %v6904
        %v6919 = vmul.f32 %v6582, %v6900
        %v6920 = vmul.f32 %v6583, %v6904
        %v6921 = vld [vmem:[#allocation5 + $0x380] sm:$0xff]
        %v6922 = vld [vmem:[#allocation5 + $0x388] sm:$0xff]
        %v6923 = vld [vmem:[#allocation5 + $0x390] sm:$0xff]
        %v6924 = vld [vmem:[#allocation5 + $0x398] sm:$0xff]
        %v6925 = vld [vmem:[#allocation5 + $0x3a0] sm:$0xff]
        %v6926 = vld [vmem:[#allocation5 + $0x3a8] sm:$0xff]
        %v6927 = vld [vmem:[#allocation5 + $0x3b0] sm:$0xff]
        %v6928 = vld [vmem:[#allocation5 + $0x3b8] sm:$0xff]
        %v6929 = vld [vmem:[#allocation5 + $0x3c0] sm:$0xff]
        %v6930 = vld [vmem:[#allocation5 + $0x3c8] sm:$0xff]
        %v6931 = vld [vmem:[#allocation5 + $0x3d0] sm:$0xff]
        %v6932 = vld [vmem:[#allocation5 + $0x3d8] sm:$0xff]
        %v6933 = vld [vmem:[#allocation5 + $0x3e0] sm:$0xff]
        %v6934 = vld [vmem:[#allocation5 + $0x3e8] sm:$0xff]
        %v6935 = vld [vmem:[#allocation5 + $0x3f0] sm:$0xff]
        %v6936 = vld [vmem:[#allocation5 + $0x3f8] sm:$0xff]
        %v6937 = vlaneseq
        %v6938 = vshrl.u32 %v6937, 7
        %v6939 = vsub.s32 7, %v6938
        %v6940 = vrot.slane %v2652, %v6939
        %v6941 = vlaneseq
        %v6942 = vshrl.u32 %v6941, 7
        %v6943 = vsub.s32 7, %v6942
        %v6944 = vrot.slane %v2653, %v6943
        %v6945 = vmul.f32 %v6921, %v6940
        %v6946 = vmul.f32 %v6922, %v6944
        %v6947 = vmul.f32 %v6923, %v6940
        %v6948 = vmul.f32 %v6924, %v6944
        %v6949 = vmul.f32 %v6925, %v6940
        %v6950 = vmul.f32 %v6926, %v6944
        %v6951 = vmul.f32 %v6927, %v6940
        %v6952 = vmul.f32 %v6928, %v6944
        %v6953 = vmul.f32 %v6929, %v6940
        %v6954 = vmul.f32 %v6930, %v6944
        %v6955 = vmul.f32 %v6931, %v6940
        %v6956 = vmul.f32 %v6932, %v6944
        %v6957 = vmul.f32 %v6933, %v6940
        %v6958 = vmul.f32 %v6934, %v6944
        %v6959 = vmul.f32 %v6935, %v6940
        %v6960 = vmul.f32 %v6936, %v6944
        %v6961 = vadd.f32 %v6905, %v6945
        %v6962 = vadd.f32 %v6906, %v6946
        %v6963 = vadd.f32 %v6907, %v6947
        %v6964 = vadd.f32 %v6908, %v6948
        %v6965 = vadd.f32 %v6909, %v6949
        %v6966 = vadd.f32 %v6910, %v6950
        %v6967 = vadd.f32 %v6911, %v6951
        %v6968 = vadd.f32 %v6912, %v6952
        %v6969 = vadd.f32 %v6913, %v6953
        %v6970 = vadd.f32 %v6914, %v6954
        %v6971 = vadd.f32 %v6915, %v6955
        %v6972 = vadd.f32 %v6916, %v6956
        %v6973 = vadd.f32 %v6917, %v6957
        %v6974 = vadd.f32 %v6918, %v6958
        %v6975 = vadd.f32 %v6919, %v6959
        %v6976 = vadd.f32 %v6920, %v6960
        %v6977 = vlaneseq
        %v6978 = vshrl.u32 %v6977, 7
        %v6979 = vsub.s32 7, %v6978
        %v6980 = vrot.slane %v2656, %v6979
        %v6981 = vlaneseq
        %v6982 = vshrl.u32 %v6981, 7
        %v6983 = vsub.s32 7, %v6982
        %v6984 = vrot.slane %v2657, %v6983
        %v6985 = vmul.f32 %v6859, %v6980
        %v6986 = vmul.f32 %v6861, %v6984
        %v6987 = vmul.f32 %v6863, %v6980
        %v6988 = vmul.f32 %v6865, %v6984
        %v6989 = vmul.f32 %v6869, %v6980
        %v6990 = vmul.f32 %v6871, %v6984
        %v6991 = vmul.f32 %v6873, %v6980
        %v6992 = vmul.f32 %v6875, %v6984
        %v6993 = vmul.f32 %v6879, %v6980
        %v6994 = vmul.f32 %v6881, %v6984
        %v6995 = vmul.f32 %v6883, %v6980
        %v6996 = vmul.f32 %v6885, %v6984
        %v6997 = vmul.f32 %v6889, %v6980
        %v6998 = vmul.f32 %v6891, %v6984
        %v6999 = vmul.f32 %v6893, %v6980
        %v7000 = vmul.f32 %v6895, %v6984
        %v7001 = vadd.f32 %v6961, %v6985
        %v7002 = vadd.f32 %v6962, %v6986
        %v7003 = vadd.f32 %v6963, %v6987
        %v7004 = vadd.f32 %v6964, %v6988
        %v7005 = vadd.f32 %v6965, %v6989
        %v7006 = vadd.f32 %v6966, %v6990
        %v7007 = vadd.f32 %v6967, %v6991
        %v7008 = vadd.f32 %v6968, %v6992
        %v7009 = vadd.f32 %v6969, %v6993
        %v7010 = vadd.f32 %v6970, %v6994
        %v7011 = vadd.f32 %v6971, %v6995
        %v7012 = vadd.f32 %v6972, %v6996
        %v7013 = vadd.f32 %v6973, %v6997
        %v7014 = vadd.f32 %v6974, %v6998
        %v7015 = vadd.f32 %v6975, %v6999
        %v7016 = vadd.f32 %v6976, %v7000
        %7017 = vst [vmem:[#allocation4 + $0x380] sm:$0xff] %v7001
        %7018 = vst [vmem:[#allocation4 + $0x388] sm:$0xff] %v7002
        %7019 = vst [vmem:[#allocation4 + $0x390] sm:$0xff] %v7003
        %7020 = vst [vmem:[#allocation4 + $0x398] sm:$0xff] %v7004
        %7021 = vst [vmem:[#allocation4 + $0x3a0] sm:$0xff] %v7005
        %7022 = vst [vmem:[#allocation4 + $0x3a8] sm:$0xff] %v7006
        %7023 = vst [vmem:[#allocation4 + $0x3b0] sm:$0xff] %v7007
        %7024 = vst [vmem:[#allocation4 + $0x3b8] sm:$0xff] %v7008
        %7025 = vst [vmem:[#allocation4 + $0x3c0] sm:$0xff] %v7009
        %7026 = vst [vmem:[#allocation4 + $0x3c8] sm:$0xff] %v7010
        %7027 = vst [vmem:[#allocation4 + $0x3d0] sm:$0xff] %v7011
        %7028 = vst [vmem:[#allocation4 + $0x3d8] sm:$0xff] %v7012
        %7029 = vst [vmem:[#allocation4 + $0x3e0] sm:$0xff] %v7013
        %7030 = vst [vmem:[#allocation4 + $0x3e8] sm:$0xff] %v7014
        %7031 = vst [vmem:[#allocation4 + $0x3f0] sm:$0xff] %v7015
        %7032 = vst [vmem:[#allocation4 + $0x3f8] sm:$0xff] %v7016
        %v7033 = vld [vmem:[#allocation4] sm:$0xff]
        %v7034 = vld [vmem:[#allocation4 + $0x8] sm:$0xff]
        %v7035 = vld [vmem:[#allocation4 + $0x10] sm:$0xff]
        %v7036 = vld [vmem:[#allocation4 + $0x18] sm:$0xff]
        %v7037 = vld [vmem:[#allocation4 + $0x20] sm:$0xff]
        %v7038 = vld [vmem:[#allocation4 + $0x28] sm:$0xff]
        %v7039 = vld [vmem:[#allocation4 + $0x30] sm:$0xff]
        %v7040 = vld [vmem:[#allocation4 + $0x38] sm:$0xff]
        %v7041 = vld [vmem:[#allocation4 + $0x40] sm:$0xff]
        %v7042 = vld [vmem:[#allocation4 + $0x48] sm:$0xff]
        %v7043 = vld [vmem:[#allocation4 + $0x50] sm:$0xff]
        %v7044 = vld [vmem:[#allocation4 + $0x58] sm:$0xff]
        %v7045 = vld [vmem:[#allocation4 + $0x60] sm:$0xff]
        %v7046 = vld [vmem:[#allocation4 + $0x68] sm:$0xff]
        %v7047 = vld [vmem:[#allocation4 + $0x70] sm:$0xff]
        %v7048 = vld [vmem:[#allocation4 + $0x78] sm:$0xff]
        %v7049 = vlaneseq
        %v7050 = vshrl.u32 %v7049, 7
        %v7051 = vsub.s32 0, %v7050
        %v7052 = vrot.slane %v2088, %v7051
        %v7053 = vlaneseq
        %v7054 = vshrl.u32 %v7053, 7
        %v7055 = vsub.s32 0, %v7054
        %v7056 = vrot.slane %v2092, %v7055
        %v7057 = vmul.f32 %v7033, %v7052
        %v7058 = vmul.f32 %v7034, %v7056
        %v7059 = vmul.f32 %v7035, %v7052
        %v7060 = vmul.f32 %v7036, %v7056
        %v7061 = vmul.f32 %v7037, %v7052
        %v7062 = vmul.f32 %v7038, %v7056
        %v7063 = vmul.f32 %v7039, %v7052
        %v7064 = vmul.f32 %v7040, %v7056
        %v7065 = vmul.f32 %v7041, %v7052
        %v7066 = vmul.f32 %v7042, %v7056
        %v7067 = vmul.f32 %v7043, %v7052
        %v7068 = vmul.f32 %v7044, %v7056
        %v7069 = vmul.f32 %v7045, %v7052
        %v7070 = vmul.f32 %v7046, %v7056
        %v7071 = vmul.f32 %v7047, %v7052
        %v7072 = vmul.f32 %v7048, %v7056
        %v7073 = vpack.c.bf16 %v7059, %v7057
        %v7074 = vpack.c.bf16 %v7060, %v7058
        %v7075 = vpack.c.bf16 %v7063, %v7061
        %v7076 = vpack.c.bf16 %v7064, %v7062
        %v7077 = vpack.c.bf16 %v7067, %v7065
        %v7078 = vpack.c.bf16 %v7068, %v7066
        %v7079 = vpack.c.bf16 %v7071, %v7069
        %v7080 = vpack.c.bf16 %v7072, %v7070
        %v7081 = vld [vmem:[#allocation6] sm:$0xff]
        %v7082 = vld [vmem:[#allocation6 + $0x8] sm:$0xff]
        %v7083 = vld [vmem:[#allocation6 + $0x10] sm:$0xff]
        %v7084 = vld [vmem:[#allocation6 + $0x18] sm:$0xff]
        %v7085 = vld [vmem:[#allocation6 + $0x20] sm:$0xff]
        %v7086 = vld [vmem:[#allocation6 + $0x28] sm:$0xff]
        %v7087 = vld [vmem:[#allocation6 + $0x30] sm:$0xff]
        %v7088 = vld [vmem:[#allocation6 + $0x38] sm:$0xff]
        %v7089 = vld [vmem:[#allocation6 + $0x40] sm:$0xff]
        %v7090 = vld [vmem:[#allocation6 + $0x48] sm:$0xff]
        %v7091 = vld [vmem:[#allocation6 + $0x50] sm:$0xff]
        %v7092 = vld [vmem:[#allocation6 + $0x58] sm:$0xff]
        %v7093 = vld [vmem:[#allocation6 + $0x60] sm:$0xff]
        %v7094 = vld [vmem:[#allocation6 + $0x68] sm:$0xff]
        %v7095 = vld [vmem:[#allocation6 + $0x70] sm:$0xff]
        %v7096 = vld [vmem:[#allocation6 + $0x78] sm:$0xff]
        %v7097 = vld [vmem:[#allocation6 + $0x80] sm:$0xff]
        %v7098 = vld [vmem:[#allocation6 + $0x88] sm:$0xff]
        %v7099 = vld [vmem:[#allocation6 + $0x90] sm:$0xff]
        %v7100 = vld [vmem:[#allocation6 + $0x98] sm:$0xff]
        %v7101 = vld [vmem:[#allocation6 + $0xa0] sm:$0xff]
        %v7102 = vld [vmem:[#allocation6 + $0xa8] sm:$0xff]
        %v7103 = vld [vmem:[#allocation6 + $0xb0] sm:$0xff]
        %v7104 = vld [vmem:[#allocation6 + $0xb8] sm:$0xff]
        %v7105 = vld [vmem:[#allocation6 + $0xc0] sm:$0xff]
        %v7106 = vld [vmem:[#allocation6 + $0xc8] sm:$0xff]
        %v7107 = vld [vmem:[#allocation6 + $0xd0] sm:$0xff]
        %v7108 = vld [vmem:[#allocation6 + $0xd8] sm:$0xff]
        %v7109 = vld [vmem:[#allocation6 + $0xe0] sm:$0xff]
        %v7110 = vld [vmem:[#allocation6 + $0xe8] sm:$0xff]
        %v7111 = vld [vmem:[#allocation6 + $0xf0] sm:$0xff]
        %v7112 = vld [vmem:[#allocation6 + $0xf8] sm:$0xff]
        %v7145 = vunpack.c.l.b16 %v7081
        %v7146 = vunpack.c.h.b16 %v7081
        %v7147 = vunpack.c.l.b16 %v7082
        %v7148 = vunpack.c.h.b16 %v7082
        %v7149 = vunpack.c.l.b16 %v7083
        %v7150 = vunpack.c.h.b16 %v7083
        %v7151 = vunpack.c.l.b16 %v7084
        %v7152 = vunpack.c.h.b16 %v7084
        %v7153 = vunpack.c.l.b16 %v7085
        %v7154 = vunpack.c.h.b16 %v7085
        %v7155 = vunpack.c.l.b16 %v7086
        %v7156 = vunpack.c.h.b16 %v7086
        %v7157 = vunpack.c.l.b16 %v7087
        %v7158 = vunpack.c.h.b16 %v7087
        %v7159 = vunpack.c.l.b16 %v7088
        %v7160 = vunpack.c.h.b16 %v7088
        %v7161 = vunpack.c.l.b16 %v7089
        %v7162 = vunpack.c.h.b16 %v7089
        %v7163 = vunpack.c.l.b16 %v7090
        %v7164 = vunpack.c.h.b16 %v7090
        %v7165 = vunpack.c.l.b16 %v7091
        %v7166 = vunpack.c.h.b16 %v7091
        %v7167 = vunpack.c.l.b16 %v7092
        %v7168 = vunpack.c.h.b16 %v7092
        %v7169 = vunpack.c.l.b16 %v7093
        %v7170 = vunpack.c.h.b16 %v7093
        %v7171 = vunpack.c.l.b16 %v7094
        %v7172 = vunpack.c.h.b16 %v7094
        %v7173 = vunpack.c.l.b16 %v7095
        %v7174 = vunpack.c.h.b16 %v7095
        %v7175 = vunpack.c.l.b16 %v7096
        %v7176 = vunpack.c.h.b16 %v7096
        %v7177 = vunpack.c.l.b16 %v7097
        %v7178 = vunpack.c.h.b16 %v7097
        %v7179 = vunpack.c.l.b16 %v7098
        %v7180 = vunpack.c.h.b16 %v7098
        %v7181 = vunpack.c.l.b16 %v7099
        %v7182 = vunpack.c.h.b16 %v7099
        %v7183 = vunpack.c.l.b16 %v7100
        %v7184 = vunpack.c.h.b16 %v7100
        %v7185 = vunpack.c.l.b16 %v7101
        %v7186 = vunpack.c.h.b16 %v7101
        %v7187 = vunpack.c.l.b16 %v7102
        %v7188 = vunpack.c.h.b16 %v7102
        %v7189 = vunpack.c.l.b16 %v7103
        %v7190 = vunpack.c.h.b16 %v7103
        %v7191 = vunpack.c.l.b16 %v7104
        %v7192 = vunpack.c.h.b16 %v7104
        %v7193 = vunpack.c.l.b16 %v7105
        %v7194 = vunpack.c.h.b16 %v7105
        %v7195 = vunpack.c.l.b16 %v7106
        %v7196 = vunpack.c.h.b16 %v7106
        %v7197 = vunpack.c.l.b16 %v7107
        %v7198 = vunpack.c.h.b16 %v7107
        %v7199 = vunpack.c.l.b16 %v7108
        %v7200 = vunpack.c.h.b16 %v7108
        %v7201 = vunpack.c.l.b16 %v7109
        %v7202 = vunpack.c.h.b16 %v7109
        %v7203 = vunpack.c.l.b16 %v7110
        %v7204 = vunpack.c.h.b16 %v7110
        %v7205 = vunpack.c.l.b16 %v7111
        %v7206 = vunpack.c.h.b16 %v7111
        %v7207 = vunpack.c.l.b16 %v7112
        %v7208 = vunpack.c.h.b16 %v7112
        %v7209 = vpack.c.b16 %v7147, %v7145
        %v7210 = vpack.c.b16 %v7148, %v7146
        %v7211 = vpack.c.b16 %v7151, %v7149
        %v7212 = vpack.c.b16 %v7152, %v7150
        %v7213 = vpack.c.b16 %v7155, %v7153
        %v7214 = vpack.c.b16 %v7156, %v7154
        %v7215 = vpack.c.b16 %v7159, %v7157
        %v7216 = vpack.c.b16 %v7160, %v7158
        %v7217 = vpack.c.b16 %v7163, %v7161
        %v7218 = vpack.c.b16 %v7164, %v7162
        %v7219 = vpack.c.b16 %v7167, %v7165
        %v7220 = vpack.c.b16 %v7168, %v7166
        %v7221 = vpack.c.b16 %v7171, %v7169
        %v7222 = vpack.c.b16 %v7172, %v7170
        %v7223 = vpack.c.b16 %v7175, %v7173
        %v7224 = vpack.c.b16 %v7176, %v7174
        %v7225 = vpack.c.b16 %v7179, %v7177
        %v7226 = vpack.c.b16 %v7180, %v7178
        %v7227 = vpack.c.b16 %v7183, %v7181
        %v7228 = vpack.c.b16 %v7184, %v7182
        %v7229 = vpack.c.b16 %v7187, %v7185
        %v7230 = vpack.c.b16 %v7188, %v7186
        %v7231 = vpack.c.b16 %v7191, %v7189
        %v7232 = vpack.c.b16 %v7192, %v7190
        %v7233 = vpack.c.b16 %v7195, %v7193
        %v7234 = vpack.c.b16 %v7196, %v7194
        %v7235 = vpack.c.b16 %v7199, %v7197
        %v7236 = vpack.c.b16 %v7200, %v7198
        %v7237 = vpack.c.b16 %v7203, %v7201
        %v7238 = vpack.c.b16 %v7204, %v7202
        %v7239 = vpack.c.b16 %v7207, %v7205
        %v7240 = vpack.c.b16 %v7208, %v7206
        %7273 = vmatprep.subr.bf16.mxu0 %v7210
        %7274 = vmatpush1.bf16.msra.mxu0 %v7209
        %7275 = vmatprep.subr.bf16.mxu0 %v7212
        %7276 = vmatpush1.bf16.msra.mxu0 %v7211
        %7277 = vmatprep.subr.bf16.mxu0 %v7214
        %7278 = vmatpush1.bf16.msra.mxu0 %v7213
        %7279 = vmatprep.subr.bf16.mxu0 %v7216
        %7280 = vmatpush1.bf16.msra.mxu0 %v7215
        %7281 = vmatprep.subr.bf16.mxu0 %v7218
        %7282 = vmatpush1.bf16.msra.mxu0 %v7217
        %7283 = vmatprep.subr.bf16.mxu0 %v7220
        %7284 = vmatpush1.bf16.msra.mxu0 %v7219
        %7285 = vmatprep.subr.bf16.mxu0 %v7222
        %7286 = vmatpush1.bf16.msra.mxu0 %v7221
        %7287 = vmatprep.subr.bf16.mxu0 %v7224
        %7288 = vmatpush1.bf16.msra.mxu0 %v7223
        %7289 = vmatprep.subr.bf16.mxu0 %v7226
        %7290 = vmatpush1.bf16.msra.mxu0 %v7225
        %7291 = vmatprep.subr.bf16.mxu0 %v7228
        %7292 = vmatpush1.bf16.msra.mxu0 %v7227
        %7293 = vmatprep.subr.bf16.mxu0 %v7230
        %7294 = vmatpush1.bf16.msra.mxu0 %v7229
        %7295 = vmatprep.subr.bf16.mxu0 %v7232
        %7296 = vmatpush1.bf16.msra.mxu0 %v7231
        %7297 = vmatprep.subr.bf16.mxu0 %v7234
        %7298 = vmatpush1.bf16.msra.mxu0 %v7233
        %7299 = vmatprep.subr.bf16.mxu0 %v7236
        %7300 = vmatpush1.bf16.msra.mxu0 %v7235
        %7301 = vmatprep.subr.bf16.mxu0 %v7238
        %7302 = vmatpush1.bf16.msra.mxu0 %v7237
        %7303 = vmatprep.subr.bf16.mxu0 %v7240
        %7304 = vmatpush1.bf16.msra.mxu0 %v7239
        %7305 = vmatprep.mubr.bf16.mxu0 %v7074
        %7306 = vmatmul.mubr.bf16.gmra.mrb[0].mxu0 %v7073
        %v7307 = vpop.f32.mrb[0].mxu0
        %v7308 = vadd.f32 0.0, %v7307
        %v7309 = vpop.f32.mrb[0].mxu0
        %v7310 = vadd.f32 0.0, %v7309
        %v7311 = vpop.f32.mrb[0].mxu0
        %v7312 = vadd.f32 0.0, %v7311
        %v7313 = vpop.f32.mrb[0].mxu0
        %v7314 = vadd.f32 0.0, %v7313
        %7315 = vmatprep.mubr.bf16.mxu0 %v7076
        %7316 = vmatmul.mubr.bf16.gmra.mrb[0].mxu0 %v7075
        %v7317 = vpop.f32.mrb[0].mxu0
        %v7318 = vadd.f32 0.0, %v7317
        %v7319 = vpop.f32.mrb[0].mxu0
        %v7320 = vadd.f32 0.0, %v7319
        %v7321 = vpop.f32.mrb[0].mxu0
        %v7322 = vadd.f32 0.0, %v7321
        %v7323 = vpop.f32.mrb[0].mxu0
        %v7324 = vadd.f32 0.0, %v7323
        %7325 = vmatprep.mubr.bf16.mxu0 %v7078
        %7326 = vmatmul.mubr.bf16.gmra.mrb[0].mxu0 %v7077
        %v7327 = vpop.f32.mrb[0].mxu0
        %v7328 = vadd.f32 0.0, %v7327
        %v7329 = vpop.f32.mrb[0].mxu0
        %v7330 = vadd.f32 0.0, %v7329
        %v7331 = vpop.f32.mrb[0].mxu0
        %v7332 = vadd.f32 0.0, %v7331
        %v7333 = vpop.f32.mrb[0].mxu0
        %v7334 = vadd.f32 0.0, %v7333
        %7335 = vmatprep.mubr.bf16.mxu0 %v7080
        %7336 = vmatmul.mubr.bf16.gmra.mrb[0].mxu0 %v7079
        %v7337 = vpop.f32.mrb[0].mxu0
        %v7338 = vadd.f32 0.0, %v7337
        %v7339 = vpop.f32.mrb[0].mxu0
        %v7340 = vadd.f32 0.0, %v7339
        %v7341 = vpop.f32.mrb[0].mxu0
        %v7342 = vadd.f32 0.0, %v7341
        %v7343 = vpop.f32.mrb[0].mxu0
        %v7344 = vadd.f32 0.0, %v7343
        %7345 = vdwg.mxu0
        %v7346 = vmul.f32 %v7308, %v2658
        %v7347 = vmul.f32 %v7310, %v2659
        %v7348 = vmul.f32 %v7312, %v2660
        %v7349 = vmul.f32 %v7314, %v2661
        %v7350 = vmul.f32 %v7318, %v2662
        %v7351 = vmul.f32 %v7320, %v2663
        %v7352 = vmul.f32 %v7322, %v2664
        %v7353 = vmul.f32 %v7324, %v2665
        %v7354 = vmul.f32 %v7328, %v2666
        %v7355 = vmul.f32 %v7330, %v2667
        %v7356 = vmul.f32 %v7332, %v2668
        %v7357 = vmul.f32 %v7334, %v2669
        %v7358 = vmul.f32 %v7338, %v2670
        %v7359 = vmul.f32 %v7340, %v2671
        %v7360 = vmul.f32 %v7342, %v2672
        %v7361 = vmul.f32 %v7344, %v2673
        %v7362 = vadd.f32 %v7346, %v7348
        %v7363 = vadd.f32 %v7362, %v7350
        %v7364 = vadd.f32 %v7363, %v7352
        %v7365 = vadd.f32 %v7364, %v7354
        %v7366 = vadd.f32 %v7365, %v7356
        %v7367 = vadd.f32 %v7366, %v7358
        %v7368 = vadd.f32 %v7367, %v7360
        %v7369 = vrot.slane %v7368, 4
        %v7370 = vadd.f32 %v7368, %v7369
        %v7371 = vrot.slane %v7370, 2
        %v7372 = vadd.f32 %v7370, %v7371
        %v7373 = vrot.slane %v7372, 1
        %v7374 = vadd.f32 %v7372, %v7373
        %v7375 = vadd.f32 %v7347, %v7349
        %v7376 = vadd.f32 %v7375, %v7351
        %v7377 = vadd.f32 %v7376, %v7353
        %v7378 = vadd.f32 %v7377, %v7355
        %v7379 = vadd.f32 %v7378, %v7357
        %v7380 = vadd.f32 %v7379, %v7359
        %v7381 = vadd.f32 %v7380, %v7361
        %v7382 = vrot.slane %v7381, 4
        %v7383 = vadd.f32 %v7381, %v7382
        %v7384 = vrot.slane %v7383, 2
        %v7385 = vadd.f32 %v7383, %v7384
        %v7386 = vrot.slane %v7385, 1
        %v7387 = vadd.f32 %v7385, %v7386
        %v7388 = vld [vmem:[#allocation4 + $0x80] sm:$0xff]
        %v7389 = vld [vmem:[#allocation4 + $0x88] sm:$0xff]
        %v7390 = vld [vmem:[#allocation4 + $0x90] sm:$0xff]
        %v7391 = vld [vmem:[#allocation4 + $0x98] sm:$0xff]
        %v7392 = vld [vmem:[#allocation4 + $0xa0] sm:$0xff]
        %v7393 = vld [vmem:[#allocation4 + $0xa8] sm:$0xff]
        %v7394 = vld [vmem:[#allocation4 + $0xb0] sm:$0xff]
        %v7395 = vld [vmem:[#allocation4 + $0xb8] sm:$0xff]
        %v7396 = vld [vmem:[#allocation4 + $0xc0] sm:$0xff]
        %v7397 = vld [vmem:[#allocation4 + $0xc8] sm:$0xff]
        %v7398 = vld [vmem:[#allocation4 + $0xd0] sm:$0xff]
        %v7399 = vld [vmem:[#allocation4 + $0xd8] sm:$0xff]
        %v7400 = vld [vmem:[#allocation4 + $0xe0] sm:$0xff]
        %v7401 = vld [vmem:[#allocation4 + $0xe8] sm:$0xff]
        %v7402 = vld [vmem:[#allocation4 + $0xf0] sm:$0xff]
        %v7403 = vld [vmem:[#allocation4 + $0xf8] sm:$0xff]
        %v7404 = vlaneseq
        %v7405 = vshrl.u32 %v7404, 7
        %v7406 = vsub.s32 1, %v7405
        %v7407 = vrot.slane %v2088, %v7406
        %v7408 = vlaneseq
        %v7409 = vshrl.u32 %v7408, 7
        %v7410 = vsub.s32 1, %v7409
        %v7411 = vrot.slane %v2092, %v7410
        %v7412 = vmul.f32 %v7388, %v7407
        %v7413 = vmul.f32 %v7389, %v7411
        %v7414 = vmul.f32 %v7390, %v7407
        %v7415 = vmul.f32 %v7391, %v7411
        %v7416 = vmul.f32 %v7392, %v7407
        %v7417 = vmul.f32 %v7393, %v7411
        %v7418 = vmul.f32 %v7394, %v7407
        %v7419 = vmul.f32 %v7395, %v7411
        %v7420 = vmul.f32 %v7396, %v7407
        %v7421 = vmul.f32 %v7397, %v7411
        %v7422 = vmul.f32 %v7398, %v7407
        %v7423 = vmul.f32 %v7399, %v7411
        %v7424 = vmul.f32 %v7400, %v7407
        %v7425 = vmul.f32 %v7401, %v7411
        %v7426 = vmul.f32 %v7402, %v7407
        %v7427 = vmul.f32 %v7403, %v7411
        %v7428 = vpack.c.bf16 %v7414, %v7412
        %v7429 = vpack.c.bf16 %v7415, %v7413
        %v7430 = vpack.c.bf16 %v7418, %v7416
        %v7431 = vpack.c.bf16 %v7419, %v7417
        %v7432 = vpack.c.bf16 %v7422, %v7420
        %v7433 = vpack.c.bf16 %v7423, %v7421
        %v7434 = vpack.c.bf16 %v7426, %v7424
        %v7435 = vpack.c.bf16 %v7427, %v7425
        %7436 = vmatprep.subr.bf16.mxu0 %v7210
        %7437 = vmatpush1.bf16.msra.mxu0 %v7209
        %7438 = vmatprep.subr.bf16.mxu0 %v7212
        %7439 = vmatpush1.bf16.msra.mxu0 %v7211
        %7440 = vmatprep.subr.bf16.mxu0 %v7214
        %7441 = vmatpush1.bf16.msra.mxu0 %v7213
        %7442 = vmatprep.subr.bf16.mxu0 %v7216
        %7443 = vmatpush1.bf16.msra.mxu0 %v7215
        %7444 = vmatprep.subr.bf16.mxu0 %v7218
        %7445 = vmatpush1.bf16.msra.mxu0 %v7217
        %7446 = vmatprep.subr.bf16.mxu0 %v7220
        %7447 = vmatpush1.bf16.msra.mxu0 %v7219
        %7448 = vmatprep.subr.bf16.mxu0 %v7222
        %7449 = vmatpush1.bf16.msra.mxu0 %v7221
        %7450 = vmatprep.subr.bf16.mxu0 %v7224
        %7451 = vmatpush1.bf16.msra.mxu0 %v7223
        %7452 = vmatprep.subr.bf16.mxu0 %v7226
        %7453 = vmatpush1.bf16.msra.mxu0 %v7225
        %7454 = vmatprep.subr.bf16.mxu0 %v7228
        %7455 = vmatpush1.bf16.msra.mxu0 %v7227
        %7456 = vmatprep.subr.bf16.mxu0 %v7230
        %7457 = vmatpush1.bf16.msra.mxu0 %v7229
        %7458 = vmatprep.subr.bf16.mxu0 %v7232
        %7459 = vmatpush1.bf16.msra.mxu0 %v7231
        %7460 = vmatprep.subr.bf16.mxu0 %v7234
        %7461 = vmatpush1.bf16.msra.mxu0 %v7233
        %7462 = vmatprep.subr.bf16.mxu0 %v7236
        %7463 = vmatpush1.bf16.msra.mxu0 %v7235
        %7464 = vmatprep.subr.bf16.mxu0 %v7238
        %7465 = vmatpush1.bf16.msra.mxu0 %v7237
        %7466 = vmatprep.subr.bf16.mxu0 %v7240
        %7467 = vmatpush1.bf16.msra.mxu0 %v7239
        %7468 = vmatprep.mubr.bf16.mxu0 %v7429
        %7469 = vmatmul.mubr.bf16.gmra.mrb[0].mxu0 %v7428
        %v7470 = vpop.f32.mrb[0].mxu0
        %v7471 = vadd.f32 0.0, %v7470
        %v7472 = vpop.f32.mrb[0].mxu0
        %v7473 = vadd.f32 0.0, %v7472
        %v7474 = vpop.f32.mrb[0].mxu0
        %v7475 = vadd.f32 0.0, %v7474
        %v7476 = vpop.f32.mrb[0].mxu0
        %v7477 = vadd.f32 0.0, %v7476
        %7478 = vmatprep.mubr.bf16.mxu0 %v7431
        %7479 = vmatmul.mubr.bf16.gmra.mrb[0].mxu0 %v7430
        %v7480 = vpop.f32.mrb[0].mxu0
        %v7481 = vadd.f32 0.0, %v7480
        %v7482 = vpop.f32.mrb[0].mxu0
        %v7483 = vadd.f32 0.0, %v7482
        %v7484 = vpop.f32.mrb[0].mxu0
        %v7485 = vadd.f32 0.0, %v7484
        %v7486 = vpop.f32.mrb[0].mxu0
        %v7487 = vadd.f32 0.0, %v7486
        %7488 = vmatprep.mubr.bf16.mxu0 %v7433
        %7489 = vmatmul.mubr.bf16.gmra.mrb[0].mxu0 %v7432
        %v7490 = vpop.f32.mrb[0].mxu0
        %v7491 = vadd.f32 0.0, %v7490
        %v7492 = vpop.f32.mrb[0].mxu0
        %v7493 = vadd.f32 0.0, %v7492
        %v7494 = vpop.f32.mrb[0].mxu0
        %v7495 = vadd.f32 0.0, %v7494
        %v7496 = vpop.f32.mrb[0].mxu0
        %v7497 = vadd.f32 0.0, %v7496
        %7498 = vmatprep.mubr.bf16.mxu0 %v7435
        %7499 = vmatmul.mubr.bf16.gmra.mrb[0].mxu0 %v7434
        %v7500 = vpop.f32.mrb[0].mxu0
        %v7501 = vadd.f32 0.0, %v7500
        %v7502 = vpop.f32.mrb[0].mxu0
        %v7503 = vadd.f32 0.0, %v7502
        %v7504 = vpop.f32.mrb[0].mxu0
        %v7505 = vadd.f32 0.0, %v7504
        %v7506 = vpop.f32.mrb[0].mxu0
        %v7507 = vadd.f32 0.0, %v7506
        %7508 = vdwg.mxu0
        %v7509 = vmul.f32 %v7471, %v2658
        %v7510 = vmul.f32 %v7473, %v2659
        %v7511 = vmul.f32 %v7475, %v2660
        %v7512 = vmul.f32 %v7477, %v2661
        %v7513 = vmul.f32 %v7481, %v2662
        %v7514 = vmul.f32 %v7483, %v2663
        %v7515 = vmul.f32 %v7485, %v2664
        %v7516 = vmul.f32 %v7487, %v2665
        %v7517 = vmul.f32 %v7491, %v2666
        %v7518 = vmul.f32 %v7493, %v2667
        %v7519 = vmul.f32 %v7495, %v2668
        %v7520 = vmul.f32 %v7497, %v2669
        %v7521 = vmul.f32 %v7501, %v2670
        %v7522 = vmul.f32 %v7503, %v2671
        %v7523 = vmul.f32 %v7505, %v2672
        %v7524 = vmul.f32 %v7507, %v2673
        %v7525 = vadd.f32 %v7509, %v7511
        %v7526 = vadd.f32 %v7525, %v7513
        %v7527 = vadd.f32 %v7526, %v7515
        %v7528 = vadd.f32 %v7527, %v7517
        %v7529 = vadd.f32 %v7528, %v7519
        %v7530 = vadd.f32 %v7529, %v7521
        %v7531 = vadd.f32 %v7530, %v7523
        %v7532 = vrot.slane %v7531, 4
        %v7533 = vadd.f32 %v7531, %v7532
        %v7534 = vrot.slane %v7533, 2
        %v7535 = vadd.f32 %v7533, %v7534
        %v7536 = vrot.slane %v7535, 1
        %v7537 = vadd.f32 %v7535, %v7536
        %v7538 = vadd.f32 %v7510, %v7512
        %v7539 = vadd.f32 %v7538, %v7514
        %v7540 = vadd.f32 %v7539, %v7516
        %v7541 = vadd.f32 %v7540, %v7518
        %v7542 = vadd.f32 %v7541, %v7520
        %v7543 = vadd.f32 %v7542, %v7522
        %v7544 = vadd.f32 %v7543, %v7524
        %v7545 = vrot.slane %v7544, 4
        %v7546 = vadd.f32 %v7544, %v7545
        %v7547 = vrot.slane %v7546, 2
        %v7548 = vadd.f32 %v7546, %v7547
        %v7549 = vrot.slane %v7548, 1
        %v7550 = vadd.f32 %v7548, %v7549
        %v7551 = vld [vmem:[#allocation4 + $0x100] sm:$0xff]
        %v7552 = vld [vmem:[#allocation4 + $0x108] sm:$0xff]
        %v7553 = vld [vmem:[#allocation4 + $0x110] sm:$0xff]
        %v7554 = vld [vmem:[#allocation4 + $0x118] sm:$0xff]
        %v7555 = vld [vmem:[#allocation4 + $0x120] sm:$0xff]
        %v7556 = vld [vmem:[#allocation4 + $0x128] sm:$0xff]
        %v7557 = vld [vmem:[#allocation4 + $0x130] sm:$0xff]
        %v7558 = vld [vmem:[#allocation4 + $0x138] sm:$0xff]
        %v7559 = vld [vmem:[#allocation4 + $0x140] sm:$0xff]
        %v7560 = vld [vmem:[#allocation4 + $0x148] sm:$0xff]
        %v7561 = vld [vmem:[#allocation4 + $0x150] sm:$0xff]
        %v7562 = vld [vmem:[#allocation4 + $0x158] sm:$0xff]
        %v7563 = vld [vmem:[#allocation4 + $0x160] sm:$0xff]
        %v7564 = vld [vmem:[#allocation4 + $0x168] sm:$0xff]
        %v7565 = vld [vmem:[#allocation4 + $0x170] sm:$0xff]
        %v7566 = vld [vmem:[#allocation4 + $0x178] sm:$0xff]
        %v7567 = vlaneseq
        %v7568 = vshrl.u32 %v7567, 7
        %v7569 = vsub.s32 2, %v7568
        %v7570 = vrot.slane %v2088, %v7569
        %v7571 = vlaneseq
        %v7572 = vshrl.u32 %v7571, 7
        %v7573 = vsub.s32 2, %v7572
        %v7574 = vrot.slane %v2092, %v7573
        %v7575 = vmul.f32 %v7551, %v7570
        %v7576 = vmul.f32 %v7552, %v7574
        %v7577 = vmul.f32 %v7553, %v7570
        %v7578 = vmul.f32 %v7554, %v7574
        %v7579 = vmul.f32 %v7555, %v7570
        %v7580 = vmul.f32 %v7556, %v7574
        %v7581 = vmul.f32 %v7557, %v7570
        %v7582 = vmul.f32 %v7558, %v7574
        %v7583 = vmul.f32 %v7559, %v7570
        %v7584 = vmul.f32 %v7560, %v7574
        %v7585 = vmul.f32 %v7561, %v7570
        %v7586 = vmul.f32 %v7562, %v7574
        %v7587 = vmul.f32 %v7563, %v7570
        %v7588 = vmul.f32 %v7564, %v7574
        %v7589 = vmul.f32 %v7565, %v7570
        %v7590 = vmul.f32 %v7566, %v7574
        %v7591 = vpack.c.bf16 %v7577, %v7575
        %v7592 = vpack.c.bf16 %v7578, %v7576
        %v7593 = vpack.c.bf16 %v7581, %v7579
        %v7594 = vpack.c.bf16 %v7582, %v7580
        %v7595 = vpack.c.bf16 %v7585, %v7583
        %v7596 = vpack.c.bf16 %v7586, %v7584
        %v7597 = vpack.c.bf16 %v7589, %v7587
        %v7598 = vpack.c.bf16 %v7590, %v7588
        %7599 = vmatprep.subr.bf16.mxu0 %v7210
        %7600 = vmatpush1.bf16.msra.mxu0 %v7209
        %7601 = vmatprep.subr.bf16.mxu0 %v7212
        %7602 = vmatpush1.bf16.msra.mxu0 %v7211
        %7603 = vmatprep.subr.bf16.mxu0 %v7214
        %7604 = vmatpush1.bf16.msra.mxu0 %v7213
        %7605 = vmatprep.subr.bf16.mxu0 %v7216
        %7606 = vmatpush1.bf16.msra.mxu0 %v7215
        %7607 = vmatprep.subr.bf16.mxu0 %v7218
        %7608 = vmatpush1.bf16.msra.mxu0 %v7217
        %7609 = vmatprep.subr.bf16.mxu0 %v7220
        %7610 = vmatpush1.bf16.msra.mxu0 %v7219
        %7611 = vmatprep.subr.bf16.mxu0 %v7222
        %7612 = vmatpush1.bf16.msra.mxu0 %v7221
        %7613 = vmatprep.subr.bf16.mxu0 %v7224
        %7614 = vmatpush1.bf16.msra.mxu0 %v7223
        %7615 = vmatprep.subr.bf16.mxu0 %v7226
        %7616 = vmatpush1.bf16.msra.mxu0 %v7225
        %7617 = vmatprep.subr.bf16.mxu0 %v7228
        %7618 = vmatpush1.bf16.msra.mxu0 %v7227
        %7619 = vmatprep.subr.bf16.mxu0 %v7230
        %7620 = vmatpush1.bf16.msra.mxu0 %v7229
        %7621 = vmatprep.subr.bf16.mxu0 %v7232
        %7622 = vmatpush1.bf16.msra.mxu0 %v7231
        %7623 = vmatprep.subr.bf16.mxu0 %v7234
        %7624 = vmatpush1.bf16.msra.mxu0 %v7233
        %7625 = vmatprep.subr.bf16.mxu0 %v7236
        %7626 = vmatpush1.bf16.msra.mxu0 %v7235
        %7627 = vmatprep.subr.bf16.mxu0 %v7238
        %7628 = vmatpush1.bf16.msra.mxu0 %v7237
        %7629 = vmatprep.subr.bf16.mxu0 %v7240
        %7630 = vmatpush1.bf16.msra.mxu0 %v7239
        %7631 = vmatprep.mubr.bf16.mxu0 %v7592
        %7632 = vmatmul.mubr.bf16.gmra.mrb[0].mxu0 %v7591
        %v7633 = vpop.f32.mrb[0].mxu0
        %v7634 = vadd.f32 0.0, %v7633
        %v7635 = vpop.f32.mrb[0].mxu0
        %v7636 = vadd.f32 0.0, %v7635
        %v7637 = vpop.f32.mrb[0].mxu0
        %v7638 = vadd.f32 0.0, %v7637
        %v7639 = vpop.f32.mrb[0].mxu0
        %v7640 = vadd.f32 0.0, %v7639
        %7641 = vmatprep.mubr.bf16.mxu0 %v7594
        %7642 = vmatmul.mubr.bf16.gmra.mrb[0].mxu0 %v7593
        %v7643 = vpop.f32.mrb[0].mxu0
        %v7644 = vadd.f32 0.0, %v7643
        %v7645 = vpop.f32.mrb[0].mxu0
        %v7646 = vadd.f32 0.0, %v7645
        %v7647 = vpop.f32.mrb[0].mxu0
        %v7648 = vadd.f32 0.0, %v7647
        %v7649 = vpop.f32.mrb[0].mxu0
        %v7650 = vadd.f32 0.0, %v7649
        %7651 = vmatprep.mubr.bf16.mxu0 %v7596
        %7652 = vmatmul.mubr.bf16.gmra.mrb[0].mxu0 %v7595
        %v7653 = vpop.f32.mrb[0].mxu0
        %v7654 = vadd.f32 0.0, %v7653
        %v7655 = vpop.f32.mrb[0].mxu0
        %v7656 = vadd.f32 0.0, %v7655
        %v7657 = vpop.f32.mrb[0].mxu0
        %v7658 = vadd.f32 0.0, %v7657
        %v7659 = vpop.f32.mrb[0].mxu0
        %v7660 = vadd.f32 0.0, %v7659
        %7661 = vmatprep.mubr.bf16.mxu0 %v7598
        %7662 = vmatmul.mubr.bf16.gmra.mrb[0].mxu0 %v7597
        %v7663 = vpop.f32.mrb[0].mxu0
        %v7664 = vadd.f32 0.0, %v7663
        %v7665 = vpop.f32.mrb[0].mxu0
        %v7666 = vadd.f32 0.0, %v7665
        %v7667 = vpop.f32.mrb[0].mxu0
        %v7668 = vadd.f32 0.0, %v7667
        %v7669 = vpop.f32.mrb[0].mxu0
        %v7670 = vadd.f32 0.0, %v7669
        %7671 = vdwg.mxu0
        %v7672 = vmul.f32 %v7634, %v2658
        %v7673 = vmul.f32 %v7636, %v2659
        %v7674 = vmul.f32 %v7638, %v2660
        %v7675 = vmul.f32 %v7640, %v2661
        %v7676 = vmul.f32 %v7644, %v2662
        %v7677 = vmul.f32 %v7646, %v2663
        %v7678 = vmul.f32 %v7648, %v2664
        %v7679 = vmul.f32 %v7650, %v2665
        %v7680 = vmul.f32 %v7654, %v2666
        %v7681 = vmul.f32 %v7656, %v2667
        %v7682 = vmul.f32 %v7658, %v2668
        %v7683 = vmul.f32 %v7660, %v2669
        %v7684 = vmul.f32 %v7664, %v2670
        %v7685 = vmul.f32 %v7666, %v2671
        %v7686 = vmul.f32 %v7668, %v2672
        %v7687 = vmul.f32 %v7670, %v2673
        %v7688 = vadd.f32 %v7672, %v7674
        %v7689 = vadd.f32 %v7688, %v7676
        %v7690 = vadd.f32 %v7689, %v7678
        %v7691 = vadd.f32 %v7690, %v7680
        %v7692 = vadd.f32 %v7691, %v7682
        %v7693 = vadd.f32 %v7692, %v7684
        %v7694 = vadd.f32 %v7693, %v7686
        %v7695 = vrot.slane %v7694, 4
        %v7696 = vadd.f32 %v7694, %v7695
        %v7697 = vrot.slane %v7696, 2
        %v7698 = vadd.f32 %v7696, %v7697
        %v7699 = vrot.slane %v7698, 1
        %v7700 = vadd.f32 %v7698, %v7699
        %v7701 = vadd.f32 %v7673, %v7675
        %v7702 = vadd.f32 %v7701, %v7677
        %v7703 = vadd.f32 %v7702, %v7679
        %v7704 = vadd.f32 %v7703, %v7681
        %v7705 = vadd.f32 %v7704, %v7683
        %v7706 = vadd.f32 %v7705, %v7685
        %v7707 = vadd.f32 %v7706, %v7687
        %v7708 = vrot.slane %v7707, 4
        %v7709 = vadd.f32 %v7707, %v7708
        %v7710 = vrot.slane %v7709, 2
        %v7711 = vadd.f32 %v7709, %v7710
        %v7712 = vrot.slane %v7711, 1
        %v7713 = vadd.f32 %v7711, %v7712
        %v7714 = vld [vmem:[#allocation4 + $0x180] sm:$0xff]
        %v7715 = vld [vmem:[#allocation4 + $0x188] sm:$0xff]
        %v7716 = vld [vmem:[#allocation4 + $0x190] sm:$0xff]
        %v7717 = vld [vmem:[#allocation4 + $0x198] sm:$0xff]
        %v7718 = vld [vmem:[#allocation4 + $0x1a0] sm:$0xff]
        %v7719 = vld [vmem:[#allocation4 + $0x1a8] sm:$0xff]
        %v7720 = vld [vmem:[#allocation4 + $0x1b0] sm:$0xff]
        %v7721 = vld [vmem:[#allocation4 + $0x1b8] sm:$0xff]
        %v7722 = vld [vmem:[#allocation4 + $0x1c0] sm:$0xff]
        %v7723 = vld [vmem:[#allocation4 + $0x1c8] sm:$0xff]
        %v7724 = vld [vmem:[#allocation4 + $0x1d0] sm:$0xff]
        %v7725 = vld [vmem:[#allocation4 + $0x1d8] sm:$0xff]
        %v7726 = vld [vmem:[#allocation4 + $0x1e0] sm:$0xff]
        %v7727 = vld [vmem:[#allocation4 + $0x1e8] sm:$0xff]
        %v7728 = vld [vmem:[#allocation4 + $0x1f0] sm:$0xff]
        %v7729 = vld [vmem:[#allocation4 + $0x1f8] sm:$0xff]
        %v7730 = vlaneseq
        %v7731 = vshrl.u32 %v7730, 7
        %v7732 = vsub.s32 3, %v7731
        %v7733 = vrot.slane %v2088, %v7732
        %v7734 = vlaneseq
        %v7735 = vshrl.u32 %v7734, 7
        %v7736 = vsub.s32 3, %v7735
        %v7737 = vrot.slane %v2092, %v7736
        %v7738 = vmul.f32 %v7714, %v7733
        %v7739 = vmul.f32 %v7715, %v7737
        %v7740 = vmul.f32 %v7716, %v7733
        %v7741 = vmul.f32 %v7717, %v7737
        %v7742 = vmul.f32 %v7718, %v7733
        %v7743 = vmul.f32 %v7719, %v7737
        %v7744 = vmul.f32 %v7720, %v7733
        %v7745 = vmul.f32 %v7721, %v7737
        %v7746 = vmul.f32 %v7722, %v7733
        %v7747 = vmul.f32 %v7723, %v7737
        %v7748 = vmul.f32 %v7724, %v7733
        %v7749 = vmul.f32 %v7725, %v7737
        %v7750 = vmul.f32 %v7726, %v7733
        %v7751 = vmul.f32 %v7727, %v7737
        %v7752 = vmul.f32 %v7728, %v7733
        %v7753 = vmul.f32 %v7729, %v7737
        %v7754 = vpack.c.bf16 %v7740, %v7738
        %v7755 = vpack.c.bf16 %v7741, %v7739
        %v7756 = vpack.c.bf16 %v7744, %v7742
        %v7757 = vpack.c.bf16 %v7745, %v7743
        %v7758 = vpack.c.bf16 %v7748, %v7746
        %v7759 = vpack.c.bf16 %v7749, %v7747
        %v7760 = vpack.c.bf16 %v7752, %v7750
        %v7761 = vpack.c.bf16 %v7753, %v7751
        %7762 = vmatprep.subr.bf16.mxu0 %v7210
        %7763 = vmatpush1.bf16.msra.mxu0 %v7209
        %7764 = vmatprep.subr.bf16.mxu0 %v7212
        %7765 = vmatpush1.bf16.msra.mxu0 %v7211
        %7766 = vmatprep.subr.bf16.mxu0 %v7214
        %7767 = vmatpush1.bf16.msra.mxu0 %v7213
        %7768 = vmatprep.subr.bf16.mxu0 %v7216
        %7769 = vmatpush1.bf16.msra.mxu0 %v7215
        %7770 = vmatprep.subr.bf16.mxu0 %v7218
        %7771 = vmatpush1.bf16.msra.mxu0 %v7217
        %7772 = vmatprep.subr.bf16.mxu0 %v7220
        %7773 = vmatpush1.bf16.msra.mxu0 %v7219
        %7774 = vmatprep.subr.bf16.mxu0 %v7222
        %7775 = vmatpush1.bf16.msra.mxu0 %v7221
        %7776 = vmatprep.subr.bf16.mxu0 %v7224
        %7777 = vmatpush1.bf16.msra.mxu0 %v7223
        %7778 = vmatprep.subr.bf16.mxu0 %v7226
        %7779 = vmatpush1.bf16.msra.mxu0 %v7225
        %7780 = vmatprep.subr.bf16.mxu0 %v7228
        %7781 = vmatpush1.bf16.msra.mxu0 %v7227
        %7782 = vmatprep.subr.bf16.mxu0 %v7230
        %7783 = vmatpush1.bf16.msra.mxu0 %v7229
        %7784 = vmatprep.subr.bf16.mxu0 %v7232
        %7785 = vmatpush1.bf16.msra.mxu0 %v7231
        %7786 = vmatprep.subr.bf16.mxu0 %v7234
        %7787 = vmatpush1.bf16.msra.mxu0 %v7233
        %7788 = vmatprep.subr.bf16.mxu0 %v7236
        %7789 = vmatpush1.bf16.msra.mxu0 %v7235
        %7790 = vmatprep.subr.bf16.mxu0 %v7238
        %7791 = vmatpush1.bf16.msra.mxu0 %v7237
        %7792 = vmatprep.subr.bf16.mxu0 %v7240
        %7793 = vmatpush1.bf16.msra.mxu0 %v7239
        %7794 = vmatprep.mubr.bf16.mxu0 %v7755
        %7795 = vmatmul.mubr.bf16.gmra.mrb[0].mxu0 %v7754
        %v7796 = vpop.f32.mrb[0].mxu0
        %v7797 = vadd.f32 0.0, %v7796
        %v7798 = vpop.f32.mrb[0].mxu0
        %v7799 = vadd.f32 0.0, %v7798
        %v7800 = vpop.f32.mrb[0].mxu0
        %v7801 = vadd.f32 0.0, %v7800
        %v7802 = vpop.f32.mrb[0].mxu0
        %v7803 = vadd.f32 0.0, %v7802
        %7804 = vmatprep.mubr.bf16.mxu0 %v7757
        %7805 = vmatmul.mubr.bf16.gmra.mrb[0].mxu0 %v7756
        %v7806 = vpop.f32.mrb[0].mxu0
        %v7807 = vadd.f32 0.0, %v7806
        %v7808 = vpop.f32.mrb[0].mxu0
        %v7809 = vadd.f32 0.0, %v7808
        %v7810 = vpop.f32.mrb[0].mxu0
        %v7811 = vadd.f32 0.0, %v7810
        %v7812 = vpop.f32.mrb[0].mxu0
        %v7813 = vadd.f32 0.0, %v7812
        %7814 = vmatprep.mubr.bf16.mxu0 %v7759
        %7815 = vmatmul.mubr.bf16.gmra.mrb[0].mxu0 %v7758
        %v7816 = vpop.f32.mrb[0].mxu0
        %v7817 = vadd.f32 0.0, %v7816
        %v7818 = vpop.f32.mrb[0].mxu0
        %v7819 = vadd.f32 0.0, %v7818
        %v7820 = vpop.f32.mrb[0].mxu0
        %v7821 = vadd.f32 0.0, %v7820
        %v7822 = vpop.f32.mrb[0].mxu0
        %v7823 = vadd.f32 0.0, %v7822
        %7824 = vmatprep.mubr.bf16.mxu0 %v7761
        %7825 = vmatmul.mubr.bf16.gmra.mrb[0].mxu0 %v7760
        %v7826 = vpop.f32.mrb[0].mxu0
        %v7827 = vadd.f32 0.0, %v7826
        %v7828 = vpop.f32.mrb[0].mxu0
        %v7829 = vadd.f32 0.0, %v7828
        %v7830 = vpop.f32.mrb[0].mxu0
        %v7831 = vadd.f32 0.0, %v7830
        %v7832 = vpop.f32.mrb[0].mxu0
        %v7833 = vadd.f32 0.0, %v7832
        %7834 = vdwg.mxu0
        %v7835 = vmul.f32 %v7797, %v2658
        %v7836 = vmul.f32 %v7799, %v2659
        %v7837 = vmul.f32 %v7801, %v2660
        %v7838 = vmul.f32 %v7803, %v2661
        %v7839 = vmul.f32 %v7807, %v2662
        %v7840 = vmul.f32 %v7809, %v2663
        %v7841 = vmul.f32 %v7811, %v2664
        %v7842 = vmul.f32 %v7813, %v2665
        %v7843 = vmul.f32 %v7817, %v2666
        %v7844 = vmul.f32 %v7819, %v2667
        %v7845 = vmul.f32 %v7821, %v2668
        %v7846 = vmul.f32 %v7823, %v2669
        %v7847 = vmul.f32 %v7827, %v2670
        %v7848 = vmul.f32 %v7829, %v2671
        %v7849 = vmul.f32 %v7831, %v2672
        %v7850 = vmul.f32 %v7833, %v2673
        %v7851 = vadd.f32 %v7835, %v7837
        %v7852 = vadd.f32 %v7851, %v7839
        %v7853 = vadd.f32 %v7852, %v7841
        %v7854 = vadd.f32 %v7853, %v7843
        %v7855 = vadd.f32 %v7854, %v7845
        %v7856 = vadd.f32 %v7855, %v7847
        %v7857 = vadd.f32 %v7856, %v7849
        %v7858 = vrot.slane %v7857, 4
        %v7859 = vadd.f32 %v7857, %v7858
        %v7860 = vrot.slane %v7859, 2
        %v7861 = vadd.f32 %v7859, %v7860
        %v7862 = vrot.slane %v7861, 1
        %v7863 = vadd.f32 %v7861, %v7862
        %v7864 = vadd.f32 %v7836, %v7838
        %v7865 = vadd.f32 %v7864, %v7840
        %v7866 = vadd.f32 %v7865, %v7842
        %v7867 = vadd.f32 %v7866, %v7844
        %v7868 = vadd.f32 %v7867, %v7846
        %v7869 = vadd.f32 %v7868, %v7848
        %v7870 = vadd.f32 %v7869, %v7850
        %v7871 = vrot.slane %v7870, 4
        %v7872 = vadd.f32 %v7870, %v7871
        %v7873 = vrot.slane %v7872, 2
        %v7874 = vadd.f32 %v7872, %v7873
        %v7875 = vrot.slane %v7874, 1
        %v7876 = vadd.f32 %v7874, %v7875
        %v7877 = vld [vmem:[#allocation4 + $0x200] sm:$0xff]
        %v7878 = vld [vmem:[#allocation4 + $0x208] sm:$0xff]
        %v7879 = vld [vmem:[#allocation4 + $0x210] sm:$0xff]
        %v7880 = vld [vmem:[#allocation4 + $0x218] sm:$0xff]
        %v7881 = vld [vmem:[#allocation4 + $0x220] sm:$0xff]
        %v7882 = vld [vmem:[#allocation4 + $0x228] sm:$0xff]
        %v7883 = vld [vmem:[#allocation4 + $0x230] sm:$0xff]
        %v7884 = vld [vmem:[#allocation4 + $0x238] sm:$0xff]
        %v7885 = vld [vmem:[#allocation4 + $0x240] sm:$0xff]
        %v7886 = vld [vmem:[#allocation4 + $0x248] sm:$0xff]
        %v7887 = vld [vmem:[#allocation4 + $0x250] sm:$0xff]
        %v7888 = vld [vmem:[#allocation4 + $0x258] sm:$0xff]
        %v7889 = vld [vmem:[#allocation4 + $0x260] sm:$0xff]
        %v7890 = vld [vmem:[#allocation4 + $0x268] sm:$0xff]
        %v7891 = vld [vmem:[#allocation4 + $0x270] sm:$0xff]
        %v7892 = vld [vmem:[#allocation4 + $0x278] sm:$0xff]
        %v7893 = vlaneseq
        %v7894 = vshrl.u32 %v7893, 7
        %v7895 = vsub.s32 4, %v7894
        %v7896 = vrot.slane %v2088, %v7895
        %v7897 = vlaneseq
        %v7898 = vshrl.u32 %v7897, 7
        %v7899 = vsub.s32 4, %v7898
        %v7900 = vrot.slane %v2092, %v7899
        %v7901 = vmul.f32 %v7877, %v7896
        %v7902 = vmul.f32 %v7878, %v7900
        %v7903 = vmul.f32 %v7879, %v7896
        %v7904 = vmul.f32 %v7880, %v7900
        %v7905 = vmul.f32 %v7881, %v7896
        %v7906 = vmul.f32 %v7882, %v7900
        %v7907 = vmul.f32 %v7883, %v7896
        %v7908 = vmul.f32 %v7884, %v7900
        %v7909 = vmul.f32 %v7885, %v7896
        %v7910 = vmul.f32 %v7886, %v7900
        %v7911 = vmul.f32 %v7887, %v7896
        %v7912 = vmul.f32 %v7888, %v7900
        %v7913 = vmul.f32 %v7889, %v7896
        %v7914 = vmul.f32 %v7890, %v7900
        %v7915 = vmul.f32 %v7891, %v7896
        %v7916 = vmul.f32 %v7892, %v7900
        %v7917 = vpack.c.bf16 %v7903, %v7901
        %v7918 = vpack.c.bf16 %v7904, %v7902
        %v7919 = vpack.c.bf16 %v7907, %v7905
        %v7920 = vpack.c.bf16 %v7908, %v7906
        %v7921 = vpack.c.bf16 %v7911, %v7909
        %v7922 = vpack.c.bf16 %v7912, %v7910
        %v7923 = vpack.c.bf16 %v7915, %v7913
        %v7924 = vpack.c.bf16 %v7916, %v7914
        %7925 = vmatprep.subr.bf16.mxu0 %v7210
        %7926 = vmatpush1.bf16.msra.mxu0 %v7209
        %7927 = vmatprep.subr.bf16.mxu0 %v7212
        %7928 = vmatpush1.bf16.msra.mxu0 %v7211
        %7929 = vmatprep.subr.bf16.mxu0 %v7214
        %7930 = vmatpush1.bf16.msra.mxu0 %v7213
        %7931 = vmatprep.subr.bf16.mxu0 %v7216
        %7932 = vmatpush1.bf16.msra.mxu0 %v7215
        %7933 = vmatprep.subr.bf16.mxu0 %v7218
        %7934 = vmatpush1.bf16.msra.mxu0 %v7217
        %7935 = vmatprep.subr.bf16.mxu0 %v7220
        %7936 = vmatpush1.bf16.msra.mxu0 %v7219
        %7937 = vmatprep.subr.bf16.mxu0 %v7222
        %7938 = vmatpush1.bf16.msra.mxu0 %v7221
        %7939 = vmatprep.subr.bf16.mxu0 %v7224
        %7940 = vmatpush1.bf16.msra.mxu0 %v7223
        %7941 = vmatprep.subr.bf16.mxu0 %v7226
        %7942 = vmatpush1.bf16.msra.mxu0 %v7225
        %7943 = vmatprep.subr.bf16.mxu0 %v7228
        %7944 = vmatpush1.bf16.msra.mxu0 %v7227
        %7945 = vmatprep.subr.bf16.mxu0 %v7230
        %7946 = vmatpush1.bf16.msra.mxu0 %v7229
        %7947 = vmatprep.subr.bf16.mxu0 %v7232
        %7948 = vmatpush1.bf16.msra.mxu0 %v7231
        %7949 = vmatprep.subr.bf16.mxu0 %v7234
        %7950 = vmatpush1.bf16.msra.mxu0 %v7233
        %7951 = vmatprep.subr.bf16.mxu0 %v7236
        %7952 = vmatpush1.bf16.msra.mxu0 %v7235
        %7953 = vmatprep.subr.bf16.mxu0 %v7238
        %7954 = vmatpush1.bf16.msra.mxu0 %v7237
        %7955 = vmatprep.subr.bf16.mxu0 %v7240
        %7956 = vmatpush1.bf16.msra.mxu0 %v7239
        %7957 = vmatprep.mubr.bf16.mxu0 %v7918
        %7958 = vmatmul.mubr.bf16.gmra.mrb[0].mxu0 %v7917
        %v7959 = vpop.f32.mrb[0].mxu0
        %v7960 = vadd.f32 0.0, %v7959
        %v7961 = vpop.f32.mrb[0].mxu0
        %v7962 = vadd.f32 0.0, %v7961
        %v7963 = vpop.f32.mrb[0].mxu0
        %v7964 = vadd.f32 0.0, %v7963
        %v7965 = vpop.f32.mrb[0].mxu0
        %v7966 = vadd.f32 0.0, %v7965
        %7967 = vmatprep.mubr.bf16.mxu0 %v7920
        %7968 = vmatmul.mubr.bf16.gmra.mrb[0].mxu0 %v7919
        %v7969 = vpop.f32.mrb[0].mxu0
        %v7970 = vadd.f32 0.0, %v7969
        %v7971 = vpop.f32.mrb[0].mxu0
        %v7972 = vadd.f32 0.0, %v7971
        %v7973 = vpop.f32.mrb[0].mxu0
        %v7974 = vadd.f32 0.0, %v7973
        %v7975 = vpop.f32.mrb[0].mxu0
        %v7976 = vadd.f32 0.0, %v7975
        %7977 = vmatprep.mubr.bf16.mxu0 %v7922
        %7978 = vmatmul.mubr.bf16.gmra.mrb[0].mxu0 %v7921
        %v7979 = vpop.f32.mrb[0].mxu0
        %v7980 = vadd.f32 0.0, %v7979
        %v7981 = vpop.f32.mrb[0].mxu0
        %v7982 = vadd.f32 0.0, %v7981
        %v7983 = vpop.f32.mrb[0].mxu0
        %v7984 = vadd.f32 0.0, %v7983
        %v7985 = vpop.f32.mrb[0].mxu0
        %v7986 = vadd.f32 0.0, %v7985
        %7987 = vmatprep.mubr.bf16.mxu0 %v7924
        %7988 = vmatmul.mubr.bf16.gmra.mrb[0].mxu0 %v7923
        %v7989 = vpop.f32.mrb[0].mxu0
        %v7990 = vadd.f32 0.0, %v7989
        %v7991 = vpop.f32.mrb[0].mxu0
        %v7992 = vadd.f32 0.0, %v7991
        %v7993 = vpop.f32.mrb[0].mxu0
        %v7994 = vadd.f32 0.0, %v7993
        %v7995 = vpop.f32.mrb[0].mxu0
        %v7996 = vadd.f32 0.0, %v7995
        %7997 = vdwg.mxu0
        %v7998 = vmul.f32 %v7960, %v2658
        %v7999 = vmul.f32 %v7962, %v2659
        %v8000 = vmul.f32 %v7964, %v2660
        %v8001 = vmul.f32 %v7966, %v2661
        %v8002 = vmul.f32 %v7970, %v2662
        %v8003 = vmul.f32 %v7972, %v2663
        %v8004 = vmul.f32 %v7974, %v2664
        %v8005 = vmul.f32 %v7976, %v2665
        %v8006 = vmul.f32 %v7980, %v2666
        %v8007 = vmul.f32 %v7982, %v2667
        %v8008 = vmul.f32 %v7984, %v2668
        %v8009 = vmul.f32 %v7986, %v2669
        %v8010 = vmul.f32 %v7990, %v2670
        %v8011 = vmul.f32 %v7992, %v2671
        %v8012 = vmul.f32 %v7994, %v2672
        %v8013 = vmul.f32 %v7996, %v2673
        %v8014 = vadd.f32 %v7998, %v8000
        %v8015 = vadd.f32 %v8014, %v8002
        %v8016 = vadd.f32 %v8015, %v8004
        %v8017 = vadd.f32 %v8016, %v8006
        %v8018 = vadd.f32 %v8017, %v8008
        %v8019 = vadd.f32 %v8018, %v8010
        %v8020 = vadd.f32 %v8019, %v8012
        %v8021 = vrot.slane %v8020, 4
        %v8022 = vadd.f32 %v8020, %v8021
        %v8023 = vrot.slane %v8022, 2
        %v8024 = vadd.f32 %v8022, %v8023
        %v8025 = vrot.slane %v8024, 1
        %v8026 = vadd.f32 %v8024, %v8025
        %v8027 = vadd.f32 %v7999, %v8001
        %v8028 = vadd.f32 %v8027, %v8003
        %v8029 = vadd.f32 %v8028, %v8005
        %v8030 = vadd.f32 %v8029, %v8007
        %v8031 = vadd.f32 %v8030, %v8009
        %v8032 = vadd.f32 %v8031, %v8011
        %v8033 = vadd.f32 %v8032, %v8013
        %v8034 = vrot.slane %v8033, 4
        %v8035 = vadd.f32 %v8033, %v8034
        %v8036 = vrot.slane %v8035, 2
        %v8037 = vadd.f32 %v8035, %v8036
        %v8038 = vrot.slane %v8037, 1
        %v8039 = vadd.f32 %v8037, %v8038
        %v8040 = vld [vmem:[#allocation4 + $0x280] sm:$0xff]
        %v8041 = vld [vmem:[#allocation4 + $0x288] sm:$0xff]
        %v8042 = vld [vmem:[#allocation4 + $0x290] sm:$0xff]
        %v8043 = vld [vmem:[#allocation4 + $0x298] sm:$0xff]
        %v8044 = vld [vmem:[#allocation4 + $0x2a0] sm:$0xff]
        %v8045 = vld [vmem:[#allocation4 + $0x2a8] sm:$0xff]
        %v8046 = vld [vmem:[#allocation4 + $0x2b0] sm:$0xff]
        %v8047 = vld [vmem:[#allocation4 + $0x2b8] sm:$0xff]
        %v8048 = vld [vmem:[#allocation4 + $0x2c0] sm:$0xff]
        %v8049 = vld [vmem:[#allocation4 + $0x2c8] sm:$0xff]
        %v8050 = vld [vmem:[#allocation4 + $0x2d0] sm:$0xff]
        %v8051 = vld [vmem:[#allocation4 + $0x2d8] sm:$0xff]
        %v8052 = vld [vmem:[#allocation4 + $0x2e0] sm:$0xff]
        %v8053 = vld [vmem:[#allocation4 + $0x2e8] sm:$0xff]
        %v8054 = vld [vmem:[#allocation4 + $0x2f0] sm:$0xff]
        %v8055 = vld [vmem:[#allocation4 + $0x2f8] sm:$0xff]
        %v8056 = vlaneseq
        %v8057 = vshrl.u32 %v8056, 7
        %v8058 = vsub.s32 5, %v8057
        %v8059 = vrot.slane %v2088, %v8058
        %v8060 = vlaneseq
        %v8061 = vshrl.u32 %v8060, 7
        %v8062 = vsub.s32 5, %v8061
        %v8063 = vrot.slane %v2092, %v8062
        %v8064 = vmul.f32 %v8040, %v8059
        %v8065 = vmul.f32 %v8041, %v8063
        %v8066 = vmul.f32 %v8042, %v8059
        %v8067 = vmul.f32 %v8043, %v8063
        %v8068 = vmul.f32 %v8044, %v8059
        %v8069 = vmul.f32 %v8045, %v8063
        %v8070 = vmul.f32 %v8046, %v8059
        %v8071 = vmul.f32 %v8047, %v8063
        %v8072 = vmul.f32 %v8048, %v8059
        %v8073 = vmul.f32 %v8049, %v8063
        %v8074 = vmul.f32 %v8050, %v8059
        %v8075 = vmul.f32 %v8051, %v8063
        %v8076 = vmul.f32 %v8052, %v8059
        %v8077 = vmul.f32 %v8053, %v8063
        %v8078 = vmul.f32 %v8054, %v8059
        %v8079 = vmul.f32 %v8055, %v8063
        %v8080 = vpack.c.bf16 %v8066, %v8064
        %v8081 = vpack.c.bf16 %v8067, %v8065
        %v8082 = vpack.c.bf16 %v8070, %v8068
        %v8083 = vpack.c.bf16 %v8071, %v8069
        %v8084 = vpack.c.bf16 %v8074, %v8072
        %v8085 = vpack.c.bf16 %v8075, %v8073
        %v8086 = vpack.c.bf16 %v8078, %v8076
        %v8087 = vpack.c.bf16 %v8079, %v8077
        %8088 = vmatprep.subr.bf16.mxu0 %v7210
        %8089 = vmatpush1.bf16.msra.mxu0 %v7209
        %8090 = vmatprep.subr.bf16.mxu0 %v7212
        %8091 = vmatpush1.bf16.msra.mxu0 %v7211
        %8092 = vmatprep.subr.bf16.mxu0 %v7214
        %8093 = vmatpush1.bf16.msra.mxu0 %v7213
        %8094 = vmatprep.subr.bf16.mxu0 %v7216
        %8095 = vmatpush1.bf16.msra.mxu0 %v7215
        %8096 = vmatprep.subr.bf16.mxu0 %v7218
        %8097 = vmatpush1.bf16.msra.mxu0 %v7217
        %8098 = vmatprep.subr.bf16.mxu0 %v7220
        %8099 = vmatpush1.bf16.msra.mxu0 %v7219
        %8100 = vmatprep.subr.bf16.mxu0 %v7222
        %8101 = vmatpush1.bf16.msra.mxu0 %v7221
        %8102 = vmatprep.subr.bf16.mxu0 %v7224
        %8103 = vmatpush1.bf16.msra.mxu0 %v7223
        %8104 = vmatprep.subr.bf16.mxu0 %v7226
        %8105 = vmatpush1.bf16.msra.mxu0 %v7225
        %8106 = vmatprep.subr.bf16.mxu0 %v7228
        %8107 = vmatpush1.bf16.msra.mxu0 %v7227
        %8108 = vmatprep.subr.bf16.mxu0 %v7230
        %8109 = vmatpush1.bf16.msra.mxu0 %v7229
        %8110 = vmatprep.subr.bf16.mxu0 %v7232
        %8111 = vmatpush1.bf16.msra.mxu0 %v7231
        %8112 = vmatprep.subr.bf16.mxu0 %v7234
        %8113 = vmatpush1.bf16.msra.mxu0 %v7233
        %8114 = vmatprep.subr.bf16.mxu0 %v7236
        %8115 = vmatpush1.bf16.msra.mxu0 %v7235
        %8116 = vmatprep.subr.bf16.mxu0 %v7238
        %8117 = vmatpush1.bf16.msra.mxu0 %v7237
        %8118 = vmatprep.subr.bf16.mxu0 %v7240
        %8119 = vmatpush1.bf16.msra.mxu0 %v7239
        %8120 = vmatprep.mubr.bf16.mxu0 %v8081
        %8121 = vmatmul.mubr.bf16.gmra.mrb[0].mxu0 %v8080
        %v8122 = vpop.f32.mrb[0].mxu0
        %v8123 = vadd.f32 0.0, %v8122
        %v8124 = vpop.f32.mrb[0].mxu0
        %v8125 = vadd.f32 0.0, %v8124
        %v8126 = vpop.f32.mrb[0].mxu0
        %v8127 = vadd.f32 0.0, %v8126
        %v8128 = vpop.f32.mrb[0].mxu0
        %v8129 = vadd.f32 0.0, %v8128
        %8130 = vmatprep.mubr.bf16.mxu0 %v8083
        %8131 = vmatmul.mubr.bf16.gmra.mrb[0].mxu0 %v8082
        %v8132 = vpop.f32.mrb[0].mxu0
        %v8133 = vadd.f32 0.0, %v8132
        %v8134 = vpop.f32.mrb[0].mxu0
        %v8135 = vadd.f32 0.0, %v8134
        %v8136 = vpop.f32.mrb[0].mxu0
        %v8137 = vadd.f32 0.0, %v8136
        %v8138 = vpop.f32.mrb[0].mxu0
        %v8139 = vadd.f32 0.0, %v8138
        %8140 = vmatprep.mubr.bf16.mxu0 %v8085
        %8141 = vmatmul.mubr.bf16.gmra.mrb[0].mxu0 %v8084
        %v8142 = vpop.f32.mrb[0].mxu0
        %v8143 = vadd.f32 0.0, %v8142
        %v8144 = vpop.f32.mrb[0].mxu0
        %v8145 = vadd.f32 0.0, %v8144
        %v8146 = vpop.f32.mrb[0].mxu0
        %v8147 = vadd.f32 0.0, %v8146
        %v8148 = vpop.f32.mrb[0].mxu0
        %v8149 = vadd.f32 0.0, %v8148
        %8150 = vmatprep.mubr.bf16.mxu0 %v8087
        %8151 = vmatmul.mubr.bf16.gmra.mrb[0].mxu0 %v8086
        %v8152 = vpop.f32.mrb[0].mxu0
        %v8153 = vadd.f32 0.0, %v8152
        %v8154 = vpop.f32.mrb[0].mxu0
        %v8155 = vadd.f32 0.0, %v8154
        %v8156 = vpop.f32.mrb[0].mxu0
        %v8157 = vadd.f32 0.0, %v8156
        %v8158 = vpop.f32.mrb[0].mxu0
        %v8159 = vadd.f32 0.0, %v8158
        %8160 = vdwg.mxu0
        %v8161 = vmul.f32 %v8123, %v2658
        %v8162 = vmul.f32 %v8125, %v2659
        %v8163 = vmul.f32 %v8127, %v2660
        %v8164 = vmul.f32 %v8129, %v2661
        %v8165 = vmul.f32 %v8133, %v2662
        %v8166 = vmul.f32 %v8135, %v2663
        %v8167 = vmul.f32 %v8137, %v2664
        %v8168 = vmul.f32 %v8139, %v2665
        %v8169 = vmul.f32 %v8143, %v2666
        %v8170 = vmul.f32 %v8145, %v2667
        %v8171 = vmul.f32 %v8147, %v2668
        %v8172 = vmul.f32 %v8149, %v2669
        %v8173 = vmul.f32 %v8153, %v2670
        %v8174 = vmul.f32 %v8155, %v2671
        %v8175 = vmul.f32 %v8157, %v2672
        %v8176 = vmul.f32 %v8159, %v2673
        %v8177 = vadd.f32 %v8161, %v8163
        %v8178 = vadd.f32 %v8177, %v8165
        %v8179 = vadd.f32 %v8178, %v8167
        %v8180 = vadd.f32 %v8179, %v8169
        %v8181 = vadd.f32 %v8180, %v8171
        %v8182 = vadd.f32 %v8181, %v8173
        %v8183 = vadd.f32 %v8182, %v8175
        %v8184 = vrot.slane %v8183, 4
        %v8185 = vadd.f32 %v8183, %v8184
        %v8186 = vrot.slane %v8185, 2
        %v8187 = vadd.f32 %v8185, %v8186
        %v8188 = vrot.slane %v8187, 1
        %v8189 = vadd.f32 %v8187, %v8188
        %v8190 = vadd.f32 %v8162, %v8164
        %v8191 = vadd.f32 %v8190, %v8166
        %v8192 = vadd.f32 %v8191, %v8168
        %v8193 = vadd.f32 %v8192, %v8170
        %v8194 = vadd.f32 %v8193, %v8172
        %v8195 = vadd.f32 %v8194, %v8174
        %v8196 = vadd.f32 %v8195, %v8176
        %v8197 = vrot.slane %v8196, 4
        %v8198 = vadd.f32 %v8196, %v8197
        %v8199 = vrot.slane %v8198, 2
        %v8200 = vadd.f32 %v8198, %v8199
        %v8201 = vrot.slane %v8200, 1
        %v8202 = vadd.f32 %v8200, %v8201
        %v8203 = vld [vmem:[#allocation4 + $0x300] sm:$0xff]
        %v8204 = vld [vmem:[#allocation4 + $0x308] sm:$0xff]
        %v8205 = vld [vmem:[#allocation4 + $0x310] sm:$0xff]
        %v8206 = vld [vmem:[#allocation4 + $0x318] sm:$0xff]
        %v8207 = vld [vmem:[#allocation4 + $0x320] sm:$0xff]
        %v8208 = vld [vmem:[#allocation4 + $0x328] sm:$0xff]
        %v8209 = vld [vmem:[#allocation4 + $0x330] sm:$0xff]
        %v8210 = vld [vmem:[#allocation4 + $0x338] sm:$0xff]
        %v8211 = vld [vmem:[#allocation4 + $0x340] sm:$0xff]
        %v8212 = vld [vmem:[#allocation4 + $0x348] sm:$0xff]
        %v8213 = vld [vmem:[#allocation4 + $0x350] sm:$0xff]
        %v8214 = vld [vmem:[#allocation4 + $0x358] sm:$0xff]
        %v8215 = vld [vmem:[#allocation4 + $0x360] sm:$0xff]
        %v8216 = vld [vmem:[#allocation4 + $0x368] sm:$0xff]
        %v8217 = vld [vmem:[#allocation4 + $0x370] sm:$0xff]
        %v8218 = vld [vmem:[#allocation4 + $0x378] sm:$0xff]
        %v8219 = vlaneseq
        %v8220 = vshrl.u32 %v8219, 7
        %v8221 = vsub.s32 6, %v8220
        %v8222 = vrot.slane %v2088, %v8221
        %v8223 = vlaneseq
        %v8224 = vshrl.u32 %v8223, 7
        %v8225 = vsub.s32 6, %v8224
        %v8226 = vrot.slane %v2092, %v8225
        %v8227 = vmul.f32 %v8203, %v8222
        %v8228 = vmul.f32 %v8204, %v8226
        %v8229 = vmul.f32 %v8205, %v8222
        %v8230 = vmul.f32 %v8206, %v8226
        %v8231 = vmul.f32 %v8207, %v8222
        %v8232 = vmul.f32 %v8208, %v8226
        %v8233 = vmul.f32 %v8209, %v8222
        %v8234 = vmul.f32 %v8210, %v8226
        %v8235 = vmul.f32 %v8211, %v8222
        %v8236 = vmul.f32 %v8212, %v8226
        %v8237 = vmul.f32 %v8213, %v8222
        %v8238 = vmul.f32 %v8214, %v8226
        %v8239 = vmul.f32 %v8215, %v8222
        %v8240 = vmul.f32 %v8216, %v8226
        %v8241 = vmul.f32 %v8217, %v8222
        %v8242 = vmul.f32 %v8218, %v8226
        %v8243 = vpack.c.bf16 %v8229, %v8227
        %v8244 = vpack.c.bf16 %v8230, %v8228
        %v8245 = vpack.c.bf16 %v8233, %v8231
        %v8246 = vpack.c.bf16 %v8234, %v8232
        %v8247 = vpack.c.bf16 %v8237, %v8235
        %v8248 = vpack.c.bf16 %v8238, %v8236
        %v8249 = vpack.c.bf16 %v8241, %v8239
        %v8250 = vpack.c.bf16 %v8242, %v8240
        %8251 = vmatprep.subr.bf16.mxu0 %v7210
        %8252 = vmatpush1.bf16.msra.mxu0 %v7209
        %8253 = vmatprep.subr.bf16.mxu0 %v7212
        %8254 = vmatpush1.bf16.msra.mxu0 %v7211
        %8255 = vmatprep.subr.bf16.mxu0 %v7214
        %8256 = vmatpush1.bf16.msra.mxu0 %v7213
        %8257 = vmatprep.subr.bf16.mxu0 %v7216
        %8258 = vmatpush1.bf16.msra.mxu0 %v7215
        %8259 = vmatprep.subr.bf16.mxu0 %v7218
        %8260 = vmatpush1.bf16.msra.mxu0 %v7217
        %8261 = vmatprep.subr.bf16.mxu0 %v7220
        %8262 = vmatpush1.bf16.msra.mxu0 %v7219
        %8263 = vmatprep.subr.bf16.mxu0 %v7222
        %8264 = vmatpush1.bf16.msra.mxu0 %v7221
        %8265 = vmatprep.subr.bf16.mxu0 %v7224
        %8266 = vmatpush1.bf16.msra.mxu0 %v7223
        %8267 = vmatprep.subr.bf16.mxu0 %v7226
        %8268 = vmatpush1.bf16.msra.mxu0 %v7225
        %8269 = vmatprep.subr.bf16.mxu0 %v7228
        %8270 = vmatpush1.bf16.msra.mxu0 %v7227
        %8271 = vmatprep.subr.bf16.mxu0 %v7230
        %8272 = vmatpush1.bf16.msra.mxu0 %v7229
        %8273 = vmatprep.subr.bf16.mxu0 %v7232
        %8274 = vmatpush1.bf16.msra.mxu0 %v7231
        %8275 = vmatprep.subr.bf16.mxu0 %v7234
        %8276 = vmatpush1.bf16.msra.mxu0 %v7233
        %8277 = vmatprep.subr.bf16.mxu0 %v7236
        %8278 = vmatpush1.bf16.msra.mxu0 %v7235
        %8279 = vmatprep.subr.bf16.mxu0 %v7238
        %8280 = vmatpush1.bf16.msra.mxu0 %v7237
        %8281 = vmatprep.subr.bf16.mxu0 %v7240
        %8282 = vmatpush1.bf16.msra.mxu0 %v7239
        %8283 = vmatprep.mubr.bf16.mxu0 %v8244
        %8284 = vmatmul.mubr.bf16.gmra.mrb[0].mxu0 %v8243
        %v8285 = vpop.f32.mrb[0].mxu0
        %v8286 = vadd.f32 0.0, %v8285
        %v8287 = vpop.f32.mrb[0].mxu0
        %v8288 = vadd.f32 0.0, %v8287
        %v8289 = vpop.f32.mrb[0].mxu0
        %v8290 = vadd.f32 0.0, %v8289
        %v8291 = vpop.f32.mrb[0].mxu0
        %v8292 = vadd.f32 0.0, %v8291
        %8293 = vmatprep.mubr.bf16.mxu0 %v8246
        %8294 = vmatmul.mubr.bf16.gmra.mrb[0].mxu0 %v8245
        %v8295 = vpop.f32.mrb[0].mxu0
        %v8296 = vadd.f32 0.0, %v8295
        %v8297 = vpop.f32.mrb[0].mxu0
        %v8298 = vadd.f32 0.0, %v8297
        %v8299 = vpop.f32.mrb[0].mxu0
        %v8300 = vadd.f32 0.0, %v8299
        %v8301 = vpop.f32.mrb[0].mxu0
        %v8302 = vadd.f32 0.0, %v8301
        %8303 = vmatprep.mubr.bf16.mxu0 %v8248
        %8304 = vmatmul.mubr.bf16.gmra.mrb[0].mxu0 %v8247
        %v8305 = vpop.f32.mrb[0].mxu0
        %v8306 = vadd.f32 0.0, %v8305
        %v8307 = vpop.f32.mrb[0].mxu0
        %v8308 = vadd.f32 0.0, %v8307
        %v8309 = vpop.f32.mrb[0].mxu0
        %v8310 = vadd.f32 0.0, %v8309
        %v8311 = vpop.f32.mrb[0].mxu0
        %v8312 = vadd.f32 0.0, %v8311
        %8313 = vmatprep.mubr.bf16.mxu0 %v8250
        %8314 = vmatmul.mubr.bf16.gmra.mrb[0].mxu0 %v8249
        %v8315 = vpop.f32.mrb[0].mxu0
        %v8316 = vadd.f32 0.0, %v8315
        %v8317 = vpop.f32.mrb[0].mxu0
        %v8318 = vadd.f32 0.0, %v8317
        %v8319 = vpop.f32.mrb[0].mxu0
        %v8320 = vadd.f32 0.0, %v8319
        %v8321 = vpop.f32.mrb[0].mxu0
        %v8322 = vadd.f32 0.0, %v8321
        %8323 = vdwg.mxu0
        %v8324 = vmul.f32 %v8286, %v2658
        %v8325 = vmul.f32 %v8288, %v2659
        %v8326 = vmul.f32 %v8290, %v2660
        %v8327 = vmul.f32 %v8292, %v2661
        %v8328 = vmul.f32 %v8296, %v2662
        %v8329 = vmul.f32 %v8298, %v2663
        %v8330 = vmul.f32 %v8300, %v2664
        %v8331 = vmul.f32 %v8302, %v2665
        %v8332 = vmul.f32 %v8306, %v2666
        %v8333 = vmul.f32 %v8308, %v2667
        %v8334 = vmul.f32 %v8310, %v2668
        %v8335 = vmul.f32 %v8312, %v2669
        %v8336 = vmul.f32 %v8316, %v2670
        %v8337 = vmul.f32 %v8318, %v2671
        %v8338 = vmul.f32 %v8320, %v2672
        %v8339 = vmul.f32 %v8322, %v2673
        %v8340 = vadd.f32 %v8324, %v8326
        %v8341 = vadd.f32 %v8340, %v8328
        %v8342 = vadd.f32 %v8341, %v8330
        %v8343 = vadd.f32 %v8342, %v8332
        %v8344 = vadd.f32 %v8343, %v8334
        %v8345 = vadd.f32 %v8344, %v8336
        %v8346 = vadd.f32 %v8345, %v8338
        %v8347 = vrot.slane %v8346, 4
        %v8348 = vadd.f32 %v8346, %v8347
        %v8349 = vrot.slane %v8348, 2
        %v8350 = vadd.f32 %v8348, %v8349
        %v8351 = vrot.slane %v8350, 1
        %v8352 = vadd.f32 %v8350, %v8351
        %v8353 = vadd.f32 %v8325, %v8327
        %v8354 = vadd.f32 %v8353, %v8329
        %v8355 = vadd.f32 %v8354, %v8331
        %v8356 = vadd.f32 %v8355, %v8333
        %v8357 = vadd.f32 %v8356, %v8335
        %v8358 = vadd.f32 %v8357, %v8337
        %v8359 = vadd.f32 %v8358, %v8339
        %v8360 = vrot.slane %v8359, 4
        %v8361 = vadd.f32 %v8359, %v8360
        %v8362 = vrot.slane %v8361, 2
        %v8363 = vadd.f32 %v8361, %v8362
        %v8364 = vrot.slane %v8363, 1
        %v8365 = vadd.f32 %v8363, %v8364
        %v8366 = vld [vmem:[#allocation4 + $0x380] sm:$0xff]
        %v8367 = vld [vmem:[#allocation4 + $0x388] sm:$0xff]
        %v8368 = vld [vmem:[#allocation4 + $0x390] sm:$0xff]
        %v8369 = vld [vmem:[#allocation4 + $0x398] sm:$0xff]
        %v8370 = vld [vmem:[#allocation4 + $0x3a0] sm:$0xff]
        %v8371 = vld [vmem:[#allocation4 + $0x3a8] sm:$0xff]
        %v8372 = vld [vmem:[#allocation4 + $0x3b0] sm:$0xff]
        %v8373 = vld [vmem:[#allocation4 + $0x3b8] sm:$0xff]
        %v8374 = vld [vmem:[#allocation4 + $0x3c0] sm:$0xff]
        %v8375 = vld [vmem:[#allocation4 + $0x3c8] sm:$0xff]
        %v8376 = vld [vmem:[#allocation4 + $0x3d0] sm:$0xff]
        %v8377 = vld [vmem:[#allocation4 + $0x3d8] sm:$0xff]
        %v8378 = vld [vmem:[#allocation4 + $0x3e0] sm:$0xff]
        %v8379 = vld [vmem:[#allocation4 + $0x3e8] sm:$0xff]
        %v8380 = vld [vmem:[#allocation4 + $0x3f0] sm:$0xff]
        %v8381 = vld [vmem:[#allocation4 + $0x3f8] sm:$0xff]
        %v8382 = vlaneseq
        %v8383 = vshrl.u32 %v8382, 7
        %v8384 = vsub.s32 7, %v8383
        %v8385 = vrot.slane %v2088, %v8384
        %v8386 = vlaneseq
        %v8387 = vshrl.u32 %v8386, 7
        %v8388 = vsub.s32 7, %v8387
        %v8389 = vrot.slane %v2092, %v8388
        %v8390 = vmul.f32 %v8366, %v8385
        %v8391 = vmul.f32 %v8367, %v8389
        %v8392 = vmul.f32 %v8368, %v8385
        %v8393 = vmul.f32 %v8369, %v8389
        %v8394 = vmul.f32 %v8370, %v8385
        %v8395 = vmul.f32 %v8371, %v8389
        %v8396 = vmul.f32 %v8372, %v8385
        %v8397 = vmul.f32 %v8373, %v8389
        %v8398 = vmul.f32 %v8374, %v8385
        %v8399 = vmul.f32 %v8375, %v8389
        %v8400 = vmul.f32 %v8376, %v8385
        %v8401 = vmul.f32 %v8377, %v8389
        %v8402 = vmul.f32 %v8378, %v8385
        %v8403 = vmul.f32 %v8379, %v8389
        %v8404 = vmul.f32 %v8380, %v8385
        %v8405 = vmul.f32 %v8381, %v8389
        %v8406 = vpack.c.bf16 %v8392, %v8390
        %v8407 = vpack.c.bf16 %v8393, %v8391
        %v8408 = vpack.c.bf16 %v8396, %v8394
        %v8409 = vpack.c.bf16 %v8397, %v8395
        %v8410 = vpack.c.bf16 %v8400, %v8398
        %v8411 = vpack.c.bf16 %v8401, %v8399
        %v8412 = vpack.c.bf16 %v8404, %v8402
        %v8413 = vpack.c.bf16 %v8405, %v8403
        %8414 = vmatprep.subr.bf16.mxu0 %v7210
        %8415 = vmatpush1.bf16.msra.mxu0 %v7209
        %8416 = vmatprep.subr.bf16.mxu0 %v7212
        %8417 = vmatpush1.bf16.msra.mxu0 %v7211
        %8418 = vmatprep.subr.bf16.mxu0 %v7214
        %8419 = vmatpush1.bf16.msra.mxu0 %v7213
        %8420 = vmatprep.subr.bf16.mxu0 %v7216
        %8421 = vmatpush1.bf16.msra.mxu0 %v7215
        %8422 = vmatprep.subr.bf16.mxu0 %v7218
        %8423 = vmatpush1.bf16.msra.mxu0 %v7217
        %8424 = vmatprep.subr.bf16.mxu0 %v7220
        %8425 = vmatpush1.bf16.msra.mxu0 %v7219
        %8426 = vmatprep.subr.bf16.mxu0 %v7222
        %8427 = vmatpush1.bf16.msra.mxu0 %v7221
        %8428 = vmatprep.subr.bf16.mxu0 %v7224
        %8429 = vmatpush1.bf16.msra.mxu0 %v7223
        %8430 = vmatprep.subr.bf16.mxu0 %v7226
        %8431 = vmatpush1.bf16.msra.mxu0 %v7225
        %8432 = vmatprep.subr.bf16.mxu0 %v7228
        %8433 = vmatpush1.bf16.msra.mxu0 %v7227
        %8434 = vmatprep.subr.bf16.mxu0 %v7230
        %8435 = vmatpush1.bf16.msra.mxu0 %v7229
        %8436 = vmatprep.subr.bf16.mxu0 %v7232
        %8437 = vmatpush1.bf16.msra.mxu0 %v7231
        %8438 = vmatprep.subr.bf16.mxu0 %v7234
        %8439 = vmatpush1.bf16.msra.mxu0 %v7233
        %8440 = vmatprep.subr.bf16.mxu0 %v7236
        %8441 = vmatpush1.bf16.msra.mxu0 %v7235
        %8442 = vmatprep.subr.bf16.mxu0 %v7238
        %8443 = vmatpush1.bf16.msra.mxu0 %v7237
        %8444 = vmatprep.subr.bf16.mxu0 %v7240
        %8445 = vmatpush1.bf16.msra.mxu0 %v7239
        %8446 = vmatprep.mubr.bf16.mxu0 %v8407
        %8447 = vmatmul.mubr.bf16.gmra.mrb[0].mxu0 %v8406
        %v8448 = vpop.f32.mrb[0].mxu0
        %v8449 = vadd.f32 0.0, %v8448
        %v8450 = vpop.f32.mrb[0].mxu0
        %v8451 = vadd.f32 0.0, %v8450
        %v8452 = vpop.f32.mrb[0].mxu0
        %v8453 = vadd.f32 0.0, %v8452
        %v8454 = vpop.f32.mrb[0].mxu0
        %v8455 = vadd.f32 0.0, %v8454
        %8456 = vmatprep.mubr.bf16.mxu0 %v8409
        %8457 = vmatmul.mubr.bf16.gmra.mrb[0].mxu0 %v8408
        %v8458 = vpop.f32.mrb[0].mxu0
        %v8459 = vadd.f32 0.0, %v8458
        %v8460 = vpop.f32.mrb[0].mxu0
        %v8461 = vadd.f32 0.0, %v8460
        %v8462 = vpop.f32.mrb[0].mxu0
        %v8463 = vadd.f32 0.0, %v8462
        %v8464 = vpop.f32.mrb[0].mxu0
        %v8465 = vadd.f32 0.0, %v8464
        %8466 = vmatprep.mubr.bf16.mxu0 %v8411
        %8467 = vmatmul.mubr.bf16.gmra.mrb[0].mxu0 %v8410
        %v8468 = vpop.f32.mrb[0].mxu0
        %v8469 = vadd.f32 0.0, %v8468
        %v8470 = vpop.f32.mrb[0].mxu0
        %v8471 = vadd.f32 0.0, %v8470
        %v8472 = vpop.f32.mrb[0].mxu0
        %v8473 = vadd.f32 0.0, %v8472
        %v8474 = vpop.f32.mrb[0].mxu0
        %v8475 = vadd.f32 0.0, %v8474
        %8476 = vmatprep.mubr.bf16.mxu0 %v8413
        %8477 = vmatmul.mubr.bf16.gmra.mrb[0].mxu0 %v8412
        %v8478 = vpop.f32.mrb[0].mxu0
        %v8479 = vadd.f32 0.0, %v8478
        %v8480 = vpop.f32.mrb[0].mxu0
        %v8481 = vadd.f32 0.0, %v8480
        %v8482 = vpop.f32.mrb[0].mxu0
        %v8483 = vadd.f32 0.0, %v8482
        %v8484 = vpop.f32.mrb[0].mxu0
        %v8485 = vadd.f32 0.0, %v8484
        %8486 = vdwg.mxu0
        %v8487 = vmul.f32 %v8449, %v2658
        %v8488 = vmul.f32 %v8451, %v2659
        %v8489 = vmul.f32 %v8453, %v2660
        %v8490 = vmul.f32 %v8455, %v2661
        %v8491 = vmul.f32 %v8459, %v2662
        %v8492 = vmul.f32 %v8461, %v2663
        %v8493 = vmul.f32 %v8463, %v2664
        %v8494 = vmul.f32 %v8465, %v2665
        %v8495 = vmul.f32 %v8469, %v2666
        %v8496 = vmul.f32 %v8471, %v2667
        %v8497 = vmul.f32 %v8473, %v2668
        %v8498 = vmul.f32 %v8475, %v2669
        %v8499 = vmul.f32 %v8479, %v2670
        %v8500 = vmul.f32 %v8481, %v2671
        %v8501 = vmul.f32 %v8483, %v2672
        %v8502 = vmul.f32 %v8485, %v2673
        %v8503 = vadd.f32 %v8487, %v8489
        %v8504 = vadd.f32 %v8503, %v8491
        %v8505 = vadd.f32 %v8504, %v8493
        %v8506 = vadd.f32 %v8505, %v8495
        %v8507 = vadd.f32 %v8506, %v8497
        %v8508 = vadd.f32 %v8507, %v8499
        %v8509 = vadd.f32 %v8508, %v8501
        %v8510 = vrot.slane %v8509, 4
        %v8511 = vadd.f32 %v8509, %v8510
        %v8512 = vrot.slane %v8511, 2
        %v8513 = vadd.f32 %v8511, %v8512
        %v8514 = vrot.slane %v8513, 1
        %v8515 = vadd.f32 %v8513, %v8514
        %v8516 = vadd.f32 %v8488, %v8490
        %v8517 = vadd.f32 %v8516, %v8492
        %v8518 = vadd.f32 %v8517, %v8494
        %v8519 = vadd.f32 %v8518, %v8496
        %v8520 = vadd.f32 %v8519, %v8498
        %v8521 = vadd.f32 %v8520, %v8500
        %v8522 = vadd.f32 %v8521, %v8502
        %v8523 = vrot.slane %v8522, 4
        %v8524 = vadd.f32 %v8522, %v8523
        %v8525 = vrot.slane %v8524, 2
        %v8526 = vadd.f32 %v8524, %v8525
        %v8527 = vrot.slane %v8526, 1
        %v8528 = vadd.f32 %v8526, %v8527
        %vm8529 = vcmask 1040384
        %v8530 = vsel %vm8529, %v7374, %v7537
        %v8531 = vsel %vm8529, %v7387, %v7550
        %vm8532 = vcmask 1041408
        %v8533 = vsel %vm8532, %v8530, %v7700
        %v8534 = vsel %vm8532, %v8531, %v7713
        %vm8535 = vcmask 1042432
        %v8536 = vsel %vm8535, %v8533, %v7863
        %v8537 = vsel %vm8535, %v8534, %v7876
        %vm8538 = vcmask 1043456
        %v8539 = vsel %vm8538, %v8536, %v8026
        %v8540 = vsel %vm8538, %v8537, %v8039
        %vm8541 = vcmask 1044480
        %v8542 = vsel %vm8541, %v8539, %v8189
        %v8543 = vsel %vm8541, %v8540, %v8202
        %vm8544 = vcmask 1045504
        %v8545 = vsel %vm8544, %v8542, %v8352
        %v8546 = vsel %vm8544, %v8543, %v8365
        %vm8547 = vcmask 1046528
        %v8548 = vsel %vm8547, %v8545, %v8515
        %v8549 = vsel %vm8547, %v8546, %v8528
        %v8550 = vmul.f32 %v8548, %v667
        %v8551 = vmul.f32 %v8549, %v667
        %8552 = vadd.xlane.f32.xlu0 %v8550
        %v8553 = vpop.xlane.xlu0 %8552
        %8554 = vadd.xlane.f32.xlu0 %v8551
        %v8555 = vpop.xlane.xlu0 %8554
        %v8556 = vmul.f32 %v667, %v8553
        %v8557 = vmul.f32 %v667, %v8555
        %v8558 = vadd.f32 %v8556, 0.0
        %v8559 = vadd.f32 %v8557, 0.0
        %v8560 = vmul.f32 %v8548, %v672
        %v8561 = vmul.f32 %v8549, %v672
        %8562 = vadd.xlane.f32.xlu0 %v8560
        %v8563 = vpop.xlane.xlu0 %8562
        %8564 = vadd.xlane.f32.xlu0 %v8561
        %v8565 = vpop.xlane.xlu0 %8564
        %v8566 = vmul.f32 %v672, %v8563
        %v8567 = vmul.f32 %v672, %v8565
        %v8568 = vadd.f32 %v8558, %v8566
        %v8569 = vadd.f32 %v8559, %v8567
        %v8570 = vmul.f32 %v8568, 0.015625
        %v8571 = vmul.f32 %v8569, 0.015625
        %v8572 = vsub.f32 %v8548, %v8570
        %v8573 = vsub.f32 %v8549, %v8571
        %v8574 = vmul.f32 %v8572, %v8572
        %v8575 = vmul.f32 %v8573, %v8573
        %v8576 = vmul.f32 %v8574, %v667
        %v8577 = vmul.f32 %v8575, %v667
        %8578 = vadd.xlane.f32.xlu0 %v8576
        %v8579 = vpop.xlane.xlu0 %8578
        %8580 = vadd.xlane.f32.xlu0 %v8577
        %v8581 = vpop.xlane.xlu0 %8580
        %v8582 = vmul.f32 %v667, %v8579
        %v8583 = vmul.f32 %v667, %v8581
        %v8584 = vadd.f32 %v8582, 0.0
        %v8585 = vadd.f32 %v8583, 0.0
        %v8586 = vmul.f32 %v8574, %v672
        %v8587 = vmul.f32 %v8575, %v672
        %8588 = vadd.xlane.f32.xlu0 %v8586
        %v8589 = vpop.xlane.xlu0 %8588
        %8590 = vadd.xlane.f32.xlu0 %v8587
        %v8591 = vpop.xlane.xlu0 %8590
        %v8592 = vmul.f32 %v672, %v8589
        %v8593 = vmul.f32 %v672, %v8591
        %v8594 = vadd.f32 %v8584, %v8592
        %v8595 = vadd.f32 %v8585, %v8593
        %v8596 = vmul.f32 %v8594, 0.015625
        %v8597 = vmul.f32 %v8595, 0.015625
        %v8598 = vadd.f32 %v8596, 0.00064
        %v8599 = vadd.f32 %v8597, 0.00064
        %v8600 = vrsqrt.pop %v8598
        %v8601 = vrsqrt.pop %v8599
        %v8602 = vmul.f32 %v8572, %v8600
        %v8603 = vmul.f32 %v8573, %v8601
        %v8604 = vlaneseq
        %v8605 = vshrl.u32 %v8604, 7
        %v8606 = vsub.s32 5, %v8605
        %v8607 = vrot.slane %v674, %v8606
        %v8608 = vmul.f32 %v8602, %v8607
        %v8609 = vmul.f32 %v8603, %v8607
        %v8610 = vlaneseq
        %v8611 = vshrl.u32 %v8610, 7
        %v8612 = vsub.s32 6, %v8611
        %v8613 = vrot.slane %v674, %v8612
        %v8614 = vadd.f32 %v8608, %v8613
        %v8615 = vadd.f32 %v8609, %v8613
        %v8616 = vmul.f32 %v2088, %v2652
        %v8617 = vmul.f32 %v2092, %v2653
        %v8618 = vlaneseq
        %v8619 = vshrl.u32 %v8618, 7
        %v8620 = vsub.s32 4, %v8619
        %v8621 = vrot.slane %v674, %v8620
        %v8622 = vmul.f32 %v8616, %v8621
        %v8623 = vmul.f32 %v8617, %v8621
        %v8624 = vmul.f32 %v8622, %v667
        %v8625 = vmul.f32 %v8623, %v667
        %8626 = vadd.xlane.f32.xlu0 %v8624
        %v8627 = vpop.xlane.xlu0 %8626
        %8628 = vadd.xlane.f32.xlu0 %v8625
        %v8629 = vpop.xlane.xlu0 %8628
        %v8630 = vmul.f32 %v667, %v8627
        %v8631 = vmul.f32 %v667, %v8629
        %v8632 = vadd.f32 %v8630, 0.0
        %v8633 = vadd.f32 %v8631, 0.0
        %v8634 = vmul.f32 %v8622, %v672
        %v8635 = vmul.f32 %v8623, %v672
        %8636 = vadd.xlane.f32.xlu0 %v8634
        %v8637 = vpop.xlane.xlu0 %8636
        %8638 = vadd.xlane.f32.xlu0 %v8635
        %v8639 = vpop.xlane.xlu0 %8638
        %v8640 = vmul.f32 %v672, %v8637
        %v8641 = vmul.f32 %v672, %v8639
        %v8642 = vadd.f32 %v8632, %v8640
        %v8643 = vadd.f32 %v8633, %v8641
        %v8644 = vmul.f32 %v8642, %v2606
        %v8645 = vmul.f32 %v8643, %v2607
        %v8646 = vadd.f32 %v8614, %v8644
        %v8647 = vadd.f32 %v8615, %v8645
        %v8648 = vmul.f32 %v8646, %v2517
        %v8649 = vmul.f32 %v8647, %v2521
        %v8650 = vld [vmem:[%s572] sm:$0xf]
        %v8651 = vld [vmem:[%s572 + $0x4] sm:$0xf]
        %v8652 = vld [vmem:[%s572 + $0x8] sm:$0xf]
        %v8653 = vld [vmem:[%s572 + $0xc] sm:$0xf]
        %v8654 = vld [vmem:[%s572 + $0x10] sm:$0xf]
        %v8655 = vld [vmem:[%s572 + $0x14] sm:$0xf]
        %v8656 = vld [vmem:[%s572 + $0x18] sm:$0xf]
        %v8657 = vld [vmem:[%s572 + $0x1c] sm:$0xf]
        %v8658 = vld [vmem:[%s572 + $0x20] sm:$0xf]
        %v8659 = vld [vmem:[%s572 + $0x24] sm:$0xf]
        %v8660 = vld [vmem:[%s572 + $0x28] sm:$0xf]
        %v8661 = vld [vmem:[%s572 + $0x2c] sm:$0xf]
        %v8662 = vld [vmem:[%s572 + $0x30] sm:$0xf]
        %v8663 = vld [vmem:[%s572 + $0x34] sm:$0xf]
        %v8664 = vld [vmem:[%s572 + $0x38] sm:$0xf]
        %v8665 = vld [vmem:[%s572 + $0x3c] sm:$0xf]
        %v8666 = vpack.c.bf16 %v8649, %v8648
        %v8683 = vunpack.c.l.b16 %v8650
        %v8684 = vunpack.c.l.b16 %v8651
        %v8685 = vunpack.c.l.b16 %v8652
        %v8686 = vunpack.c.l.b16 %v8653
        %v8687 = vunpack.c.l.b16 %v8654
        %v8688 = vunpack.c.l.b16 %v8655
        %v8689 = vunpack.c.l.b16 %v8656
        %v8690 = vunpack.c.l.b16 %v8657
        %v8691 = vunpack.c.l.b16 %v8658
        %v8692 = vunpack.c.l.b16 %v8659
        %v8693 = vunpack.c.l.b16 %v8660
        %v8694 = vunpack.c.l.b16 %v8661
        %v8695 = vunpack.c.l.b16 %v8662
        %v8696 = vunpack.c.l.b16 %v8663
        %v8697 = vunpack.c.l.b16 %v8664
        %v8698 = vunpack.c.l.b16 %v8665
        %v8699 = vpack.c.b16 %v8684, %v8683
        %v8700 = vpack.c.b16 %v8686, %v8685
        %v8701 = vpack.c.b16 %v8688, %v8687
        %v8702 = vpack.c.b16 %v8690, %v8689
        %v8703 = vpack.c.b16 %v8692, %v8691
        %v8704 = vpack.c.b16 %v8694, %v8693
        %v8705 = vpack.c.b16 %v8696, %v8695
        %v8706 = vpack.c.b16 %v8698, %v8697
        %8715 = vmatprep.subr.bf16.mxu0 0
        %8716 = vmatpush1.bf16.msra.mxu0 %v8699
        %8717 = vmatprep.subr.bf16.mxu0 0
        %8718 = vmatpush1.bf16.msra.mxu0 %v8700
        %8719 = vmatprep.subr.bf16.mxu0 0
        %8720 = vmatpush1.bf16.msra.mxu0 %v8701
        %8721 = vmatprep.subr.bf16.mxu0 0
        %8722 = vmatpush1.bf16.msra.mxu0 %v8702
        %8723 = vmatprep.subr.bf16.mxu0 0
        %8724 = vmatpush1.bf16.msra.mxu0 %v8703
        %8725 = vmatprep.subr.bf16.mxu0 0
        %8726 = vmatpush1.bf16.msra.mxu0 %v8704
        %8727 = vmatprep.subr.bf16.mxu0 0
        %8728 = vmatpush1.bf16.msra.mxu0 %v8705
        %8729 = vmatprep.subr.bf16.mxu0 0
        %8730 = vmatpush1.bf16.msra.mxu0 %v8706
        %8731 = vmatprep.subr.bf16.mxu0 0
        %8732 = vmatpush1.bf16.msra.mxu0 0
        %8733 = vmatprep.subr.bf16.mxu0 0
        %8734 = vmatpush1.bf16.msra.mxu0 0
        %8735 = vmatprep.subr.bf16.mxu0 0
        %8736 = vmatpush1.bf16.msra.mxu0 0
        %8737 = vmatprep.subr.bf16.mxu0 0
        %8738 = vmatpush1.bf16.msra.mxu0 0
        %8739 = vmatprep.subr.bf16.mxu0 0
        %8740 = vmatpush1.bf16.msra.mxu0 0
        %8741 = vmatprep.subr.bf16.mxu0 0
        %8742 = vmatpush1.bf16.msra.mxu0 0
        %8743 = vmatprep.subr.bf16.mxu0 0
        %8744 = vmatpush1.bf16.msra.mxu0 0
        %8745 = vmatprep.subr.bf16.mxu0 0
        %8746 = vmatpush1.bf16.msra.mxu0 0
        %8747 = vmatprep.mubr.bf16.mxu0 0
        %8748 = vmatmul.mubr.bf16.gmra.mrb[0].mxu0 %v8666
        %v8749 = vpop.f32.mrb[0].mxu0
        %v8750 = vadd.f32 0.0, %v8749
        %v8751 = vpop.f32.mrb[0].mxu0
        %v8752 = vpop.f32.mrb[0].mxu0
        %v8753 = vadd.f32 0.0, %v8752
        %v8754 = vpop.f32.mrb[0].mxu0
        %8755 = vdwg.mxu0
        %v8756 = vadd.f32 %v682, %v8750
        %v8757 = vadd.f32 %v683, %v8753
        %v8758 = vmul.f32 %v8756, %v8756
        %v8759 = vmul.f32 %v8757, %v8757
        %8760 = vadd.xlane.f32.xlu0 %v8758
        %v8761 = vpop.xlane.xlu0 %8760
        %8762 = vadd.xlane.f32.xlu0 %v8759
        %v8763 = vpop.xlane.xlu0 %8762
        %v8764 = vmul.f32 %v8761, %v692
        %v8765 = vmul.f32 %v8763, %v692
        %v8766 = vadd.f32 %v8764, 1e-06
        %v8767 = vadd.f32 %v8765, 1e-06
        %v8768 = vrsqrt.pop %v8766
        %v8769 = vrsqrt.pop %v8767
        %v8770 = vmul.f32 %v8756, %v8768
        %v8771 = vmul.f32 %v8757, %v8769
        %v8772 = vlaneseq
        %v8773 = vshrl.u32 %v8772, 7
        %v8774 = vsub.s32 7, %v8773
        %v8775 = vrot.slane %v674, %v8774
        %v8776 = vmul.f32 %v8770, %v8775
        %v8777 = vmul.f32 %v8771, %v8775
        %v8778 = vld [vmem:[%s581] sm:$0xff]
        %v8779 = vld [vmem:[%s581 + $0x8] sm:$0xff]
        %v8780 = vld [vmem:[%s581 + $0x10] sm:$0xff]
        %v8781 = vld [vmem:[%s581 + $0x18] sm:$0xff]
        %v8782 = vld [vmem:[%s581 + $0x20] sm:$0xff]
        %v8783 = vld [vmem:[%s581 + $0x28] sm:$0xff]
        %v8784 = vld [vmem:[%s581 + $0x30] sm:$0xff]
        %v8785 = vld [vmem:[%s581 + $0x38] sm:$0xff]
        %v8786 = vld [vmem:[%s581 + $0x40] sm:$0xff]
        %v8787 = vld [vmem:[%s581 + $0x48] sm:$0xff]
        %v8788 = vld [vmem:[%s581 + $0x50] sm:$0xff]
        %v8789 = vld [vmem:[%s581 + $0x58] sm:$0xff]
        %v8790 = vld [vmem:[%s581 + $0x60] sm:$0xff]
        %v8791 = vld [vmem:[%s581 + $0x68] sm:$0xff]
        %v8792 = vld [vmem:[%s581 + $0x70] sm:$0xff]
        %v8793 = vld [vmem:[%s581 + $0x78] sm:$0xff]
        %v8794 = vld [vmem:[%s581 + $0x80] sm:$0xff]
        %v8795 = vld [vmem:[%s581 + $0x88] sm:$0xff]
        %v8796 = vld [vmem:[%s581 + $0x90] sm:$0xff]
        %v8797 = vld [vmem:[%s581 + $0x98] sm:$0xff]
        %v8798 = vld [vmem:[%s581 + $0xa0] sm:$0xff]
        %v8799 = vld [vmem:[%s581 + $0xa8] sm:$0xff]
        %v8800 = vld [vmem:[%s581 + $0xb0] sm:$0xff]
        %v8801 = vld [vmem:[%s581 + $0xb8] sm:$0xff]
        %v8802 = vld [vmem:[%s581 + $0xc0] sm:$0xff]
        %v8803 = vld [vmem:[%s581 + $0xc8] sm:$0xff]
        %v8804 = vld [vmem:[%s581 + $0xd0] sm:$0xff]
        %v8805 = vld [vmem:[%s581 + $0xd8] sm:$0xff]
        %v8806 = vld [vmem:[%s581 + $0xe0] sm:$0xff]
        %v8807 = vld [vmem:[%s581 + $0xe8] sm:$0xff]
        %v8808 = vld [vmem:[%s581 + $0xf0] sm:$0xff]
        %v8809 = vld [vmem:[%s581 + $0xf8] sm:$0xff]
        %v8810 = vpack.c.bf16 %v8777, %v8776
        %v8843 = vunpack.c.l.b16 %v8778
        %v8844 = vunpack.c.h.b16 %v8778
        %v8845 = vunpack.c.l.b16 %v8779
        %v8846 = vunpack.c.h.b16 %v8779
        %v8847 = vunpack.c.l.b16 %v8780
        %v8848 = vunpack.c.h.b16 %v8780
        %v8849 = vunpack.c.l.b16 %v8781
        %v8850 = vunpack.c.h.b16 %v8781
        %v8851 = vunpack.c.l.b16 %v8782
        %v8852 = vunpack.c.h.b16 %v8782
        %v8853 = vunpack.c.l.b16 %v8783
        %v8854 = vunpack.c.h.b16 %v8783
        %v8855 = vunpack.c.l.b16 %v8784
        %v8856 = vunpack.c.h.b16 %v8784
        %v8857 = vunpack.c.l.b16 %v8785
        %v8858 = vunpack.c.h.b16 %v8785
        %v8859 = vunpack.c.l.b16 %v8786
        %v8860 = vunpack.c.h.b16 %v8786
        %v8861 = vunpack.c.l.b16 %v8787
        %v8862 = vunpack.c.h.b16 %v8787
        %v8863 = vunpack.c.l.b16 %v8788
        %v8864 = vunpack.c.h.b16 %v8788
        %v8865 = vunpack.c.l.b16 %v8789
        %v8866 = vunpack.c.h.b16 %v8789
        %v8867 = vunpack.c.l.b16 %v8790
        %v8868 = vunpack.c.h.b16 %v8790
        %v8869 = vunpack.c.l.b16 %v8791
        %v8870 = vunpack.c.h.b16 %v8791
        %v8871 = vunpack.c.l.b16 %v8792
        %v8872 = vunpack.c.h.b16 %v8792
        %v8873 = vunpack.c.l.b16 %v8793
        %v8874 = vunpack.c.h.b16 %v8793
        %v8875 = vunpack.c.l.b16 %v8794
        %v8876 = vunpack.c.h.b16 %v8794
        %v8877 = vunpack.c.l.b16 %v8795
        %v8878 = vunpack.c.h.b16 %v8795
        %v8879 = vunpack.c.l.b16 %v8796
        %v8880 = vunpack.c.h.b16 %v8796
        %v8881 = vunpack.c.l.b16 %v8797
        %v8882 = vunpack.c.h.b16 %v8797
        %v8883 = vunpack.c.l.b16 %v8798
        %v8884 = vunpack.c.h.b16 %v8798
        %v8885 = vunpack.c.l.b16 %v8799
        %v8886 = vunpack.c.h.b16 %v8799
        %v8887 = vunpack.c.l.b16 %v8800
        %v8888 = vunpack.c.h.b16 %v8800
        %v8889 = vunpack.c.l.b16 %v8801
        %v8890 = vunpack.c.h.b16 %v8801
        %v8891 = vunpack.c.l.b16 %v8802
        %v8892 = vunpack.c.h.b16 %v8802
        %v8893 = vunpack.c.l.b16 %v8803
        %v8894 = vunpack.c.h.b16 %v8803
        %v8895 = vunpack.c.l.b16 %v8804
        %v8896 = vunpack.c.h.b16 %v8804
        %v8897 = vunpack.c.l.b16 %v8805
        %v8898 = vunpack.c.h.b16 %v8805
        %v8899 = vunpack.c.l.b16 %v8806
        %v8900 = vunpack.c.h.b16 %v8806
        %v8901 = vunpack.c.l.b16 %v8807
        %v8902 = vunpack.c.h.b16 %v8807
        %v8903 = vunpack.c.l.b16 %v8808
        %v8904 = vunpack.c.h.b16 %v8808
        %v8905 = vunpack.c.l.b16 %v8809
        %v8906 = vunpack.c.h.b16 %v8809
        %v8907 = vpack.c.b16 %v8847, %v8843
        %v8908 = vpack.c.b16 %v8848, %v8844
        %v8909 = vpack.c.b16 %v8849, %v8845
        %v8910 = vpack.c.b16 %v8850, %v8846
        %v8911 = vpack.c.b16 %v8855, %v8851
        %v8912 = vpack.c.b16 %v8856, %v8852
        %v8913 = vpack.c.b16 %v8857, %v8853
        %v8914 = vpack.c.b16 %v8858, %v8854
        %v8915 = vpack.c.b16 %v8863, %v8859
        %v8916 = vpack.c.b16 %v8864, %v8860
        %v8917 = vpack.c.b16 %v8865, %v8861
        %v8918 = vpack.c.b16 %v8866, %v8862
        %v8919 = vpack.c.b16 %v8871, %v8867
        %v8920 = vpack.c.b16 %v8872, %v8868
        %v8921 = vpack.c.b16 %v8873, %v8869
        %v8922 = vpack.c.b16 %v8874, %v8870
        %v8923 = vpack.c.b16 %v8879, %v8875
        %v8924 = vpack.c.b16 %v8880, %v8876
        %v8925 = vpack.c.b16 %v8881, %v8877
        %v8926 = vpack.c.b16 %v8882, %v8878
        %v8927 = vpack.c.b16 %v8887, %v8883
        %v8928 = vpack.c.b16 %v8888, %v8884
        %v8929 = vpack.c.b16 %v8889, %v8885
        %v8930 = vpack.c.b16 %v8890, %v8886
        %v8931 = vpack.c.b16 %v8895, %v8891
        %v8932 = vpack.c.b16 %v8896, %v8892
        %v8933 = vpack.c.b16 %v8897, %v8893
        %v8934 = vpack.c.b16 %v8898, %v8894
        %v8935 = vpack.c.b16 %v8903, %v8899
        %v8936 = vpack.c.b16 %v8904, %v8900
        %v8937 = vpack.c.b16 %v8905, %v8901
        %v8938 = vpack.c.b16 %v8906, %v8902
        %8971 = vmatprep.subr.bf16.mxu0 %v8908
        %8972 = vmatpush1.bf16.msra.mxu0 %v8907
        %8973 = vmatprep.subr.bf16.mxu0 %v8912
        %8974 = vmatpush1.bf16.msra.mxu0 %v8911
        %8975 = vmatprep.subr.bf16.mxu0 %v8916
        %8976 = vmatpush1.bf16.msra.mxu0 %v8915
        %8977 = vmatprep.subr.bf16.mxu0 %v8920
        %8978 = vmatpush1.bf16.msra.mxu0 %v8919
        %8979 = vmatprep.subr.bf16.mxu0 %v8924
        %8980 = vmatpush1.bf16.msra.mxu0 %v8923
        %8981 = vmatprep.subr.bf16.mxu0 %v8928
        %8982 = vmatpush1.bf16.msra.mxu0 %v8927
        %8983 = vmatprep.subr.bf16.mxu0 %v8932
        %8984 = vmatpush1.bf16.msra.mxu0 %v8931
        %8985 = vmatprep.subr.bf16.mxu0 %v8936
        %8986 = vmatpush1.bf16.msra.mxu0 %v8935
        %8987 = vmatprep.subr.bf16.mxu0 0
        %8988 = vmatpush1.bf16.msra.mxu0 0
        %8989 = vmatprep.subr.bf16.mxu0 0
        %8990 = vmatpush1.bf16.msra.mxu0 0
        %8991 = vmatprep.subr.bf16.mxu0 0
        %8992 = vmatpush1.bf16.msra.mxu0 0
        %8993 = vmatprep.subr.bf16.mxu0 0
        %8994 = vmatpush1.bf16.msra.mxu0 0
        %8995 = vmatprep.subr.bf16.mxu0 0
        %8996 = vmatpush1.bf16.msra.mxu0 0
        %8997 = vmatprep.subr.bf16.mxu0 0
        %8998 = vmatpush1.bf16.msra.mxu0 0
        %8999 = vmatprep.subr.bf16.mxu0 0
        %9000 = vmatpush1.bf16.msra.mxu0 0
        %9001 = vmatprep.subr.bf16.mxu0 0
        %9002 = vmatpush1.bf16.msra.mxu0 0
        %9003 = vmatprep.mubr.bf16.mxu0 0
        %9004 = vmatmul.mubr.bf16.gmra.mrb[0].mxu0 %v8810
        %v9005 = vpop.f32.mrb[0].mxu0
        %v9006 = vadd.f32 0.0, %v9005
        %v9007 = vpop.f32.mrb[0].mxu0
        %v9008 = vadd.f32 0.0, %v9007
        %v9009 = vpop.f32.mrb[0].mxu0
        %v9010 = vadd.f32 0.0, %v9009
        %v9011 = vpop.f32.mrb[0].mxu0
        %v9012 = vadd.f32 0.0, %v9011
        %9013 = vdwg.mxu0
        %9014 = vmatprep.subr.bf16.mxu0 %v8910
        %9015 = vmatpush1.bf16.msra.mxu0 %v8909
        %9016 = vmatprep.subr.bf16.mxu0 %v8914
        %9017 = vmatpush1.bf16.msra.mxu0 %v8913
        %9018 = vmatprep.subr.bf16.mxu0 %v8918
        %9019 = vmatpush1.bf16.msra.mxu0 %v8917
        %9020 = vmatprep.subr.bf16.mxu0 %v8922
        %9021 = vmatpush1.bf16.msra.mxu0 %v8921
        %9022 = vmatprep.subr.bf16.mxu0 %v8926
        %9023 = vmatpush1.bf16.msra.mxu0 %v8925
        %9024 = vmatprep.subr.bf16.mxu0 %v8930
        %9025 = vmatpush1.bf16.msra.mxu0 %v8929
        %9026 = vmatprep.subr.bf16.mxu0 %v8934
        %9027 = vmatpush1.bf16.msra.mxu0 %v8933
        %9028 = vmatprep.subr.bf16.mxu0 %v8938
        %9029 = vmatpush1.bf16.msra.mxu0 %v8937
        %9030 = vmatprep.subr.bf16.mxu0 0
        %9031 = vmatpush1.bf16.msra.mxu0 0
        %9032 = vmatprep.subr.bf16.mxu0 0
        %9033 = vmatpush1.bf16.msra.mxu0 0
        %9034 = vmatprep.subr.bf16.mxu0 0
        %9035 = vmatpush1.bf16.msra.mxu0 0
        %9036 = vmatprep.subr.bf16.mxu0 0
        %9037 = vmatpush1.bf16.msra.mxu0 0
        %9038 = vmatprep.subr.bf16.mxu0 0
        %9039 = vmatpush1.bf16.msra.mxu0 0
        %9040 = vmatprep.subr.bf16.mxu0 0
        %9041 = vmatpush1.bf16.msra.mxu0 0
        %9042 = vmatprep.subr.bf16.mxu0 0
        %9043 = vmatpush1.bf16.msra.mxu0 0
        %9044 = vmatprep.subr.bf16.mxu0 0
        %9045 = vmatpush1.bf16.msra.mxu0 0
        %9046 = vmatprep.mubr.bf16.mxu0 0
        %9047 = vmatmul.mubr.bf16.gmra.mrb[0].mxu0 %v8810
        %v9048 = vpop.f32.mrb[0].mxu0
        %v9049 = vadd.f32 0.0, %v9048
        %v9050 = vpop.f32.mrb[0].mxu0
        %v9051 = vadd.f32 0.0, %v9050
        %v9052 = vpop.f32.mrb[0].mxu0
        %v9053 = vadd.f32 0.0, %v9052
        %v9054 = vpop.f32.mrb[0].mxu0
        %v9055 = vadd.f32 0.0, %v9054
        %9056 = vdwg.mxu0
        %v9057 = vsub.f32 0.0, %v9006
        %v9058 = vsub.f32 0.0, %v9008
        %v9059 = vsub.f32 0.0, %v9010
        %v9060 = vsub.f32 0.0, %v9012
        %v9061 = vmul.f32 %v9057, 1.442695
        %v9062 = vpow.pop %v9061
        %v9063 = vmul.f32 %v9058, 1.442695
        %v9064 = vpow.pop %v9063
        %v9065 = vmul.f32 %v9059, 1.442695
        %v9066 = vpow.pop %v9065
        %v9067 = vmul.f32 %v9060, 1.442695
        %v9068 = vpow.pop %v9067
        %v9069 = vadd.f32 %v9062, 1.0
        %v9070 = vadd.f32 %v9064, 1.0
        %v9071 = vadd.f32 %v9066, 1.0
        %v9072 = vadd.f32 %v9068, 1.0
        %v9073 = vrcp.pop %v9069
        %v9074 = vrcp.pop %v9070
        %v9075 = vrcp.pop %v9071
        %v9076 = vrcp.pop %v9072
        %v9077 = vmul.f32 %v9006, %v9073
        %v9078 = vmul.f32 %v9008, %v9074
        %v9079 = vmul.f32 %v9010, %v9075
        %v9080 = vmul.f32 %v9012, %v9076
        %v9081 = vmul.f32 %v9077, %v9049
        %v9082 = vmul.f32 %v9078, %v9051
        %v9083 = vmul.f32 %v9079, %v9053
        %v9084 = vmul.f32 %v9080, %v9055
        %v9085 = vld [vmem:[%s590] sm:$0xf]
        %v9086 = vld [vmem:[%s590 + $0x4] sm:$0xf]
        %v9087 = vld [vmem:[%s590 + $0x8] sm:$0xf]
        %v9088 = vld [vmem:[%s590 + $0xc] sm:$0xf]
        %v9089 = vld [vmem:[%s590 + $0x10] sm:$0xf]
        %v9090 = vld [vmem:[%s590 + $0x14] sm:$0xf]
        %v9091 = vld [vmem:[%s590 + $0x18] sm:$0xf]
        %v9092 = vld [vmem:[%s590 + $0x1c] sm:$0xf]
        %v9093 = vld [vmem:[%s590 + $0x20] sm:$0xf]
        %v9094 = vld [vmem:[%s590 + $0x24] sm:$0xf]
        %v9095 = vld [vmem:[%s590 + $0x28] sm:$0xf]
        %v9096 = vld [vmem:[%s590 + $0x2c] sm:$0xf]
        %v9097 = vld [vmem:[%s590 + $0x30] sm:$0xf]
        %v9098 = vld [vmem:[%s590 + $0x34] sm:$0xf]
        %v9099 = vld [vmem:[%s590 + $0x38] sm:$0xf]
        %v9100 = vld [vmem:[%s590 + $0x3c] sm:$0xf]
        %v9101 = vld [vmem:[%s590 + $0x40] sm:$0xf]
        %v9102 = vld [vmem:[%s590 + $0x44] sm:$0xf]
        %v9103 = vld [vmem:[%s590 + $0x48] sm:$0xf]
        %v9104 = vld [vmem:[%s590 + $0x4c] sm:$0xf]
        %v9105 = vld [vmem:[%s590 + $0x50] sm:$0xf]
        %v9106 = vld [vmem:[%s590 + $0x54] sm:$0xf]
        %v9107 = vld [vmem:[%s590 + $0x58] sm:$0xf]
        %v9108 = vld [vmem:[%s590 + $0x5c] sm:$0xf]
        %v9109 = vld [vmem:[%s590 + $0x60] sm:$0xf]
        %v9110 = vld [vmem:[%s590 + $0x64] sm:$0xf]
        %v9111 = vld [vmem:[%s590 + $0x68] sm:$0xf]
        %v9112 = vld [vmem:[%s590 + $0x6c] sm:$0xf]
        %v9113 = vld [vmem:[%s590 + $0x70] sm:$0xf]
        %v9114 = vld [vmem:[%s590 + $0x74] sm:$0xf]
        %v9115 = vld [vmem:[%s590 + $0x78] sm:$0xf]
        %v9116 = vld [vmem:[%s590 + $0x7c] sm:$0xf]
        %v9117 = vpack.c.bf16 %v9083, %v9081
        %v9118 = vpack.c.bf16 %v9084, %v9082
        %v9151 = vunpack.c.l.b16 %v9085
        %v9152 = vunpack.c.l.b16 %v9086
        %v9153 = vunpack.c.l.b16 %v9087
        %v9154 = vunpack.c.l.b16 %v9088
        %v9155 = vunpack.c.l.b16 %v9089
        %v9156 = vunpack.c.l.b16 %v9090
        %v9157 = vunpack.c.l.b16 %v9091
        %v9158 = vunpack.c.l.b16 %v9092
        %v9159 = vunpack.c.l.b16 %v9093
        %v9160 = vunpack.c.l.b16 %v9094
        %v9161 = vunpack.c.l.b16 %v9095
        %v9162 = vunpack.c.l.b16 %v9096
        %v9163 = vunpack.c.l.b16 %v9097
        %v9164 = vunpack.c.l.b16 %v9098
        %v9165 = vunpack.c.l.b16 %v9099
        %v9166 = vunpack.c.l.b16 %v9100
        %v9167 = vunpack.c.l.b16 %v9101
        %v9168 = vunpack.c.l.b16 %v9102
        %v9169 = vunpack.c.l.b16 %v9103
        %v9170 = vunpack.c.l.b16 %v9104
        %v9171 = vunpack.c.l.b16 %v9105
        %v9172 = vunpack.c.l.b16 %v9106
        %v9173 = vunpack.c.l.b16 %v9107
        %v9174 = vunpack.c.l.b16 %v9108
        %v9175 = vunpack.c.l.b16 %v9109
        %v9176 = vunpack.c.l.b16 %v9110
        %v9177 = vunpack.c.l.b16 %v9111
        %v9178 = vunpack.c.l.b16 %v9112
        %v9179 = vunpack.c.l.b16 %v9113
        %v9180 = vunpack.c.l.b16 %v9114
        %v9181 = vunpack.c.l.b16 %v9115
        %v9182 = vunpack.c.l.b16 %v9116
        %v9183 = vpack.c.b16 %v9152, %v9151
        %v9184 = vpack.c.b16 %v9154, %v9153
        %v9185 = vpack.c.b16 %v9156, %v9155
        %v9186 = vpack.c.b16 %v9158, %v9157
        %v9187 = vpack.c.b16 %v9160, %v9159
        %v9188 = vpack.c.b16 %v9162, %v9161
        %v9189 = vpack.c.b16 %v9164, %v9163
        %v9190 = vpack.c.b16 %v9166, %v9165
        %v9191 = vpack.c.b16 %v9168, %v9167
        %v9192 = vpack.c.b16 %v9170, %v9169
        %v9193 = vpack.c.b16 %v9172, %v9171
        %v9194 = vpack.c.b16 %v9174, %v9173
        %v9195 = vpack.c.b16 %v9176, %v9175
        %v9196 = vpack.c.b16 %v9178, %v9177
        %v9197 = vpack.c.b16 %v9180, %v9179
        %v9198 = vpack.c.b16 %v9182, %v9181
        %9215 = vmatprep.subr.bf16.mxu0 0
        %9216 = vmatpush1.bf16.msra.mxu0 %v9183
        %9217 = vmatprep.subr.bf16.mxu0 0
        %9218 = vmatpush1.bf16.msra.mxu0 %v9184
        %9219 = vmatprep.subr.bf16.mxu0 0
        %9220 = vmatpush1.bf16.msra.mxu0 %v9185
        %9221 = vmatprep.subr.bf16.mxu0 0
        %9222 = vmatpush1.bf16.msra.mxu0 %v9186
        %9223 = vmatprep.subr.bf16.mxu0 0
        %9224 = vmatpush1.bf16.msra.mxu0 %v9187
        %9225 = vmatprep.subr.bf16.mxu0 0
        %9226 = vmatpush1.bf16.msra.mxu0 %v9188
        %9227 = vmatprep.subr.bf16.mxu0 0
        %9228 = vmatpush1.bf16.msra.mxu0 %v9189
        %9229 = vmatprep.subr.bf16.mxu0 0
        %9230 = vmatpush1.bf16.msra.mxu0 %v9190
        %9231 = vmatprep.subr.bf16.mxu0 0
        %9232 = vmatpush1.bf16.msra.mxu0 %v9191
        %9233 = vmatprep.subr.bf16.mxu0 0
        %9234 = vmatpush1.bf16.msra.mxu0 %v9192
        %9235 = vmatprep.subr.bf16.mxu0 0
        %9236 = vmatpush1.bf16.msra.mxu0 %v9193
        %9237 = vmatprep.subr.bf16.mxu0 0
        %9238 = vmatpush1.bf16.msra.mxu0 %v9194
        %9239 = vmatprep.subr.bf16.mxu0 0
        %9240 = vmatpush1.bf16.msra.mxu0 %v9195
        %9241 = vmatprep.subr.bf16.mxu0 0
        %9242 = vmatpush1.bf16.msra.mxu0 %v9196
        %9243 = vmatprep.subr.bf16.mxu0 0
        %9244 = vmatpush1.bf16.msra.mxu0 %v9197
        %9245 = vmatprep.subr.bf16.mxu0 0
        %9246 = vmatpush1.bf16.msra.mxu0 %v9198
        %9247 = vmatprep.mubr.bf16.mxu0 %v9118
        %9248 = vmatmul.mubr.bf16.gmra.mrb[0].mxu0 %v9117
        %v9249 = vpop.f32.mrb[0].mxu0
        %v9250 = vadd.f32 0.0, %v9249
        %v9251 = vpop.f32.mrb[0].mxu0
        %v9252 = vpop.f32.mrb[0].mxu0
        %v9253 = vadd.f32 0.0, %v9252
        %v9254 = vpop.f32.mrb[0].mxu0
        %9255 = vdwg.mxu0
        %v9256 = vadd.f32 %v8756, %v9250
        %v9257 = vadd.f32 %v8757, %v9253
        %9258 = vst [vmem:[#allocation2] sm:$0xff] %v9256
        %9259 = vst [vmem:[#allocation2 + $0x8] sm:$0xff] %v9257
        %v9260 = vmul.f32 %v9256, %v9256
        %v9261 = vmul.f32 %v9257, %v9257
        %9262 = vadd.xlane.f32.xlu0 %v9260
        %v9263 = vpop.xlane.xlu0 %9262
        %9264 = vadd.xlane.f32.xlu0 %v9261
        %v9265 = vpop.xlane.xlu0 %9264
        %v9266 = vmul.f32 %v9263, %v692
        %v9267 = vmul.f32 %v9265, %v692
        %v9268 = vadd.f32 %v9266, 1e-06
        %v9269 = vadd.f32 %v9267, 1e-06
        %v9270 = vrsqrt.pop %v9268
        %v9271 = vrsqrt.pop %v9269
        %v9272 = vmul.f32 %v9256, %v9270
        %v9273 = vmul.f32 %v9257, %v9271
        %v9274 = vld [vmem:[#allocation17] sm:$0x1]
        %v9276 = vlaneseq
        %v9277 = vshrl.u32 %v9276, 7
        %v9278 = vsub.s32 0, %v9277
        %v9279 = vrot.slane %v9274, %v9278
        %v9281 = vmul.f32 %v9272, %v9279
        %v9282 = vmul.f32 %v9273, %v9279
        %v9283 = vld [vmem:[#allocation18] sm:$0xff]
        %v9284 = vld [vmem:[#allocation18 + $0x8] sm:$0xff]
        %v9285 = vld [vmem:[#allocation18 + $0x10] sm:$0xff]
        %v9286 = vld [vmem:[#allocation18 + $0x18] sm:$0xff]
        %v9287 = vld [vmem:[#allocation18 + $0x20] sm:$0xff]
        %v9288 = vld [vmem:[#allocation18 + $0x28] sm:$0xff]
        %v9289 = vld [vmem:[#allocation18 + $0x30] sm:$0xff]
        %v9290 = vld [vmem:[#allocation18 + $0x38] sm:$0xff]
        %v9291 = vld [vmem:[#allocation18 + $0x40] sm:$0xff]
        %v9292 = vld [vmem:[#allocation18 + $0x48] sm:$0xff]
        %v9293 = vld [vmem:[#allocation18 + $0x50] sm:$0xff]
        %v9294 = vld [vmem:[#allocation18 + $0x58] sm:$0xff]
        %v9295 = vld [vmem:[#allocation18 + $0x60] sm:$0xff]
        %v9296 = vld [vmem:[#allocation18 + $0x68] sm:$0xff]
        %v9297 = vld [vmem:[#allocation18 + $0x70] sm:$0xff]
        %v9298 = vld [vmem:[#allocation18 + $0x78] sm:$0xff]
        %v9299 = vpack.c.bf16 %v9282, %v9281
        %v9316 = vunpack.c.l.b16 %v9283
        %v9317 = vunpack.c.h.b16 %v9283
        %v9318 = vunpack.c.l.b16 %v9284
        %v9319 = vunpack.c.h.b16 %v9284
        %v9320 = vunpack.c.l.b16 %v9285
        %v9321 = vunpack.c.h.b16 %v9285
        %v9322 = vunpack.c.l.b16 %v9286
        %v9323 = vunpack.c.h.b16 %v9286
        %v9324 = vunpack.c.l.b16 %v9287
        %v9325 = vunpack.c.h.b16 %v9287
        %v9326 = vunpack.c.l.b16 %v9288
        %v9327 = vunpack.c.h.b16 %v9288
        %v9328 = vunpack.c.l.b16 %v9289
        %v9329 = vunpack.c.h.b16 %v9289
        %v9330 = vunpack.c.l.b16 %v9290
        %v9331 = vunpack.c.h.b16 %v9290
        %v9332 = vunpack.c.l.b16 %v9291
        %v9333 = vunpack.c.h.b16 %v9291
        %v9334 = vunpack.c.l.b16 %v9292
        %v9335 = vunpack.c.h.b16 %v9292
        %v9336 = vunpack.c.l.b16 %v9293
        %v9337 = vunpack.c.h.b16 %v9293
        %v9338 = vunpack.c.l.b16 %v9294
        %v9339 = vunpack.c.h.b16 %v9294
        %v9340 = vunpack.c.l.b16 %v9295
        %v9341 = vunpack.c.h.b16 %v9295
        %v9342 = vunpack.c.l.b16 %v9296
        %v9343 = vunpack.c.h.b16 %v9296
        %v9344 = vunpack.c.l.b16 %v9297
        %v9345 = vunpack.c.h.b16 %v9297
        %v9346 = vunpack.c.l.b16 %v9298
        %v9347 = vunpack.c.h.b16 %v9298
        %v9348 = vpack.c.b16 %v9318, %v9316
        %v9349 = vpack.c.b16 %v9319, %v9317
        %v9350 = vpack.c.b16 %v9322, %v9320
        %v9351 = vpack.c.b16 %v9323, %v9321
        %v9352 = vpack.c.b16 %v9326, %v9324
        %v9353 = vpack.c.b16 %v9327, %v9325
        %v9354 = vpack.c.b16 %v9330, %v9328
        %v9355 = vpack.c.b16 %v9331, %v9329
        %v9356 = vpack.c.b16 %v9334, %v9332
        %v9357 = vpack.c.b16 %v9335, %v9333
        %v9358 = vpack.c.b16 %v9338, %v9336
        %v9359 = vpack.c.b16 %v9339, %v9337
        %v9360 = vpack.c.b16 %v9342, %v9340
        %v9361 = vpack.c.b16 %v9343, %v9341
        %v9362 = vpack.c.b16 %v9346, %v9344
        %v9363 = vpack.c.b16 %v9347, %v9345
        %9380 = vmatprep.subr.bf16.mxu0 %v9349
        %9381 = vmatpush1.bf16.msra.mxu0 %v9348
        %9382 = vmatprep.subr.bf16.mxu0 %v9351
        %9383 = vmatpush1.bf16.msra.mxu0 %v9350
        %9384 = vmatprep.subr.bf16.mxu0 %v9353
        %9385 = vmatpush1.bf16.msra.mxu0 %v9352
        %9386 = vmatprep.subr.bf16.mxu0 %v9355
        %9387 = vmatpush1.bf16.msra.mxu0 %v9354
        %9388 = vmatprep.subr.bf16.mxu0 %v9357
        %9389 = vmatpush1.bf16.msra.mxu0 %v9356
        %9390 = vmatprep.subr.bf16.mxu0 %v9359
        %9391 = vmatpush1.bf16.msra.mxu0 %v9358
        %9392 = vmatprep.subr.bf16.mxu0 %v9361
        %9393 = vmatpush1.bf16.msra.mxu0 %v9360
        %9394 = vmatprep.subr.bf16.mxu0 %v9363
        %9395 = vmatpush1.bf16.msra.mxu0 %v9362
        %9396 = vmatprep.subr.bf16.mxu0 0
        %9397 = vmatpush1.bf16.msra.mxu0 0
        %9398 = vmatprep.subr.bf16.mxu0 0
        %9399 = vmatpush1.bf16.msra.mxu0 0
        %9400 = vmatprep.subr.bf16.mxu0 0
        %9401 = vmatpush1.bf16.msra.mxu0 0
        %9402 = vmatprep.subr.bf16.mxu0 0
        %9403 = vmatpush1.bf16.msra.mxu0 0
        %9404 = vmatprep.subr.bf16.mxu0 0
        %9405 = vmatpush1.bf16.msra.mxu0 0
        %9406 = vmatprep.subr.bf16.mxu0 0
        %9407 = vmatpush1.bf16.msra.mxu0 0
        %9408 = vmatprep.subr.bf16.mxu0 0
        %9409 = vmatpush1.bf16.msra.mxu0 0
        %9410 = vmatprep.subr.bf16.mxu0 0
        %9411 = vmatpush1.bf16.msra.mxu0 0
        %9412 = vmatprep.mubr.bf16.mxu0 0
        %9413 = vmatmul.mubr.bf16.gmra.mrb[0].mxu0 %v9299
        %v9414 = vpop.f32.mrb[0].mxu0
        %v9415 = vadd.f32 0.0, %v9414
        %v9416 = vpop.f32.mrb[0].mxu0
        %v9417 = vadd.f32 0.0, %v9416
        %v9418 = vpop.f32.mrb[0].mxu0
        %v9419 = vadd.f32 0.0, %v9418
        %v9420 = vpop.f32.mrb[0].mxu0
        %v9421 = vadd.f32 0.0, %v9420
        %9422 = vdwg.mxu0
        %9423 = vst [vmem:[#allocation20] sm:$0xff] %v9415
        %9424 = vst [vmem:[#allocation20 + $0x8] sm:$0xff] %v9417
        %9425 = vst [vmem:[#allocation20 + $0x10] sm:$0xff] %v9419
        %9426 = vst [vmem:[#allocation20 + $0x18] sm:$0xff] %v9421
        // Predicated region
        $region117: #{hybrid_forward.1} parent=67 // pred_check
          %p9427 = pneg %p322
        $region118: #{hybrid_forward.1} parent=67 // pred_check_branch
          %9429 = sbr.rel (%p9427) target = $region120
        $region119: #{hybrid_forward.1} parent=67 // pred_region
          %s9431 = ssub.s32 512, 512
          %9432 = vsyncadd [#allocation8], %s9431
          %s9433 = sshll.u32 [#allocation20], 4
          %s9434 = int_to_ptr.vmem [resolvable:$true] %s9433
          %9439 = dma.vmem_to_hbm [thread:$0]  %s9434, 512, %s12, [#allocation8], 256, 256, 16
        $region120: #{hybrid_forward.1} parent=67 // pred_fallthru
          _
        // Predicated region
        $region121: #{hybrid_forward.1} parent=67 // pred_check
          %p9440 = pneg %p322
        $region122: #{hybrid_forward.1} parent=67 // pred_check_branch
          %9442 = sbr.rel (%p9440) target = $region124
        $region123: #{hybrid_forward.1} parent=67 // pred_region
          %9443 = dma.done [#allocation8], 512
        $region124: #{hybrid_forward.1} parent=67 // pred_fallthru
          _
      $region68: #{hybrid_forward.1} parent=5 // pred_fallthru
        _
      %p9444 = scmp.le.s32.totalorder 2, %s22
      // Predicated region
      $region125: #{hybrid_forward.1} parent=5 // pred_check
        %p9445 = pneg %p9444
      $region126: #{hybrid_forward.1} parent=5 // pred_check_branch
        %9447 = sbr.rel (%p9445) target = $region128
      $region127: #{hybrid_forward.1} parent=5 // pred_region
        %s9448 = ssub.s32 %s22, 2
      $region128: #{hybrid_forward.1} parent=5 // pred_fallthru
        _
    $region6: #{hybrid_forward.1} parent=1 // loop_footer
      %s26 = sadd.s32 1, %s22
    $region7: #{hybrid_forward.1} parent=1 // loop_footer_branch
      %21 = sbr.rel target = $region3
    $region8: #{hybrid_forward.1} parent=1 // loop_exit
      _
    %9449 = vsyncpa [#allocation7], 1
    %s9450 = scalar_lea.sflag [#allocation7], 1
    %9451 = vsyncpa %s9450, 1
    %9452 = vsyncpa [#allocation10], 1
    %9453 = vsyncpa [#allocation19], 1
    %9454 = vsyncpa [#allocation8], 1
    %s9455 = scalar_lea.sflag [#allocation8], 1
    %9456 = vsyncpa %s9455, 1

</llo_original>
